<compile_context>
chip_gen: v6e
topology: v6e:2x2x1
jax: 0.10.0
libtpu: 0.0.40
codegen_flags: <defaults>
</compile_context>

<pallas_src>
import functools

import jax
import jax.numpy as jnp
from jax import lax
from jax.experimental import pallas as pl
from jax.experimental.pallas import tpu as pltpu


# ----------------------------------------------------------------------------
# Pallas kernel: fused (teacher+student) Conv3x3(pad=1) + bias + ReLU
#                + NCHW feature writeback + global average pool.
# ----------------------------------------------------------------------------
def _distiller_conv_kernel(x_ref, w_ref, b_ref,
                           tfeat_ref, sfeat_ref, tpool_ref, spool_ref,
                           *, bs, n_t, n_s, H, W, Wp, L_out):
    """Refs (per grid step):
      x_ref     : (bs, Cin, L_in) f32  zero-padded input, rows flattened at
                                       padded width Wp, plus a zero tail
      w_ref     : (9, N, Cin)     f32  conv weights, tap-major (tap = kh*3+kw)
      b_ref     : (N, 1)          f32  concatenated conv biases
      tfeat_ref : (bs, n_t, H, W) f32  hooked teacher feature (post-ReLU)
      sfeat_ref : (bs, n_s, H, W) f32  hooked student feature (post-ReLU)
      tpool_ref : (bs, n_t, 1)    f32  global-avg-pool of teacher feature
      spool_ref : (bs, n_s, 1)    f32  global-avg-pool of student feature
    """
    n = n_t + n_s
    inv_hw = 1.0 / float(H * W)
    bias = b_ref[...]                                      # (n, 1)

    for b in range(bs):                                    # static unroll (bs small)
        # Conv as 9 shifted matmuls over the flattened padded input: the output
        # is computed at padded width Wp (column m = i*Wp + j); tap (kh, kw)
        # reads flat column m + kh*Wp + kw.  Columns j in [W, Wp) are halo
        # garbage and are dropped below.
        acc = jnp.zeros((n, L_out), jnp.float32)
        for kh in range(3):
            for kw in range(3):
                tap = kh * 3 + kw
                x_tap = x_ref[b, :, pl.ds(kh * Wp + kw, L_out)]   # (Cin, L_out)
                acc = acc + jnp.dot(w_ref[tap], x_tap,
                                    preferred_element_type=jnp.float32)
        acc = jnp.maximum(acc + bias, 0.0)                 # bias + ReLU (hooked feat)

        # Drop halo columns while storing NCHW features; accumulate the pooled
        # sum from the same valid slices (lane reductions ride the XLU slot).
        pool = jnp.zeros((n, 1), jnp.float32)
        for i in range(H):
            row = acc[:, i * Wp:i * Wp + W]                # (n, W) valid columns
            tfeat_ref[b, :, i, :] = row[:n_t, :]
            sfeat_ref[b, :, i, :] = row[n_t:, :]
            pool = pool + jnp.sum(row, axis=1, keepdims=True)
        pool = pool * inv_hw
        tpool_ref[b, :, :] = pool[:n_t, :]
        spool_ref[b, :, :] = pool[n_t:, :]


# ----------------------------------------------------------------------------
# Wrapper: single fused pallas_call for both nets' conv stage + pooling.
# ----------------------------------------------------------------------------
def fused_conv_relu_pool(x_nchw, w_t, b_t, w_s, b_s, *, batch_per_step=None):
    """x: (B, Cin, H, W); w_t: (Ct, Cin, 3, 3); w_s: (Cs, Cin, 3, 3).

    Returns (teacher_feat, student_feat, teacher_pool, student_pool):
      feats NCHW, pools (B, C)."""
    B, Cin, H, W = x_nchw.shape
    Ct, Cs = int(w_t.shape[0]), int(w_s.shape[0])
    N = Ct + Cs
    Hp, Wp = H + 2, W + 2
    L_out = H * Wp                       # conv output computed at padded width
    # Tap reads reach flat offset (2*Wp + 2) + L_out - 1; round the flat
    # buffer length up to a multiple of 128 (lane-dense DMA).
    L_in = ((2 * Wp + 2 + L_out + 127) // 128) * 128

    # Only wrapper-side prep: zero-pad the *input* (tiny, ~12 KB) and flatten
    # its rows.  The 9x im2col expansion never hits HBM -- it is formed
    # implicitly in-kernel by 9 shifted slices of this flat buffer.
    xp = jnp.pad(x_nchw, ((0, 0), (0, 0), (1, 1), (1, 1)))      # (B,Cin,Hp,Wp)
    xflat = xp.reshape(B, Cin, Hp * Wp)
    xflat = jnp.pad(xflat, ((0, 0), (0, 0), (0, L_in - Hp * Wp)))

    # Teacher+student conv params fused along output channels, tap-major K.
    w_cat = jnp.concatenate([w_t, w_s], axis=0).astype(jnp.float32)  # (N,Cin,3,3)
    w_taps = jnp.transpose(w_cat, (2, 3, 0, 1)).reshape(9, N, Cin)   # (9,N,Cin)
    b_cat = jnp.concatenate([b_t, b_s]).reshape(N, 1).astype(jnp.float32)

    # One grid step handles `bs` images.  Default: the whole batch in a single
    # step -- v5e/v6e are single-TC, so every extra grid step is ~0.35us of
    # pure overhead for a body this small.  For large per-batch work on v7x,
    # set batch_per_step=1 so the 'parallel' batch axis shards across both
    # TensorCores, and size the block so double-buffered in+out tiles stay
    # under v7x's 64 MiB VMEM (raise vmem_limit_bytes if needed).
    bs = B if batch_per_step is None else batch_per_step
    assert B % bs == 0, "TODO(synk): pad/mask ragged batch tails"
    grid = (B // bs,)

    kernel = functools.partial(
        _distiller_conv_kernel,
        bs=bs, n_t=Ct, n_s=Cs, H=H, W=W, Wp=Wp, L_out=L_out)

    out_shape = (
        jax.ShapeDtypeStruct((B, Ct, H, W), jnp.float32),
        jax.ShapeDtypeStruct((B, Cs, H, W), jnp.float32),
        jax.ShapeDtypeStruct((B, Ct, 1), jnp.float32),
        jax.ShapeDtypeStruct((B, Cs, 1), jnp.float32),
    )
    t_feat, s_feat, t_pool, s_pool = pl.pallas_call(
        kernel,
        out_shape=out_shape,
        grid=grid,
        in_specs=[
            pl.BlockSpec((bs, Cin, L_in), lambda g: (g, 0, 0)),   # input tile
            pl.BlockSpec((9, N, Cin), lambda g: (0, 0, 0)),       # weights resident
            pl.BlockSpec((N, 1), lambda g: (0, 0)),               # bias resident
        ],
        out_specs=(
            pl.BlockSpec((bs, Ct, H, W), lambda g: (g, 0, 0, 0)),
            pl.BlockSpec((bs, Cs, H, W), lambda g: (g, 0, 0, 0)),
            pl.BlockSpec((bs, Ct, 1), lambda g: (g, 0, 0)),
            pl.BlockSpec((bs, Cs, 1), lambda g: (g, 0, 0)),
        ),
        compiler_params=pltpu.CompilerParams(
            dimension_semantics=("parallel",),   # batch steps are independent
        ),
    )(xflat, w_taps, b_cat)
    return t_feat, s_feat, t_pool[..., 0], s_pool[..., 0]


# ----------------------------------------------------------------------------
# Classifier head (plain JAX): the pool is already fused into the kernel.
# ----------------------------------------------------------------------------
def classifier_head(pooled, fc_w, fc_b):
    # (B, C) @ (C, 10): ~hundreds of MACs -- a pallas_call here would be pure
    # launch/DMA overhead; XLA fuses the matmul with the bias add.
    return pooled @ fc_w + fc_b


# ----------------------------------------------------------------------------
# Small teacher / student nets + DistillerModule forward
# ----------------------------------------------------------------------------
def make_net_params(key, cin, cmid, num_classes):
    k1, k2, k3, k4 = jax.random.split(key, 4)
    return {
        "conv_w": jax.random.normal(k1, (cmid, cin, 3, 3), jnp.float32) * 0.1,
        "conv_b": jax.random.normal(k2, (cmid,), jnp.float32) * 0.01,
        "fc_w": jax.random.normal(k3, (cmid, num_classes), jnp.float32) * 0.1,
        "fc_b": jax.random.normal(k4, (1, num_classes), jnp.float32) * 0.01,
    }


def distiller_forward(teacher_params, student_params, x_nchw):
    """Mirrors DistillerModule.forward: run teacher, run student, expose the
    hooked post-ReLU conv features.  Both conv stages (and the avg-pool) run
    in a single fused Pallas kernel."""
    t_feat, s_feat, t_pool, s_pool = fused_conv_relu_pool(
        x_nchw,
        teacher_params["conv_w"], teacher_params["conv_b"],
        student_params["conv_w"], student_params["conv_b"],
    )
    t_pred = classifier_head(t_pool, teacher_params["fc_w"], teacher_params["fc_b"])
    s_pred = classifier_head(s_pool, student_params["fc_w"], student_params["fc_b"])
    # TODO(synk): LayerMap/LayerConfig hook registration is Python-side
    # bookkeeping only; the hooked activations are returned directly instead.
    return {
        "teacher_pred": t_pred,
        "student_pred": s_pred,
        "teacher_feat": t_feat,
        "student_feat": s_feat,
    }


# ----------------------------------------------------------------------------
# Pure-JAX reference (f32) for a tolerance check.
# ----------------------------------------------------------------------------
def _reference_forward(teacher_params, student_params, x):
    def net(p):
        feat = lax.conv_general_dilated(
            x, p["conv_w"], window_strides=(1, 1), padding="SAME",
            dimension_numbers=("NCHW", "OIHW", "NCHW"))
        feat = jnp.maximum(feat + p["conv_b"][None, :, None, None], 0.0)
        pooled = jnp.mean(feat, axis=(2, 3))
        return feat, pooled @ p["fc_w"] + p["fc_b"]

    t_feat, t_pred = net(teacher_params)
    s_feat, s_pred = net(student_params)
    return {"teacher_pred": t_pred, "student_pred": s_pred,
            "teacher_feat": t_feat, "student_feat": s_feat}


if __name__ == "__main__":
    key = jax.random.PRNGKey(0)
    kx, kt, ks = jax.random.split(key, 3)

    B, C, H, W = 2, 4, 16, 16
    NUM_CLASSES = 10
    x = jax.random.normal(kx, (B, C, H, W), jnp.float32)   # layout: NCHW

    teacher_params = make_net_params(kt, cin=C, cmid=16, num_classes=NUM_CLASSES)
    student_params = make_net_params(ks, cin=C, cmid=8, num_classes=NUM_CLASSES)

    out = jax.jit(distiller_forward)(teacher_params, student_params, x)
    jax.block_until_ready(out)

    assert out["teacher_pred"].shape == (B, NUM_CLASSES)
    assert out["student_pred"].shape == (B, NUM_CLASSES)
    assert out["teacher_feat"].shape == (B, 16, H, W)
    assert out["student_feat"].shape == (B, 8, H, W)

    # Numerical check against a pure-JAX f32 reference (tolerance absorbs
    # TPU matmul/conv pass differences).
    ref = jax.jit(_reference_forward)(teacher_params, student_params, x)
    jax.block_until_ready(ref)
    for k in ("teacher_feat", "student_feat", "teacher_pred", "student_pred"):
        assert jnp.allclose(out[k], ref[k], rtol=2e-2, atol=2e-2), k

    print("KERNEL_OK")
</pallas_src>

<mosaic_0001>
module attributes {stable_mosaic.version = 11 : i64} {
  func.func @_distiller_conv_kernel(%arg0: i32, %arg1: memref<2x4x384xf32, #tpu.memory_space<vmem>>, %arg2: memref<9x24x4xf32, #tpu.memory_space<vmem>>, %arg3: memref<24x1xf32, #tpu.memory_space<vmem>>, %arg4: memref<2x16x16x16xf32, #tpu.memory_space<vmem>>, %arg5: memref<2x8x16x16xf32, #tpu.memory_space<vmem>>, %arg6: memref<2x16x1xf32, #tpu.memory_space<vmem>>, %arg7: memref<2x8x1xf32, #tpu.memory_space<vmem>>) attributes {dimension_semantics = [#tpu.dimension_semantics<parallel>], iteration_bounds = array<i64: 1>, scalar_prefetch = 0 : i64, scratch_operands = 0 : i64, tpu.core_type = #tpu.core_type<tc>, window_params = [{transform_indices = @transform_0, window_bounds = array<i64: 2, 4, 384>}, {pipeline_mode = #tpu.pipeline_mode<synchronous>, transform_indices = @transform_1, window_bounds = array<i64: 9, 24, 4>}, {pipeline_mode = #tpu.pipeline_mode<synchronous>, transform_indices = @transform_2, window_bounds = array<i64: 24, 1>}, {transform_indices = @transform_3, window_bounds = array<i64: 2, 16, 16, 16>}, {transform_indices = @transform_4, window_bounds = array<i64: 2, 8, 16, 16>}, {transform_indices = @transform_5, window_bounds = array<i64: 2, 16, 1>}, {transform_indices = @transform_6, window_bounds = array<i64: 2, 8, 1>}]} {
    %c0 = arith.constant 0 : index
    %c0_0 = arith.constant 0 : index
    %0 = vector.load %arg3[%c0, %c0_0] : memref<24x1xf32, #tpu.memory_space<vmem>>, vector<24x1xf32>
    %cst = arith.constant 0.000000e+00 : f32
    %1 = vector.broadcast %cst : f32 to vector<24x288xf32>
    %c0_1 = arith.constant 0 : index
    %c0_2 = arith.constant 0 : index
    %c0_3 = arith.constant 0 : index
    %2 = vector.load %arg1[%c0_1, %c0_2, %c0_3] : memref<2x4x384xf32, #tpu.memory_space<vmem>>, vector<1x4x288xf32>
    %3 = vector.shape_cast %2 : vector<1x4x288xf32> to vector<4x288xf32>
    %c0_4 = arith.constant 0 : index
    %c0_5 = arith.constant 0 : index
    %c0_6 = arith.constant 0 : index
    %4 = vector.load %arg2[%c0_4, %c0_5, %c0_6] : memref<9x24x4xf32, #tpu.memory_space<vmem>>, vector<1x24x4xf32>
    %5 = vector.shape_cast %4 : vector<1x24x4xf32> to vector<24x4xf32>
    %cst_7 = arith.constant dense<0.000000e+00> : vector<24x288xf32>
    %6 = tpu.matmul %5, %3, %cst_7 {dimension_numbers = #tpu.dot_dimension_numbers<[1], [0], [0], [1], [0, 0, 1, 1], [], []>} : vector<24x4xf32>, vector<4x288xf32>, vector<24x288xf32> -> vector<24x288xf32>
    %7 = arith.addf %1, %6 : vector<24x288xf32>
    %c0_8 = arith.constant 0 : index
    %c0_9 = arith.constant 0 : index
    %c1 = arith.constant 1 : index
    %8 = vector.load %arg1[%c0_8, %c0_9, %c1] : memref<2x4x384xf32, #tpu.memory_space<vmem>>, vector<1x4x288xf32>
    %9 = vector.shape_cast %8 : vector<1x4x288xf32> to vector<4x288xf32>
    %c1_10 = arith.constant 1 : index
    %c0_11 = arith.constant 0 : index
    %c0_12 = arith.constant 0 : index
    %10 = vector.load %arg2[%c1_10, %c0_11, %c0_12] : memref<9x24x4xf32, #tpu.memory_space<vmem>>, vector<1x24x4xf32>
    %11 = vector.shape_cast %10 : vector<1x24x4xf32> to vector<24x4xf32>
    %cst_13 = arith.constant dense<0.000000e+00> : vector<24x288xf32>
    %12 = tpu.matmul %11, %9, %cst_13 {dimension_numbers = #tpu.dot_dimension_numbers<[1], [0], [0], [1], [0, 0, 1, 1], [], []>} : vector<24x4xf32>, vector<4x288xf32>, vector<24x288xf32> -> vector<24x288xf32>
    %13 = arith.addf %7, %12 : vector<24x288xf32>
    %c0_14 = arith.constant 0 : index
    %c0_15 = arith.constant 0 : index
    %c2 = arith.constant 2 : index
    %14 = vector.load %arg1[%c0_14, %c0_15, %c2] : memref<2x4x384xf32, #tpu.memory_space<vmem>>, vector<1x4x288xf32>
    %15 = vector.shape_cast %14 : vector<1x4x288xf32> to vector<4x288xf32>
    %c2_16 = arith.constant 2 : index
    %c0_17 = arith.constant 0 : index
    %c0_18 = arith.constant 0 : index
    %16 = vector.load %arg2[%c2_16, %c0_17, %c0_18] : memref<9x24x4xf32, #tpu.memory_space<vmem>>, vector<1x24x4xf32>
    %17 = vector.shape_cast %16 : vector<1x24x4xf32> to vector<24x4xf32>
    %cst_19 = arith.constant dense<0.000000e+00> : vector<24x288xf32>
    %18 = tpu.matmul %17, %15, %cst_19 {dimension_numbers = #tpu.dot_dimension_numbers<[1], [0], [0], [1], [0, 0, 1, 1], [], []>} : vector<24x4xf32>, vector<4x288xf32>, vector<24x288xf32> -> vector<24x288xf32>
    %19 = arith.addf %13, %18 : vector<24x288xf32>
    %c0_20 = arith.constant 0 : index
    %c0_21 = arith.constant 0 : index
    %c18 = arith.constant 18 : index
    %20 = vector.load %arg1[%c0_20, %c0_21, %c18] : memref<2x4x384xf32, #tpu.memory_space<vmem>>, vector<1x4x288xf32>
    %21 = vector.shape_cast %20 : vector<1x4x288xf32> to vector<4x288xf32>
    %c3 = arith.constant 3 : index
    %c0_22 = arith.constant 0 : index
    %c0_23 = arith.constant 0 : index
    %22 = vector.load %arg2[%c3, %c0_22, %c0_23] : memref<9x24x4xf32, #tpu.memory_space<vmem>>, vector<1x24x4xf32>
    %23 = vector.shape_cast %22 : vector<1x24x4xf32> to vector<24x4xf32>
    %cst_24 = arith.constant dense<0.000000e+00> : vector<24x288xf32>
    %24 = tpu.matmul %23, %21, %cst_24 {dimension_numbers = #tpu.dot_dimension_numbers<[1], [0], [0], [1], [0, 0, 1, 1], [], []>} : vector<24x4xf32>, vector<4x288xf32>, vector<24x288xf32> -> vector<24x288xf32>
    %25 = arith.addf %19, %24 : vector<24x288xf32>
    %c0_25 = arith.constant 0 : index
    %c0_26 = arith.constant 0 : index
    %c19 = arith.constant 19 : index
    %26 = vector.load %arg1[%c0_25, %c0_26, %c19] : memref<2x4x384xf32, #tpu.memory_space<vmem>>, vector<1x4x288xf32>
    %27 = vector.shape_cast %26 : vector<1x4x288xf32> to vector<4x288xf32>
    %c4 = arith.constant 4 : index
    %c0_27 = arith.constant 0 : index
    %c0_28 = arith.constant 0 : index
    %28 = vector.load %arg2[%c4, %c0_27, %c0_28] : memref<9x24x4xf32, #tpu.memory_space<vmem>>, vector<1x24x4xf32>
    %29 = vector.shape_cast %28 : vector<1x24x4xf32> to vector<24x4xf32>
    %cst_29 = arith.constant dense<0.000000e+00> : vector<24x288xf32>
    %30 = tpu.matmul %29, %27, %cst_29 {dimension_numbers = #tpu.dot_dimension_numbers<[1], [0], [0], [1], [0, 0, 1, 1], [], []>} : vector<24x4xf32>, vector<4x288xf32>, vector<24x288xf32> -> vector<24x288xf32>
    %31 = arith.addf %25, %30 : vector<24x288xf32>
    %c0_30 = arith.constant 0 : index
    %c0_31 = arith.constant 0 : index
    %c20 = arith.constant 20 : index
    %32 = vector.load %arg1[%c0_30, %c0_31, %c20] : memref<2x4x384xf32, #tpu.memory_space<vmem>>, vector<1x4x288xf32>
    %33 = vector.shape_cast %32 : vector<1x4x288xf32> to vector<4x288xf32>
    %c5 = arith.constant 5 : index
    %c0_32 = arith.constant 0 : index
    %c0_33 = arith.constant 0 : index
    %34 = vector.load %arg2[%c5, %c0_32, %c0_33] : memref<9x24x4xf32, #tpu.memory_space<vmem>>, vector<1x24x4xf32>
    %35 = vector.shape_cast %34 : vector<1x24x4xf32> to vector<24x4xf32>
    %cst_34 = arith.constant dense<0.000000e+00> : vector<24x288xf32>
    %36 = tpu.matmul %35, %33, %cst_34 {dimension_numbers = #tpu.dot_dimension_numbers<[1], [0], [0], [1], [0, 0, 1, 1], [], []>} : vector<24x4xf32>, vector<4x288xf32>, vector<24x288xf32> -> vector<24x288xf32>
    %37 = arith.addf %31, %36 : vector<24x288xf32>
    %c0_35 = arith.constant 0 : index
    %c0_36 = arith.constant 0 : index
    %c36 = arith.constant 36 : index
    %38 = vector.load %arg1[%c0_35, %c0_36, %c36] : memref<2x4x384xf32, #tpu.memory_space<vmem>>, vector<1x4x288xf32>
    %39 = vector.shape_cast %38 : vector<1x4x288xf32> to vector<4x288xf32>
    %c6 = arith.constant 6 : index
    %c0_37 = arith.constant 0 : index
    %c0_38 = arith.constant 0 : index
    %40 = vector.load %arg2[%c6, %c0_37, %c0_38] : memref<9x24x4xf32, #tpu.memory_space<vmem>>, vector<1x24x4xf32>
    %41 = vector.shape_cast %40 : vector<1x24x4xf32> to vector<24x4xf32>
    %cst_39 = arith.constant dense<0.000000e+00> : vector<24x288xf32>
    %42 = tpu.matmul %41, %39, %cst_39 {dimension_numbers = #tpu.dot_dimension_numbers<[1], [0], [0], [1], [0, 0, 1, 1], [], []>} : vector<24x4xf32>, vector<4x288xf32>, vector<24x288xf32> -> vector<24x288xf32>
    %43 = arith.addf %37, %42 : vector<24x288xf32>
    %c0_40 = arith.constant 0 : index
    %c0_41 = arith.constant 0 : index
    %c37 = arith.constant 37 : index
    %44 = vector.load %arg1[%c0_40, %c0_41, %c37] : memref<2x4x384xf32, #tpu.memory_space<vmem>>, vector<1x4x288xf32>
    %45 = vector.shape_cast %44 : vector<1x4x288xf32> to vector<4x288xf32>
    %c7 = arith.constant 7 : index
    %c0_42 = arith.constant 0 : index
    %c0_43 = arith.constant 0 : index
    %46 = vector.load %arg2[%c7, %c0_42, %c0_43] : memref<9x24x4xf32, #tpu.memory_space<vmem>>, vector<1x24x4xf32>
    %47 = vector.shape_cast %46 : vector<1x24x4xf32> to vector<24x4xf32>
    %cst_44 = arith.constant dense<0.000000e+00> : vector<24x288xf32>
    %48 = tpu.matmul %47, %45, %cst_44 {dimension_numbers = #tpu.dot_dimension_numbers<[1], [0], [0], [1], [0, 0, 1, 1], [], []>} : vector<24x4xf32>, vector<4x288xf32>, vector<24x288xf32> -> vector<24x288xf32>
    %49 = arith.addf %43, %48 : vector<24x288xf32>
    %c0_45 = arith.constant 0 : index
    %c0_46 = arith.constant 0 : index
    %c38 = arith.constant 38 : index
    %50 = vector.load %arg1[%c0_45, %c0_46, %c38] : memref<2x4x384xf32, #tpu.memory_space<vmem>>, vector<1x4x288xf32>
    %51 = vector.shape_cast %50 : vector<1x4x288xf32> to vector<4x288xf32>
    %c8 = arith.constant 8 : index
    %c0_47 = arith.constant 0 : index
    %c0_48 = arith.constant 0 : index
    %52 = vector.load %arg2[%c8, %c0_47, %c0_48] : memref<9x24x4xf32, #tpu.memory_space<vmem>>, vector<1x24x4xf32>
    %53 = vector.shape_cast %52 : vector<1x24x4xf32> to vector<24x4xf32>
    %cst_49 = arith.constant dense<0.000000e+00> : vector<24x288xf32>
    %54 = tpu.matmul %53, %51, %cst_49 {dimension_numbers = #tpu.dot_dimension_numbers<[1], [0], [0], [1], [0, 0, 1, 1], [], []>} : vector<24x4xf32>, vector<4x288xf32>, vector<24x288xf32> -> vector<24x288xf32>
    %55 = arith.addf %49, %54 : vector<24x288xf32>
    %56 = vector.broadcast %0 : vector<24x1xf32> to vector<24x288xf32>
    %57 = arith.addf %55, %56 : vector<24x288xf32>
    %cst_50 = arith.constant 0.000000e+00 : f32
    %58 = vector.broadcast %cst_50 : f32 to vector<24x288xf32>
    %59 = arith.maximumf %57, %58 : vector<24x288xf32>
    %cst_51 = arith.constant 0.000000e+00 : f32
    %60 = vector.broadcast %cst_51 : f32 to vector<24x1xf32>
    %61 = vector.extract_strided_slice %59 {offsets = [0, 0], sizes = [24, 16], strides = [1, 1]} : vector<24x288xf32> to vector<24x16xf32>
    %62 = vector.extract_strided_slice %61 {offsets = [0, 0], sizes = [16, 16], strides = [1, 1]} : vector<24x16xf32> to vector<16x16xf32>
    %c0_52 = arith.constant 0 : index
    %c0_53 = arith.constant 0 : index
    %c0_54 = arith.constant 0 : index
    %c0_55 = arith.constant 0 : index
    %63 = vector.load %arg4[%c0_52, %c0_53, %c0_54, %c0_55] : memref<2x16x16x16xf32, #tpu.memory_space<vmem>>, vector<1x16x1x16xf32>
    %64 = vector.shape_cast %63 : vector<1x16x1x16xf32> to vector<16x16xf32>
    %65 = vector.shape_cast %62 : vector<16x16xf32> to vector<1x16x1x16xf32>
    tpu.vector_store %arg4[%c0_52, %c0_53, %c0_54, %c0_55], %65 {strides = array<i32>} : memref<2x16x16x16xf32, #tpu.memory_space<vmem>>, vector<1x16x1x16xf32>,
    %66 = vector.extract_strided_slice %61 {offsets = [16, 0], sizes = [8, 16], strides = [1, 1]} : vector<24x16xf32> to vector<8x16xf32>
    %c0_56 = arith.constant 0 : index
    %c0_57 = arith.constant 0 : index
    %c0_58 = arith.constant 0 : index
    %c0_59 = arith.constant 0 : index
    %67 = vector.load %arg5[%c0_56, %c0_57, %c0_58, %c0_59] : memref<2x8x16x16xf32, #tpu.memory_space<vmem>>, vector<1x8x1x16xf32>
    %68 = vector.shape_cast %67 : vector<1x8x1x16xf32> to vector<8x16xf32>
    %69 = vector.shape_cast %66 : vector<8x16xf32> to vector<1x8x1x16xf32>
    tpu.vector_store %arg5[%c0_56, %c0_57, %c0_58, %c0_59], %69 {strides = array<i32>} : memref<2x8x16x16xf32, #tpu.memory_space<vmem>>, vector<1x8x1x16xf32>,
    %cst_60 = arith.constant dense<0.000000e+00> : vector<24xf32>
    %70 = vector.multi_reduction <add>, %61, %cst_60 [1] : vector<24x16xf32> to vector<24xf32>
    %71 = vector.shape_cast %70 : vector<24xf32> to vector<24x1xf32>
    %72 = arith.addf %60, %71 : vector<24x1xf32>
    %73 = vector.extract_strided_slice %59 {offsets = [0, 18], sizes = [24, 16], strides = [1, 1]} : vector<24x288xf32> to vector<24x16xf32>
    %74 = vector.extract_strided_slice %73 {offsets = [0, 0], sizes = [16, 16], strides = [1, 1]} : vector<24x16xf32> to vector<16x16xf32>
    %c0_61 = arith.constant 0 : index
    %c0_62 = arith.constant 0 : index
    %c1_63 = arith.constant 1 : index
    %c0_64 = arith.constant 0 : index
    %75 = vector.load %arg4[%c0_61, %c0_62, %c1_63, %c0_64] : memref<2x16x16x16xf32, #tpu.memory_space<vmem>>, vector<1x16x1x16xf32>
    %76 = vector.shape_cast %75 : vector<1x16x1x16xf32> to vector<16x16xf32>
    %77 = vector.shape_cast %74 : vector<16x16xf32> to vector<1x16x1x16xf32>
    tpu.vector_store %arg4[%c0_61, %c0_62, %c1_63, %c0_64], %77 {strides = array<i32>} : memref<2x16x16x16xf32, #tpu.memory_space<vmem>>, vector<1x16x1x16xf32>,
    %78 = vector.extract_strided_slice %73 {offsets = [16, 0], sizes = [8, 16], strides = [1, 1]} : vector<24x16xf32> to vector<8x16xf32>
    %c0_65 = arith.constant 0 : index
    %c0_66 = arith.constant 0 : index
    %c1_67 = arith.constant 1 : index
    %c0_68 = arith.constant 0 : index
    %79 = vector.load %arg5[%c0_65, %c0_66, %c1_67, %c0_68] : memref<2x8x16x16xf32, #tpu.memory_space<vmem>>, vector<1x8x1x16xf32>
    %80 = vector.shape_cast %79 : vector<1x8x1x16xf32> to vector<8x16xf32>
    %81 = vector.shape_cast %78 : vector<8x16xf32> to vector<1x8x1x16xf32>
    tpu.vector_store %arg5[%c0_65, %c0_66, %c1_67, %c0_68], %81 {strides = array<i32>} : memref<2x8x16x16xf32, #tpu.memory_space<vmem>>, vector<1x8x1x16xf32>,
    %cst_69 = arith.constant dense<0.000000e+00> : vector<24xf32>
    %82 = vector.multi_reduction <add>, %73, %cst_69 [1] : vector<24x16xf32> to vector<24xf32>
    %83 = vector.shape_cast %82 : vector<24xf32> to vector<24x1xf32>
    %84 = arith.addf %72, %83 : vector<24x1xf32>
    %85 = vector.extract_strided_slice %59 {offsets = [0, 36], sizes = [24, 16], strides = [1, 1]} : vector<24x288xf32> to vector<24x16xf32>
    %86 = vector.extract_strided_slice %85 {offsets = [0, 0], sizes = [16, 16], strides = [1, 1]} : vector<24x16xf32> to vector<16x16xf32>
    %c0_70 = arith.constant 0 : index
    %c0_71 = arith.constant 0 : index
    %c2_72 = arith.constant 2 : index
    %c0_73 = arith.constant 0 : index
    %87 = vector.load %arg4[%c0_70, %c0_71, %c2_72, %c0_73] : memref<2x16x16x16xf32, #tpu.memory_space<vmem>>, vector<1x16x1x16xf32>
    %88 = vector.shape_cast %87 : vector<1x16x1x16xf32> to vector<16x16xf32>
    %89 = vector.shape_cast %86 : vector<16x16xf32> to vector<1x16x1x16xf32>
    tpu.vector_store %arg4[%c0_70, %c0_71, %c2_72, %c0_73], %89 {strides = array<i32>} : memref<2x16x16x16xf32, #tpu.memory_space<vmem>>, vector<1x16x1x16xf32>,
    %90 = vector.extract_strided_slice %85 {offsets = [16, 0], sizes = [8, 16], strides = [1, 1]} : vector<24x16xf32> to vector<8x16xf32>
    %c0_74 = arith.constant 0 : index
    %c0_75 = arith.constant 0 : index
    %c2_76 = arith.constant 2 : index
    %c0_77 = arith.constant 0 : index
    %91 = vector.load %arg5[%c0_74, %c0_75, %c2_76, %c0_77] : memref<2x8x16x16xf32, #tpu.memory_space<vmem>>, vector<1x8x1x16xf32>
    %92 = vector.shape_cast %91 : vector<1x8x1x16xf32> to vector<8x16xf32>
    %93 = vector.shape_cast %90 : vector<8x16xf32> to vector<1x8x1x16xf32>
    tpu.vector_store %arg5[%c0_74, %c0_75, %c2_76, %c0_77], %93 {strides = array<i32>} : memref<2x8x16x16xf32, #tpu.memory_space<vmem>>, vector<1x8x1x16xf32>,
    %cst_78 = arith.constant dense<0.000000e+00> : vector<24xf32>
    %94 = vector.multi_reduction <add>, %85, %cst_78 [1] : vector<24x16xf32> to vector<24xf32>
    %95 = vector.shape_cast %94 : vector<24xf32> to vector<24x1xf32>
    %96 = arith.addf %84, %95 : vector<24x1xf32>
    %97 = vector.extract_strided_slice %59 {offsets = [0, 54], sizes = [24, 16], strides = [1, 1]} : vector<24x288xf32> to vector<24x16xf32>
    %98 = vector.extract_strided_slice %97 {offsets = [0, 0], sizes = [16, 16], strides = [1, 1]} : vector<24x16xf32> to vector<16x16xf32>
    %c0_79 = arith.constant 0 : index
    %c0_80 = arith.constant 0 : index
    %c3_81 = arith.constant 3 : index
    %c0_82 = arith.constant 0 : index
    %99 = vector.load %arg4[%c0_79, %c0_80, %c3_81, %c0_82] : memref<2x16x16x16xf32, #tpu.memory_space<vmem>>, vector<1x16x1x16xf32>
    %100 = vector.shape_cast %99 : vector<1x16x1x16xf32> to vector<16x16xf32>
    %101 = vector.shape_cast %98 : vector<16x16xf32> to vector<1x16x1x16xf32>
    tpu.vector_store %arg4[%c0_79, %c0_80, %c3_81, %c0_82], %101 {strides = array<i32>} : memref<2x16x16x16xf32, #tpu.memory_space<vmem>>, vector<1x16x1x16xf32>,
    %102 = vector.extract_strided_slice %97 {offsets = [16, 0], sizes = [8, 16], strides = [1, 1]} : vector<24x16xf32> to vector<8x16xf32>
    %c0_83 = arith.constant 0 : index
    %c0_84 = arith.constant 0 : index
    %c3_85 = arith.constant 3 : index
    %c0_86 = arith.constant 0 : index
    %103 = vector.load %arg5[%c0_83, %c0_84, %c3_85, %c0_86] : memref<2x8x16x16xf32, #tpu.memory_space<vmem>>, vector<1x8x1x16xf32>
    %104 = vector.shape_cast %103 : vector<1x8x1x16xf32> to vector<8x16xf32>
    %105 = vector.shape_cast %102 : vector<8x16xf32> to vector<1x8x1x16xf32>
    tpu.vector_store %arg5[%c0_83, %c0_84, %c3_85, %c0_86], %105 {strides = array<i32>} : memref<2x8x16x16xf32, #tpu.memory_space<vmem>>, vector<1x8x1x16xf32>,
    %cst_87 = arith.constant dense<0.000000e+00> : vector<24xf32>
    %106 = vector.multi_reduction <add>, %97, %cst_87 [1] : vector<24x16xf32> to vector<24xf32>
    %107 = vector.shape_cast %106 : vector<24xf32> to vector<24x1xf32>
    %108 = arith.addf %96, %107 : vector<24x1xf32>
    %109 = vector.extract_strided_slice %59 {offsets = [0, 72], sizes = [24, 16], strides = [1, 1]} : vector<24x288xf32> to vector<24x16xf32>
    %110 = vector.extract_strided_slice %109 {offsets = [0, 0], sizes = [16, 16], strides = [1, 1]} : vector<24x16xf32> to vector<16x16xf32>
    %c0_88 = arith.constant 0 : index
    %c0_89 = arith.constant 0 : index
    %c4_90 = arith.constant 4 : index
    %c0_91 = arith.constant 0 : index
    %111 = vector.load %arg4[%c0_88, %c0_89, %c4_90, %c0_91] : memref<2x16x16x16xf32, #tpu.memory_space<vmem>>, vector<1x16x1x16xf32>
    %112 = vector.shape_cast %111 : vector<1x16x1x16xf32> to vector<16x16xf32>
    %113 = vector.shape_cast %110 : vector<16x16xf32> to vector<1x16x1x16xf32>
    tpu.vector_store %arg4[%c0_88, %c0_89, %c4_90, %c0_91], %113 {strides = array<i32>} : memref<2x16x16x16xf32, #tpu.memory_space<vmem>>, vector<1x16x1x16xf32>,
    %114 = vector.extract_strided_slice %109 {offsets = [16, 0], sizes = [8, 16], strides = [1, 1]} : vector<24x16xf32> to vector<8x16xf32>
    %c0_92 = arith.constant 0 : index
    %c0_93 = arith.constant 0 : index
    %c4_94 = arith.constant 4 : index
    %c0_95 = arith.constant 0 : index
    %115 = vector.load %arg5[%c0_92, %c0_93, %c4_94, %c0_95] : memref<2x8x16x16xf32, #tpu.memory_space<vmem>>, vector<1x8x1x16xf32>
    %116 = vector.shape_cast %115 : vector<1x8x1x16xf32> to vector<8x16xf32>
    %117 = vector.shape_cast %114 : vector<8x16xf32> to vector<1x8x1x16xf32>
    tpu.vector_store %arg5[%c0_92, %c0_93, %c4_94, %c0_95], %117 {strides = array<i32>} : memref<2x8x16x16xf32, #tpu.memory_space<vmem>>, vector<1x8x1x16xf32>,
    %cst_96 = arith.constant dense<0.000000e+00> : vector<24xf32>
    %118 = vector.multi_reduction <add>, %109, %cst_96 [1] : vector<24x16xf32> to vector<24xf32>
    %119 = vector.shape_cast %118 : vector<24xf32> to vector<24x1xf32>
    %120 = arith.addf %108, %119 : vector<24x1xf32>
    %121 = vector.extract_strided_slice %59 {offsets = [0, 90], sizes = [24, 16], strides = [1, 1]} : vector<24x288xf32> to vector<24x16xf32>
    %122 = vector.extract_strided_slice %121 {offsets = [0, 0], sizes = [16, 16], strides = [1, 1]} : vector<24x16xf32> to vector<16x16xf32>
    %c0_97 = arith.constant 0 : index
    %c0_98 = arith.constant 0 : index
    %c5_99 = arith.constant 5 : index
    %c0_100 = arith.constant 0 : index
    %123 = vector.load %arg4[%c0_97, %c0_98, %c5_99, %c0_100] : memref<2x16x16x16xf32, #tpu.memory_space<vmem>>, vector<1x16x1x16xf32>
    %124 = vector.shape_cast %123 : vector<1x16x1x16xf32> to vector<16x16xf32>
    %125 = vector.shape_cast %122 : vector<16x16xf32> to vector<1x16x1x16xf32>
    tpu.vector_store %arg4[%c0_97, %c0_98, %c5_99, %c0_100], %125 {strides = array<i32>} : memref<2x16x16x16xf32, #tpu.memory_space<vmem>>, vector<1x16x1x16xf32>,
    %126 = vector.extract_strided_slice %121 {offsets = [16, 0], sizes = [8, 16], strides = [1, 1]} : vector<24x16xf32> to vector<8x16xf32>
    %c0_101 = arith.constant 0 : index
    %c0_102 = arith.constant 0 : index
    %c5_103 = arith.constant 5 : index
    %c0_104 = arith.constant 0 : index
    %127 = vector.load %arg5[%c0_101, %c0_102, %c5_103, %c0_104] : memref<2x8x16x16xf32, #tpu.memory_space<vmem>>, vector<1x8x1x16xf32>
    %128 = vector.shape_cast %127 : vector<1x8x1x16xf32> to vector<8x16xf32>
    %129 = vector.shape_cast %126 : vector<8x16xf32> to vector<1x8x1x16xf32>
    tpu.vector_store %arg5[%c0_101, %c0_102, %c5_103, %c0_104], %129 {strides = array<i32>} : memref<2x8x16x16xf32, #tpu.memory_space<vmem>>, vector<1x8x1x16xf32>,
    %cst_105 = arith.constant dense<0.000000e+00> : vector<24xf32>
    %130 = vector.multi_reduction <add>, %121, %cst_105 [1] : vector<24x16xf32> to vector<24xf32>
    %131 = vector.shape_cast %130 : vector<24xf32> to vector<24x1xf32>
    %132 = arith.addf %120, %131 : vector<24x1xf32>
    %133 = vector.extract_strided_slice %59 {offsets = [0, 108], sizes = [24, 16], strides = [1, 1]} : vector<24x288xf32> to vector<24x16xf32>
    %134 = vector.extract_strided_slice %133 {offsets = [0, 0], sizes = [16, 16], strides = [1, 1]} : vector<24x16xf32> to vector<16x16xf32>
    %c0_106 = arith.constant 0 : index
    %c0_107 = arith.constant 0 : index
    %c6_108 = arith.constant 6 : index
    %c0_109 = arith.constant 0 : index
    %135 = vector.load %arg4[%c0_106, %c0_107, %c6_108, %c0_109] : memref<2x16x16x16xf32, #tpu.memory_space<vmem>>, vector<1x16x1x16xf32>
    %136 = vector.shape_cast %135 : vector<1x16x1x16xf32> to vector<16x16xf32>
    %137 = vector.shape_cast %134 : vector<16x16xf32> to vector<1x16x1x16xf32>
    tpu.vector_store %arg4[%c0_106, %c0_107, %c6_108, %c0_109], %137 {strides = array<i32>} : memref<2x16x16x16xf32, #tpu.memory_space<vmem>>, vector<1x16x1x16xf32>,
    %138 = vector.extract_strided_slice %133 {offsets = [16, 0], sizes = [8, 16], strides = [1, 1]} : vector<24x16xf32> to vector<8x16xf32>
    %c0_110 = arith.constant 0 : index
    %c0_111 = arith.constant 0 : index
    %c6_112 = arith.constant 6 : index
    %c0_113 = arith.constant 0 : index
    %139 = vector.load %arg5[%c0_110, %c0_111, %c6_112, %c0_113] : memref<2x8x16x16xf32, #tpu.memory_space<vmem>>, vector<1x8x1x16xf32>
    %140 = vector.shape_cast %139 : vector<1x8x1x16xf32> to vector<8x16xf32>
    %141 = vector.shape_cast %138 : vector<8x16xf32> to vector<1x8x1x16xf32>
    tpu.vector_store %arg5[%c0_110, %c0_111, %c6_112, %c0_113], %141 {strides = array<i32>} : memref<2x8x16x16xf32, #tpu.memory_space<vmem>>, vector<1x8x1x16xf32>,
    %cst_114 = arith.constant dense<0.000000e+00> : vector<24xf32>
    %142 = vector.multi_reduction <add>, %133, %cst_114 [1] : vector<24x16xf32> to vector<24xf32>
    %143 = vector.shape_cast %142 : vector<24xf32> to vector<24x1xf32>
    %144 = arith.addf %132, %143 : vector<24x1xf32>
    %145 = vector.extract_strided_slice %59 {offsets = [0, 126], sizes = [24, 16], strides = [1, 1]} : vector<24x288xf32> to vector<24x16xf32>
    %146 = vector.extract_strided_slice %145 {offsets = [0, 0], sizes = [16, 16], strides = [1, 1]} : vector<24x16xf32> to vector<16x16xf32>
    %c0_115 = arith.constant 0 : index
    %c0_116 = arith.constant 0 : index
    %c7_117 = arith.constant 7 : index
    %c0_118 = arith.constant 0 : index
    %147 = vector.load %arg4[%c0_115, %c0_116, %c7_117, %c0_118] : memref<2x16x16x16xf32, #tpu.memory_space<vmem>>, vector<1x16x1x16xf32>
    %148 = vector.shape_cast %147 : vector<1x16x1x16xf32> to vector<16x16xf32>
    %149 = vector.shape_cast %146 : vector<16x16xf32> to vector<1x16x1x16xf32>
    tpu.vector_store %arg4[%c0_115, %c0_116, %c7_117, %c0_118], %149 {strides = array<i32>} : memref<2x16x16x16xf32, #tpu.memory_space<vmem>>, vector<1x16x1x16xf32>,
    %150 = vector.extract_strided_slice %145 {offsets = [16, 0], sizes = [8, 16], strides = [1, 1]} : vector<24x16xf32> to vector<8x16xf32>
    %c0_119 = arith.constant 0 : index
    %c0_120 = arith.constant 0 : index
    %c7_121 = arith.constant 7 : index
    %c0_122 = arith.constant 0 : index
    %151 = vector.load %arg5[%c0_119, %c0_120, %c7_121, %c0_122] : memref<2x8x16x16xf32, #tpu.memory_space<vmem>>, vector<1x8x1x16xf32>
    %152 = vector.shape_cast %151 : vector<1x8x1x16xf32> to vector<8x16xf32>
    %153 = vector.shape_cast %150 : vector<8x16xf32> to vector<1x8x1x16xf32>
    tpu.vector_store %arg5[%c0_119, %c0_120, %c7_121, %c0_122], %153 {strides = array<i32>} : memref<2x8x16x16xf32, #tpu.memory_space<vmem>>, vector<1x8x1x16xf32>,
    %cst_123 = arith.constant dense<0.000000e+00> : vector<24xf32>
    %154 = vector.multi_reduction <add>, %145, %cst_123 [1] : vector<24x16xf32> to vector<24xf32>
    %155 = vector.shape_cast %154 : vector<24xf32> to vector<24x1xf32>
    %156 = arith.addf %144, %155 : vector<24x1xf32>
    %157 = vector.extract_strided_slice %59 {offsets = [0, 144], sizes = [24, 16], strides = [1, 1]} : vector<24x288xf32> to vector<24x16xf32>
    %158 = vector.extract_strided_slice %157 {offsets = [0, 0], sizes = [16, 16], strides = [1, 1]} : vector<24x16xf32> to vector<16x16xf32>
    %c0_124 = arith.constant 0 : index
    %c0_125 = arith.constant 0 : index
    %c8_126 = arith.constant 8 : index
    %c0_127 = arith.constant 0 : index
    %159 = vector.load %arg4[%c0_124, %c0_125, %c8_126, %c0_127] : memref<2x16x16x16xf32, #tpu.memory_space<vmem>>, vector<1x16x1x16xf32>
    %160 = vector.shape_cast %159 : vector<1x16x1x16xf32> to vector<16x16xf32>
    %161 = vector.shape_cast %158 : vector<16x16xf32> to vector<1x16x1x16xf32>
    tpu.vector_store %arg4[%c0_124, %c0_125, %c8_126, %c0_127], %161 {strides = array<i32>} : memref<2x16x16x16xf32, #tpu.memory_space<vmem>>, vector<1x16x1x16xf32>,
    %162 = vector.extract_strided_slice %157 {offsets = [16, 0], sizes = [8, 16], strides = [1, 1]} : vector<24x16xf32> to vector<8x16xf32>
    %c0_128 = arith.constant 0 : index
    %c0_129 = arith.constant 0 : index
    %c8_130 = arith.constant 8 : index
    %c0_131 = arith.constant 0 : index
    %163 = vector.load %arg5[%c0_128, %c0_129, %c8_130, %c0_131] : memref<2x8x16x16xf32, #tpu.memory_space<vmem>>, vector<1x8x1x16xf32>
    %164 = vector.shape_cast %163 : vector<1x8x1x16xf32> to vector<8x16xf32>
    %165 = vector.shape_cast %162 : vector<8x16xf32> to vector<1x8x1x16xf32>
    tpu.vector_store %arg5[%c0_128, %c0_129, %c8_130, %c0_131], %165 {strides = array<i32>} : memref<2x8x16x16xf32, #tpu.memory_space<vmem>>, vector<1x8x1x16xf32>,
    %cst_132 = arith.constant dense<0.000000e+00> : vector<24xf32>
    %166 = vector.multi_reduction <add>, %157, %cst_132 [1] : vector<24x16xf32> to vector<24xf32>
    %167 = vector.shape_cast %166 : vector<24xf32> to vector<24x1xf32>
    %168 = arith.addf %156, %167 : vector<24x1xf32>
    %169 = vector.extract_strided_slice %59 {offsets = [0, 162], sizes = [24, 16], strides = [1, 1]} : vector<24x288xf32> to vector<24x16xf32>
    %170 = vector.extract_strided_slice %169 {offsets = [0, 0], sizes = [16, 16], strides = [1, 1]} : vector<24x16xf32> to vector<16x16xf32>
    %c0_133 = arith.constant 0 : index
    %c0_134 = arith.constant 0 : index
    %c9 = arith.constant 9 : index
    %c0_135 = arith.constant 0 : index
    %171 = vector.load %arg4[%c0_133, %c0_134, %c9, %c0_135] : memref<2x16x16x16xf32, #tpu.memory_space<vmem>>, vector<1x16x1x16xf32>
    %172 = vector.shape_cast %171 : vector<1x16x1x16xf32> to vector<16x16xf32>
    %173 = vector.shape_cast %170 : vector<16x16xf32> to vector<1x16x1x16xf32>
    tpu.vector_store %arg4[%c0_133, %c0_134, %c9, %c0_135], %173 {strides = array<i32>} : memref<2x16x16x16xf32, #tpu.memory_space<vmem>>, vector<1x16x1x16xf32>,
    %174 = vector.extract_strided_slice %169 {offsets = [16, 0], sizes = [8, 16], strides = [1, 1]} : vector<24x16xf32> to vector<8x16xf32>
    %c0_136 = arith.constant 0 : index
    %c0_137 = arith.constant 0 : index
    %c9_138 = arith.constant 9 : index
    %c0_139 = arith.constant 0 : index
    %175 = vector.load %arg5[%c0_136, %c0_137, %c9_138, %c0_139] : memref<2x8x16x16xf32, #tpu.memory_space<vmem>>, vector<1x8x1x16xf32>
    %176 = vector.shape_cast %175 : vector<1x8x1x16xf32> to vector<8x16xf32>
    %177 = vector.shape_cast %174 : vector<8x16xf32> to vector<1x8x1x16xf32>
    tpu.vector_store %arg5[%c0_136, %c0_137, %c9_138, %c0_139], %177 {strides = array<i32>} : memref<2x8x16x16xf32, #tpu.memory_space<vmem>>, vector<1x8x1x16xf32>,
    %cst_140 = arith.constant dense<0.000000e+00> : vector<24xf32>
    %178 = vector.multi_reduction <add>, %169, %cst_140 [1] : vector<24x16xf32> to vector<24xf32>
    %179 = vector.shape_cast %178 : vector<24xf32> to vector<24x1xf32>
    %180 = arith.addf %168, %179 : vector<24x1xf32>
    %181 = vector.extract_strided_slice %59 {offsets = [0, 180], sizes = [24, 16], strides = [1, 1]} : vector<24x288xf32> to vector<24x16xf32>
    %182 = vector.extract_strided_slice %181 {offsets = [0, 0], sizes = [16, 16], strides = [1, 1]} : vector<24x16xf32> to vector<16x16xf32>
    %c0_141 = arith.constant 0 : index
    %c0_142 = arith.constant 0 : index
    %c10 = arith.constant 10 : index
    %c0_143 = arith.constant 0 : index
    %183 = vector.load %arg4[%c0_141, %c0_142, %c10, %c0_143] : memref<2x16x16x16xf32, #tpu.memory_space<vmem>>, vector<1x16x1x16xf32>
    %184 = vector.shape_cast %183 : vector<1x16x1x16xf32> to vector<16x16xf32>
    %185 = vector.shape_cast %182 : vector<16x16xf32> to vector<1x16x1x16xf32>
    tpu.vector_store %arg4[%c0_141, %c0_142, %c10, %c0_143], %185 {strides = array<i32>} : memref<2x16x16x16xf32, #tpu.memory_space<vmem>>, vector<1x16x1x16xf32>,
    %186 = vector.extract_strided_slice %181 {offsets = [16, 0], sizes = [8, 16], strides = [1, 1]} : vector<24x16xf32> to vector<8x16xf32>
    %c0_144 = arith.constant 0 : index
    %c0_145 = arith.constant 0 : index
    %c10_146 = arith.constant 10 : index
    %c0_147 = arith.constant 0 : index
    %187 = vector.load %arg5[%c0_144, %c0_145, %c10_146, %c0_147] : memref<2x8x16x16xf32, #tpu.memory_space<vmem>>, vector<1x8x1x16xf32>
    %188 = vector.shape_cast %187 : vector<1x8x1x16xf32> to vector<8x16xf32>
    %189 = vector.shape_cast %186 : vector<8x16xf32> to vector<1x8x1x16xf32>
    tpu.vector_store %arg5[%c0_144, %c0_145, %c10_146, %c0_147], %189 {strides = array<i32>} : memref<2x8x16x16xf32, #tpu.memory_space<vmem>>, vector<1x8x1x16xf32>,
    %cst_148 = arith.constant dense<0.000000e+00> : vector<24xf32>
    %190 = vector.multi_reduction <add>, %181, %cst_148 [1] : vector<24x16xf32> to vector<24xf32>
    %191 = vector.shape_cast %190 : vector<24xf32> to vector<24x1xf32>
    %192 = arith.addf %180, %191 : vector<24x1xf32>
    %193 = vector.extract_strided_slice %59 {offsets = [0, 198], sizes = [24, 16], strides = [1, 1]} : vector<24x288xf32> to vector<24x16xf32>
    %194 = vector.extract_strided_slice %193 {offsets = [0, 0], sizes = [16, 16], strides = [1, 1]} : vector<24x16xf32> to vector<16x16xf32>
    %c0_149 = arith.constant 0 : index
    %c0_150 = arith.constant 0 : index
    %c11 = arith.constant 11 : index
    %c0_151 = arith.constant 0 : index
    %195 = vector.load %arg4[%c0_149, %c0_150, %c11, %c0_151] : memref<2x16x16x16xf32, #tpu.memory_space<vmem>>, vector<1x16x1x16xf32>
    %196 = vector.shape_cast %195 : vector<1x16x1x16xf32> to vector<16x16xf32>
    %197 = vector.shape_cast %194 : vector<16x16xf32> to vector<1x16x1x16xf32>
    tpu.vector_store %arg4[%c0_149, %c0_150, %c11, %c0_151], %197 {strides = array<i32>} : memref<2x16x16x16xf32, #tpu.memory_space<vmem>>, vector<1x16x1x16xf32>,
    %198 = vector.extract_strided_slice %193 {offsets = [16, 0], sizes = [8, 16], strides = [1, 1]} : vector<24x16xf32> to vector<8x16xf32>
    %c0_152 = arith.constant 0 : index
    %c0_153 = arith.constant 0 : index
    %c11_154 = arith.constant 11 : index
    %c0_155 = arith.constant 0 : index
    %199 = vector.load %arg5[%c0_152, %c0_153, %c11_154, %c0_155] : memref<2x8x16x16xf32, #tpu.memory_space<vmem>>, vector<1x8x1x16xf32>
    %200 = vector.shape_cast %199 : vector<1x8x1x16xf32> to vector<8x16xf32>
    %201 = vector.shape_cast %198 : vector<8x16xf32> to vector<1x8x1x16xf32>
    tpu.vector_store %arg5[%c0_152, %c0_153, %c11_154, %c0_155], %201 {strides = array<i32>} : memref<2x8x16x16xf32, #tpu.memory_space<vmem>>, vector<1x8x1x16xf32>,
    %cst_156 = arith.constant dense<0.000000e+00> : vector<24xf32>
    %202 = vector.multi_reduction <add>, %193, %cst_156 [1] : vector<24x16xf32> to vector<24xf32>
    %203 = vector.shape_cast %202 : vector<24xf32> to vector<24x1xf32>
    %204 = arith.addf %192, %203 : vector<24x1xf32>
    %205 = vector.extract_strided_slice %59 {offsets = [0, 216], sizes = [24, 16], strides = [1, 1]} : vector<24x288xf32> to vector<24x16xf32>
    %206 = vector.extract_strided_slice %205 {offsets = [0, 0], sizes = [16, 16], strides = [1, 1]} : vector<24x16xf32> to vector<16x16xf32>
    %c0_157 = arith.constant 0 : index
    %c0_158 = arith.constant 0 : index
    %c12 = arith.constant 12 : index
    %c0_159 = arith.constant 0 : index
    %207 = vector.load %arg4[%c0_157, %c0_158, %c12, %c0_159] : memref<2x16x16x16xf32, #tpu.memory_space<vmem>>, vector<1x16x1x16xf32>
    %208 = vector.shape_cast %207 : vector<1x16x1x16xf32> to vector<16x16xf32>
    %209 = vector.shape_cast %206 : vector<16x16xf32> to vector<1x16x1x16xf32>
    tpu.vector_store %arg4[%c0_157, %c0_158, %c12, %c0_159], %209 {strides = array<i32>} : memref<2x16x16x16xf32, #tpu.memory_space<vmem>>, vector<1x16x1x16xf32>,
    %210 = vector.extract_strided_slice %205 {offsets = [16, 0], sizes = [8, 16], strides = [1, 1]} : vector<24x16xf32> to vector<8x16xf32>
    %c0_160 = arith.constant 0 : index
    %c0_161 = arith.constant 0 : index
    %c12_162 = arith.constant 12 : index
    %c0_163 = arith.constant 0 : index
    %211 = vector.load %arg5[%c0_160, %c0_161, %c12_162, %c0_163] : memref<2x8x16x16xf32, #tpu.memory_space<vmem>>, vector<1x8x1x16xf32>
    %212 = vector.shape_cast %211 : vector<1x8x1x16xf32> to vector<8x16xf32>
    %213 = vector.shape_cast %210 : vector<8x16xf32> to vector<1x8x1x16xf32>
    tpu.vector_store %arg5[%c0_160, %c0_161, %c12_162, %c0_163], %213 {strides = array<i32>} : memref<2x8x16x16xf32, #tpu.memory_space<vmem>>, vector<1x8x1x16xf32>,
    %cst_164 = arith.constant dense<0.000000e+00> : vector<24xf32>
    %214 = vector.multi_reduction <add>, %205, %cst_164 [1] : vector<24x16xf32> to vector<24xf32>
    %215 = vector.shape_cast %214 : vector<24xf32> to vector<24x1xf32>
    %216 = arith.addf %204, %215 : vector<24x1xf32>
    %217 = vector.extract_strided_slice %59 {offsets = [0, 234], sizes = [24, 16], strides = [1, 1]} : vector<24x288xf32> to vector<24x16xf32>
    %218 = vector.extract_strided_slice %217 {offsets = [0, 0], sizes = [16, 16], strides = [1, 1]} : vector<24x16xf32> to vector<16x16xf32>
    %c0_165 = arith.constant 0 : index
    %c0_166 = arith.constant 0 : index
    %c13 = arith.constant 13 : index
    %c0_167 = arith.constant 0 : index
    %219 = vector.load %arg4[%c0_165, %c0_166, %c13, %c0_167] : memref<2x16x16x16xf32, #tpu.memory_space<vmem>>, vector<1x16x1x16xf32>
    %220 = vector.shape_cast %219 : vector<1x16x1x16xf32> to vector<16x16xf32>
    %221 = vector.shape_cast %218 : vector<16x16xf32> to vector<1x16x1x16xf32>
    tpu.vector_store %arg4[%c0_165, %c0_166, %c13, %c0_167], %221 {strides = array<i32>} : memref<2x16x16x16xf32, #tpu.memory_space<vmem>>, vector<1x16x1x16xf32>,
    %222 = vector.extract_strided_slice %217 {offsets = [16, 0], sizes = [8, 16], strides = [1, 1]} : vector<24x16xf32> to vector<8x16xf32>
    %c0_168 = arith.constant 0 : index
    %c0_169 = arith.constant 0 : index
    %c13_170 = arith.constant 13 : index
    %c0_171 = arith.constant 0 : index
    %223 = vector.load %arg5[%c0_168, %c0_169, %c13_170, %c0_171] : memref<2x8x16x16xf32, #tpu.memory_space<vmem>>, vector<1x8x1x16xf32>
    %224 = vector.shape_cast %223 : vector<1x8x1x16xf32> to vector<8x16xf32>
    %225 = vector.shape_cast %222 : vector<8x16xf32> to vector<1x8x1x16xf32>
    tpu.vector_store %arg5[%c0_168, %c0_169, %c13_170, %c0_171], %225 {strides = array<i32>} : memref<2x8x16x16xf32, #tpu.memory_space<vmem>>, vector<1x8x1x16xf32>,
    %cst_172 = arith.constant dense<0.000000e+00> : vector<24xf32>
    %226 = vector.multi_reduction <add>, %217, %cst_172 [1] : vector<24x16xf32> to vector<24xf32>
    %227 = vector.shape_cast %226 : vector<24xf32> to vector<24x1xf32>
    %228 = arith.addf %216, %227 : vector<24x1xf32>
    %229 = vector.extract_strided_slice %59 {offsets = [0, 252], sizes = [24, 16], strides = [1, 1]} : vector<24x288xf32> to vector<24x16xf32>
    %230 = vector.extract_strided_slice %229 {offsets = [0, 0], sizes = [16, 16], strides = [1, 1]} : vector<24x16xf32> to vector<16x16xf32>
    %c0_173 = arith.constant 0 : index
    %c0_174 = arith.constant 0 : index
    %c14 = arith.constant 14 : index
    %c0_175 = arith.constant 0 : index
    %231 = vector.load %arg4[%c0_173, %c0_174, %c14, %c0_175] : memref<2x16x16x16xf32, #tpu.memory_space<vmem>>, vector<1x16x1x16xf32>
    %232 = vector.shape_cast %231 : vector<1x16x1x16xf32> to vector<16x16xf32>
    %233 = vector.shape_cast %230 : vector<16x16xf32> to vector<1x16x1x16xf32>
    tpu.vector_store %arg4[%c0_173, %c0_174, %c14, %c0_175], %233 {strides = array<i32>} : memref<2x16x16x16xf32, #tpu.memory_space<vmem>>, vector<1x16x1x16xf32>,
    %234 = vector.extract_strided_slice %229 {offsets = [16, 0], sizes = [8, 16], strides = [1, 1]} : vector<24x16xf32> to vector<8x16xf32>
    %c0_176 = arith.constant 0 : index
    %c0_177 = arith.constant 0 : index
    %c14_178 = arith.constant 14 : index
    %c0_179 = arith.constant 0 : index
    %235 = vector.load %arg5[%c0_176, %c0_177, %c14_178, %c0_179] : memref<2x8x16x16xf32, #tpu.memory_space<vmem>>, vector<1x8x1x16xf32>
    %236 = vector.shape_cast %235 : vector<1x8x1x16xf32> to vector<8x16xf32>
    %237 = vector.shape_cast %234 : vector<8x16xf32> to vector<1x8x1x16xf32>
    tpu.vector_store %arg5[%c0_176, %c0_177, %c14_178, %c0_179], %237 {strides = array<i32>} : memref<2x8x16x16xf32, #tpu.memory_space<vmem>>, vector<1x8x1x16xf32>,
    %cst_180 = arith.constant dense<0.000000e+00> : vector<24xf32>
    %238 = vector.multi_reduction <add>, %229, %cst_180 [1] : vector<24x16xf32> to vector<24xf32>
    %239 = vector.shape_cast %238 : vector<24xf32> to vector<24x1xf32>
    %240 = arith.addf %228, %239 : vector<24x1xf32>
    %241 = vector.extract_strided_slice %59 {offsets = [0, 270], sizes = [24, 16], strides = [1, 1]} : vector<24x288xf32> to vector<24x16xf32>
    %242 = vector.extract_strided_slice %241 {offsets = [0, 0], sizes = [16, 16], strides = [1, 1]} : vector<24x16xf32> to vector<16x16xf32>
    %c0_181 = arith.constant 0 : index
    %c0_182 = arith.constant 0 : index
    %c15 = arith.constant 15 : index
    %c0_183 = arith.constant 0 : index
    %243 = vector.load %arg4[%c0_181, %c0_182, %c15, %c0_183] : memref<2x16x16x16xf32, #tpu.memory_space<vmem>>, vector<1x16x1x16xf32>
    %244 = vector.shape_cast %243 : vector<1x16x1x16xf32> to vector<16x16xf32>
    %245 = vector.shape_cast %242 : vector<16x16xf32> to vector<1x16x1x16xf32>
    tpu.vector_store %arg4[%c0_181, %c0_182, %c15, %c0_183], %245 {strides = array<i32>} : memref<2x16x16x16xf32, #tpu.memory_space<vmem>>, vector<1x16x1x16xf32>,
    %246 = vector.extract_strided_slice %241 {offsets = [16, 0], sizes = [8, 16], strides = [1, 1]} : vector<24x16xf32> to vector<8x16xf32>
    %c0_184 = arith.constant 0 : index
    %c0_185 = arith.constant 0 : index
    %c15_186 = arith.constant 15 : index
    %c0_187 = arith.constant 0 : index
    %247 = vector.load %arg5[%c0_184, %c0_185, %c15_186, %c0_187] : memref<2x8x16x16xf32, #tpu.memory_space<vmem>>, vector<1x8x1x16xf32>
    %248 = vector.shape_cast %247 : vector<1x8x1x16xf32> to vector<8x16xf32>
    %249 = vector.shape_cast %246 : vector<8x16xf32> to vector<1x8x1x16xf32>
    tpu.vector_store %arg5[%c0_184, %c0_185, %c15_186, %c0_187], %249 {strides = array<i32>} : memref<2x8x16x16xf32, #tpu.memory_space<vmem>>, vector<1x8x1x16xf32>,
    %cst_188 = arith.constant dense<0.000000e+00> : vector<24xf32>
    %250 = vector.multi_reduction <add>, %241, %cst_188 [1] : vector<24x16xf32> to vector<24xf32>
    %251 = vector.shape_cast %250 : vector<24xf32> to vector<24x1xf32>
    %252 = arith.addf %240, %251 : vector<24x1xf32>
    %cst_189 = arith.constant 3.906250e-03 : f32
    %253 = vector.broadcast %cst_189 : f32 to vector<24x1xf32>
    %254 = arith.mulf %252, %253 : vector<24x1xf32>
    %255 = vector.extract_strided_slice %254 {offsets = [0, 0], sizes = [16, 1], strides = [1, 1]} : vector<24x1xf32> to vector<16x1xf32>
    %c0_190 = arith.constant 0 : index
    %c0_191 = arith.constant 0 : index
    %c0_192 = arith.constant 0 : index
    %256 = vector.load %arg6[%c0_190, %c0_191, %c0_192] : memref<2x16x1xf32, #tpu.memory_space<vmem>>, vector<1x16x1xf32>
    %257 = vector.shape_cast %256 : vector<1x16x1xf32> to vector<16x1xf32>
    %258 = vector.shape_cast %255 : vector<16x1xf32> to vector<1x16x1xf32>
    tpu.vector_store %arg6[%c0_190, %c0_191, %c0_192], %258 {strides = array<i32>} : memref<2x16x1xf32, #tpu.memory_space<vmem>>, vector<1x16x1xf32>,
    %259 = vector.extract_strided_slice %254 {offsets = [16, 0], sizes = [8, 1], strides = [1, 1]} : vector<24x1xf32> to vector<8x1xf32>
    %c0_193 = arith.constant 0 : index
    %c0_194 = arith.constant 0 : index
    %c0_195 = arith.constant 0 : index
    %260 = vector.load %arg7[%c0_193, %c0_194, %c0_195] : memref<2x8x1xf32, #tpu.memory_space<vmem>>, vector<1x8x1xf32>
    %261 = vector.shape_cast %260 : vector<1x8x1xf32> to vector<8x1xf32>
    %262 = vector.shape_cast %259 : vector<8x1xf32> to vector<1x8x1xf32>
    tpu.vector_store %arg7[%c0_193, %c0_194, %c0_195], %262 {strides = array<i32>} : memref<2x8x1xf32, #tpu.memory_space<vmem>>, vector<1x8x1xf32>,
    %cst_196 = arith.constant 0.000000e+00 : f32
    %263 = vector.broadcast %cst_196 : f32 to vector<24x288xf32>
    %c1_197 = arith.constant 1 : index
    %c0_198 = arith.constant 0 : index
    %c0_199 = arith.constant 0 : index
    %264 = vector.load %arg1[%c1_197, %c0_198, %c0_199] : memref<2x4x384xf32, #tpu.memory_space<vmem>>, vector<1x4x288xf32>
    %265 = vector.shape_cast %264 : vector<1x4x288xf32> to vector<4x288xf32>
    %c0_200 = arith.constant 0 : index
    %c0_201 = arith.constant 0 : index
    %c0_202 = arith.constant 0 : index
    %266 = vector.load %arg2[%c0_200, %c0_201, %c0_202] : memref<9x24x4xf32, #tpu.memory_space<vmem>>, vector<1x24x4xf32>
    %267 = vector.shape_cast %266 : vector<1x24x4xf32> to vector<24x4xf32>
    %cst_203 = arith.constant dense<0.000000e+00> : vector<24x288xf32>
    %268 = tpu.matmul %267, %265, %cst_203 {dimension_numbers = #tpu.dot_dimension_numbers<[1], [0], [0], [1], [0, 0, 1, 1], [], []>} : vector<24x4xf32>, vector<4x288xf32>, vector<24x288xf32> -> vector<24x288xf32>
    %269 = arith.addf %263, %268 : vector<24x288xf32>
    %c1_204 = arith.constant 1 : index
    %c0_205 = arith.constant 0 : index
    %c1_206 = arith.constant 1 : index
    %270 = vector.load %arg1[%c1_204, %c0_205, %c1_206] : memref<2x4x384xf32, #tpu.memory_space<vmem>>, vector<1x4x288xf32>
    %271 = vector.shape_cast %270 : vector<1x4x288xf32> to vector<4x288xf32>
    %c1_207 = arith.constant 1 : index
    %c0_208 = arith.constant 0 : index
    %c0_209 = arith.constant 0 : index
    %272 = vector.load %arg2[%c1_207, %c0_208, %c0_209] : memref<9x24x4xf32, #tpu.memory_space<vmem>>, vector<1x24x4xf32>
    %273 = vector.shape_cast %272 : vector<1x24x4xf32> to vector<24x4xf32>
    %cst_210 = arith.constant dense<0.000000e+00> : vector<24x288xf32>
    %274 = tpu.matmul %273, %271, %cst_210 {dimension_numbers = #tpu.dot_dimension_numbers<[1], [0], [0], [1], [0, 0, 1, 1], [], []>} : vector<24x4xf32>, vector<4x288xf32>, vector<24x288xf32> -> vector<24x288xf32>
    %275 = arith.addf %269, %274 : vector<24x288xf32>
    %c1_211 = arith.constant 1 : index
    %c0_212 = arith.constant 0 : index
    %c2_213 = arith.constant 2 : index
    %276 = vector.load %arg1[%c1_211, %c0_212, %c2_213] : memref<2x4x384xf32, #tpu.memory_space<vmem>>, vector<1x4x288xf32>
    %277 = vector.shape_cast %276 : vector<1x4x288xf32> to vector<4x288xf32>
    %c2_214 = arith.constant 2 : index
    %c0_215 = arith.constant 0 : index
    %c0_216 = arith.constant 0 : index
    %278 = vector.load %arg2[%c2_214, %c0_215, %c0_216] : memref<9x24x4xf32, #tpu.memory_space<vmem>>, vector<1x24x4xf32>
    %279 = vector.shape_cast %278 : vector<1x24x4xf32> to vector<24x4xf32>
    %cst_217 = arith.constant dense<0.000000e+00> : vector<24x288xf32>
    %280 = tpu.matmul %279, %277, %cst_217 {dimension_numbers = #tpu.dot_dimension_numbers<[1], [0], [0], [1], [0, 0, 1, 1], [], []>} : vector<24x4xf32>, vector<4x288xf32>, vector<24x288xf32> -> vector<24x288xf32>
    %281 = arith.addf %275, %280 : vector<24x288xf32>
    %c1_218 = arith.constant 1 : index
    %c0_219 = arith.constant 0 : index
    %c18_220 = arith.constant 18 : index
    %282 = vector.load %arg1[%c1_218, %c0_219, %c18_220] : memref<2x4x384xf32, #tpu.memory_space<vmem>>, vector<1x4x288xf32>
    %283 = vector.shape_cast %282 : vector<1x4x288xf32> to vector<4x288xf32>
    %c3_221 = arith.constant 3 : index
    %c0_222 = arith.constant 0 : index
    %c0_223 = arith.constant 0 : index
    %284 = vector.load %arg2[%c3_221, %c0_222, %c0_223] : memref<9x24x4xf32, #tpu.memory_space<vmem>>, vector<1x24x4xf32>
    %285 = vector.shape_cast %284 : vector<1x24x4xf32> to vector<24x4xf32>
    %cst_224 = arith.constant dense<0.000000e+00> : vector<24x288xf32>
    %286 = tpu.matmul %285, %283, %cst_224 {dimension_numbers = #tpu.dot_dimension_numbers<[1], [0], [0], [1], [0, 0, 1, 1], [], []>} : vector<24x4xf32>, vector<4x288xf32>, vector<24x288xf32> -> vector<24x288xf32>
    %287 = arith.addf %281, %286 : vector<24x288xf32>
    %c1_225 = arith.constant 1 : index
    %c0_226 = arith.constant 0 : index
    %c19_227 = arith.constant 19 : index
    %288 = vector.load %arg1[%c1_225, %c0_226, %c19_227] : memref<2x4x384xf32, #tpu.memory_space<vmem>>, vector<1x4x288xf32>
    %289 = vector.shape_cast %288 : vector<1x4x288xf32> to vector<4x288xf32>
    %c4_228 = arith.constant 4 : index
    %c0_229 = arith.constant 0 : index
    %c0_230 = arith.constant 0 : index
    %290 = vector.load %arg2[%c4_228, %c0_229, %c0_230] : memref<9x24x4xf32, #tpu.memory_space<vmem>>, vector<1x24x4xf32>
    %291 = vector.shape_cast %290 : vector<1x24x4xf32> to vector<24x4xf32>
    %cst_231 = arith.constant dense<0.000000e+00> : vector<24x288xf32>
    %292 = tpu.matmul %291, %289, %cst_231 {dimension_numbers = #tpu.dot_dimension_numbers<[1], [0], [0], [1], [0, 0, 1, 1], [], []>} : vector<24x4xf32>, vector<4x288xf32>, vector<24x288xf32> -> vector<24x288xf32>
    %293 = arith.addf %287, %292 : vector<24x288xf32>
    %c1_232 = arith.constant 1 : index
    %c0_233 = arith.constant 0 : index
    %c20_234 = arith.constant 20 : index
    %294 = vector.load %arg1[%c1_232, %c0_233, %c20_234] : memref<2x4x384xf32, #tpu.memory_space<vmem>>, vector<1x4x288xf32>
    %295 = vector.shape_cast %294 : vector<1x4x288xf32> to vector<4x288xf32>
    %c5_235 = arith.constant 5 : index
    %c0_236 = arith.constant 0 : index
    %c0_237 = arith.constant 0 : index
    %296 = vector.load %arg2[%c5_235, %c0_236, %c0_237] : memref<9x24x4xf32, #tpu.memory_space<vmem>>, vector<1x24x4xf32>
    %297 = vector.shape_cast %296 : vector<1x24x4xf32> to vector<24x4xf32>
    %cst_238 = arith.constant dense<0.000000e+00> : vector<24x288xf32>
    %298 = tpu.matmul %297, %295, %cst_238 {dimension_numbers = #tpu.dot_dimension_numbers<[1], [0], [0], [1], [0, 0, 1, 1], [], []>} : vector<24x4xf32>, vector<4x288xf32>, vector<24x288xf32> -> vector<24x288xf32>
    %299 = arith.addf %293, %298 : vector<24x288xf32>
    %c1_239 = arith.constant 1 : index
    %c0_240 = arith.constant 0 : index
    %c36_241 = arith.constant 36 : index
    %300 = vector.load %arg1[%c1_239, %c0_240, %c36_241] : memref<2x4x384xf32, #tpu.memory_space<vmem>>, vector<1x4x288xf32>
    %301 = vector.shape_cast %300 : vector<1x4x288xf32> to vector<4x288xf32>
    %c6_242 = arith.constant 6 : index
    %c0_243 = arith.constant 0 : index
    %c0_244 = arith.constant 0 : index
    %302 = vector.load %arg2[%c6_242, %c0_243, %c0_244] : memref<9x24x4xf32, #tpu.memory_space<vmem>>, vector<1x24x4xf32>
    %303 = vector.shape_cast %302 : vector<1x24x4xf32> to vector<24x4xf32>
    %cst_245 = arith.constant dense<0.000000e+00> : vector<24x288xf32>
    %304 = tpu.matmul %303, %301, %cst_245 {dimension_numbers = #tpu.dot_dimension_numbers<[1], [0], [0], [1], [0, 0, 1, 1], [], []>} : vector<24x4xf32>, vector<4x288xf32>, vector<24x288xf32> -> vector<24x288xf32>
    %305 = arith.addf %299, %304 : vector<24x288xf32>
    %c1_246 = arith.constant 1 : index
    %c0_247 = arith.constant 0 : index
    %c37_248 = arith.constant 37 : index
    %306 = vector.load %arg1[%c1_246, %c0_247, %c37_248] : memref<2x4x384xf32, #tpu.memory_space<vmem>>, vector<1x4x288xf32>
    %307 = vector.shape_cast %306 : vector<1x4x288xf32> to vector<4x288xf32>
    %c7_249 = arith.constant 7 : index
    %c0_250 = arith.constant 0 : index
    %c0_251 = arith.constant 0 : index
    %308 = vector.load %arg2[%c7_249, %c0_250, %c0_251] : memref<9x24x4xf32, #tpu.memory_space<vmem>>, vector<1x24x4xf32>
    %309 = vector.shape_cast %308 : vector<1x24x4xf32> to vector<24x4xf32>
    %cst_252 = arith.constant dense<0.000000e+00> : vector<24x288xf32>
    %310 = tpu.matmul %309, %307, %cst_252 {dimension_numbers = #tpu.dot_dimension_numbers<[1], [0], [0], [1], [0, 0, 1, 1], [], []>} : vector<24x4xf32>, vector<4x288xf32>, vector<24x288xf32> -> vector<24x288xf32>
    %311 = arith.addf %305, %310 : vector<24x288xf32>
    %c1_253 = arith.constant 1 : index
    %c0_254 = arith.constant 0 : index
    %c38_255 = arith.constant 38 : index
    %312 = vector.load %arg1[%c1_253, %c0_254, %c38_255] : memref<2x4x384xf32, #tpu.memory_space<vmem>>, vector<1x4x288xf32>
    %313 = vector.shape_cast %312 : vector<1x4x288xf32> to vector<4x288xf32>
    %c8_256 = arith.constant 8 : index
    %c0_257 = arith.constant 0 : index
    %c0_258 = arith.constant 0 : index
    %314 = vector.load %arg2[%c8_256, %c0_257, %c0_258] : memref<9x24x4xf32, #tpu.memory_space<vmem>>, vector<1x24x4xf32>
    %315 = vector.shape_cast %314 : vector<1x24x4xf32> to vector<24x4xf32>
    %cst_259 = arith.constant dense<0.000000e+00> : vector<24x288xf32>
    %316 = tpu.matmul %315, %313, %cst_259 {dimension_numbers = #tpu.dot_dimension_numbers<[1], [0], [0], [1], [0, 0, 1, 1], [], []>} : vector<24x4xf32>, vector<4x288xf32>, vector<24x288xf32> -> vector<24x288xf32>
    %317 = arith.addf %311, %316 : vector<24x288xf32>
    %318 = vector.broadcast %0 : vector<24x1xf32> to vector<24x288xf32>
    %319 = arith.addf %317, %318 : vector<24x288xf32>
    %cst_260 = arith.constant 0.000000e+00 : f32
    %320 = vector.broadcast %cst_260 : f32 to vector<24x288xf32>
    %321 = arith.maximumf %319, %320 : vector<24x288xf32>
    %cst_261 = arith.constant 0.000000e+00 : f32
    %322 = vector.broadcast %cst_261 : f32 to vector<24x1xf32>
    %323 = vector.extract_strided_slice %321 {offsets = [0, 0], sizes = [24, 16], strides = [1, 1]} : vector<24x288xf32> to vector<24x16xf32>
    %324 = vector.extract_strided_slice %323 {offsets = [0, 0], sizes = [16, 16], strides = [1, 1]} : vector<24x16xf32> to vector<16x16xf32>
    %c1_262 = arith.constant 1 : index
    %c0_263 = arith.constant 0 : index
    %c0_264 = arith.constant 0 : index
    %c0_265 = arith.constant 0 : index
    %325 = vector.load %arg4[%c1_262, %c0_263, %c0_264, %c0_265] : memref<2x16x16x16xf32, #tpu.memory_space<vmem>>, vector<1x16x1x16xf32>
    %326 = vector.shape_cast %325 : vector<1x16x1x16xf32> to vector<16x16xf32>
    %327 = vector.shape_cast %324 : vector<16x16xf32> to vector<1x16x1x16xf32>
    tpu.vector_store %arg4[%c1_262, %c0_263, %c0_264, %c0_265], %327 {strides = array<i32>} : memref<2x16x16x16xf32, #tpu.memory_space<vmem>>, vector<1x16x1x16xf32>,
    %328 = vector.extract_strided_slice %323 {offsets = [16, 0], sizes = [8, 16], strides = [1, 1]} : vector<24x16xf32> to vector<8x16xf32>
    %c1_266 = arith.constant 1 : index
    %c0_267 = arith.constant 0 : index
    %c0_268 = arith.constant 0 : index
    %c0_269 = arith.constant 0 : index
    %329 = vector.load %arg5[%c1_266, %c0_267, %c0_268, %c0_269] : memref<2x8x16x16xf32, #tpu.memory_space<vmem>>, vector<1x8x1x16xf32>
    %330 = vector.shape_cast %329 : vector<1x8x1x16xf32> to vector<8x16xf32>
    %331 = vector.shape_cast %328 : vector<8x16xf32> to vector<1x8x1x16xf32>
    tpu.vector_store %arg5[%c1_266, %c0_267, %c0_268, %c0_269], %331 {strides = array<i32>} : memref<2x8x16x16xf32, #tpu.memory_space<vmem>>, vector<1x8x1x16xf32>,
    %cst_270 = arith.constant dense<0.000000e+00> : vector<24xf32>
    %332 = vector.multi_reduction <add>, %323, %cst_270 [1] : vector<24x16xf32> to vector<24xf32>
    %333 = vector.shape_cast %332 : vector<24xf32> to vector<24x1xf32>
    %334 = arith.addf %322, %333 : vector<24x1xf32>
    %335 = vector.extract_strided_slice %321 {offsets = [0, 18], sizes = [24, 16], strides = [1, 1]} : vector<24x288xf32> to vector<24x16xf32>
    %336 = vector.extract_strided_slice %335 {offsets = [0, 0], sizes = [16, 16], strides = [1, 1]} : vector<24x16xf32> to vector<16x16xf32>
    %c1_271 = arith.constant 1 : index
    %c0_272 = arith.constant 0 : index
    %c1_273 = arith.constant 1 : index
    %c0_274 = arith.constant 0 : index
    %337 = vector.load %arg4[%c1_271, %c0_272, %c1_273, %c0_274] : memref<2x16x16x16xf32, #tpu.memory_space<vmem>>, vector<1x16x1x16xf32>
    %338 = vector.shape_cast %337 : vector<1x16x1x16xf32> to vector<16x16xf32>
    %339 = vector.shape_cast %336 : vector<16x16xf32> to vector<1x16x1x16xf32>
    tpu.vector_store %arg4[%c1_271, %c0_272, %c1_273, %c0_274], %339 {strides = array<i32>} : memref<2x16x16x16xf32, #tpu.memory_space<vmem>>, vector<1x16x1x16xf32>,
    %340 = vector.extract_strided_slice %335 {offsets = [16, 0], sizes = [8, 16], strides = [1, 1]} : vector<24x16xf32> to vector<8x16xf32>
    %c1_275 = arith.constant 1 : index
    %c0_276 = arith.constant 0 : index
    %c1_277 = arith.constant 1 : index
    %c0_278 = arith.constant 0 : index
    %341 = vector.load %arg5[%c1_275, %c0_276, %c1_277, %c0_278] : memref<2x8x16x16xf32, #tpu.memory_space<vmem>>, vector<1x8x1x16xf32>
    %342 = vector.shape_cast %341 : vector<1x8x1x16xf32> to vector<8x16xf32>
    %343 = vector.shape_cast %340 : vector<8x16xf32> to vector<1x8x1x16xf32>
    tpu.vector_store %arg5[%c1_275, %c0_276, %c1_277, %c0_278], %343 {strides = array<i32>} : memref<2x8x16x16xf32, #tpu.memory_space<vmem>>, vector<1x8x1x16xf32>,
    %cst_279 = arith.constant dense<0.000000e+00> : vector<24xf32>
    %344 = vector.multi_reduction <add>, %335, %cst_279 [1] : vector<24x16xf32> to vector<24xf32>
    %345 = vector.shape_cast %344 : vector<24xf32> to vector<24x1xf32>
    %346 = arith.addf %334, %345 : vector<24x1xf32>
    %347 = vector.extract_strided_slice %321 {offsets = [0, 36], sizes = [24, 16], strides = [1, 1]} : vector<24x288xf32> to vector<24x16xf32>
    %348 = vector.extract_strided_slice %347 {offsets = [0, 0], sizes = [16, 16], strides = [1, 1]} : vector<24x16xf32> to vector<16x16xf32>
    %c1_280 = arith.constant 1 : index
    %c0_281 = arith.constant 0 : index
    %c2_282 = arith.constant 2 : index
    %c0_283 = arith.constant 0 : index
    %349 = vector.load %arg4[%c1_280, %c0_281, %c2_282, %c0_283] : memref<2x16x16x16xf32, #tpu.memory_space<vmem>>, vector<1x16x1x16xf32>
    %350 = vector.shape_cast %349 : vector<1x16x1x16xf32> to vector<16x16xf32>
    %351 = vector.shape_cast %348 : vector<16x16xf32> to vector<1x16x1x16xf32>
    tpu.vector_store %arg4[%c1_280, %c0_281, %c2_282, %c0_283], %351 {strides = array<i32>} : memref<2x16x16x16xf32, #tpu.memory_space<vmem>>, vector<1x16x1x16xf32>,
    %352 = vector.extract_strided_slice %347 {offsets = [16, 0], sizes = [8, 16], strides = [1, 1]} : vector<24x16xf32> to vector<8x16xf32>
    %c1_284 = arith.constant 1 : index
    %c0_285 = arith.constant 0 : index
    %c2_286 = arith.constant 2 : index
    %c0_287 = arith.constant 0 : index
    %353 = vector.load %arg5[%c1_284, %c0_285, %c2_286, %c0_287] : memref<2x8x16x16xf32, #tpu.memory_space<vmem>>, vector<1x8x1x16xf32>
    %354 = vector.shape_cast %353 : vector<1x8x1x16xf32> to vector<8x16xf32>
    %355 = vector.shape_cast %352 : vector<8x16xf32> to vector<1x8x1x16xf32>
    tpu.vector_store %arg5[%c1_284, %c0_285, %c2_286, %c0_287], %355 {strides = array<i32>} : memref<2x8x16x16xf32, #tpu.memory_space<vmem>>, vector<1x8x1x16xf32>,
    %cst_288 = arith.constant dense<0.000000e+00> : vector<24xf32>
    %356 = vector.multi_reduction <add>, %347, %cst_288 [1] : vector<24x16xf32> to vector<24xf32>
    %357 = vector.shape_cast %356 : vector<24xf32> to vector<24x1xf32>
    %358 = arith.addf %346, %357 : vector<24x1xf32>
    %359 = vector.extract_strided_slice %321 {offsets = [0, 54], sizes = [24, 16], strides = [1, 1]} : vector<24x288xf32> to vector<24x16xf32>
    %360 = vector.extract_strided_slice %359 {offsets = [0, 0], sizes = [16, 16], strides = [1, 1]} : vector<24x16xf32> to vector<16x16xf32>
    %c1_289 = arith.constant 1 : index
    %c0_290 = arith.constant 0 : index
    %c3_291 = arith.constant 3 : index
    %c0_292 = arith.constant 0 : index
    %361 = vector.load %arg4[%c1_289, %c0_290, %c3_291, %c0_292] : memref<2x16x16x16xf32, #tpu.memory_space<vmem>>, vector<1x16x1x16xf32>
    %362 = vector.shape_cast %361 : vector<1x16x1x16xf32> to vector<16x16xf32>
    %363 = vector.shape_cast %360 : vector<16x16xf32> to vector<1x16x1x16xf32>
    tpu.vector_store %arg4[%c1_289, %c0_290, %c3_291, %c0_292], %363 {strides = array<i32>} : memref<2x16x16x16xf32, #tpu.memory_space<vmem>>, vector<1x16x1x16xf32>,
    %364 = vector.extract_strided_slice %359 {offsets = [16, 0], sizes = [8, 16], strides = [1, 1]} : vector<24x16xf32> to vector<8x16xf32>
    %c1_293 = arith.constant 1 : index
    %c0_294 = arith.constant 0 : index
    %c3_295 = arith.constant 3 : index
    %c0_296 = arith.constant 0 : index
    %365 = vector.load %arg5[%c1_293, %c0_294, %c3_295, %c0_296] : memref<2x8x16x16xf32, #tpu.memory_space<vmem>>, vector<1x8x1x16xf32>
    %366 = vector.shape_cast %365 : vector<1x8x1x16xf32> to vector<8x16xf32>
    %367 = vector.shape_cast %364 : vector<8x16xf32> to vector<1x8x1x16xf32>
    tpu.vector_store %arg5[%c1_293, %c0_294, %c3_295, %c0_296], %367 {strides = array<i32>} : memref<2x8x16x16xf32, #tpu.memory_space<vmem>>, vector<1x8x1x16xf32>,
    %cst_297 = arith.constant dense<0.000000e+00> : vector<24xf32>
    %368 = vector.multi_reduction <add>, %359, %cst_297 [1] : vector<24x16xf32> to vector<24xf32>
    %369 = vector.shape_cast %368 : vector<24xf32> to vector<24x1xf32>
    %370 = arith.addf %358, %369 : vector<24x1xf32>
    %371 = vector.extract_strided_slice %321 {offsets = [0, 72], sizes = [24, 16], strides = [1, 1]} : vector<24x288xf32> to vector<24x16xf32>
    %372 = vector.extract_strided_slice %371 {offsets = [0, 0], sizes = [16, 16], strides = [1, 1]} : vector<24x16xf32> to vector<16x16xf32>
    %c1_298 = arith.constant 1 : index
    %c0_299 = arith.constant 0 : index
    %c4_300 = arith.constant 4 : index
    %c0_301 = arith.constant 0 : index
    %373 = vector.load %arg4[%c1_298, %c0_299, %c4_300, %c0_301] : memref<2x16x16x16xf32, #tpu.memory_space<vmem>>, vector<1x16x1x16xf32>
    %374 = vector.shape_cast %373 : vector<1x16x1x16xf32> to vector<16x16xf32>
    %375 = vector.shape_cast %372 : vector<16x16xf32> to vector<1x16x1x16xf32>
    tpu.vector_store %arg4[%c1_298, %c0_299, %c4_300, %c0_301], %375 {strides = array<i32>} : memref<2x16x16x16xf32, #tpu.memory_space<vmem>>, vector<1x16x1x16xf32>,
    %376 = vector.extract_strided_slice %371 {offsets = [16, 0], sizes = [8, 16], strides = [1, 1]} : vector<24x16xf32> to vector<8x16xf32>
    %c1_302 = arith.constant 1 : index
    %c0_303 = arith.constant 0 : index
    %c4_304 = arith.constant 4 : index
    %c0_305 = arith.constant 0 : index
    %377 = vector.load %arg5[%c1_302, %c0_303, %c4_304, %c0_305] : memref<2x8x16x16xf32, #tpu.memory_space<vmem>>, vector<1x8x1x16xf32>
    %378 = vector.shape_cast %377 : vector<1x8x1x16xf32> to vector<8x16xf32>
    %379 = vector.shape_cast %376 : vector<8x16xf32> to vector<1x8x1x16xf32>
    tpu.vector_store %arg5[%c1_302, %c0_303, %c4_304, %c0_305], %379 {strides = array<i32>} : memref<2x8x16x16xf32, #tpu.memory_space<vmem>>, vector<1x8x1x16xf32>,
    %cst_306 = arith.constant dense<0.000000e+00> : vector<24xf32>
    %380 = vector.multi_reduction <add>, %371, %cst_306 [1] : vector<24x16xf32> to vector<24xf32>
    %381 = vector.shape_cast %380 : vector<24xf32> to vector<24x1xf32>
    %382 = arith.addf %370, %381 : vector<24x1xf32>
    %383 = vector.extract_strided_slice %321 {offsets = [0, 90], sizes = [24, 16], strides = [1, 1]} : vector<24x288xf32> to vector<24x16xf32>
    %384 = vector.extract_strided_slice %383 {offsets = [0, 0], sizes = [16, 16], strides = [1, 1]} : vector<24x16xf32> to vector<16x16xf32>
    %c1_307 = arith.constant 1 : index
    %c0_308 = arith.constant 0 : index
    %c5_309 = arith.constant 5 : index
    %c0_310 = arith.constant 0 : index
    %385 = vector.load %arg4[%c1_307, %c0_308, %c5_309, %c0_310] : memref<2x16x16x16xf32, #tpu.memory_space<vmem>>, vector<1x16x1x16xf32>
    %386 = vector.shape_cast %385 : vector<1x16x1x16xf32> to vector<16x16xf32>
    %387 = vector.shape_cast %384 : vector<16x16xf32> to vector<1x16x1x16xf32>
    tpu.vector_store %arg4[%c1_307, %c0_308, %c5_309, %c0_310], %387 {strides = array<i32>} : memref<2x16x16x16xf32, #tpu.memory_space<vmem>>, vector<1x16x1x16xf32>,
    %388 = vector.extract_strided_slice %383 {offsets = [16, 0], sizes = [8, 16], strides = [1, 1]} : vector<24x16xf32> to vector<8x16xf32>
    %c1_311 = arith.constant 1 : index
    %c0_312 = arith.constant 0 : index
    %c5_313 = arith.constant 5 : index
    %c0_314 = arith.constant 0 : index
    %389 = vector.load %arg5[%c1_311, %c0_312, %c5_313, %c0_314] : memref<2x8x16x16xf32, #tpu.memory_space<vmem>>, vector<1x8x1x16xf32>
    %390 = vector.shape_cast %389 : vector<1x8x1x16xf32> to vector<8x16xf32>
    %391 = vector.shape_cast %388 : vector<8x16xf32> to vector<1x8x1x16xf32>
    tpu.vector_store %arg5[%c1_311, %c0_312, %c5_313, %c0_314], %391 {strides = array<i32>} : memref<2x8x16x16xf32, #tpu.memory_space<vmem>>, vector<1x8x1x16xf32>,
    %cst_315 = arith.constant dense<0.000000e+00> : vector<24xf32>
    %392 = vector.multi_reduction <add>, %383, %cst_315 [1] : vector<24x16xf32> to vector<24xf32>
    %393 = vector.shape_cast %392 : vector<24xf32> to vector<24x1xf32>
    %394 = arith.addf %382, %393 : vector<24x1xf32>
    %395 = vector.extract_strided_slice %321 {offsets = [0, 108], sizes = [24, 16], strides = [1, 1]} : vector<24x288xf32> to vector<24x16xf32>
    %396 = vector.extract_strided_slice %395 {offsets = [0, 0], sizes = [16, 16], strides = [1, 1]} : vector<24x16xf32> to vector<16x16xf32>
    %c1_316 = arith.constant 1 : index
    %c0_317 = arith.constant 0 : index
    %c6_318 = arith.constant 6 : index
    %c0_319 = arith.constant 0 : index
    %397 = vector.load %arg4[%c1_316, %c0_317, %c6_318, %c0_319] : memref<2x16x16x16xf32, #tpu.memory_space<vmem>>, vector<1x16x1x16xf32>
    %398 = vector.shape_cast %397 : vector<1x16x1x16xf32> to vector<16x16xf32>
    %399 = vector.shape_cast %396 : vector<16x16xf32> to vector<1x16x1x16xf32>
    tpu.vector_store %arg4[%c1_316, %c0_317, %c6_318, %c0_319], %399 {strides = array<i32>} : memref<2x16x16x16xf32, #tpu.memory_space<vmem>>, vector<1x16x1x16xf32>,
    %400 = vector.extract_strided_slice %395 {offsets = [16, 0], sizes = [8, 16], strides = [1, 1]} : vector<24x16xf32> to vector<8x16xf32>
    %c1_320 = arith.constant 1 : index
    %c0_321 = arith.constant 0 : index
    %c6_322 = arith.constant 6 : index
    %c0_323 = arith.constant 0 : index
    %401 = vector.load %arg5[%c1_320, %c0_321, %c6_322, %c0_323] : memref<2x8x16x16xf32, #tpu.memory_space<vmem>>, vector<1x8x1x16xf32>
    %402 = vector.shape_cast %401 : vector<1x8x1x16xf32> to vector<8x16xf32>
    %403 = vector.shape_cast %400 : vector<8x16xf32> to vector<1x8x1x16xf32>
    tpu.vector_store %arg5[%c1_320, %c0_321, %c6_322, %c0_323], %403 {strides = array<i32>} : memref<2x8x16x16xf32, #tpu.memory_space<vmem>>, vector<1x8x1x16xf32>,
    %cst_324 = arith.constant dense<0.000000e+00> : vector<24xf32>
    %404 = vector.multi_reduction <add>, %395, %cst_324 [1] : vector<24x16xf32> to vector<24xf32>
    %405 = vector.shape_cast %404 : vector<24xf32> to vector<24x1xf32>
    %406 = arith.addf %394, %405 : vector<24x1xf32>
    %407 = vector.extract_strided_slice %321 {offsets = [0, 126], sizes = [24, 16], strides = [1, 1]} : vector<24x288xf32> to vector<24x16xf32>
    %408 = vector.extract_strided_slice %407 {offsets = [0, 0], sizes = [16, 16], strides = [1, 1]} : vector<24x16xf32> to vector<16x16xf32>
    %c1_325 = arith.constant 1 : index
    %c0_326 = arith.constant 0 : index
    %c7_327 = arith.constant 7 : index
    %c0_328 = arith.constant 0 : index
    %409 = vector.load %arg4[%c1_325, %c0_326, %c7_327, %c0_328] : memref<2x16x16x16xf32, #tpu.memory_space<vmem>>, vector<1x16x1x16xf32>
    %410 = vector.shape_cast %409 : vector<1x16x1x16xf32> to vector<16x16xf32>
    %411 = vector.shape_cast %408 : vector<16x16xf32> to vector<1x16x1x16xf32>
    tpu.vector_store %arg4[%c1_325, %c0_326, %c7_327, %c0_328], %411 {strides = array<i32>} : memref<2x16x16x16xf32, #tpu.memory_space<vmem>>, vector<1x16x1x16xf32>,
    %412 = vector.extract_strided_slice %407 {offsets = [16, 0], sizes = [8, 16], strides = [1, 1]} : vector<24x16xf32> to vector<8x16xf32>
    %c1_329 = arith.constant 1 : index
    %c0_330 = arith.constant 0 : index
    %c7_331 = arith.constant 7 : index
    %c0_332 = arith.constant 0 : index
    %413 = vector.load %arg5[%c1_329, %c0_330, %c7_331, %c0_332] : memref<2x8x16x16xf32, #tpu.memory_space<vmem>>, vector<1x8x1x16xf32>
    %414 = vector.shape_cast %413 : vector<1x8x1x16xf32> to vector<8x16xf32>
    %415 = vector.shape_cast %412 : vector<8x16xf32> to vector<1x8x1x16xf32>
    tpu.vector_store %arg5[%c1_329, %c0_330, %c7_331, %c0_332], %415 {strides = array<i32>} : memref<2x8x16x16xf32, #tpu.memory_space<vmem>>, vector<1x8x1x16xf32>,
    %cst_333 = arith.constant dense<0.000000e+00> : vector<24xf32>
    %416 = vector.multi_reduction <add>, %407, %cst_333 [1] : vector<24x16xf32> to vector<24xf32>
    %417 = vector.shape_cast %416 : vector<24xf32> to vector<24x1xf32>
    %418 = arith.addf %406, %417 : vector<24x1xf32>
    %419 = vector.extract_strided_slice %321 {offsets = [0, 144], sizes = [24, 16], strides = [1, 1]} : vector<24x288xf32> to vector<24x16xf32>
    %420 = vector.extract_strided_slice %419 {offsets = [0, 0], sizes = [16, 16], strides = [1, 1]} : vector<24x16xf32> to vector<16x16xf32>
    %c1_334 = arith.constant 1 : index
    %c0_335 = arith.constant 0 : index
    %c8_336 = arith.constant 8 : index
    %c0_337 = arith.constant 0 : index
    %421 = vector.load %arg4[%c1_334, %c0_335, %c8_336, %c0_337] : memref<2x16x16x16xf32, #tpu.memory_space<vmem>>, vector<1x16x1x16xf32>
    %422 = vector.shape_cast %421 : vector<1x16x1x16xf32> to vector<16x16xf32>
    %423 = vector.shape_cast %420 : vector<16x16xf32> to vector<1x16x1x16xf32>
    tpu.vector_store %arg4[%c1_334, %c0_335, %c8_336, %c0_337], %423 {strides = array<i32>} : memref<2x16x16x16xf32, #tpu.memory_space<vmem>>, vector<1x16x1x16xf32>,
    %424 = vector.extract_strided_slice %419 {offsets = [16, 0], sizes = [8, 16], strides = [1, 1]} : vector<24x16xf32> to vector<8x16xf32>
    %c1_338 = arith.constant 1 : index
    %c0_339 = arith.constant 0 : index
    %c8_340 = arith.constant 8 : index
    %c0_341 = arith.constant 0 : index
    %425 = vector.load %arg5[%c1_338, %c0_339, %c8_340, %c0_341] : memref<2x8x16x16xf32, #tpu.memory_space<vmem>>, vector<1x8x1x16xf32>
    %426 = vector.shape_cast %425 : vector<1x8x1x16xf32> to vector<8x16xf32>
    %427 = vector.shape_cast %424 : vector<8x16xf32> to vector<1x8x1x16xf32>
    tpu.vector_store %arg5[%c1_338, %c0_339, %c8_340, %c0_341], %427 {strides = array<i32>} : memref<2x8x16x16xf32, #tpu.memory_space<vmem>>, vector<1x8x1x16xf32>,
    %cst_342 = arith.constant dense<0.000000e+00> : vector<24xf32>
    %428 = vector.multi_reduction <add>, %419, %cst_342 [1] : vector<24x16xf32> to vector<24xf32>
    %429 = vector.shape_cast %428 : vector<24xf32> to vector<24x1xf32>
    %430 = arith.addf %418, %429 : vector<24x1xf32>
    %431 = vector.extract_strided_slice %321 {offsets = [0, 162], sizes = [24, 16], strides = [1, 1]} : vector<24x288xf32> to vector<24x16xf32>
    %432 = vector.extract_strided_slice %431 {offsets = [0, 0], sizes = [16, 16], strides = [1, 1]} : vector<24x16xf32> to vector<16x16xf32>
    %c1_343 = arith.constant 1 : index
    %c0_344 = arith.constant 0 : index
    %c9_345 = arith.constant 9 : index
    %c0_346 = arith.constant 0 : index
    %433 = vector.load %arg4[%c1_343, %c0_344, %c9_345, %c0_346] : memref<2x16x16x16xf32, #tpu.memory_space<vmem>>, vector<1x16x1x16xf32>
    %434 = vector.shape_cast %433 : vector<1x16x1x16xf32> to vector<16x16xf32>
    %435 = vector.shape_cast %432 : vector<16x16xf32> to vector<1x16x1x16xf32>
    tpu.vector_store %arg4[%c1_343, %c0_344, %c9_345, %c0_346], %435 {strides = array<i32>} : memref<2x16x16x16xf32, #tpu.memory_space<vmem>>, vector<1x16x1x16xf32>,
    %436 = vector.extract_strided_slice %431 {offsets = [16, 0], sizes = [8, 16], strides = [1, 1]} : vector<24x16xf32> to vector<8x16xf32>
    %c1_347 = arith.constant 1 : index
    %c0_348 = arith.constant 0 : index
    %c9_349 = arith.constant 9 : index
    %c0_350 = arith.constant 0 : index
    %437 = vector.load %arg5[%c1_347, %c0_348, %c9_349, %c0_350] : memref<2x8x16x16xf32, #tpu.memory_space<vmem>>, vector<1x8x1x16xf32>
    %438 = vector.shape_cast %437 : vector<1x8x1x16xf32> to vector<8x16xf32>
    %439 = vector.shape_cast %436 : vector<8x16xf32> to vector<1x8x1x16xf32>
    tpu.vector_store %arg5[%c1_347, %c0_348, %c9_349, %c0_350], %439 {strides = array<i32>} : memref<2x8x16x16xf32, #tpu.memory_space<vmem>>, vector<1x8x1x16xf32>,
    %cst_351 = arith.constant dense<0.000000e+00> : vector<24xf32>
    %440 = vector.multi_reduction <add>, %431, %cst_351 [1] : vector<24x16xf32> to vector<24xf32>
    %441 = vector.shape_cast %440 : vector<24xf32> to vector<24x1xf32>
    %442 = arith.addf %430, %441 : vector<24x1xf32>
    %443 = vector.extract_strided_slice %321 {offsets = [0, 180], sizes = [24, 16], strides = [1, 1]} : vector<24x288xf32> to vector<24x16xf32>
    %444 = vector.extract_strided_slice %443 {offsets = [0, 0], sizes = [16, 16], strides = [1, 1]} : vector<24x16xf32> to vector<16x16xf32>
    %c1_352 = arith.constant 1 : index
    %c0_353 = arith.constant 0 : index
    %c10_354 = arith.constant 10 : index
    %c0_355 = arith.constant 0 : index
    %445 = vector.load %arg4[%c1_352, %c0_353, %c10_354, %c0_355] : memref<2x16x16x16xf32, #tpu.memory_space<vmem>>, vector<1x16x1x16xf32>
    %446 = vector.shape_cast %445 : vector<1x16x1x16xf32> to vector<16x16xf32>
    %447 = vector.shape_cast %444 : vector<16x16xf32> to vector<1x16x1x16xf32>
    tpu.vector_store %arg4[%c1_352, %c0_353, %c10_354, %c0_355], %447 {strides = array<i32>} : memref<2x16x16x16xf32, #tpu.memory_space<vmem>>, vector<1x16x1x16xf32>,
    %448 = vector.extract_strided_slice %443 {offsets = [16, 0], sizes = [8, 16], strides = [1, 1]} : vector<24x16xf32> to vector<8x16xf32>
    %c1_356 = arith.constant 1 : index
    %c0_357 = arith.constant 0 : index
    %c10_358 = arith.constant 10 : index
    %c0_359 = arith.constant 0 : index
    %449 = vector.load %arg5[%c1_356, %c0_357, %c10_358, %c0_359] : memref<2x8x16x16xf32, #tpu.memory_space<vmem>>, vector<1x8x1x16xf32>
    %450 = vector.shape_cast %449 : vector<1x8x1x16xf32> to vector<8x16xf32>
    %451 = vector.shape_cast %448 : vector<8x16xf32> to vector<1x8x1x16xf32>
    tpu.vector_store %arg5[%c1_356, %c0_357, %c10_358, %c0_359], %451 {strides = array<i32>} : memref<2x8x16x16xf32, #tpu.memory_space<vmem>>, vector<1x8x1x16xf32>,
    %cst_360 = arith.constant dense<0.000000e+00> : vector<24xf32>
    %452 = vector.multi_reduction <add>, %443, %cst_360 [1] : vector<24x16xf32> to vector<24xf32>
    %453 = vector.shape_cast %452 : vector<24xf32> to vector<24x1xf32>
    %454 = arith.addf %442, %453 : vector<24x1xf32>
    %455 = vector.extract_strided_slice %321 {offsets = [0, 198], sizes = [24, 16], strides = [1, 1]} : vector<24x288xf32> to vector<24x16xf32>
    %456 = vector.extract_strided_slice %455 {offsets = [0, 0], sizes = [16, 16], strides = [1, 1]} : vector<24x16xf32> to vector<16x16xf32>
    %c1_361 = arith.constant 1 : index
    %c0_362 = arith.constant 0 : index
    %c11_363 = arith.constant 11 : index
    %c0_364 = arith.constant 0 : index
    %457 = vector.load %arg4[%c1_361, %c0_362, %c11_363, %c0_364] : memref<2x16x16x16xf32, #tpu.memory_space<vmem>>, vector<1x16x1x16xf32>
    %458 = vector.shape_cast %457 : vector<1x16x1x16xf32> to vector<16x16xf32>
    %459 = vector.shape_cast %456 : vector<16x16xf32> to vector<1x16x1x16xf32>
    tpu.vector_store %arg4[%c1_361, %c0_362, %c11_363, %c0_364], %459 {strides = array<i32>} : memref<2x16x16x16xf32, #tpu.memory_space<vmem>>, vector<1x16x1x16xf32>,
    %460 = vector.extract_strided_slice %455 {offsets = [16, 0], sizes = [8, 16], strides = [1, 1]} : vector<24x16xf32> to vector<8x16xf32>
    %c1_365 = arith.constant 1 : index
    %c0_366 = arith.constant 0 : index
    %c11_367 = arith.constant 11 : index
    %c0_368 = arith.constant 0 : index
    %461 = vector.load %arg5[%c1_365, %c0_366, %c11_367, %c0_368] : memref<2x8x16x16xf32, #tpu.memory_space<vmem>>, vector<1x8x1x16xf32>
    %462 = vector.shape_cast %461 : vector<1x8x1x16xf32> to vector<8x16xf32>
    %463 = vector.shape_cast %460 : vector<8x16xf32> to vector<1x8x1x16xf32>
    tpu.vector_store %arg5[%c1_365, %c0_366, %c11_367, %c0_368], %463 {strides = array<i32>} : memref<2x8x16x16xf32, #tpu.memory_space<vmem>>, vector<1x8x1x16xf32>,
    %cst_369 = arith.constant dense<0.000000e+00> : vector<24xf32>
    %464 = vector.multi_reduction <add>, %455, %cst_369 [1] : vector<24x16xf32> to vector<24xf32>
    %465 = vector.shape_cast %464 : vector<24xf32> to vector<24x1xf32>
    %466 = arith.addf %454, %465 : vector<24x1xf32>
    %467 = vector.extract_strided_slice %321 {offsets = [0, 216], sizes = [24, 16], strides = [1, 1]} : vector<24x288xf32> to vector<24x16xf32>
    %468 = vector.extract_strided_slice %467 {offsets = [0, 0], sizes = [16, 16], strides = [1, 1]} : vector<24x16xf32> to vector<16x16xf32>
    %c1_370 = arith.constant 1 : index
    %c0_371 = arith.constant 0 : index
    %c12_372 = arith.constant 12 : index
    %c0_373 = arith.constant 0 : index
    %469 = vector.load %arg4[%c1_370, %c0_371, %c12_372, %c0_373] : memref<2x16x16x16xf32, #tpu.memory_space<vmem>>, vector<1x16x1x16xf32>
    %470 = vector.shape_cast %469 : vector<1x16x1x16xf32> to vector<16x16xf32>
    %471 = vector.shape_cast %468 : vector<16x16xf32> to vector<1x16x1x16xf32>
    tpu.vector_store %arg4[%c1_370, %c0_371, %c12_372, %c0_373], %471 {strides = array<i32>} : memref<2x16x16x16xf32, #tpu.memory_space<vmem>>, vector<1x16x1x16xf32>,
    %472 = vector.extract_strided_slice %467 {offsets = [16, 0], sizes = [8, 16], strides = [1, 1]} : vector<24x16xf32> to vector<8x16xf32>
    %c1_374 = arith.constant 1 : index
    %c0_375 = arith.constant 0 : index
    %c12_376 = arith.constant 12 : index
    %c0_377 = arith.constant 0 : index
    %473 = vector.load %arg5[%c1_374, %c0_375, %c12_376, %c0_377] : memref<2x8x16x16xf32, #tpu.memory_space<vmem>>, vector<1x8x1x16xf32>
    %474 = vector.shape_cast %473 : vector<1x8x1x16xf32> to vector<8x16xf32>
    %475 = vector.shape_cast %472 : vector<8x16xf32> to vector<1x8x1x16xf32>
    tpu.vector_store %arg5[%c1_374, %c0_375, %c12_376, %c0_377], %475 {strides = array<i32>} : memref<2x8x16x16xf32, #tpu.memory_space<vmem>>, vector<1x8x1x16xf32>,
    %cst_378 = arith.constant dense<0.000000e+00> : vector<24xf32>
    %476 = vector.multi_reduction <add>, %467, %cst_378 [1] : vector<24x16xf32> to vector<24xf32>
    %477 = vector.shape_cast %476 : vector<24xf32> to vector<24x1xf32>
    %478 = arith.addf %466, %477 : vector<24x1xf32>
    %479 = vector.extract_strided_slice %321 {offsets = [0, 234], sizes = [24, 16], strides = [1, 1]} : vector<24x288xf32> to vector<24x16xf32>
    %480 = vector.extract_strided_slice %479 {offsets = [0, 0], sizes = [16, 16], strides = [1, 1]} : vector<24x16xf32> to vector<16x16xf32>
    %c1_379 = arith.constant 1 : index
    %c0_380 = arith.constant 0 : index
    %c13_381 = arith.constant 13 : index
    %c0_382 = arith.constant 0 : index
    %481 = vector.load %arg4[%c1_379, %c0_380, %c13_381, %c0_382] : memref<2x16x16x16xf32, #tpu.memory_space<vmem>>, vector<1x16x1x16xf32>
    %482 = vector.shape_cast %481 : vector<1x16x1x16xf32> to vector<16x16xf32>
    %483 = vector.shape_cast %480 : vector<16x16xf32> to vector<1x16x1x16xf32>
    tpu.vector_store %arg4[%c1_379, %c0_380, %c13_381, %c0_382], %483 {strides = array<i32>} : memref<2x16x16x16xf32, #tpu.memory_space<vmem>>, vector<1x16x1x16xf32>,
    %484 = vector.extract_strided_slice %479 {offsets = [16, 0], sizes = [8, 16], strides = [1, 1]} : vector<24x16xf32> to vector<8x16xf32>
    %c1_383 = arith.constant 1 : index
    %c0_384 = arith.constant 0 : index
    %c13_385 = arith.constant 13 : index
    %c0_386 = arith.constant 0 : index
    %485 = vector.load %arg5[%c1_383, %c0_384, %c13_385, %c0_386] : memref<2x8x16x16xf32, #tpu.memory_space<vmem>>, vector<1x8x1x16xf32>
    %486 = vector.shape_cast %485 : vector<1x8x1x16xf32> to vector<8x16xf32>
    %487 = vector.shape_cast %484 : vector<8x16xf32> to vector<1x8x1x16xf32>
    tpu.vector_store %arg5[%c1_383, %c0_384, %c13_385, %c0_386], %487 {strides = array<i32>} : memref<2x8x16x16xf32, #tpu.memory_space<vmem>>, vector<1x8x1x16xf32>,
    %cst_387 = arith.constant dense<0.000000e+00> : vector<24xf32>
    %488 = vector.multi_reduction <add>, %479, %cst_387 [1] : vector<24x16xf32> to vector<24xf32>
    %489 = vector.shape_cast %488 : vector<24xf32> to vector<24x1xf32>
    %490 = arith.addf %478, %489 : vector<24x1xf32>
    %491 = vector.extract_strided_slice %321 {offsets = [0, 252], sizes = [24, 16], strides = [1, 1]} : vector<24x288xf32> to vector<24x16xf32>
    %492 = vector.extract_strided_slice %491 {offsets = [0, 0], sizes = [16, 16], strides = [1, 1]} : vector<24x16xf32> to vector<16x16xf32>
    %c1_388 = arith.constant 1 : index
    %c0_389 = arith.constant 0 : index
    %c14_390 = arith.constant 14 : index
    %c0_391 = arith.constant 0 : index
    %493 = vector.load %arg4[%c1_388, %c0_389, %c14_390, %c0_391] : memref<2x16x16x16xf32, #tpu.memory_space<vmem>>, vector<1x16x1x16xf32>
    %494 = vector.shape_cast %493 : vector<1x16x1x16xf32> to vector<16x16xf32>
    %495 = vector.shape_cast %492 : vector<16x16xf32> to vector<1x16x1x16xf32>
    tpu.vector_store %arg4[%c1_388, %c0_389, %c14_390, %c0_391], %495 {strides = array<i32>} : memref<2x16x16x16xf32, #tpu.memory_space<vmem>>, vector<1x16x1x16xf32>,
    %496 = vector.extract_strided_slice %491 {offsets = [16, 0], sizes = [8, 16], strides = [1, 1]} : vector<24x16xf32> to vector<8x16xf32>
    %c1_392 = arith.constant 1 : index
    %c0_393 = arith.constant 0 : index
    %c14_394 = arith.constant 14 : index
    %c0_395 = arith.constant 0 : index
    %497 = vector.load %arg5[%c1_392, %c0_393, %c14_394, %c0_395] : memref<2x8x16x16xf32, #tpu.memory_space<vmem>>, vector<1x8x1x16xf32>
    %498 = vector.shape_cast %497 : vector<1x8x1x16xf32> to vector<8x16xf32>
    %499 = vector.shape_cast %496 : vector<8x16xf32> to vector<1x8x1x16xf32>
    tpu.vector_store %arg5[%c1_392, %c0_393, %c14_394, %c0_395], %499 {strides = array<i32>} : memref<2x8x16x16xf32, #tpu.memory_space<vmem>>, vector<1x8x1x16xf32>,
    %cst_396 = arith.constant dense<0.000000e+00> : vector<24xf32>
    %500 = vector.multi_reduction <add>, %491, %cst_396 [1] : vector<24x16xf32> to vector<24xf32>
    %501 = vector.shape_cast %500 : vector<24xf32> to vector<24x1xf32>
    %502 = arith.addf %490, %501 : vector<24x1xf32>
    %503 = vector.extract_strided_slice %321 {offsets = [0, 270], sizes = [24, 16], strides = [1, 1]} : vector<24x288xf32> to vector<24x16xf32>
    %504 = vector.extract_strided_slice %503 {offsets = [0, 0], sizes = [16, 16], strides = [1, 1]} : vector<24x16xf32> to vector<16x16xf32>
    %c1_397 = arith.constant 1 : index
    %c0_398 = arith.constant 0 : index
    %c15_399 = arith.constant 15 : index
    %c0_400 = arith.constant 0 : index
    %505 = vector.load %arg4[%c1_397, %c0_398, %c15_399, %c0_400] : memref<2x16x16x16xf32, #tpu.memory_space<vmem>>, vector<1x16x1x16xf32>
    %506 = vector.shape_cast %505 : vector<1x16x1x16xf32> to vector<16x16xf32>
    %507 = vector.shape_cast %504 : vector<16x16xf32> to vector<1x16x1x16xf32>
    tpu.vector_store %arg4[%c1_397, %c0_398, %c15_399, %c0_400], %507 {strides = array<i32>} : memref<2x16x16x16xf32, #tpu.memory_space<vmem>>, vector<1x16x1x16xf32>,
    %508 = vector.extract_strided_slice %503 {offsets = [16, 0], sizes = [8, 16], strides = [1, 1]} : vector<24x16xf32> to vector<8x16xf32>
    %c1_401 = arith.constant 1 : index
    %c0_402 = arith.constant 0 : index
    %c15_403 = arith.constant 15 : index
    %c0_404 = arith.constant 0 : index
    %509 = vector.load %arg5[%c1_401, %c0_402, %c15_403, %c0_404] : memref<2x8x16x16xf32, #tpu.memory_space<vmem>>, vector<1x8x1x16xf32>
    %510 = vector.shape_cast %509 : vector<1x8x1x16xf32> to vector<8x16xf32>
    %511 = vector.shape_cast %508 : vector<8x16xf32> to vector<1x8x1x16xf32>
    tpu.vector_store %arg5[%c1_401, %c0_402, %c15_403, %c0_404], %511 {strides = array<i32>} : memref<2x8x16x16xf32, #tpu.memory_space<vmem>>, vector<1x8x1x16xf32>,
    %cst_405 = arith.constant dense<0.000000e+00> : vector<24xf32>
    %512 = vector.multi_reduction <add>, %503, %cst_405 [1] : vector<24x16xf32> to vector<24xf32>
    %513 = vector.shape_cast %512 : vector<24xf32> to vector<24x1xf32>
    %514 = arith.addf %502, %513 : vector<24x1xf32>
    %cst_406 = arith.constant 3.906250e-03 : f32
    %515 = vector.broadcast %cst_406 : f32 to vector<24x1xf32>
    %516 = arith.mulf %514, %515 : vector<24x1xf32>
    %517 = vector.extract_strided_slice %516 {offsets = [0, 0], sizes = [16, 1], strides = [1, 1]} : vector<24x1xf32> to vector<16x1xf32>
    %c1_407 = arith.constant 1 : index
    %c0_408 = arith.constant 0 : index
    %c0_409 = arith.constant 0 : index
    %518 = vector.load %arg6[%c1_407, %c0_408, %c0_409] : memref<2x16x1xf32, #tpu.memory_space<vmem>>, vector<1x16x1xf32>
    %519 = vector.shape_cast %518 : vector<1x16x1xf32> to vector<16x1xf32>
    %520 = vector.shape_cast %517 : vector<16x1xf32> to vector<1x16x1xf32>
    tpu.vector_store %arg6[%c1_407, %c0_408, %c0_409], %520 {strides = array<i32>} : memref<2x16x1xf32, #tpu.memory_space<vmem>>, vector<1x16x1xf32>,
    %521 = vector.extract_strided_slice %516 {offsets = [16, 0], sizes = [8, 1], strides = [1, 1]} : vector<24x1xf32> to vector<8x1xf32>
    %c1_410 = arith.constant 1 : index
    %c0_411 = arith.constant 0 : index
    %c0_412 = arith.constant 0 : index
    %522 = vector.load %arg7[%c1_410, %c0_411, %c0_412] : memref<2x8x1xf32, #tpu.memory_space<vmem>>, vector<1x8x1xf32>
    %523 = vector.shape_cast %522 : vector<1x8x1xf32> to vector<8x1xf32>
    %524 = vector.shape_cast %521 : vector<8x1xf32> to vector<1x8x1xf32>
    tpu.vector_store %arg7[%c1_410, %c0_411, %c0_412], %524 {strides = array<i32>} : memref<2x8x1xf32, #tpu.memory_space<vmem>>, vector<1x8x1xf32>,
    return
  }
  func.func @transform_0(%arg0: i32) -> (i32, i32, i32) {
    %c0_i32 = arith.constant 0 : i32
    %c0_i32_0 = arith.constant 0 : i32
    %c0_i32_1 = arith.constant 0 : i32
    return %arg0, %c0_i32, %c0_i32_0 : i32, i32, i32
  }
  func.func @transform_1(%arg0: i32) -> (i32, i32, i32) {
    %c0_i32 = arith.constant 0 : i32
    %c0_i32_0 = arith.constant 0 : i32
    %c0_i32_1 = arith.constant 0 : i32
    %c0_i32_2 = arith.constant 0 : i32
    return %c0_i32, %c0_i32_0, %c0_i32_1 : i32, i32, i32
  }
  func.func @transform_2(%arg0: i32) -> (i32, i32) {
    %c0_i32 = arith.constant 0 : i32
    %c0_i32_0 = arith.constant 0 : i32
    %c0_i32_1 = arith.constant 0 : i32
    return %c0_i32, %c0_i32_0 : i32, i32
  }
  func.func @transform_3(%arg0: i32) -> (i32, i32, i32, i32) {
    %c0_i32 = arith.constant 0 : i32
    %c0_i32_0 = arith.constant 0 : i32
    %c0_i32_1 = arith.constant 0 : i32
    %c0_i32_2 = arith.constant 0 : i32
    return %arg0, %c0_i32, %c0_i32_0, %c0_i32_1 : i32, i32, i32, i32
  }
  func.func @transform_4(%arg0: i32) -> (i32, i32, i32, i32) {
    %c0_i32 = arith.constant 0 : i32
    %c0_i32_0 = arith.constant 0 : i32
    %c0_i32_1 = arith.constant 0 : i32
    %c0_i32_2 = arith.constant 0 : i32
    return %arg0, %c0_i32, %c0_i32_0, %c0_i32_1 : i32, i32, i32, i32
  }
  func.func @transform_5(%arg0: i32) -> (i32, i32, i32) {
    %c0_i32 = arith.constant 0 : i32
    %c0_i32_0 = arith.constant 0 : i32
    %c0_i32_1 = arith.constant 0 : i32
    return %arg0, %c0_i32, %c0_i32_0 : i32, i32, i32
  }
  func.func @transform_6(%arg0: i32) -> (i32, i32, i32) {
    %c0_i32 = arith.constant 0 : i32
    %c0_i32_0 = arith.constant 0 : i32
    %c0_i32_1 = arith.constant 0 : i32
    return %arg0, %c0_i32, %c0_i32_0 : i32, i32, i32
  }
}

</mosaic_0001>

<llo_original>
// kernel: distiller_forward.1
$region0: #{distiller_forward.1}
  #allocation0 [shape = 'u32[]', space=smem, size = 0x4, offset = 0x4, fixed_abs, tag = 'smem constant byte address 0x4 - core index']
  #allocation1 [shape = 'u32[144,128]{1,0:T(1,128)}', space=vmem, size = 0x12000, scoped, tag = 'internal scratch']
  %s0 = inlined_call_operand.vmem [shape: f32[2,4,384], index: 0, kind: input, shape index: {}]
  %s1 = inlined_call_operand.vmem [shape: f32[9,24,4], index: 1, kind: input, shape index: {}]
  %s2 = inlined_call_operand.vmem [shape: f32[24,1], index: 2, kind: input, shape index: {}]
  %s3 = inlined_call_operand.hbm [shape: f32[2,16,16,16], index: 3, kind: output, shape index: {0}]
  %s4 = inlined_call_operand.hbm [shape: f32[2,8,16,16], index: 4, kind: output, shape index: {1}]
  %s5 = inlined_call_operand.vmem [shape: f32[2,16,1], index: 5, kind: output, shape index: {2}]
  %s6 = inlined_call_operand.vmem [shape: f32[2,8,1], index: 6, kind: output, shape index: {3}]
  %7 = xla_tuple %s3, %s4, %s5, %s6
  %s8 = sld [smem:[#allocation0]]
  $region46: #{distiller_forward.1} parent=0
    _
  %s10 = ssub.s32 1, %s8
  %s11 = scalar_select 0, %s10, %s8
  $region1: #{distiller_forward.1} parent=0
    #allocation2 [shape = 'u8[262144]{0}', space=vmem, size = 0x40000, scoped, tag = 'output window, operand 0, single buffered']
    #allocation3 [shape = 's32[1]{0}', space=sflag, size = 0x4, scoped, tag = 'scoped memory for distiller_forward.1']
    #allocation4 [shape = 'u8[131072]{0}', space=vmem, size = 0x20000, scoped, tag = 'output window, operand 1, single buffered']
    #allocation5 [shape = 's32[1]{0}', space=sflag, size = 0x4, scoped, tag = 'scoped memory for distiller_forward.1']
    %12 = vsyncpa [#allocation3], 0
    %13 = vsyncpa [#allocation5], 0
    // Predicated region
    $region2: #{distiller_forward.1} parent=1 // pred_check
      _
    $region3: #{distiller_forward.1} parent=1 // pred_check_branch
      %15 = sbr.rel (0) target = $region5
    $region4: #{distiller_forward.1} parent=1 // pred_region
      _
    $region5: #{distiller_forward.1} parent=1 // pred_fallthru
      _
    // Predicated region
    $region6: #{distiller_forward.1} parent=1 // pred_check
      _
    $region7: #{distiller_forward.1} parent=1 // pred_check_branch
      %17 = sbr.rel (0) target = $region9
    $region8: #{distiller_forward.1} parent=1 // pred_region
      _
    $region9: #{distiller_forward.1} parent=1 // pred_fallthru
      _
    // Predicated region
    $region10: #{distiller_forward.1} parent=1 // pred_check
      _
    $region11: #{distiller_forward.1} parent=1 // pred_check_branch
      %19 = sbr.rel (0) target = $region13
    $region12: #{distiller_forward.1} parent=1 // pred_region
      _
    $region13: #{distiller_forward.1} parent=1 // pred_fallthru
      _
    %v20 = vld [vmem:[%s2] sm:$0xff]
    %v21 = vld [vmem:[%s2 + $0x8] sm:$0xff]
    %v22 = vld [vmem:[%s2 + $0x10] sm:$0xff]
    %v23 = vld [vmem:[%s0] sm:$0xff]
    %v24 = vld [vmem:[%s0 + $0x8] sm:$0xf]
    %v25 = vld [vmem:[%s1] sm:$0xff]
    %v26 = vld [vmem:[%s1 + $0x8] sm:$0xff]
    %v27 = vld [vmem:[%s1 + $0x10] sm:$0xff]
    %s28 = scalar_lea.vmem %s1, 24
    %v29 = vld [vmem:[%s28] sm:$0xff]
    %v30 = vld [vmem:[%s28 + $0x8] sm:$0xff]
    %v31 = vld [vmem:[%s28 + $0x10] sm:$0xff]
    %v34 = vcombine.high %v23, %v23
    %35 = vrot.lane.b32.xlu0 %v23, 127
    %v36 = vpop.permute.xlu0 %35
    %37 = vrot.lane.b32.xlu0 %v34, 127
    %v38 = vpop.permute.xlu0 %37
    %39 = vrot.lane.b32.xlu0 %v24, 127
    %v40 = vpop.permute.xlu0 %39
    %vm41 = vcmask 1039360
    %v42 = vsel %vm41, %v36, %v38
    %v43 = vsel %vm41, %v38, %v40
    %vm44 = vcmask 31744
    %v46 = vsel %vm44, %v29, 0
    %v49 = vsel %vm44, %v30, 0
    %v52 = vsel %vm44, %v31, 0
    %vm54 = vcmask 1043456
    %v55 = vsel %vm54, %v42, 0
    %v57 = vsel %vm54, %v43, 0
    %v59 = vsel %vm54, %v40, 0
    %61 = vmatprep.subr.mxu0 0.0
    %62 = vmatpush1.msra.mxu0 0.0
    %63 = vmatprep.subr.mxu0 0.0
    %64 = vmatpush1.msra.mxu0 0.0
    %65 = vmatprep.subr.mxu0 0.0
    %66 = vmatpush1.msra.mxu0 0.0
    %67 = vmatprep.subr.mxu0 0.0
    %68 = vmatpush1.msra.mxu0 0.0
    %69 = vmatprep.subr.mxu0 0.0
    %70 = vmatpush1.msra.mxu0 0.0
    %71 = vmatprep.subr.mxu0 0.0
    %72 = vmatpush1.msra.mxu0 0.0
    %73 = vmatprep.subr.mxu0 0.0
    %74 = vmatpush1.msra.mxu0 0.0
    %75 = vmatprep.subr.mxu0 0.0
    %76 = vmatpush1.msra.mxu0 0.0
    %77 = vmatprep.subr.mxu0 0.0
    %78 = vmatpush1.msra.mxu0 0.0
    %79 = vmatprep.subr.mxu0 0.0
    %80 = vmatpush1.msra.mxu0 0.0
    %81 = vmatprep.subr.mxu0 0.0
    %82 = vmatpush1.msra.mxu0 0.0
    %83 = vmatprep.subr.mxu0 0.0
    %84 = vmatpush1.msra.mxu0 0.0
    %85 = vmatprep.subr.mxu0 0.0
    %86 = vmatpush1.msra.mxu0 0.0
    %87 = vmatprep.subr.mxu0 0.0
    %88 = vmatpush1.msra.mxu0 0.0
    %89 = vmatprep.subr.mxu0 0.0
    %90 = vmatpush1.msra.mxu0 0.0
    %91 = vmatprep.subr.mxu0 %v57
    %92 = vmatpush1.msra.mxu0 %v55
    %93 = vmatprep.subr.mxu0 0.0
    %94 = vmatpush2.msra.mxu0 0.0
    %95 = vmatprep.subr.mxu0 0.0
    %96 = vmatpush2.msra.mxu0 0.0
    %97 = vmatprep.subr.mxu0 0.0
    %98 = vmatpush2.msra.mxu0 0.0
    %99 = vmatprep.subr.mxu0 0.0
    %100 = vmatpush2.msra.mxu0 0.0
    %101 = vmatprep.subr.mxu0 0.0
    %102 = vmatpush2.msra.mxu0 0.0
    %103 = vmatprep.subr.mxu0 0.0
    %104 = vmatpush2.msra.mxu0 0.0
    %105 = vmatprep.subr.mxu0 0.0
    %106 = vmatpush2.msra.mxu0 0.0
    %107 = vmatprep.subr.mxu0 0.0
    %108 = vmatpush2.msra.mxu0 0.0
    %109 = vmatprep.subr.mxu0 0.0
    %110 = vmatpush2.msra.mxu0 0.0
    %111 = vmatprep.subr.mxu0 0.0
    %112 = vmatpush2.msra.mxu0 0.0
    %113 = vmatprep.subr.mxu0 0.0
    %114 = vmatpush2.msra.mxu0 0.0
    %115 = vmatprep.subr.mxu0 0.0
    %116 = vmatpush2.msra.mxu0 0.0
    %117 = vmatprep.subr.mxu0 0.0
    %118 = vmatpush2.msra.mxu0 0.0
    %119 = vmatprep.subr.mxu0 0.0
    %120 = vmatpush2.msra.mxu0 0.0
    %121 = vmatprep.subr.mxu0 0.0
    %122 = vmatpush2.msra.mxu0 0.0
    %123 = vmatprep.subr.mxu0 0.0
    %124 = vmatpush2.msra.mxu0 0.0
    %125 = vmatprep.mubr.f32.mxu0 0.0
    %126 = vmatmul.mubr.f32.gmra.mxu0 %v46
    %v127 = vpop.f32.mrf.mxu0
    %v128 = vadd.f32 0.0, %v127
    %v129 = vpop.f32.mrf.mxu0
    %v130 = vadd.f32 0.0, %v129
    %131 = vmatprep.mubr.f32.mxu0 0.0
    %132 = vmatmul.mubr.f32.gmra.mxu0 %v49
    %v133 = vpop.f32.mrf.mxu0
    %v134 = vadd.f32 0.0, %v133
    %v135 = vpop.f32.mrf.mxu0
    %v136 = vadd.f32 0.0, %v135
    %137 = vmatprep.mubr.f32.mxu0 0.0
    %138 = vmatmul.mubr.f32.gmra.mxu0 %v52
    %v139 = vpop.f32.mrf.mxu0
    %v140 = vadd.f32 0.0, %v139
    %v141 = vpop.f32.mrf.mxu0
    %v142 = vadd.f32 0.0, %v141
    %143 = vdwg.mxu0
    %144 = vmatprep.subr.mxu0 0.0
    %145 = vmatpush1.msra.mxu0 0.0
    %146 = vmatprep.subr.mxu0 0.0
    %147 = vmatpush1.msra.mxu0 0.0
    %148 = vmatprep.subr.mxu0 0.0
    %149 = vmatpush1.msra.mxu0 0.0
    %150 = vmatprep.subr.mxu0 0.0
    %151 = vmatpush1.msra.mxu0 0.0
    %152 = vmatprep.subr.mxu0 0.0
    %153 = vmatpush1.msra.mxu0 0.0
    %154 = vmatprep.subr.mxu0 0.0
    %155 = vmatpush1.msra.mxu0 0.0
    %156 = vmatprep.subr.mxu0 0.0
    %157 = vmatpush1.msra.mxu0 0.0
    %158 = vmatprep.subr.mxu0 0.0
    %159 = vmatpush1.msra.mxu0 0.0
    %160 = vmatprep.subr.mxu0 0.0
    %161 = vmatpush1.msra.mxu0 0.0
    %162 = vmatprep.subr.mxu0 0.0
    %163 = vmatpush1.msra.mxu0 0.0
    %164 = vmatprep.subr.mxu0 0.0
    %165 = vmatpush1.msra.mxu0 0.0
    %166 = vmatprep.subr.mxu0 0.0
    %167 = vmatpush1.msra.mxu0 0.0
    %168 = vmatprep.subr.mxu0 0.0
    %169 = vmatpush1.msra.mxu0 0.0
    %170 = vmatprep.subr.mxu0 0.0
    %171 = vmatpush1.msra.mxu0 0.0
    %172 = vmatprep.subr.mxu0 0.0
    %173 = vmatpush1.msra.mxu0 0.0
    %174 = vmatprep.subr.mxu0 0.0
    %175 = vmatpush1.msra.mxu0 %v59
    %176 = vmatprep.subr.mxu0 0.0
    %177 = vmatpush2.msra.mxu0 0.0
    %178 = vmatprep.subr.mxu0 0.0
    %179 = vmatpush2.msra.mxu0 0.0
    %180 = vmatprep.subr.mxu0 0.0
    %181 = vmatpush2.msra.mxu0 0.0
    %182 = vmatprep.subr.mxu0 0.0
    %183 = vmatpush2.msra.mxu0 0.0
    %184 = vmatprep.subr.mxu0 0.0
    %185 = vmatpush2.msra.mxu0 0.0
    %186 = vmatprep.subr.mxu0 0.0
    %187 = vmatpush2.msra.mxu0 0.0
    %188 = vmatprep.subr.mxu0 0.0
    %189 = vmatpush2.msra.mxu0 0.0
    %190 = vmatprep.subr.mxu0 0.0
    %191 = vmatpush2.msra.mxu0 0.0
    %192 = vmatprep.subr.mxu0 0.0
    %193 = vmatpush2.msra.mxu0 0.0
    %194 = vmatprep.subr.mxu0 0.0
    %195 = vmatpush2.msra.mxu0 0.0
    %196 = vmatprep.subr.mxu0 0.0
    %197 = vmatpush2.msra.mxu0 0.0
    %198 = vmatprep.subr.mxu0 0.0
    %199 = vmatpush2.msra.mxu0 0.0
    %200 = vmatprep.subr.mxu0 0.0
    %201 = vmatpush2.msra.mxu0 0.0
    %202 = vmatprep.subr.mxu0 0.0
    %203 = vmatpush2.msra.mxu0 0.0
    %204 = vmatprep.subr.mxu0 0.0
    %205 = vmatpush2.msra.mxu0 0.0
    %206 = vmatprep.subr.mxu0 0.0
    %207 = vmatpush2.msra.mxu0 0.0
    %208 = vmatprep.mubr.f32.mxu0 0.0
    %209 = vmatmul.mubr.f32.gmra.mxu0 %v46
    %v210 = vpop.f32.mrf.mxu0
    %v211 = vadd.f32 0.0, %v210
    %v212 = vpop.f32.mrf.mxu0
    %213 = vmatprep.mubr.f32.mxu0 0.0
    %214 = vmatmul.mubr.f32.gmra.mxu0 %v49
    %v215 = vpop.f32.mrf.mxu0
    %v216 = vadd.f32 0.0, %v215
    %v217 = vpop.f32.mrf.mxu0
    %218 = vmatprep.mubr.f32.mxu0 0.0
    %219 = vmatmul.mubr.f32.gmra.mxu0 %v52
    %v220 = vpop.f32.mrf.mxu0
    %v221 = vadd.f32 0.0, %v220
    %v222 = vpop.f32.mrf.mxu0
    %223 = vdwg.mxu0
    %v225 = vsel %vm44, %v25, 0
    %v228 = vsel %vm44, %v26, 0
    %v231 = vsel %vm44, %v27, 0
    %v233 = vsel %vm54, %v23, 0
    %v235 = vsel %vm54, %v34, 0
    %v237 = vsel %vm54, %v24, 0
    %239 = vmatprep.subr.mxu0 0.0
    %240 = vmatpush1.msra.mxu0 0.0
    %241 = vmatprep.subr.mxu0 0.0
    %242 = vmatpush1.msra.mxu0 0.0
    %243 = vmatprep.subr.mxu0 0.0
    %244 = vmatpush1.msra.mxu0 0.0
    %245 = vmatprep.subr.mxu0 0.0
    %246 = vmatpush1.msra.mxu0 0.0
    %247 = vmatprep.subr.mxu0 0.0
    %248 = vmatpush1.msra.mxu0 0.0
    %249 = vmatprep.subr.mxu0 0.0
    %250 = vmatpush1.msra.mxu0 0.0
    %251 = vmatprep.subr.mxu0 0.0
    %252 = vmatpush1.msra.mxu0 0.0
    %253 = vmatprep.subr.mxu0 0.0
    %254 = vmatpush1.msra.mxu0 0.0
    %255 = vmatprep.subr.mxu0 0.0
    %256 = vmatpush1.msra.mxu0 0.0
    %257 = vmatprep.subr.mxu0 0.0
    %258 = vmatpush1.msra.mxu0 0.0
    %259 = vmatprep.subr.mxu0 0.0
    %260 = vmatpush1.msra.mxu0 0.0
    %261 = vmatprep.subr.mxu0 0.0
    %262 = vmatpush1.msra.mxu0 0.0
    %263 = vmatprep.subr.mxu0 0.0
    %264 = vmatpush1.msra.mxu0 0.0
    %265 = vmatprep.subr.mxu0 0.0
    %266 = vmatpush1.msra.mxu0 0.0
    %267 = vmatprep.subr.mxu0 0.0
    %268 = vmatpush1.msra.mxu0 0.0
    %269 = vmatprep.subr.mxu0 %v235
    %270 = vmatpush1.msra.mxu0 %v233
    %271 = vmatprep.subr.mxu0 0.0
    %272 = vmatpush2.msra.mxu0 0.0
    %273 = vmatprep.subr.mxu0 0.0
    %274 = vmatpush2.msra.mxu0 0.0
    %275 = vmatprep.subr.mxu0 0.0
    %276 = vmatpush2.msra.mxu0 0.0
    %277 = vmatprep.subr.mxu0 0.0
    %278 = vmatpush2.msra.mxu0 0.0
    %279 = vmatprep.subr.mxu0 0.0
    %280 = vmatpush2.msra.mxu0 0.0
    %281 = vmatprep.subr.mxu0 0.0
    %282 = vmatpush2.msra.mxu0 0.0
    %283 = vmatprep.subr.mxu0 0.0
    %284 = vmatpush2.msra.mxu0 0.0
    %285 = vmatprep.subr.mxu0 0.0
    %286 = vmatpush2.msra.mxu0 0.0
    %287 = vmatprep.subr.mxu0 0.0
    %288 = vmatpush2.msra.mxu0 0.0
    %289 = vmatprep.subr.mxu0 0.0
    %290 = vmatpush2.msra.mxu0 0.0
    %291 = vmatprep.subr.mxu0 0.0
    %292 = vmatpush2.msra.mxu0 0.0
    %293 = vmatprep.subr.mxu0 0.0
    %294 = vmatpush2.msra.mxu0 0.0
    %295 = vmatprep.subr.mxu0 0.0
    %296 = vmatpush2.msra.mxu0 0.0
    %297 = vmatprep.subr.mxu0 0.0
    %298 = vmatpush2.msra.mxu0 0.0
    %299 = vmatprep.subr.mxu0 0.0
    %300 = vmatpush2.msra.mxu0 0.0
    %301 = vmatprep.subr.mxu0 0.0
    %302 = vmatpush2.msra.mxu0 0.0
    %303 = vmatprep.mubr.f32.mxu0 0.0
    %304 = vmatmul.mubr.f32.gmra.mxu0 %v225
    %v305 = vpop.f32.mrf.mxu0
    %v306 = vadd.f32 %v128, %v305
    %v307 = vpop.f32.mrf.mxu0
    %v308 = vadd.f32 %v130, %v307
    %309 = vmatprep.mubr.f32.mxu0 0.0
    %310 = vmatmul.mubr.f32.gmra.mxu0 %v228
    %v311 = vpop.f32.mrf.mxu0
    %v312 = vadd.f32 %v134, %v311
    %v313 = vpop.f32.mrf.mxu0
    %v314 = vadd.f32 %v136, %v313
    %315 = vmatprep.mubr.f32.mxu0 0.0
    %316 = vmatmul.mubr.f32.gmra.mxu0 %v231
    %v317 = vpop.f32.mrf.mxu0
    %v318 = vadd.f32 %v140, %v317
    %v319 = vpop.f32.mrf.mxu0
    %v320 = vadd.f32 %v142, %v319
    %321 = vdwg.mxu0
    %322 = vmatprep.subr.mxu0 0.0
    %323 = vmatpush1.msra.mxu0 0.0
    %324 = vmatprep.subr.mxu0 0.0
    %325 = vmatpush1.msra.mxu0 0.0
    %326 = vmatprep.subr.mxu0 0.0
    %327 = vmatpush1.msra.mxu0 0.0
    %328 = vmatprep.subr.mxu0 0.0
    %329 = vmatpush1.msra.mxu0 0.0
    %330 = vmatprep.subr.mxu0 0.0
    %331 = vmatpush1.msra.mxu0 0.0
    %332 = vmatprep.subr.mxu0 0.0
    %333 = vmatpush1.msra.mxu0 0.0
    %334 = vmatprep.subr.mxu0 0.0
    %335 = vmatpush1.msra.mxu0 0.0
    %336 = vmatprep.subr.mxu0 0.0
    %337 = vmatpush1.msra.mxu0 0.0
    %338 = vmatprep.subr.mxu0 0.0
    %339 = vmatpush1.msra.mxu0 0.0
    %340 = vmatprep.subr.mxu0 0.0
    %341 = vmatpush1.msra.mxu0 0.0
    %342 = vmatprep.subr.mxu0 0.0
    %343 = vmatpush1.msra.mxu0 0.0
    %344 = vmatprep.subr.mxu0 0.0
    %345 = vmatpush1.msra.mxu0 0.0
    %346 = vmatprep.subr.mxu0 0.0
    %347 = vmatpush1.msra.mxu0 0.0
    %348 = vmatprep.subr.mxu0 0.0
    %349 = vmatpush1.msra.mxu0 0.0
    %350 = vmatprep.subr.mxu0 0.0
    %351 = vmatpush1.msra.mxu0 0.0
    %352 = vmatprep.subr.mxu0 0.0
    %353 = vmatpush1.msra.mxu0 %v237
    %354 = vmatprep.subr.mxu0 0.0
    %355 = vmatpush2.msra.mxu0 0.0
    %356 = vmatprep.subr.mxu0 0.0
    %357 = vmatpush2.msra.mxu0 0.0
    %358 = vmatprep.subr.mxu0 0.0
    %359 = vmatpush2.msra.mxu0 0.0
    %360 = vmatprep.subr.mxu0 0.0
    %361 = vmatpush2.msra.mxu0 0.0
    %362 = vmatprep.subr.mxu0 0.0
    %363 = vmatpush2.msra.mxu0 0.0
    %364 = vmatprep.subr.mxu0 0.0
    %365 = vmatpush2.msra.mxu0 0.0
    %366 = vmatprep.subr.mxu0 0.0
    %367 = vmatpush2.msra.mxu0 0.0
    %368 = vmatprep.subr.mxu0 0.0
    %369 = vmatpush2.msra.mxu0 0.0
    %370 = vmatprep.subr.mxu0 0.0
    %371 = vmatpush2.msra.mxu0 0.0
    %372 = vmatprep.subr.mxu0 0.0
    %373 = vmatpush2.msra.mxu0 0.0
    %374 = vmatprep.subr.mxu0 0.0
    %375 = vmatpush2.msra.mxu0 0.0
    %376 = vmatprep.subr.mxu0 0.0
    %377 = vmatpush2.msra.mxu0 0.0
    %378 = vmatprep.subr.mxu0 0.0
    %379 = vmatpush2.msra.mxu0 0.0
    %380 = vmatprep.subr.mxu0 0.0
    %381 = vmatpush2.msra.mxu0 0.0
    %382 = vmatprep.subr.mxu0 0.0
    %383 = vmatpush2.msra.mxu0 0.0
    %384 = vmatprep.subr.mxu0 0.0
    %385 = vmatpush2.msra.mxu0 0.0
    %386 = vmatprep.mubr.f32.mxu0 0.0
    %387 = vmatmul.mubr.f32.gmra.mxu0 %v225
    %v388 = vpop.f32.mrf.mxu0
    %v389 = vadd.f32 %v211, %v388
    %v390 = vpop.f32.mrf.mxu0
    %391 = vmatprep.mubr.f32.mxu0 0.0
    %392 = vmatmul.mubr.f32.gmra.mxu0 %v228
    %v393 = vpop.f32.mrf.mxu0
    %v394 = vadd.f32 %v216, %v393
    %v395 = vpop.f32.mrf.mxu0
    %396 = vmatprep.mubr.f32.mxu0 0.0
    %397 = vmatmul.mubr.f32.gmra.mxu0 %v231
    %v398 = vpop.f32.mrf.mxu0
    %v399 = vadd.f32 %v221, %v398
    %v400 = vpop.f32.mrf.mxu0
    %401 = vdwg.mxu0
    %v402 = vld [vmem:[%s0] sm:$0xff]
    %v403 = vld [vmem:[%s0 + $0x8] sm:$0xf]
    %s404 = scalar_lea.vmem %s1, 48
    %v405 = vld [vmem:[%s404] sm:$0xff]
    %v406 = vld [vmem:[%s404 + $0x8] sm:$0xff]
    %v407 = vld [vmem:[%s404 + $0x10] sm:$0xff]
    %v410 = vcombine.high %v402, %v402
    %411 = vrot.lane.b32.xlu0 %v402, 126
    %v412 = vpop.permute.xlu0 %411
    %413 = vrot.lane.b32.xlu0 %v410, 126
    %v414 = vpop.permute.xlu0 %413
    %415 = vrot.lane.b32.xlu0 %v403, 126
    %v416 = vpop.permute.xlu0 %415
    %vm417 = vcmask 1031168
    %v418 = vsel %vm417, %v412, %v414
    %v419 = vsel %vm417, %v414, %v416
    %v421 = vsel %vm44, %v405, 0
    %v424 = vsel %vm44, %v406, 0
    %v427 = vsel %vm44, %v407, 0
    %v429 = vsel %vm54, %v418, 0
    %v431 = vsel %vm54, %v419, 0
    %v433 = vsel %vm54, %v416, 0
    %435 = vmatprep.subr.mxu0 0.0
    %436 = vmatpush1.msra.mxu0 0.0
    %437 = vmatprep.subr.mxu0 0.0
    %438 = vmatpush1.msra.mxu0 0.0
    %439 = vmatprep.subr.mxu0 0.0
    %440 = vmatpush1.msra.mxu0 0.0
    %441 = vmatprep.subr.mxu0 0.0
    %442 = vmatpush1.msra.mxu0 0.0
    %443 = vmatprep.subr.mxu0 0.0
    %444 = vmatpush1.msra.mxu0 0.0
    %445 = vmatprep.subr.mxu0 0.0
    %446 = vmatpush1.msra.mxu0 0.0
    %447 = vmatprep.subr.mxu0 0.0
    %448 = vmatpush1.msra.mxu0 0.0
    %449 = vmatprep.subr.mxu0 0.0
    %450 = vmatpush1.msra.mxu0 0.0
    %451 = vmatprep.subr.mxu0 0.0
    %452 = vmatpush1.msra.mxu0 0.0
    %453 = vmatprep.subr.mxu0 0.0
    %454 = vmatpush1.msra.mxu0 0.0
    %455 = vmatprep.subr.mxu0 0.0
    %456 = vmatpush1.msra.mxu0 0.0
    %457 = vmatprep.subr.mxu0 0.0
    %458 = vmatpush1.msra.mxu0 0.0
    %459 = vmatprep.subr.mxu0 0.0
    %460 = vmatpush1.msra.mxu0 0.0
    %461 = vmatprep.subr.mxu0 0.0
    %462 = vmatpush1.msra.mxu0 0.0
    %463 = vmatprep.subr.mxu0 0.0
    %464 = vmatpush1.msra.mxu0 0.0
    %465 = vmatprep.subr.mxu0 %v431
    %466 = vmatpush1.msra.mxu0 %v429
    %467 = vmatprep.subr.mxu0 0.0
    %468 = vmatpush2.msra.mxu0 0.0
    %469 = vmatprep.subr.mxu0 0.0
    %470 = vmatpush2.msra.mxu0 0.0
    %471 = vmatprep.subr.mxu0 0.0
    %472 = vmatpush2.msra.mxu0 0.0
    %473 = vmatprep.subr.mxu0 0.0
    %474 = vmatpush2.msra.mxu0 0.0
    %475 = vmatprep.subr.mxu0 0.0
    %476 = vmatpush2.msra.mxu0 0.0
    %477 = vmatprep.subr.mxu0 0.0
    %478 = vmatpush2.msra.mxu0 0.0
    %479 = vmatprep.subr.mxu0 0.0
    %480 = vmatpush2.msra.mxu0 0.0
    %481 = vmatprep.subr.mxu0 0.0
    %482 = vmatpush2.msra.mxu0 0.0
    %483 = vmatprep.subr.mxu0 0.0
    %484 = vmatpush2.msra.mxu0 0.0
    %485 = vmatprep.subr.mxu0 0.0
    %486 = vmatpush2.msra.mxu0 0.0
    %487 = vmatprep.subr.mxu0 0.0
    %488 = vmatpush2.msra.mxu0 0.0
    %489 = vmatprep.subr.mxu0 0.0
    %490 = vmatpush2.msra.mxu0 0.0
    %491 = vmatprep.subr.mxu0 0.0
    %492 = vmatpush2.msra.mxu0 0.0
    %493 = vmatprep.subr.mxu0 0.0
    %494 = vmatpush2.msra.mxu0 0.0
    %495 = vmatprep.subr.mxu0 0.0
    %496 = vmatpush2.msra.mxu0 0.0
    %497 = vmatprep.subr.mxu0 0.0
    %498 = vmatpush2.msra.mxu0 0.0
    %499 = vmatprep.mubr.f32.mxu0 0.0
    %500 = vmatmul.mubr.f32.gmra.mxu0 %v421
    %v501 = vpop.f32.mrf.mxu0
    %v502 = vadd.f32 0.0, %v501
    %v503 = vpop.f32.mrf.mxu0
    %v504 = vadd.f32 0.0, %v503
    %505 = vmatprep.mubr.f32.mxu0 0.0
    %506 = vmatmul.mubr.f32.gmra.mxu0 %v424
    %v507 = vpop.f32.mrf.mxu0
    %v508 = vadd.f32 0.0, %v507
    %v509 = vpop.f32.mrf.mxu0
    %v510 = vadd.f32 0.0, %v509
    %511 = vmatprep.mubr.f32.mxu0 0.0
    %512 = vmatmul.mubr.f32.gmra.mxu0 %v427
    %v513 = vpop.f32.mrf.mxu0
    %v514 = vadd.f32 0.0, %v513
    %v515 = vpop.f32.mrf.mxu0
    %v516 = vadd.f32 0.0, %v515
    %517 = vdwg.mxu0
    %518 = vmatprep.subr.mxu0 0.0
    %519 = vmatpush1.msra.mxu0 0.0
    %520 = vmatprep.subr.mxu0 0.0
    %521 = vmatpush1.msra.mxu0 0.0
    %522 = vmatprep.subr.mxu0 0.0
    %523 = vmatpush1.msra.mxu0 0.0
    %524 = vmatprep.subr.mxu0 0.0
    %525 = vmatpush1.msra.mxu0 0.0
    %526 = vmatprep.subr.mxu0 0.0
    %527 = vmatpush1.msra.mxu0 0.0
    %528 = vmatprep.subr.mxu0 0.0
    %529 = vmatpush1.msra.mxu0 0.0
    %530 = vmatprep.subr.mxu0 0.0
    %531 = vmatpush1.msra.mxu0 0.0
    %532 = vmatprep.subr.mxu0 0.0
    %533 = vmatpush1.msra.mxu0 0.0
    %534 = vmatprep.subr.mxu0 0.0
    %535 = vmatpush1.msra.mxu0 0.0
    %536 = vmatprep.subr.mxu0 0.0
    %537 = vmatpush1.msra.mxu0 0.0
    %538 = vmatprep.subr.mxu0 0.0
    %539 = vmatpush1.msra.mxu0 0.0
    %540 = vmatprep.subr.mxu0 0.0
    %541 = vmatpush1.msra.mxu0 0.0
    %542 = vmatprep.subr.mxu0 0.0
    %543 = vmatpush1.msra.mxu0 0.0
    %544 = vmatprep.subr.mxu0 0.0
    %545 = vmatpush1.msra.mxu0 0.0
    %546 = vmatprep.subr.mxu0 0.0
    %547 = vmatpush1.msra.mxu0 0.0
    %548 = vmatprep.subr.mxu0 0.0
    %549 = vmatpush1.msra.mxu0 %v433
    %550 = vmatprep.subr.mxu0 0.0
    %551 = vmatpush2.msra.mxu0 0.0
    %552 = vmatprep.subr.mxu0 0.0
    %553 = vmatpush2.msra.mxu0 0.0
    %554 = vmatprep.subr.mxu0 0.0
    %555 = vmatpush2.msra.mxu0 0.0
    %556 = vmatprep.subr.mxu0 0.0
    %557 = vmatpush2.msra.mxu0 0.0
    %558 = vmatprep.subr.mxu0 0.0
    %559 = vmatpush2.msra.mxu0 0.0
    %560 = vmatprep.subr.mxu0 0.0
    %561 = vmatpush2.msra.mxu0 0.0
    %562 = vmatprep.subr.mxu0 0.0
    %563 = vmatpush2.msra.mxu0 0.0
    %564 = vmatprep.subr.mxu0 0.0
    %565 = vmatpush2.msra.mxu0 0.0
    %566 = vmatprep.subr.mxu0 0.0
    %567 = vmatpush2.msra.mxu0 0.0
    %568 = vmatprep.subr.mxu0 0.0
    %569 = vmatpush2.msra.mxu0 0.0
    %570 = vmatprep.subr.mxu0 0.0
    %571 = vmatpush2.msra.mxu0 0.0
    %572 = vmatprep.subr.mxu0 0.0
    %573 = vmatpush2.msra.mxu0 0.0
    %574 = vmatprep.subr.mxu0 0.0
    %575 = vmatpush2.msra.mxu0 0.0
    %576 = vmatprep.subr.mxu0 0.0
    %577 = vmatpush2.msra.mxu0 0.0
    %578 = vmatprep.subr.mxu0 0.0
    %579 = vmatpush2.msra.mxu0 0.0
    %580 = vmatprep.subr.mxu0 0.0
    %581 = vmatpush2.msra.mxu0 0.0
    %582 = vmatprep.mubr.f32.mxu0 0.0
    %583 = vmatmul.mubr.f32.gmra.mxu0 %v421
    %v584 = vpop.f32.mrf.mxu0
    %v585 = vadd.f32 0.0, %v584
    %v586 = vpop.f32.mrf.mxu0
    %587 = vmatprep.mubr.f32.mxu0 0.0
    %588 = vmatmul.mubr.f32.gmra.mxu0 %v424
    %v589 = vpop.f32.mrf.mxu0
    %v590 = vadd.f32 0.0, %v589
    %v591 = vpop.f32.mrf.mxu0
    %592 = vmatprep.mubr.f32.mxu0 0.0
    %593 = vmatmul.mubr.f32.gmra.mxu0 %v427
    %v594 = vpop.f32.mrf.mxu0
    %v595 = vadd.f32 0.0, %v594
    %v596 = vpop.f32.mrf.mxu0
    %597 = vdwg.mxu0
    %v598 = vadd.f32 %v306, %v502
    %v599 = vadd.f32 %v308, %v504
    %v600 = vadd.f32 %v389, %v585
    %v601 = vadd.f32 %v312, %v508
    %v602 = vadd.f32 %v314, %v510
    %v603 = vadd.f32 %v394, %v590
    %v604 = vadd.f32 %v318, %v514
    %v605 = vadd.f32 %v320, %v516
    %v606 = vadd.f32 %v399, %v595
    %v607 = vld [vmem:[%s0] sm:$0xff]
    %v608 = vld [vmem:[%s0 + $0x8] sm:$0xf]
    %s609 = scalar_lea.vmem %s1, 72
    %v610 = vld [vmem:[%s609] sm:$0xff]
    %v611 = vld [vmem:[%s609 + $0x8] sm:$0xff]
    %v612 = vld [vmem:[%s609 + $0x10] sm:$0xff]
    %v615 = vcombine.high %v607, %v607
    %616 = vrot.lane.b32.xlu0 %v607, 110
    %v617 = vpop.permute.xlu0 %616
    %618 = vrot.lane.b32.xlu0 %v615, 110
    %v619 = vpop.permute.xlu0 %618
    %620 = vrot.lane.b32.xlu0 %v608, 110
    %v621 = vpop.permute.xlu0 %620
    %vm622 = vcmask 900096
    %v623 = vsel %vm622, %v617, %v619
    %v624 = vsel %vm622, %v619, %v621
    %v626 = vsel %vm44, %v610, 0
    %v629 = vsel %vm44, %v611, 0
    %v632 = vsel %vm44, %v612, 0
    %v634 = vsel %vm54, %v623, 0
    %v636 = vsel %vm54, %v624, 0
    %v638 = vsel %vm54, %v621, 0
    %640 = vmatprep.subr.mxu0 0.0
    %641 = vmatpush1.msra.mxu0 0.0
    %642 = vmatprep.subr.mxu0 0.0
    %643 = vmatpush1.msra.mxu0 0.0
    %644 = vmatprep.subr.mxu0 0.0
    %645 = vmatpush1.msra.mxu0 0.0
    %646 = vmatprep.subr.mxu0 0.0
    %647 = vmatpush1.msra.mxu0 0.0
    %648 = vmatprep.subr.mxu0 0.0
    %649 = vmatpush1.msra.mxu0 0.0
    %650 = vmatprep.subr.mxu0 0.0
    %651 = vmatpush1.msra.mxu0 0.0
    %652 = vmatprep.subr.mxu0 0.0
    %653 = vmatpush1.msra.mxu0 0.0
    %654 = vmatprep.subr.mxu0 0.0
    %655 = vmatpush1.msra.mxu0 0.0
    %656 = vmatprep.subr.mxu0 0.0
    %657 = vmatpush1.msra.mxu0 0.0
    %658 = vmatprep.subr.mxu0 0.0
    %659 = vmatpush1.msra.mxu0 0.0
    %660 = vmatprep.subr.mxu0 0.0
    %661 = vmatpush1.msra.mxu0 0.0
    %662 = vmatprep.subr.mxu0 0.0
    %663 = vmatpush1.msra.mxu0 0.0
    %664 = vmatprep.subr.mxu0 0.0
    %665 = vmatpush1.msra.mxu0 0.0
    %666 = vmatprep.subr.mxu0 0.0
    %667 = vmatpush1.msra.mxu0 0.0
    %668 = vmatprep.subr.mxu0 0.0
    %669 = vmatpush1.msra.mxu0 0.0
    %670 = vmatprep.subr.mxu0 %v636
    %671 = vmatpush1.msra.mxu0 %v634
    %672 = vmatprep.subr.mxu0 0.0
    %673 = vmatpush2.msra.mxu0 0.0
    %674 = vmatprep.subr.mxu0 0.0
    %675 = vmatpush2.msra.mxu0 0.0
    %676 = vmatprep.subr.mxu0 0.0
    %677 = vmatpush2.msra.mxu0 0.0
    %678 = vmatprep.subr.mxu0 0.0
    %679 = vmatpush2.msra.mxu0 0.0
    %680 = vmatprep.subr.mxu0 0.0
    %681 = vmatpush2.msra.mxu0 0.0
    %682 = vmatprep.subr.mxu0 0.0
    %683 = vmatpush2.msra.mxu0 0.0
    %684 = vmatprep.subr.mxu0 0.0
    %685 = vmatpush2.msra.mxu0 0.0
    %686 = vmatprep.subr.mxu0 0.0
    %687 = vmatpush2.msra.mxu0 0.0
    %688 = vmatprep.subr.mxu0 0.0
    %689 = vmatpush2.msra.mxu0 0.0
    %690 = vmatprep.subr.mxu0 0.0
    %691 = vmatpush2.msra.mxu0 0.0
    %692 = vmatprep.subr.mxu0 0.0
    %693 = vmatpush2.msra.mxu0 0.0
    %694 = vmatprep.subr.mxu0 0.0
    %695 = vmatpush2.msra.mxu0 0.0
    %696 = vmatprep.subr.mxu0 0.0
    %697 = vmatpush2.msra.mxu0 0.0
    %698 = vmatprep.subr.mxu0 0.0
    %699 = vmatpush2.msra.mxu0 0.0
    %700 = vmatprep.subr.mxu0 0.0
    %701 = vmatpush2.msra.mxu0 0.0
    %702 = vmatprep.subr.mxu0 0.0
    %703 = vmatpush2.msra.mxu0 0.0
    %704 = vmatprep.mubr.f32.mxu0 0.0
    %705 = vmatmul.mubr.f32.gmra.mxu0 %v626
    %v706 = vpop.f32.mrf.mxu0
    %v707 = vadd.f32 0.0, %v706
    %v708 = vpop.f32.mrf.mxu0
    %v709 = vadd.f32 0.0, %v708
    %710 = vmatprep.mubr.f32.mxu0 0.0
    %711 = vmatmul.mubr.f32.gmra.mxu0 %v629
    %v712 = vpop.f32.mrf.mxu0
    %v713 = vadd.f32 0.0, %v712
    %v714 = vpop.f32.mrf.mxu0
    %v715 = vadd.f32 0.0, %v714
    %716 = vmatprep.mubr.f32.mxu0 0.0
    %717 = vmatmul.mubr.f32.gmra.mxu0 %v632
    %v718 = vpop.f32.mrf.mxu0
    %v719 = vadd.f32 0.0, %v718
    %v720 = vpop.f32.mrf.mxu0
    %v721 = vadd.f32 0.0, %v720
    %722 = vdwg.mxu0
    %723 = vmatprep.subr.mxu0 0.0
    %724 = vmatpush1.msra.mxu0 0.0
    %725 = vmatprep.subr.mxu0 0.0
    %726 = vmatpush1.msra.mxu0 0.0
    %727 = vmatprep.subr.mxu0 0.0
    %728 = vmatpush1.msra.mxu0 0.0
    %729 = vmatprep.subr.mxu0 0.0
    %730 = vmatpush1.msra.mxu0 0.0
    %731 = vmatprep.subr.mxu0 0.0
    %732 = vmatpush1.msra.mxu0 0.0
    %733 = vmatprep.subr.mxu0 0.0
    %734 = vmatpush1.msra.mxu0 0.0
    %735 = vmatprep.subr.mxu0 0.0
    %736 = vmatpush1.msra.mxu0 0.0
    %737 = vmatprep.subr.mxu0 0.0
    %738 = vmatpush1.msra.mxu0 0.0
    %739 = vmatprep.subr.mxu0 0.0
    %740 = vmatpush1.msra.mxu0 0.0
    %741 = vmatprep.subr.mxu0 0.0
    %742 = vmatpush1.msra.mxu0 0.0
    %743 = vmatprep.subr.mxu0 0.0
    %744 = vmatpush1.msra.mxu0 0.0
    %745 = vmatprep.subr.mxu0 0.0
    %746 = vmatpush1.msra.mxu0 0.0
    %747 = vmatprep.subr.mxu0 0.0
    %748 = vmatpush1.msra.mxu0 0.0
    %749 = vmatprep.subr.mxu0 0.0
    %750 = vmatpush1.msra.mxu0 0.0
    %751 = vmatprep.subr.mxu0 0.0
    %752 = vmatpush1.msra.mxu0 0.0
    %753 = vmatprep.subr.mxu0 0.0
    %754 = vmatpush1.msra.mxu0 %v638
    %755 = vmatprep.subr.mxu0 0.0
    %756 = vmatpush2.msra.mxu0 0.0
    %757 = vmatprep.subr.mxu0 0.0
    %758 = vmatpush2.msra.mxu0 0.0
    %759 = vmatprep.subr.mxu0 0.0
    %760 = vmatpush2.msra.mxu0 0.0
    %761 = vmatprep.subr.mxu0 0.0
    %762 = vmatpush2.msra.mxu0 0.0
    %763 = vmatprep.subr.mxu0 0.0
    %764 = vmatpush2.msra.mxu0 0.0
    %765 = vmatprep.subr.mxu0 0.0
    %766 = vmatpush2.msra.mxu0 0.0
    %767 = vmatprep.subr.mxu0 0.0
    %768 = vmatpush2.msra.mxu0 0.0
    %769 = vmatprep.subr.mxu0 0.0
    %770 = vmatpush2.msra.mxu0 0.0
    %771 = vmatprep.subr.mxu0 0.0
    %772 = vmatpush2.msra.mxu0 0.0
    %773 = vmatprep.subr.mxu0 0.0
    %774 = vmatpush2.msra.mxu0 0.0
    %775 = vmatprep.subr.mxu0 0.0
    %776 = vmatpush2.msra.mxu0 0.0
    %777 = vmatprep.subr.mxu0 0.0
    %778 = vmatpush2.msra.mxu0 0.0
    %779 = vmatprep.subr.mxu0 0.0
    %780 = vmatpush2.msra.mxu0 0.0
    %781 = vmatprep.subr.mxu0 0.0
    %782 = vmatpush2.msra.mxu0 0.0
    %783 = vmatprep.subr.mxu0 0.0
    %784 = vmatpush2.msra.mxu0 0.0
    %785 = vmatprep.subr.mxu0 0.0
    %786 = vmatpush2.msra.mxu0 0.0
    %787 = vmatprep.mubr.f32.mxu0 0.0
    %788 = vmatmul.mubr.f32.gmra.mxu0 %v626
    %v789 = vpop.f32.mrf.mxu0
    %v790 = vadd.f32 0.0, %v789
    %v791 = vpop.f32.mrf.mxu0
    %792 = vmatprep.mubr.f32.mxu0 0.0
    %793 = vmatmul.mubr.f32.gmra.mxu0 %v629
    %v794 = vpop.f32.mrf.mxu0
    %v795 = vadd.f32 0.0, %v794
    %v796 = vpop.f32.mrf.mxu0
    %797 = vmatprep.mubr.f32.mxu0 0.0
    %798 = vmatmul.mubr.f32.gmra.mxu0 %v632
    %v799 = vpop.f32.mrf.mxu0
    %v800 = vadd.f32 0.0, %v799
    %v801 = vpop.f32.mrf.mxu0
    %802 = vdwg.mxu0
    %v803 = vadd.f32 %v598, %v707
    %v804 = vadd.f32 %v599, %v709
    %v805 = vadd.f32 %v600, %v790
    %v806 = vadd.f32 %v601, %v713
    %v807 = vadd.f32 %v602, %v715
    %v808 = vadd.f32 %v603, %v795
    %v809 = vadd.f32 %v604, %v719
    %v810 = vadd.f32 %v605, %v721
    %v811 = vadd.f32 %v606, %v800
    %v812 = vld [vmem:[%s0] sm:$0xff]
    %v813 = vld [vmem:[%s0 + $0x8] sm:$0xf]
    %s814 = scalar_lea.vmem %s1, 96
    %v815 = vld [vmem:[%s814] sm:$0xff]
    %v816 = vld [vmem:[%s814 + $0x8] sm:$0xff]
    %v817 = vld [vmem:[%s814 + $0x10] sm:$0xff]
    %v820 = vcombine.high %v812, %v812
    %821 = vrot.lane.b32.xlu0 %v812, 109
    %v822 = vpop.permute.xlu0 %821
    %823 = vrot.lane.b32.xlu0 %v820, 109
    %v824 = vpop.permute.xlu0 %823
    %825 = vrot.lane.b32.xlu0 %v813, 109
    %v826 = vpop.permute.xlu0 %825
    %vm827 = vcmask 891904
    %v828 = vsel %vm827, %v822, %v824
    %v829 = vsel %vm827, %v824, %v826
    %v831 = vsel %vm44, %v815, 0
    %v834 = vsel %vm44, %v816, 0
    %v837 = vsel %vm44, %v817, 0
    %v839 = vsel %vm54, %v828, 0
    %v841 = vsel %vm54, %v829, 0
    %v843 = vsel %vm54, %v826, 0
    %845 = vmatprep.subr.mxu0 0.0
    %846 = vmatpush1.msra.mxu0 0.0
    %847 = vmatprep.subr.mxu0 0.0
    %848 = vmatpush1.msra.mxu0 0.0
    %849 = vmatprep.subr.mxu0 0.0
    %850 = vmatpush1.msra.mxu0 0.0
    %851 = vmatprep.subr.mxu0 0.0
    %852 = vmatpush1.msra.mxu0 0.0
    %853 = vmatprep.subr.mxu0 0.0
    %854 = vmatpush1.msra.mxu0 0.0
    %855 = vmatprep.subr.mxu0 0.0
    %856 = vmatpush1.msra.mxu0 0.0
    %857 = vmatprep.subr.mxu0 0.0
    %858 = vmatpush1.msra.mxu0 0.0
    %859 = vmatprep.subr.mxu0 0.0
    %860 = vmatpush1.msra.mxu0 0.0
    %861 = vmatprep.subr.mxu0 0.0
    %862 = vmatpush1.msra.mxu0 0.0
    %863 = vmatprep.subr.mxu0 0.0
    %864 = vmatpush1.msra.mxu0 0.0
    %865 = vmatprep.subr.mxu0 0.0
    %866 = vmatpush1.msra.mxu0 0.0
    %867 = vmatprep.subr.mxu0 0.0
    %868 = vmatpush1.msra.mxu0 0.0
    %869 = vmatprep.subr.mxu0 0.0
    %870 = vmatpush1.msra.mxu0 0.0
    %871 = vmatprep.subr.mxu0 0.0
    %872 = vmatpush1.msra.mxu0 0.0
    %873 = vmatprep.subr.mxu0 0.0
    %874 = vmatpush1.msra.mxu0 0.0
    %875 = vmatprep.subr.mxu0 %v841
    %876 = vmatpush1.msra.mxu0 %v839
    %877 = vmatprep.subr.mxu0 0.0
    %878 = vmatpush2.msra.mxu0 0.0
    %879 = vmatprep.subr.mxu0 0.0
    %880 = vmatpush2.msra.mxu0 0.0
    %881 = vmatprep.subr.mxu0 0.0
    %882 = vmatpush2.msra.mxu0 0.0
    %883 = vmatprep.subr.mxu0 0.0
    %884 = vmatpush2.msra.mxu0 0.0
    %885 = vmatprep.subr.mxu0 0.0
    %886 = vmatpush2.msra.mxu0 0.0
    %887 = vmatprep.subr.mxu0 0.0
    %888 = vmatpush2.msra.mxu0 0.0
    %889 = vmatprep.subr.mxu0 0.0
    %890 = vmatpush2.msra.mxu0 0.0
    %891 = vmatprep.subr.mxu0 0.0
    %892 = vmatpush2.msra.mxu0 0.0
    %893 = vmatprep.subr.mxu0 0.0
    %894 = vmatpush2.msra.mxu0 0.0
    %895 = vmatprep.subr.mxu0 0.0
    %896 = vmatpush2.msra.mxu0 0.0
    %897 = vmatprep.subr.mxu0 0.0
    %898 = vmatpush2.msra.mxu0 0.0
    %899 = vmatprep.subr.mxu0 0.0
    %900 = vmatpush2.msra.mxu0 0.0
    %901 = vmatprep.subr.mxu0 0.0
    %902 = vmatpush2.msra.mxu0 0.0
    %903 = vmatprep.subr.mxu0 0.0
    %904 = vmatpush2.msra.mxu0 0.0
    %905 = vmatprep.subr.mxu0 0.0
    %906 = vmatpush2.msra.mxu0 0.0
    %907 = vmatprep.subr.mxu0 0.0
    %908 = vmatpush2.msra.mxu0 0.0
    %909 = vmatprep.mubr.f32.mxu0 0.0
    %910 = vmatmul.mubr.f32.gmra.mxu0 %v831
    %v911 = vpop.f32.mrf.mxu0
    %v912 = vadd.f32 0.0, %v911
    %v913 = vpop.f32.mrf.mxu0
    %v914 = vadd.f32 0.0, %v913
    %915 = vmatprep.mubr.f32.mxu0 0.0
    %916 = vmatmul.mubr.f32.gmra.mxu0 %v834
    %v917 = vpop.f32.mrf.mxu0
    %v918 = vadd.f32 0.0, %v917
    %v919 = vpop.f32.mrf.mxu0
    %v920 = vadd.f32 0.0, %v919
    %921 = vmatprep.mubr.f32.mxu0 0.0
    %922 = vmatmul.mubr.f32.gmra.mxu0 %v837
    %v923 = vpop.f32.mrf.mxu0
    %v924 = vadd.f32 0.0, %v923
    %v925 = vpop.f32.mrf.mxu0
    %v926 = vadd.f32 0.0, %v925
    %927 = vdwg.mxu0
    %928 = vmatprep.subr.mxu0 0.0
    %929 = vmatpush1.msra.mxu0 0.0
    %930 = vmatprep.subr.mxu0 0.0
    %931 = vmatpush1.msra.mxu0 0.0
    %932 = vmatprep.subr.mxu0 0.0
    %933 = vmatpush1.msra.mxu0 0.0
    %934 = vmatprep.subr.mxu0 0.0
    %935 = vmatpush1.msra.mxu0 0.0
    %936 = vmatprep.subr.mxu0 0.0
    %937 = vmatpush1.msra.mxu0 0.0
    %938 = vmatprep.subr.mxu0 0.0
    %939 = vmatpush1.msra.mxu0 0.0
    %940 = vmatprep.subr.mxu0 0.0
    %941 = vmatpush1.msra.mxu0 0.0
    %942 = vmatprep.subr.mxu0 0.0
    %943 = vmatpush1.msra.mxu0 0.0
    %944 = vmatprep.subr.mxu0 0.0
    %945 = vmatpush1.msra.mxu0 0.0
    %946 = vmatprep.subr.mxu0 0.0
    %947 = vmatpush1.msra.mxu0 0.0
    %948 = vmatprep.subr.mxu0 0.0
    %949 = vmatpush1.msra.mxu0 0.0
    %950 = vmatprep.subr.mxu0 0.0
    %951 = vmatpush1.msra.mxu0 0.0
    %952 = vmatprep.subr.mxu0 0.0
    %953 = vmatpush1.msra.mxu0 0.0
    %954 = vmatprep.subr.mxu0 0.0
    %955 = vmatpush1.msra.mxu0 0.0
    %956 = vmatprep.subr.mxu0 0.0
    %957 = vmatpush1.msra.mxu0 0.0
    %958 = vmatprep.subr.mxu0 0.0
    %959 = vmatpush1.msra.mxu0 %v843
    %960 = vmatprep.subr.mxu0 0.0
    %961 = vmatpush2.msra.mxu0 0.0
    %962 = vmatprep.subr.mxu0 0.0
    %963 = vmatpush2.msra.mxu0 0.0
    %964 = vmatprep.subr.mxu0 0.0
    %965 = vmatpush2.msra.mxu0 0.0
    %966 = vmatprep.subr.mxu0 0.0
    %967 = vmatpush2.msra.mxu0 0.0
    %968 = vmatprep.subr.mxu0 0.0
    %969 = vmatpush2.msra.mxu0 0.0
    %970 = vmatprep.subr.mxu0 0.0
    %971 = vmatpush2.msra.mxu0 0.0
    %972 = vmatprep.subr.mxu0 0.0
    %973 = vmatpush2.msra.mxu0 0.0
    %974 = vmatprep.subr.mxu0 0.0
    %975 = vmatpush2.msra.mxu0 0.0
    %976 = vmatprep.subr.mxu0 0.0
    %977 = vmatpush2.msra.mxu0 0.0
    %978 = vmatprep.subr.mxu0 0.0
    %979 = vmatpush2.msra.mxu0 0.0
    %980 = vmatprep.subr.mxu0 0.0
    %981 = vmatpush2.msra.mxu0 0.0
    %982 = vmatprep.subr.mxu0 0.0
    %983 = vmatpush2.msra.mxu0 0.0
    %984 = vmatprep.subr.mxu0 0.0
    %985 = vmatpush2.msra.mxu0 0.0
    %986 = vmatprep.subr.mxu0 0.0
    %987 = vmatpush2.msra.mxu0 0.0
    %988 = vmatprep.subr.mxu0 0.0
    %989 = vmatpush2.msra.mxu0 0.0
    %990 = vmatprep.subr.mxu0 0.0
    %991 = vmatpush2.msra.mxu0 0.0
    %992 = vmatprep.mubr.f32.mxu0 0.0
    %993 = vmatmul.mubr.f32.gmra.mxu0 %v831
    %v994 = vpop.f32.mrf.mxu0
    %v995 = vadd.f32 0.0, %v994
    %v996 = vpop.f32.mrf.mxu0
    %997 = vmatprep.mubr.f32.mxu0 0.0
    %998 = vmatmul.mubr.f32.gmra.mxu0 %v834
    %v999 = vpop.f32.mrf.mxu0
    %v1000 = vadd.f32 0.0, %v999
    %v1001 = vpop.f32.mrf.mxu0
    %1002 = vmatprep.mubr.f32.mxu0 0.0
    %1003 = vmatmul.mubr.f32.gmra.mxu0 %v837
    %v1004 = vpop.f32.mrf.mxu0
    %v1005 = vadd.f32 0.0, %v1004
    %v1006 = vpop.f32.mrf.mxu0
    %1007 = vdwg.mxu0
    %v1008 = vadd.f32 %v803, %v912
    %v1009 = vadd.f32 %v804, %v914
    %v1010 = vadd.f32 %v805, %v995
    %v1011 = vadd.f32 %v806, %v918
    %v1012 = vadd.f32 %v807, %v920
    %v1013 = vadd.f32 %v808, %v1000
    %v1014 = vadd.f32 %v809, %v924
    %v1015 = vadd.f32 %v810, %v926
    %v1016 = vadd.f32 %v811, %v1005
    %v1017 = vld [vmem:[%s0] sm:$0xff]
    %v1018 = vld [vmem:[%s0 + $0x8] sm:$0xf]
    %s1019 = scalar_lea.vmem %s1, 120
    %v1020 = vld [vmem:[%s1019] sm:$0xff]
    %v1021 = vld [vmem:[%s1019 + $0x8] sm:$0xff]
    %v1022 = vld [vmem:[%s1019 + $0x10] sm:$0xff]
    %v1025 = vcombine.high %v1017, %v1017
    %1026 = vrot.lane.b32.xlu0 %v1017, 108
    %v1027 = vpop.permute.xlu0 %1026
    %1028 = vrot.lane.b32.xlu0 %v1025, 108
    %v1029 = vpop.permute.xlu0 %1028
    %1030 = vrot.lane.b32.xlu0 %v1018, 108
    %v1031 = vpop.permute.xlu0 %1030
    %vm1032 = vcmask 883712
    %v1033 = vsel %vm1032, %v1027, %v1029
    %v1034 = vsel %vm1032, %v1029, %v1031
    %v1036 = vsel %vm44, %v1020, 0
    %v1039 = vsel %vm44, %v1021, 0
    %v1042 = vsel %vm44, %v1022, 0
    %v1044 = vsel %vm54, %v1033, 0
    %v1046 = vsel %vm54, %v1034, 0
    %v1048 = vsel %vm54, %v1031, 0
    %1050 = vmatprep.subr.mxu0 0.0
    %1051 = vmatpush1.msra.mxu0 0.0
    %1052 = vmatprep.subr.mxu0 0.0
    %1053 = vmatpush1.msra.mxu0 0.0
    %1054 = vmatprep.subr.mxu0 0.0
    %1055 = vmatpush1.msra.mxu0 0.0
    %1056 = vmatprep.subr.mxu0 0.0
    %1057 = vmatpush1.msra.mxu0 0.0
    %1058 = vmatprep.subr.mxu0 0.0
    %1059 = vmatpush1.msra.mxu0 0.0
    %1060 = vmatprep.subr.mxu0 0.0
    %1061 = vmatpush1.msra.mxu0 0.0
    %1062 = vmatprep.subr.mxu0 0.0
    %1063 = vmatpush1.msra.mxu0 0.0
    %1064 = vmatprep.subr.mxu0 0.0
    %1065 = vmatpush1.msra.mxu0 0.0
    %1066 = vmatprep.subr.mxu0 0.0
    %1067 = vmatpush1.msra.mxu0 0.0
    %1068 = vmatprep.subr.mxu0 0.0
    %1069 = vmatpush1.msra.mxu0 0.0
    %1070 = vmatprep.subr.mxu0 0.0
    %1071 = vmatpush1.msra.mxu0 0.0
    %1072 = vmatprep.subr.mxu0 0.0
    %1073 = vmatpush1.msra.mxu0 0.0
    %1074 = vmatprep.subr.mxu0 0.0
    %1075 = vmatpush1.msra.mxu0 0.0
    %1076 = vmatprep.subr.mxu0 0.0
    %1077 = vmatpush1.msra.mxu0 0.0
    %1078 = vmatprep.subr.mxu0 0.0
    %1079 = vmatpush1.msra.mxu0 0.0
    %1080 = vmatprep.subr.mxu0 %v1046
    %1081 = vmatpush1.msra.mxu0 %v1044
    %1082 = vmatprep.subr.mxu0 0.0
    %1083 = vmatpush2.msra.mxu0 0.0
    %1084 = vmatprep.subr.mxu0 0.0
    %1085 = vmatpush2.msra.mxu0 0.0
    %1086 = vmatprep.subr.mxu0 0.0
    %1087 = vmatpush2.msra.mxu0 0.0
    %1088 = vmatprep.subr.mxu0 0.0
    %1089 = vmatpush2.msra.mxu0 0.0
    %1090 = vmatprep.subr.mxu0 0.0
    %1091 = vmatpush2.msra.mxu0 0.0
    %1092 = vmatprep.subr.mxu0 0.0
    %1093 = vmatpush2.msra.mxu0 0.0
    %1094 = vmatprep.subr.mxu0 0.0
    %1095 = vmatpush2.msra.mxu0 0.0
    %1096 = vmatprep.subr.mxu0 0.0
    %1097 = vmatpush2.msra.mxu0 0.0
    %1098 = vmatprep.subr.mxu0 0.0
    %1099 = vmatpush2.msra.mxu0 0.0
    %1100 = vmatprep.subr.mxu0 0.0
    %1101 = vmatpush2.msra.mxu0 0.0
    %1102 = vmatprep.subr.mxu0 0.0
    %1103 = vmatpush2.msra.mxu0 0.0
    %1104 = vmatprep.subr.mxu0 0.0
    %1105 = vmatpush2.msra.mxu0 0.0
    %1106 = vmatprep.subr.mxu0 0.0
    %1107 = vmatpush2.msra.mxu0 0.0
    %1108 = vmatprep.subr.mxu0 0.0
    %1109 = vmatpush2.msra.mxu0 0.0
    %1110 = vmatprep.subr.mxu0 0.0
    %1111 = vmatpush2.msra.mxu0 0.0
    %1112 = vmatprep.subr.mxu0 0.0
    %1113 = vmatpush2.msra.mxu0 0.0
    %1114 = vmatprep.mubr.f32.mxu0 0.0
    %1115 = vmatmul.mubr.f32.gmra.mxu0 %v1036
    %v1116 = vpop.f32.mrf.mxu0
    %v1117 = vadd.f32 0.0, %v1116
    %v1118 = vpop.f32.mrf.mxu0
    %v1119 = vadd.f32 0.0, %v1118
    %1120 = vmatprep.mubr.f32.mxu0 0.0
    %1121 = vmatmul.mubr.f32.gmra.mxu0 %v1039
    %v1122 = vpop.f32.mrf.mxu0
    %v1123 = vadd.f32 0.0, %v1122
    %v1124 = vpop.f32.mrf.mxu0
    %v1125 = vadd.f32 0.0, %v1124
    %1126 = vmatprep.mubr.f32.mxu0 0.0
    %1127 = vmatmul.mubr.f32.gmra.mxu0 %v1042
    %v1128 = vpop.f32.mrf.mxu0
    %v1129 = vadd.f32 0.0, %v1128
    %v1130 = vpop.f32.mrf.mxu0
    %v1131 = vadd.f32 0.0, %v1130
    %1132 = vdwg.mxu0
    %1133 = vmatprep.subr.mxu0 0.0
    %1134 = vmatpush1.msra.mxu0 0.0
    %1135 = vmatprep.subr.mxu0 0.0
    %1136 = vmatpush1.msra.mxu0 0.0
    %1137 = vmatprep.subr.mxu0 0.0
    %1138 = vmatpush1.msra.mxu0 0.0
    %1139 = vmatprep.subr.mxu0 0.0
    %1140 = vmatpush1.msra.mxu0 0.0
    %1141 = vmatprep.subr.mxu0 0.0
    %1142 = vmatpush1.msra.mxu0 0.0
    %1143 = vmatprep.subr.mxu0 0.0
    %1144 = vmatpush1.msra.mxu0 0.0
    %1145 = vmatprep.subr.mxu0 0.0
    %1146 = vmatpush1.msra.mxu0 0.0
    %1147 = vmatprep.subr.mxu0 0.0
    %1148 = vmatpush1.msra.mxu0 0.0
    %1149 = vmatprep.subr.mxu0 0.0
    %1150 = vmatpush1.msra.mxu0 0.0
    %1151 = vmatprep.subr.mxu0 0.0
    %1152 = vmatpush1.msra.mxu0 0.0
    %1153 = vmatprep.subr.mxu0 0.0
    %1154 = vmatpush1.msra.mxu0 0.0
    %1155 = vmatprep.subr.mxu0 0.0
    %1156 = vmatpush1.msra.mxu0 0.0
    %1157 = vmatprep.subr.mxu0 0.0
    %1158 = vmatpush1.msra.mxu0 0.0
    %1159 = vmatprep.subr.mxu0 0.0
    %1160 = vmatpush1.msra.mxu0 0.0
    %1161 = vmatprep.subr.mxu0 0.0
    %1162 = vmatpush1.msra.mxu0 0.0
    %1163 = vmatprep.subr.mxu0 0.0
    %1164 = vmatpush1.msra.mxu0 %v1048
    %1165 = vmatprep.subr.mxu0 0.0
    %1166 = vmatpush2.msra.mxu0 0.0
    %1167 = vmatprep.subr.mxu0 0.0
    %1168 = vmatpush2.msra.mxu0 0.0
    %1169 = vmatprep.subr.mxu0 0.0
    %1170 = vmatpush2.msra.mxu0 0.0
    %1171 = vmatprep.subr.mxu0 0.0
    %1172 = vmatpush2.msra.mxu0 0.0
    %1173 = vmatprep.subr.mxu0 0.0
    %1174 = vmatpush2.msra.mxu0 0.0
    %1175 = vmatprep.subr.mxu0 0.0
    %1176 = vmatpush2.msra.mxu0 0.0
    %1177 = vmatprep.subr.mxu0 0.0
    %1178 = vmatpush2.msra.mxu0 0.0
    %1179 = vmatprep.subr.mxu0 0.0
    %1180 = vmatpush2.msra.mxu0 0.0
    %1181 = vmatprep.subr.mxu0 0.0
    %1182 = vmatpush2.msra.mxu0 0.0
    %1183 = vmatprep.subr.mxu0 0.0
    %1184 = vmatpush2.msra.mxu0 0.0
    %1185 = vmatprep.subr.mxu0 0.0
    %1186 = vmatpush2.msra.mxu0 0.0
    %1187 = vmatprep.subr.mxu0 0.0
    %1188 = vmatpush2.msra.mxu0 0.0
    %1189 = vmatprep.subr.mxu0 0.0
    %1190 = vmatpush2.msra.mxu0 0.0
    %1191 = vmatprep.subr.mxu0 0.0
    %1192 = vmatpush2.msra.mxu0 0.0
    %1193 = vmatprep.subr.mxu0 0.0
    %1194 = vmatpush2.msra.mxu0 0.0
    %1195 = vmatprep.subr.mxu0 0.0
    %1196 = vmatpush2.msra.mxu0 0.0
    %1197 = vmatprep.mubr.f32.mxu0 0.0
    %1198 = vmatmul.mubr.f32.gmra.mxu0 %v1036
    %v1199 = vpop.f32.mrf.mxu0
    %v1200 = vadd.f32 0.0, %v1199
    %v1201 = vpop.f32.mrf.mxu0
    %1202 = vmatprep.mubr.f32.mxu0 0.0
    %1203 = vmatmul.mubr.f32.gmra.mxu0 %v1039
    %v1204 = vpop.f32.mrf.mxu0
    %v1205 = vadd.f32 0.0, %v1204
    %v1206 = vpop.f32.mrf.mxu0
    %1207 = vmatprep.mubr.f32.mxu0 0.0
    %1208 = vmatmul.mubr.f32.gmra.mxu0 %v1042
    %v1209 = vpop.f32.mrf.mxu0
    %v1210 = vadd.f32 0.0, %v1209
    %v1211 = vpop.f32.mrf.mxu0
    %1212 = vdwg.mxu0
    %v1213 = vadd.f32 %v1008, %v1117
    %v1214 = vadd.f32 %v1009, %v1119
    %v1215 = vadd.f32 %v1010, %v1200
    %v1216 = vadd.f32 %v1011, %v1123
    %v1217 = vadd.f32 %v1012, %v1125
    %v1218 = vadd.f32 %v1013, %v1205
    %v1219 = vadd.f32 %v1014, %v1129
    %v1220 = vadd.f32 %v1015, %v1131
    %v1221 = vadd.f32 %v1016, %v1210
    %v1222 = vld [vmem:[%s0] sm:$0xff]
    %v1223 = vld [vmem:[%s0 + $0x8] sm:$0xf]
    %s1224 = scalar_lea.vmem %s1, 144
    %v1225 = vld [vmem:[%s1224] sm:$0xff]
    %v1226 = vld [vmem:[%s1224 + $0x8] sm:$0xff]
    %v1227 = vld [vmem:[%s1224 + $0x10] sm:$0xff]
    %v1230 = vcombine.high %v1222, %v1222
    %1231 = vrot.lane.b32.xlu0 %v1222, 92
    %v1232 = vpop.permute.xlu0 %1231
    %1233 = vrot.lane.b32.xlu0 %v1230, 92
    %v1234 = vpop.permute.xlu0 %1233
    %1235 = vrot.lane.b32.xlu0 %v1223, 92
    %v1236 = vpop.permute.xlu0 %1235
    %vm1237 = vcmask 752640
    %v1238 = vsel %vm1237, %v1232, %v1234
    %v1239 = vsel %vm1237, %v1234, %v1236
    %v1241 = vsel %vm44, %v1225, 0
    %v1244 = vsel %vm44, %v1226, 0
    %v1247 = vsel %vm44, %v1227, 0
    %v1249 = vsel %vm54, %v1238, 0
    %v1251 = vsel %vm54, %v1239, 0
    %v1253 = vsel %vm54, %v1236, 0
    %1255 = vmatprep.subr.mxu0 0.0
    %1256 = vmatpush1.msra.mxu0 0.0
    %1257 = vmatprep.subr.mxu0 0.0
    %1258 = vmatpush1.msra.mxu0 0.0
    %1259 = vmatprep.subr.mxu0 0.0
    %1260 = vmatpush1.msra.mxu0 0.0
    %1261 = vmatprep.subr.mxu0 0.0
    %1262 = vmatpush1.msra.mxu0 0.0
    %1263 = vmatprep.subr.mxu0 0.0
    %1264 = vmatpush1.msra.mxu0 0.0
    %1265 = vmatprep.subr.mxu0 0.0
    %1266 = vmatpush1.msra.mxu0 0.0
    %1267 = vmatprep.subr.mxu0 0.0
    %1268 = vmatpush1.msra.mxu0 0.0
    %1269 = vmatprep.subr.mxu0 0.0
    %1270 = vmatpush1.msra.mxu0 0.0
    %1271 = vmatprep.subr.mxu0 0.0
    %1272 = vmatpush1.msra.mxu0 0.0
    %1273 = vmatprep.subr.mxu0 0.0
    %1274 = vmatpush1.msra.mxu0 0.0
    %1275 = vmatprep.subr.mxu0 0.0
    %1276 = vmatpush1.msra.mxu0 0.0
    %1277 = vmatprep.subr.mxu0 0.0
    %1278 = vmatpush1.msra.mxu0 0.0
    %1279 = vmatprep.subr.mxu0 0.0
    %1280 = vmatpush1.msra.mxu0 0.0
    %1281 = vmatprep.subr.mxu0 0.0
    %1282 = vmatpush1.msra.mxu0 0.0
    %1283 = vmatprep.subr.mxu0 0.0
    %1284 = vmatpush1.msra.mxu0 0.0
    %1285 = vmatprep.subr.mxu0 %v1251
    %1286 = vmatpush1.msra.mxu0 %v1249
    %1287 = vmatprep.subr.mxu0 0.0
    %1288 = vmatpush2.msra.mxu0 0.0
    %1289 = vmatprep.subr.mxu0 0.0
    %1290 = vmatpush2.msra.mxu0 0.0
    %1291 = vmatprep.subr.mxu0 0.0
    %1292 = vmatpush2.msra.mxu0 0.0
    %1293 = vmatprep.subr.mxu0 0.0
    %1294 = vmatpush2.msra.mxu0 0.0
    %1295 = vmatprep.subr.mxu0 0.0
    %1296 = vmatpush2.msra.mxu0 0.0
    %1297 = vmatprep.subr.mxu0 0.0
    %1298 = vmatpush2.msra.mxu0 0.0
    %1299 = vmatprep.subr.mxu0 0.0
    %1300 = vmatpush2.msra.mxu0 0.0
    %1301 = vmatprep.subr.mxu0 0.0
    %1302 = vmatpush2.msra.mxu0 0.0
    %1303 = vmatprep.subr.mxu0 0.0
    %1304 = vmatpush2.msra.mxu0 0.0
    %1305 = vmatprep.subr.mxu0 0.0
    %1306 = vmatpush2.msra.mxu0 0.0
    %1307 = vmatprep.subr.mxu0 0.0
    %1308 = vmatpush2.msra.mxu0 0.0
    %1309 = vmatprep.subr.mxu0 0.0
    %1310 = vmatpush2.msra.mxu0 0.0
    %1311 = vmatprep.subr.mxu0 0.0
    %1312 = vmatpush2.msra.mxu0 0.0
    %1313 = vmatprep.subr.mxu0 0.0
    %1314 = vmatpush2.msra.mxu0 0.0
    %1315 = vmatprep.subr.mxu0 0.0
    %1316 = vmatpush2.msra.mxu0 0.0
    %1317 = vmatprep.subr.mxu0 0.0
    %1318 = vmatpush2.msra.mxu0 0.0
    %1319 = vmatprep.mubr.f32.mxu0 0.0
    %1320 = vmatmul.mubr.f32.gmra.mxu0 %v1241
    %v1321 = vpop.f32.mrf.mxu0
    %v1322 = vadd.f32 0.0, %v1321
    %v1323 = vpop.f32.mrf.mxu0
    %v1324 = vadd.f32 0.0, %v1323
    %1325 = vmatprep.mubr.f32.mxu0 0.0
    %1326 = vmatmul.mubr.f32.gmra.mxu0 %v1244
    %v1327 = vpop.f32.mrf.mxu0
    %v1328 = vadd.f32 0.0, %v1327
    %v1329 = vpop.f32.mrf.mxu0
    %v1330 = vadd.f32 0.0, %v1329
    %1331 = vmatprep.mubr.f32.mxu0 0.0
    %1332 = vmatmul.mubr.f32.gmra.mxu0 %v1247
    %v1333 = vpop.f32.mrf.mxu0
    %v1334 = vadd.f32 0.0, %v1333
    %v1335 = vpop.f32.mrf.mxu0
    %v1336 = vadd.f32 0.0, %v1335
    %1337 = vdwg.mxu0
    %1338 = vmatprep.subr.mxu0 0.0
    %1339 = vmatpush1.msra.mxu0 0.0
    %1340 = vmatprep.subr.mxu0 0.0
    %1341 = vmatpush1.msra.mxu0 0.0
    %1342 = vmatprep.subr.mxu0 0.0
    %1343 = vmatpush1.msra.mxu0 0.0
    %1344 = vmatprep.subr.mxu0 0.0
    %1345 = vmatpush1.msra.mxu0 0.0
    %1346 = vmatprep.subr.mxu0 0.0
    %1347 = vmatpush1.msra.mxu0 0.0
    %1348 = vmatprep.subr.mxu0 0.0
    %1349 = vmatpush1.msra.mxu0 0.0
    %1350 = vmatprep.subr.mxu0 0.0
    %1351 = vmatpush1.msra.mxu0 0.0
    %1352 = vmatprep.subr.mxu0 0.0
    %1353 = vmatpush1.msra.mxu0 0.0
    %1354 = vmatprep.subr.mxu0 0.0
    %1355 = vmatpush1.msra.mxu0 0.0
    %1356 = vmatprep.subr.mxu0 0.0
    %1357 = vmatpush1.msra.mxu0 0.0
    %1358 = vmatprep.subr.mxu0 0.0
    %1359 = vmatpush1.msra.mxu0 0.0
    %1360 = vmatprep.subr.mxu0 0.0
    %1361 = vmatpush1.msra.mxu0 0.0
    %1362 = vmatprep.subr.mxu0 0.0
    %1363 = vmatpush1.msra.mxu0 0.0
    %1364 = vmatprep.subr.mxu0 0.0
    %1365 = vmatpush1.msra.mxu0 0.0
    %1366 = vmatprep.subr.mxu0 0.0
    %1367 = vmatpush1.msra.mxu0 0.0
    %1368 = vmatprep.subr.mxu0 0.0
    %1369 = vmatpush1.msra.mxu0 %v1253
    %1370 = vmatprep.subr.mxu0 0.0
    %1371 = vmatpush2.msra.mxu0 0.0
    %1372 = vmatprep.subr.mxu0 0.0
    %1373 = vmatpush2.msra.mxu0 0.0
    %1374 = vmatprep.subr.mxu0 0.0
    %1375 = vmatpush2.msra.mxu0 0.0
    %1376 = vmatprep.subr.mxu0 0.0
    %1377 = vmatpush2.msra.mxu0 0.0
    %1378 = vmatprep.subr.mxu0 0.0
    %1379 = vmatpush2.msra.mxu0 0.0
    %1380 = vmatprep.subr.mxu0 0.0
    %1381 = vmatpush2.msra.mxu0 0.0
    %1382 = vmatprep.subr.mxu0 0.0
    %1383 = vmatpush2.msra.mxu0 0.0
    %1384 = vmatprep.subr.mxu0 0.0
    %1385 = vmatpush2.msra.mxu0 0.0
    %1386 = vmatprep.subr.mxu0 0.0
    %1387 = vmatpush2.msra.mxu0 0.0
    %1388 = vmatprep.subr.mxu0 0.0
    %1389 = vmatpush2.msra.mxu0 0.0
    %1390 = vmatprep.subr.mxu0 0.0
    %1391 = vmatpush2.msra.mxu0 0.0
    %1392 = vmatprep.subr.mxu0 0.0
    %1393 = vmatpush2.msra.mxu0 0.0
    %1394 = vmatprep.subr.mxu0 0.0
    %1395 = vmatpush2.msra.mxu0 0.0
    %1396 = vmatprep.subr.mxu0 0.0
    %1397 = vmatpush2.msra.mxu0 0.0
    %1398 = vmatprep.subr.mxu0 0.0
    %1399 = vmatpush2.msra.mxu0 0.0
    %1400 = vmatprep.subr.mxu0 0.0
    %1401 = vmatpush2.msra.mxu0 0.0
    %1402 = vmatprep.mubr.f32.mxu0 0.0
    %1403 = vmatmul.mubr.f32.gmra.mxu0 %v1241
    %v1404 = vpop.f32.mrf.mxu0
    %v1405 = vadd.f32 0.0, %v1404
    %v1406 = vpop.f32.mrf.mxu0
    %1407 = vmatprep.mubr.f32.mxu0 0.0
    %1408 = vmatmul.mubr.f32.gmra.mxu0 %v1244
    %v1409 = vpop.f32.mrf.mxu0
    %v1410 = vadd.f32 0.0, %v1409
    %v1411 = vpop.f32.mrf.mxu0
    %1412 = vmatprep.mubr.f32.mxu0 0.0
    %1413 = vmatmul.mubr.f32.gmra.mxu0 %v1247
    %v1414 = vpop.f32.mrf.mxu0
    %v1415 = vadd.f32 0.0, %v1414
    %v1416 = vpop.f32.mrf.mxu0
    %1417 = vdwg.mxu0
    %v1418 = vadd.f32 %v1213, %v1322
    %v1419 = vadd.f32 %v1214, %v1324
    %v1420 = vadd.f32 %v1215, %v1405
    %v1421 = vadd.f32 %v1216, %v1328
    %v1422 = vadd.f32 %v1217, %v1330
    %v1423 = vadd.f32 %v1218, %v1410
    %v1424 = vadd.f32 %v1219, %v1334
    %v1425 = vadd.f32 %v1220, %v1336
    %v1426 = vadd.f32 %v1221, %v1415
    %v1427 = vld [vmem:[%s0] sm:$0xff]
    %v1428 = vld [vmem:[%s0 + $0x8] sm:$0xf]
    %s1429 = scalar_lea.vmem %s1, 168
    %v1430 = vld [vmem:[%s1429] sm:$0xff]
    %v1431 = vld [vmem:[%s1429 + $0x8] sm:$0xff]
    %v1432 = vld [vmem:[%s1429 + $0x10] sm:$0xff]
    %v1435 = vcombine.high %v1427, %v1427
    %1436 = vrot.lane.b32.xlu0 %v1427, 91
    %v1437 = vpop.permute.xlu0 %1436
    %1438 = vrot.lane.b32.xlu0 %v1435, 91
    %v1439 = vpop.permute.xlu0 %1438
    %1440 = vrot.lane.b32.xlu0 %v1428, 91
    %v1441 = vpop.permute.xlu0 %1440
    %vm1442 = vcmask 744448
    %v1443 = vsel %vm1442, %v1437, %v1439
    %v1444 = vsel %vm1442, %v1439, %v1441
    %v1446 = vsel %vm44, %v1430, 0
    %v1449 = vsel %vm44, %v1431, 0
    %v1452 = vsel %vm44, %v1432, 0
    %v1454 = vsel %vm54, %v1443, 0
    %v1456 = vsel %vm54, %v1444, 0
    %v1458 = vsel %vm54, %v1441, 0
    %1460 = vmatprep.subr.mxu0 0.0
    %1461 = vmatpush1.msra.mxu0 0.0
    %1462 = vmatprep.subr.mxu0 0.0
    %1463 = vmatpush1.msra.mxu0 0.0
    %1464 = vmatprep.subr.mxu0 0.0
    %1465 = vmatpush1.msra.mxu0 0.0
    %1466 = vmatprep.subr.mxu0 0.0
    %1467 = vmatpush1.msra.mxu0 0.0
    %1468 = vmatprep.subr.mxu0 0.0
    %1469 = vmatpush1.msra.mxu0 0.0
    %1470 = vmatprep.subr.mxu0 0.0
    %1471 = vmatpush1.msra.mxu0 0.0
    %1472 = vmatprep.subr.mxu0 0.0
    %1473 = vmatpush1.msra.mxu0 0.0
    %1474 = vmatprep.subr.mxu0 0.0
    %1475 = vmatpush1.msra.mxu0 0.0
    %1476 = vmatprep.subr.mxu0 0.0
    %1477 = vmatpush1.msra.mxu0 0.0
    %1478 = vmatprep.subr.mxu0 0.0
    %1479 = vmatpush1.msra.mxu0 0.0
    %1480 = vmatprep.subr.mxu0 0.0
    %1481 = vmatpush1.msra.mxu0 0.0
    %1482 = vmatprep.subr.mxu0 0.0
    %1483 = vmatpush1.msra.mxu0 0.0
    %1484 = vmatprep.subr.mxu0 0.0
    %1485 = vmatpush1.msra.mxu0 0.0
    %1486 = vmatprep.subr.mxu0 0.0
    %1487 = vmatpush1.msra.mxu0 0.0
    %1488 = vmatprep.subr.mxu0 0.0
    %1489 = vmatpush1.msra.mxu0 0.0
    %1490 = vmatprep.subr.mxu0 %v1456
    %1491 = vmatpush1.msra.mxu0 %v1454
    %1492 = vmatprep.subr.mxu0 0.0
    %1493 = vmatpush2.msra.mxu0 0.0
    %1494 = vmatprep.subr.mxu0 0.0
    %1495 = vmatpush2.msra.mxu0 0.0
    %1496 = vmatprep.subr.mxu0 0.0
    %1497 = vmatpush2.msra.mxu0 0.0
    %1498 = vmatprep.subr.mxu0 0.0
    %1499 = vmatpush2.msra.mxu0 0.0
    %1500 = vmatprep.subr.mxu0 0.0
    %1501 = vmatpush2.msra.mxu0 0.0
    %1502 = vmatprep.subr.mxu0 0.0
    %1503 = vmatpush2.msra.mxu0 0.0
    %1504 = vmatprep.subr.mxu0 0.0
    %1505 = vmatpush2.msra.mxu0 0.0
    %1506 = vmatprep.subr.mxu0 0.0
    %1507 = vmatpush2.msra.mxu0 0.0
    %1508 = vmatprep.subr.mxu0 0.0
    %1509 = vmatpush2.msra.mxu0 0.0
    %1510 = vmatprep.subr.mxu0 0.0
    %1511 = vmatpush2.msra.mxu0 0.0
    %1512 = vmatprep.subr.mxu0 0.0
    %1513 = vmatpush2.msra.mxu0 0.0
    %1514 = vmatprep.subr.mxu0 0.0
    %1515 = vmatpush2.msra.mxu0 0.0
    %1516 = vmatprep.subr.mxu0 0.0
    %1517 = vmatpush2.msra.mxu0 0.0
    %1518 = vmatprep.subr.mxu0 0.0
    %1519 = vmatpush2.msra.mxu0 0.0
    %1520 = vmatprep.subr.mxu0 0.0
    %1521 = vmatpush2.msra.mxu0 0.0
    %1522 = vmatprep.subr.mxu0 0.0
    %1523 = vmatpush2.msra.mxu0 0.0
    %1524 = vmatprep.mubr.f32.mxu0 0.0
    %1525 = vmatmul.mubr.f32.gmra.mxu0 %v1446
    %v1526 = vpop.f32.mrf.mxu0
    %v1527 = vadd.f32 0.0, %v1526
    %v1528 = vpop.f32.mrf.mxu0
    %v1529 = vadd.f32 0.0, %v1528
    %1530 = vmatprep.mubr.f32.mxu0 0.0
    %1531 = vmatmul.mubr.f32.gmra.mxu0 %v1449
    %v1532 = vpop.f32.mrf.mxu0
    %v1533 = vadd.f32 0.0, %v1532
    %v1534 = vpop.f32.mrf.mxu0
    %v1535 = vadd.f32 0.0, %v1534
    %1536 = vmatprep.mubr.f32.mxu0 0.0
    %1537 = vmatmul.mubr.f32.gmra.mxu0 %v1452
    %v1538 = vpop.f32.mrf.mxu0
    %v1539 = vadd.f32 0.0, %v1538
    %v1540 = vpop.f32.mrf.mxu0
    %v1541 = vadd.f32 0.0, %v1540
    %1542 = vdwg.mxu0
    %1543 = vmatprep.subr.mxu0 0.0
    %1544 = vmatpush1.msra.mxu0 0.0
    %1545 = vmatprep.subr.mxu0 0.0
    %1546 = vmatpush1.msra.mxu0 0.0
    %1547 = vmatprep.subr.mxu0 0.0
    %1548 = vmatpush1.msra.mxu0 0.0
    %1549 = vmatprep.subr.mxu0 0.0
    %1550 = vmatpush1.msra.mxu0 0.0
    %1551 = vmatprep.subr.mxu0 0.0
    %1552 = vmatpush1.msra.mxu0 0.0
    %1553 = vmatprep.subr.mxu0 0.0
    %1554 = vmatpush1.msra.mxu0 0.0
    %1555 = vmatprep.subr.mxu0 0.0
    %1556 = vmatpush1.msra.mxu0 0.0
    %1557 = vmatprep.subr.mxu0 0.0
    %1558 = vmatpush1.msra.mxu0 0.0
    %1559 = vmatprep.subr.mxu0 0.0
    %1560 = vmatpush1.msra.mxu0 0.0
    %1561 = vmatprep.subr.mxu0 0.0
    %1562 = vmatpush1.msra.mxu0 0.0
    %1563 = vmatprep.subr.mxu0 0.0
    %1564 = vmatpush1.msra.mxu0 0.0
    %1565 = vmatprep.subr.mxu0 0.0
    %1566 = vmatpush1.msra.mxu0 0.0
    %1567 = vmatprep.subr.mxu0 0.0
    %1568 = vmatpush1.msra.mxu0 0.0
    %1569 = vmatprep.subr.mxu0 0.0
    %1570 = vmatpush1.msra.mxu0 0.0
    %1571 = vmatprep.subr.mxu0 0.0
    %1572 = vmatpush1.msra.mxu0 0.0
    %1573 = vmatprep.subr.mxu0 0.0
    %1574 = vmatpush1.msra.mxu0 %v1458
    %1575 = vmatprep.subr.mxu0 0.0
    %1576 = vmatpush2.msra.mxu0 0.0
    %1577 = vmatprep.subr.mxu0 0.0
    %1578 = vmatpush2.msra.mxu0 0.0
    %1579 = vmatprep.subr.mxu0 0.0
    %1580 = vmatpush2.msra.mxu0 0.0
    %1581 = vmatprep.subr.mxu0 0.0
    %1582 = vmatpush2.msra.mxu0 0.0
    %1583 = vmatprep.subr.mxu0 0.0
    %1584 = vmatpush2.msra.mxu0 0.0
    %1585 = vmatprep.subr.mxu0 0.0
    %1586 = vmatpush2.msra.mxu0 0.0
    %1587 = vmatprep.subr.mxu0 0.0
    %1588 = vmatpush2.msra.mxu0 0.0
    %1589 = vmatprep.subr.mxu0 0.0
    %1590 = vmatpush2.msra.mxu0 0.0
    %1591 = vmatprep.subr.mxu0 0.0
    %1592 = vmatpush2.msra.mxu0 0.0
    %1593 = vmatprep.subr.mxu0 0.0
    %1594 = vmatpush2.msra.mxu0 0.0
    %1595 = vmatprep.subr.mxu0 0.0
    %1596 = vmatpush2.msra.mxu0 0.0
    %1597 = vmatprep.subr.mxu0 0.0
    %1598 = vmatpush2.msra.mxu0 0.0
    %1599 = vmatprep.subr.mxu0 0.0
    %1600 = vmatpush2.msra.mxu0 0.0
    %1601 = vmatprep.subr.mxu0 0.0
    %1602 = vmatpush2.msra.mxu0 0.0
    %1603 = vmatprep.subr.mxu0 0.0
    %1604 = vmatpush2.msra.mxu0 0.0
    %1605 = vmatprep.subr.mxu0 0.0
    %1606 = vmatpush2.msra.mxu0 0.0
    %1607 = vmatprep.mubr.f32.mxu0 0.0
    %1608 = vmatmul.mubr.f32.gmra.mxu0 %v1446
    %v1609 = vpop.f32.mrf.mxu0
    %v1610 = vadd.f32 0.0, %v1609
    %v1611 = vpop.f32.mrf.mxu0
    %1612 = vmatprep.mubr.f32.mxu0 0.0
    %1613 = vmatmul.mubr.f32.gmra.mxu0 %v1449
    %v1614 = vpop.f32.mrf.mxu0
    %v1615 = vadd.f32 0.0, %v1614
    %v1616 = vpop.f32.mrf.mxu0
    %1617 = vmatprep.mubr.f32.mxu0 0.0
    %1618 = vmatmul.mubr.f32.gmra.mxu0 %v1452
    %v1619 = vpop.f32.mrf.mxu0
    %v1620 = vadd.f32 0.0, %v1619
    %v1621 = vpop.f32.mrf.mxu0
    %1622 = vdwg.mxu0
    %v1623 = vadd.f32 %v1418, %v1527
    %v1624 = vadd.f32 %v1419, %v1529
    %v1625 = vadd.f32 %v1420, %v1610
    %v1626 = vadd.f32 %v1421, %v1533
    %v1627 = vadd.f32 %v1422, %v1535
    %v1628 = vadd.f32 %v1423, %v1615
    %v1629 = vadd.f32 %v1424, %v1539
    %v1630 = vadd.f32 %v1425, %v1541
    %v1631 = vadd.f32 %v1426, %v1620
    %v1632 = vld [vmem:[%s0] sm:$0xff]
    %v1633 = vld [vmem:[%s0 + $0x8] sm:$0xf]
    %s1634 = scalar_lea.vmem %s1, 192
    %v1635 = vld [vmem:[%s1634] sm:$0xff]
    %v1636 = vld [vmem:[%s1634 + $0x8] sm:$0xff]
    %v1637 = vld [vmem:[%s1634 + $0x10] sm:$0xff]
    %v1640 = vcombine.high %v1632, %v1632
    %1641 = vrot.lane.b32.xlu0 %v1632, 90
    %v1642 = vpop.permute.xlu0 %1641
    %1643 = vrot.lane.b32.xlu0 %v1640, 90
    %v1644 = vpop.permute.xlu0 %1643
    %1645 = vrot.lane.b32.xlu0 %v1633, 90
    %v1646 = vpop.permute.xlu0 %1645
    %vm1647 = vcmask 736256
    %v1648 = vsel %vm1647, %v1642, %v1644
    %v1649 = vsel %vm1647, %v1644, %v1646
    %v1651 = vsel %vm44, %v1635, 0
    %v1654 = vsel %vm44, %v1636, 0
    %v1657 = vsel %vm44, %v1637, 0
    %v1659 = vsel %vm54, %v1648, 0
    %v1661 = vsel %vm54, %v1649, 0
    %v1663 = vsel %vm54, %v1646, 0
    %1665 = vmatprep.subr.mxu0 0.0
    %1666 = vmatpush1.msra.mxu0 0.0
    %1667 = vmatprep.subr.mxu0 0.0
    %1668 = vmatpush1.msra.mxu0 0.0
    %1669 = vmatprep.subr.mxu0 0.0
    %1670 = vmatpush1.msra.mxu0 0.0
    %1671 = vmatprep.subr.mxu0 0.0
    %1672 = vmatpush1.msra.mxu0 0.0
    %1673 = vmatprep.subr.mxu0 0.0
    %1674 = vmatpush1.msra.mxu0 0.0
    %1675 = vmatprep.subr.mxu0 0.0
    %1676 = vmatpush1.msra.mxu0 0.0
    %1677 = vmatprep.subr.mxu0 0.0
    %1678 = vmatpush1.msra.mxu0 0.0
    %1679 = vmatprep.subr.mxu0 0.0
    %1680 = vmatpush1.msra.mxu0 0.0
    %1681 = vmatprep.subr.mxu0 0.0
    %1682 = vmatpush1.msra.mxu0 0.0
    %1683 = vmatprep.subr.mxu0 0.0
    %1684 = vmatpush1.msra.mxu0 0.0
    %1685 = vmatprep.subr.mxu0 0.0
    %1686 = vmatpush1.msra.mxu0 0.0
    %1687 = vmatprep.subr.mxu0 0.0
    %1688 = vmatpush1.msra.mxu0 0.0
    %1689 = vmatprep.subr.mxu0 0.0
    %1690 = vmatpush1.msra.mxu0 0.0
    %1691 = vmatprep.subr.mxu0 0.0
    %1692 = vmatpush1.msra.mxu0 0.0
    %1693 = vmatprep.subr.mxu0 0.0
    %1694 = vmatpush1.msra.mxu0 0.0
    %1695 = vmatprep.subr.mxu0 %v1661
    %1696 = vmatpush1.msra.mxu0 %v1659
    %1697 = vmatprep.subr.mxu0 0.0
    %1698 = vmatpush2.msra.mxu0 0.0
    %1699 = vmatprep.subr.mxu0 0.0
    %1700 = vmatpush2.msra.mxu0 0.0
    %1701 = vmatprep.subr.mxu0 0.0
    %1702 = vmatpush2.msra.mxu0 0.0
    %1703 = vmatprep.subr.mxu0 0.0
    %1704 = vmatpush2.msra.mxu0 0.0
    %1705 = vmatprep.subr.mxu0 0.0
    %1706 = vmatpush2.msra.mxu0 0.0
    %1707 = vmatprep.subr.mxu0 0.0
    %1708 = vmatpush2.msra.mxu0 0.0
    %1709 = vmatprep.subr.mxu0 0.0
    %1710 = vmatpush2.msra.mxu0 0.0
    %1711 = vmatprep.subr.mxu0 0.0
    %1712 = vmatpush2.msra.mxu0 0.0
    %1713 = vmatprep.subr.mxu0 0.0
    %1714 = vmatpush2.msra.mxu0 0.0
    %1715 = vmatprep.subr.mxu0 0.0
    %1716 = vmatpush2.msra.mxu0 0.0
    %1717 = vmatprep.subr.mxu0 0.0
    %1718 = vmatpush2.msra.mxu0 0.0
    %1719 = vmatprep.subr.mxu0 0.0
    %1720 = vmatpush2.msra.mxu0 0.0
    %1721 = vmatprep.subr.mxu0 0.0
    %1722 = vmatpush2.msra.mxu0 0.0
    %1723 = vmatprep.subr.mxu0 0.0
    %1724 = vmatpush2.msra.mxu0 0.0
    %1725 = vmatprep.subr.mxu0 0.0
    %1726 = vmatpush2.msra.mxu0 0.0
    %1727 = vmatprep.subr.mxu0 0.0
    %1728 = vmatpush2.msra.mxu0 0.0
    %1729 = vmatprep.mubr.f32.mxu0 0.0
    %1730 = vmatmul.mubr.f32.gmra.mxu0 %v1651
    %v1731 = vpop.f32.mrf.mxu0
    %v1732 = vadd.f32 0.0, %v1731
    %v1733 = vpop.f32.mrf.mxu0
    %v1734 = vadd.f32 0.0, %v1733
    %1735 = vmatprep.mubr.f32.mxu0 0.0
    %1736 = vmatmul.mubr.f32.gmra.mxu0 %v1654
    %v1737 = vpop.f32.mrf.mxu0
    %v1738 = vadd.f32 0.0, %v1737
    %v1739 = vpop.f32.mrf.mxu0
    %v1740 = vadd.f32 0.0, %v1739
    %1741 = vmatprep.mubr.f32.mxu0 0.0
    %1742 = vmatmul.mubr.f32.gmra.mxu0 %v1657
    %v1743 = vpop.f32.mrf.mxu0
    %v1744 = vadd.f32 0.0, %v1743
    %v1745 = vpop.f32.mrf.mxu0
    %v1746 = vadd.f32 0.0, %v1745
    %1747 = vdwg.mxu0
    %1748 = vmatprep.subr.mxu0 0.0
    %1749 = vmatpush1.msra.mxu0 0.0
    %1750 = vmatprep.subr.mxu0 0.0
    %1751 = vmatpush1.msra.mxu0 0.0
    %1752 = vmatprep.subr.mxu0 0.0
    %1753 = vmatpush1.msra.mxu0 0.0
    %1754 = vmatprep.subr.mxu0 0.0
    %1755 = vmatpush1.msra.mxu0 0.0
    %1756 = vmatprep.subr.mxu0 0.0
    %1757 = vmatpush1.msra.mxu0 0.0
    %1758 = vmatprep.subr.mxu0 0.0
    %1759 = vmatpush1.msra.mxu0 0.0
    %1760 = vmatprep.subr.mxu0 0.0
    %1761 = vmatpush1.msra.mxu0 0.0
    %1762 = vmatprep.subr.mxu0 0.0
    %1763 = vmatpush1.msra.mxu0 0.0
    %1764 = vmatprep.subr.mxu0 0.0
    %1765 = vmatpush1.msra.mxu0 0.0
    %1766 = vmatprep.subr.mxu0 0.0
    %1767 = vmatpush1.msra.mxu0 0.0
    %1768 = vmatprep.subr.mxu0 0.0
    %1769 = vmatpush1.msra.mxu0 0.0
    %1770 = vmatprep.subr.mxu0 0.0
    %1771 = vmatpush1.msra.mxu0 0.0
    %1772 = vmatprep.subr.mxu0 0.0
    %1773 = vmatpush1.msra.mxu0 0.0
    %1774 = vmatprep.subr.mxu0 0.0
    %1775 = vmatpush1.msra.mxu0 0.0
    %1776 = vmatprep.subr.mxu0 0.0
    %1777 = vmatpush1.msra.mxu0 0.0
    %1778 = vmatprep.subr.mxu0 0.0
    %1779 = vmatpush1.msra.mxu0 %v1663
    %1780 = vmatprep.subr.mxu0 0.0
    %1781 = vmatpush2.msra.mxu0 0.0
    %1782 = vmatprep.subr.mxu0 0.0
    %1783 = vmatpush2.msra.mxu0 0.0
    %1784 = vmatprep.subr.mxu0 0.0
    %1785 = vmatpush2.msra.mxu0 0.0
    %1786 = vmatprep.subr.mxu0 0.0
    %1787 = vmatpush2.msra.mxu0 0.0
    %1788 = vmatprep.subr.mxu0 0.0
    %1789 = vmatpush2.msra.mxu0 0.0
    %1790 = vmatprep.subr.mxu0 0.0
    %1791 = vmatpush2.msra.mxu0 0.0
    %1792 = vmatprep.subr.mxu0 0.0
    %1793 = vmatpush2.msra.mxu0 0.0
    %1794 = vmatprep.subr.mxu0 0.0
    %1795 = vmatpush2.msra.mxu0 0.0
    %1796 = vmatprep.subr.mxu0 0.0
    %1797 = vmatpush2.msra.mxu0 0.0
    %1798 = vmatprep.subr.mxu0 0.0
    %1799 = vmatpush2.msra.mxu0 0.0
    %1800 = vmatprep.subr.mxu0 0.0
    %1801 = vmatpush2.msra.mxu0 0.0
    %1802 = vmatprep.subr.mxu0 0.0
    %1803 = vmatpush2.msra.mxu0 0.0
    %1804 = vmatprep.subr.mxu0 0.0
    %1805 = vmatpush2.msra.mxu0 0.0
    %1806 = vmatprep.subr.mxu0 0.0
    %1807 = vmatpush2.msra.mxu0 0.0
    %1808 = vmatprep.subr.mxu0 0.0
    %1809 = vmatpush2.msra.mxu0 0.0
    %1810 = vmatprep.subr.mxu0 0.0
    %1811 = vmatpush2.msra.mxu0 0.0
    %1812 = vmatprep.mubr.f32.mxu0 0.0
    %1813 = vmatmul.mubr.f32.gmra.mxu0 %v1651
    %v1814 = vpop.f32.mrf.mxu0
    %v1815 = vadd.f32 0.0, %v1814
    %v1816 = vpop.f32.mrf.mxu0
    %1817 = vmatprep.mubr.f32.mxu0 0.0
    %1818 = vmatmul.mubr.f32.gmra.mxu0 %v1654
    %v1819 = vpop.f32.mrf.mxu0
    %v1820 = vadd.f32 0.0, %v1819
    %v1821 = vpop.f32.mrf.mxu0
    %1822 = vmatprep.mubr.f32.mxu0 0.0
    %1823 = vmatmul.mubr.f32.gmra.mxu0 %v1657
    %v1824 = vpop.f32.mrf.mxu0
    %v1825 = vadd.f32 0.0, %v1824
    %v1826 = vpop.f32.mrf.mxu0
    %1827 = vdwg.mxu0
    %v1828 = vadd.f32 %v1623, %v1732
    %v1829 = vadd.f32 %v1624, %v1734
    %v1830 = vadd.f32 %v1625, %v1815
    %v1831 = vadd.f32 %v1626, %v1738
    %v1832 = vadd.f32 %v1627, %v1740
    %v1833 = vadd.f32 %v1628, %v1820
    %v1834 = vadd.f32 %v1629, %v1744
    %v1835 = vadd.f32 %v1630, %v1746
    %v1836 = vadd.f32 %v1631, %v1825
    %1838 = vset.pattern.permute.xlu0 0
    %1839 = vperm.xlu0 %1838, %v20
    %v1840 = vpop.permute.xlu0 %1839
    %1843 = vset.pattern.permute.xlu0 0
    %1844 = vperm.xlu0 %1843, %v21
    %v1845 = vpop.permute.xlu0 %1844
    %1848 = vset.pattern.permute.xlu0 0
    %1849 = vperm.xlu0 %1848, %v22
    %v1850 = vpop.permute.xlu0 %1849
    %v1852 = vadd.f32 %v1828, %v1840
    %v1853 = vadd.f32 %v1829, %v1840
    %v1854 = vadd.f32 %v1830, %v1840
    %v1855 = vadd.f32 %v1831, %v1845
    %v1856 = vadd.f32 %v1832, %v1845
    %v1857 = vadd.f32 %v1833, %v1845
    %v1858 = vadd.f32 %v1834, %v1850
    %v1859 = vadd.f32 %v1835, %v1850
    %v1860 = vadd.f32 %v1836, %v1850
    %v1861 = vmax.f32 %v1852, 0.0
    %v1862 = vmax.f32 %v1853, 0.0
    %v1863 = vmax.f32 %v1854, 0.0
    %v1864 = vmax.f32 %v1855, 0.0
    %v1865 = vmax.f32 %v1856, 0.0
    %v1866 = vmax.f32 %v1857, 0.0
    %v1867 = vmax.f32 %v1858, 0.0
    %v1868 = vmax.f32 %v1859, 0.0
    %v1869 = vmax.f32 %v1860, 0.0
    %v1872 = vcombine.high %v1861, %v1861
    %v1874 = vunpack.c.l.s4 1966171168
    %v1875 = vunpack.c.0.s8 %v1874
    %v1876 = vlaneseq
    %v1877 = vshrl.u32 %v1876, 7
    %v1878 = vsub.s32 %v1875, %v1877
    %v1879 = vrot.slane %v1861, %v1878
    %v1881 = vunpack.c.l.s4 1966171168
    %v1882 = vunpack.c.0.s8 %v1881
    %v1883 = vlaneseq
    %v1884 = vshrl.u32 %v1883, 7
    %v1885 = vsub.s32 %v1882, %v1884
    %v1886 = vrot.slane %v1872, %v1885
    %v1887 = vcombine.high %v1879, %v1879
    %v1888 = vcombine.high %v1886, %v1886
    %v1890 = vunpack.c.l.s4 1966171168
    %v1891 = vunpack.c.0.s8 %v1890
    %v1892 = vlaneseq
    %v1893 = vshrl.u32 %v1892, 7
    %v1894 = vsub.s32 %v1891, %v1893
    %v1895 = vrot.slane %v1879, %v1894
    %v1897 = vunpack.c.l.s4 1966171168
    %v1898 = vunpack.c.0.s8 %v1897
    %v1899 = vlaneseq
    %v1900 = vshrl.u32 %v1899, 7
    %v1901 = vsub.s32 %v1898, %v1900
    %v1902 = vrot.slane %v1886, %v1901
    %v1904 = vunpack.c.l.s4 1966171168
    %v1905 = vunpack.c.0.s8 %v1904
    %v1906 = vlaneseq
    %v1907 = vshrl.u32 %v1906, 7
    %v1908 = vsub.s32 %v1905, %v1907
    %v1909 = vrot.slane %v1887, %v1908
    %v1911 = vunpack.c.l.s4 1966171168
    %v1912 = vunpack.c.0.s8 %v1911
    %v1913 = vlaneseq
    %v1914 = vshrl.u32 %v1913, 7
    %v1915 = vsub.s32 %v1912, %v1914
    %v1916 = vrot.slane %v1888, %v1915
    %v1917 = vcombine.high %v1895, %v1895
    %v1918 = vcombine.high %v1902, %v1902
    %v1919 = vcombine.high %v1909, %v1909
    %v1920 = vcombine.high %v1916, %v1916
    %v1921 = vcombine.high %v1864, %v1864
    %v1923 = vunpack.c.l.s4 1966171168
    %v1924 = vunpack.c.0.s8 %v1923
    %v1925 = vlaneseq
    %v1926 = vshrl.u32 %v1925, 7
    %v1927 = vsub.s32 %v1924, %v1926
    %v1928 = vrot.slane %v1864, %v1927
    %v1930 = vunpack.c.l.s4 1966171168
    %v1931 = vunpack.c.0.s8 %v1930
    %v1932 = vlaneseq
    %v1933 = vshrl.u32 %v1932, 7
    %v1934 = vsub.s32 %v1931, %v1933
    %v1935 = vrot.slane %v1921, %v1934
    %v1936 = vcombine.high %v1928, %v1928
    %v1937 = vcombine.high %v1935, %v1935
    %v1939 = vunpack.c.l.s4 1966171168
    %v1940 = vunpack.c.0.s8 %v1939
    %v1941 = vlaneseq
    %v1942 = vshrl.u32 %v1941, 7
    %v1943 = vsub.s32 %v1940, %v1942
    %v1944 = vrot.slane %v1928, %v1943
    %v1946 = vunpack.c.l.s4 1966171168
    %v1947 = vunpack.c.0.s8 %v1946
    %v1948 = vlaneseq
    %v1949 = vshrl.u32 %v1948, 7
    %v1950 = vsub.s32 %v1947, %v1949
    %v1951 = vrot.slane %v1935, %v1950
    %v1953 = vunpack.c.l.s4 1966171168
    %v1954 = vunpack.c.0.s8 %v1953
    %v1955 = vlaneseq
    %v1956 = vshrl.u32 %v1955, 7
    %v1957 = vsub.s32 %v1954, %v1956
    %v1958 = vrot.slane %v1936, %v1957
    %v1960 = vunpack.c.l.s4 1966171168
    %v1961 = vunpack.c.0.s8 %v1960
    %v1962 = vlaneseq
    %v1963 = vshrl.u32 %v1962, 7
    %v1964 = vsub.s32 %v1961, %v1963
    %v1965 = vrot.slane %v1937, %v1964
    %v1966 = vcombine.high %v1944, %v1944
    %v1967 = vcombine.high %v1951, %v1951
    %v1968 = vcombine.high %v1958, %v1958
    %v1969 = vcombine.high %v1965, %v1965
    %vm1986 = vcmask 122880
    %1987 = vst.msk [vmem:[#allocation2] sm:$0x1] %vm1986, %v1895
    %1988 = vst.msk [vmem:[#allocation2 + $0x10] sm:$0x1] %vm1986, %v1909
    %1989 = vst.msk [vmem:[#allocation2 + $0x20] sm:$0x1] %vm1986, %v1917
    %1990 = vst.msk [vmem:[#allocation2 + $0x30] sm:$0x1] %vm1986, %v1919
    %1991 = vst.msk [vmem:[#allocation2 + $0x40] sm:$0x1] %vm1986, %v1902
    %1992 = vst.msk [vmem:[#allocation2 + $0x50] sm:$0x1] %vm1986, %v1916
    %1993 = vst.msk [vmem:[#allocation2 + $0x60] sm:$0x1] %vm1986, %v1918
    %1994 = vst.msk [vmem:[#allocation2 + $0x70] sm:$0x1] %vm1986, %v1920
    %1995 = vst.msk [vmem:[#allocation2 + $0x80] sm:$0x1] %vm1986, %v1944
    %1996 = vst.msk [vmem:[#allocation2 + $0x90] sm:$0x1] %vm1986, %v1958
    %1997 = vst.msk [vmem:[#allocation2 + $0xa0] sm:$0x1] %vm1986, %v1966
    %1998 = vst.msk [vmem:[#allocation2 + $0xb0] sm:$0x1] %vm1986, %v1968
    %1999 = vst.msk [vmem:[#allocation2 + $0xc0] sm:$0x1] %vm1986, %v1951
    %2000 = vst.msk [vmem:[#allocation2 + $0xd0] sm:$0x1] %vm1986, %v1965
    %2001 = vst.msk [vmem:[#allocation2 + $0xe0] sm:$0x1] %vm1986, %v1967
    %2002 = vst.msk [vmem:[#allocation2 + $0xf0] sm:$0x1] %vm1986, %v1969
    %v2004 = vcombine.high %v1867, %v1867
    %v2006 = vunpack.c.l.s4 1966171168
    %v2007 = vunpack.c.0.s8 %v2006
    %v2008 = vlaneseq
    %v2009 = vshrl.u32 %v2008, 7
    %v2010 = vsub.s32 %v2007, %v2009
    %v2011 = vrot.slane %v1867, %v2010
    %v2013 = vunpack.c.l.s4 1966171168
    %v2014 = vunpack.c.0.s8 %v2013
    %v2015 = vlaneseq
    %v2016 = vshrl.u32 %v2015, 7
    %v2017 = vsub.s32 %v2014, %v2016
    %v2018 = vrot.slane %v2004, %v2017
    %v2019 = vcombine.high %v2011, %v2011
    %v2020 = vcombine.high %v2018, %v2018
    %v2022 = vunpack.c.l.s4 1966171168
    %v2023 = vunpack.c.0.s8 %v2022
    %v2024 = vlaneseq
    %v2025 = vshrl.u32 %v2024, 7
    %v2026 = vsub.s32 %v2023, %v2025
    %v2027 = vrot.slane %v2011, %v2026
    %v2029 = vunpack.c.l.s4 1966171168
    %v2030 = vunpack.c.0.s8 %v2029
    %v2031 = vlaneseq
    %v2032 = vshrl.u32 %v2031, 7
    %v2033 = vsub.s32 %v2030, %v2032
    %v2034 = vrot.slane %v2018, %v2033
    %v2036 = vunpack.c.l.s4 1966171168
    %v2037 = vunpack.c.0.s8 %v2036
    %v2038 = vlaneseq
    %v2039 = vshrl.u32 %v2038, 7
    %v2040 = vsub.s32 %v2037, %v2039
    %v2041 = vrot.slane %v2019, %v2040
    %v2043 = vunpack.c.l.s4 1966171168
    %v2044 = vunpack.c.0.s8 %v2043
    %v2045 = vlaneseq
    %v2046 = vshrl.u32 %v2045, 7
    %v2047 = vsub.s32 %v2044, %v2046
    %v2048 = vrot.slane %v2020, %v2047
    %v2049 = vcombine.high %v2027, %v2027
    %v2050 = vcombine.high %v2034, %v2034
    %v2051 = vcombine.high %v2041, %v2041
    %v2052 = vcombine.high %v2048, %v2048
    %2061 = vst.msk [vmem:[#allocation4] sm:$0x1] %vm1986, %v2027
    %2062 = vst.msk [vmem:[#allocation4 + $0x10] sm:$0x1] %vm1986, %v2041
    %2063 = vst.msk [vmem:[#allocation4 + $0x20] sm:$0x1] %vm1986, %v2049
    %2064 = vst.msk [vmem:[#allocation4 + $0x30] sm:$0x1] %vm1986, %v2051
    %2065 = vst.msk [vmem:[#allocation4 + $0x40] sm:$0x1] %vm1986, %v2034
    %2066 = vst.msk [vmem:[#allocation4 + $0x50] sm:$0x1] %vm1986, %v2048
    %2067 = vst.msk [vmem:[#allocation4 + $0x60] sm:$0x1] %vm1986, %v2050
    %2068 = vst.msk [vmem:[#allocation4 + $0x70] sm:$0x1] %vm1986, %v2052
    %vm2069 = vcmask 130048
    %v2070 = vsel %vm2069, %v1861, 0.0
    %2071 = vadd.xlane.f32.xlu0 %v2070
    %v2072 = vpop.xlane.xlu0 %2071
    %v2073 = vsel %vm2069, %v1864, 0.0
    %2074 = vadd.xlane.f32.xlu0 %v2073
    %v2075 = vpop.xlane.xlu0 %2074
    %v2076 = vsel %vm2069, %v1867, 0.0
    %2077 = vadd.xlane.f32.xlu0 %v2076
    %v2078 = vpop.xlane.xlu0 %2077
    %v2079 = vadd.f32 %v2072, 0.0
    %v2080 = vadd.f32 %v2075, 0.0
    %v2081 = vadd.f32 %v2078, 0.0
    %v2082 = vlaneseq
    %v2083 = vshrl.u32 %v2082, 7
    %v2084 = vsub.s32 0, %v2083
    %v2085 = vrot.slane %v1895, %v2084
    %v2086 = vlaneseq
    %v2087 = vshrl.u32 %v2086, 7
    %v2088 = vsub.s32 0, %v2087
    %v2089 = vrot.slane %v1909, %v2088
    %v2090 = vlaneseq
    %v2091 = vshrl.u32 %v2090, 7
    %v2092 = vsub.s32 0, %v2091
    %v2093 = vrot.slane %v1917, %v2092
    %v2094 = vlaneseq
    %v2095 = vshrl.u32 %v2094, 7
    %v2096 = vsub.s32 0, %v2095
    %v2097 = vrot.slane %v1919, %v2096
    %v2098 = vlaneseq
    %v2099 = vshrl.u32 %v2098, 7
    %v2100 = vsub.s32 0, %v2099
    %v2101 = vrot.slane %v1902, %v2100
    %v2102 = vlaneseq
    %v2103 = vshrl.u32 %v2102, 7
    %v2104 = vsub.s32 0, %v2103
    %v2105 = vrot.slane %v1916, %v2104
    %v2106 = vlaneseq
    %v2107 = vshrl.u32 %v2106, 7
    %v2108 = vsub.s32 0, %v2107
    %v2109 = vrot.slane %v1918, %v2108
    %v2110 = vlaneseq
    %v2111 = vshrl.u32 %v2110, 7
    %v2112 = vsub.s32 0, %v2111
    %v2113 = vrot.slane %v1920, %v2112
    %v2114 = vlaneseq
    %v2115 = vshrl.u32 %v2114, 7
    %v2116 = vsub.s32 0, %v2115
    %v2117 = vrot.slane %v1944, %v2116
    %v2118 = vlaneseq
    %v2119 = vshrl.u32 %v2118, 7
    %v2120 = vsub.s32 0, %v2119
    %v2121 = vrot.slane %v1958, %v2120
    %v2122 = vlaneseq
    %v2123 = vshrl.u32 %v2122, 7
    %v2124 = vsub.s32 0, %v2123
    %v2125 = vrot.slane %v1966, %v2124
    %v2126 = vlaneseq
    %v2127 = vshrl.u32 %v2126, 7
    %v2128 = vsub.s32 0, %v2127
    %v2129 = vrot.slane %v1968, %v2128
    %v2130 = vlaneseq
    %v2131 = vshrl.u32 %v2130, 7
    %v2132 = vsub.s32 0, %v2131
    %v2133 = vrot.slane %v1951, %v2132
    %v2134 = vlaneseq
    %v2135 = vshrl.u32 %v2134, 7
    %v2136 = vsub.s32 0, %v2135
    %v2137 = vrot.slane %v1965, %v2136
    %v2138 = vlaneseq
    %v2139 = vshrl.u32 %v2138, 7
    %v2140 = vsub.s32 0, %v2139
    %v2141 = vrot.slane %v1967, %v2140
    %v2142 = vlaneseq
    %v2143 = vshrl.u32 %v2142, 7
    %v2144 = vsub.s32 0, %v2143
    %v2145 = vrot.slane %v1969, %v2144
    %2146 = vrot.lane.b32.xlu0 %v2085, 110
    %v2147 = vpop.permute.xlu0 %2146
    %2148 = vrot.lane.b32.xlu0 %v2089, 110
    %v2149 = vpop.permute.xlu0 %2148
    %2150 = vrot.lane.b32.xlu0 %v2093, 110
    %v2151 = vpop.permute.xlu0 %2150
    %2152 = vrot.lane.b32.xlu0 %v2097, 110
    %v2153 = vpop.permute.xlu0 %2152
    %2154 = vrot.lane.b32.xlu0 %v2101, 110
    %v2155 = vpop.permute.xlu0 %2154
    %2156 = vrot.lane.b32.xlu0 %v2105, 110
    %v2157 = vpop.permute.xlu0 %2156
    %2158 = vrot.lane.b32.xlu0 %v2109, 110
    %v2159 = vpop.permute.xlu0 %2158
    %2160 = vrot.lane.b32.xlu0 %v2113, 110
    %v2161 = vpop.permute.xlu0 %2160
    %2162 = vrot.lane.b32.xlu0 %v2117, 110
    %v2163 = vpop.permute.xlu0 %2162
    %2164 = vrot.lane.b32.xlu0 %v2121, 110
    %v2165 = vpop.permute.xlu0 %2164
    %2166 = vrot.lane.b32.xlu0 %v2125, 110
    %v2167 = vpop.permute.xlu0 %2166
    %2168 = vrot.lane.b32.xlu0 %v2129, 110
    %v2169 = vpop.permute.xlu0 %2168
    %2170 = vrot.lane.b32.xlu0 %v2133, 110
    %v2171 = vpop.permute.xlu0 %2170
    %2172 = vrot.lane.b32.xlu0 %v2137, 110
    %v2173 = vpop.permute.xlu0 %2172
    %2174 = vrot.lane.b32.xlu0 %v2141, 110
    %v2175 = vpop.permute.xlu0 %2174
    %2176 = vrot.lane.b32.xlu0 %v2145, 110
    %v2177 = vpop.permute.xlu0 %2176
    %2194 = vst.msk [vmem:[#allocation2 + $0x1] sm:$0x1] %vm1986, %v2147
    %2195 = vst.msk [vmem:[#allocation2 + $0x11] sm:$0x1] %vm1986, %v2149
    %2196 = vst.msk [vmem:[#allocation2 + $0x21] sm:$0x1] %vm1986, %v2151
    %2197 = vst.msk [vmem:[#allocation2 + $0x31] sm:$0x1] %vm1986, %v2153
    %2198 = vst.msk [vmem:[#allocation2 + $0x41] sm:$0x1] %vm1986, %v2155
    %2199 = vst.msk [vmem:[#allocation2 + $0x51] sm:$0x1] %vm1986, %v2157
    %2200 = vst.msk [vmem:[#allocation2 + $0x61] sm:$0x1] %vm1986, %v2159
    %2201 = vst.msk [vmem:[#allocation2 + $0x71] sm:$0x1] %vm1986, %v2161
    %2202 = vst.msk [vmem:[#allocation2 + $0x81] sm:$0x1] %vm1986, %v2163
    %2203 = vst.msk [vmem:[#allocation2 + $0x91] sm:$0x1] %vm1986, %v2165
    %2204 = vst.msk [vmem:[#allocation2 + $0xa1] sm:$0x1] %vm1986, %v2167
    %2205 = vst.msk [vmem:[#allocation2 + $0xb1] sm:$0x1] %vm1986, %v2169
    %2206 = vst.msk [vmem:[#allocation2 + $0xc1] sm:$0x1] %vm1986, %v2171
    %2207 = vst.msk [vmem:[#allocation2 + $0xd1] sm:$0x1] %vm1986, %v2173
    %2208 = vst.msk [vmem:[#allocation2 + $0xe1] sm:$0x1] %vm1986, %v2175
    %2209 = vst.msk [vmem:[#allocation2 + $0xf1] sm:$0x1] %vm1986, %v2177
    %v2210 = vlaneseq
    %v2211 = vshrl.u32 %v2210, 7
    %v2212 = vsub.s32 0, %v2211
    %v2213 = vrot.slane %v2027, %v2212
    %v2214 = vlaneseq
    %v2215 = vshrl.u32 %v2214, 7
    %v2216 = vsub.s32 0, %v2215
    %v2217 = vrot.slane %v2041, %v2216
    %v2218 = vlaneseq
    %v2219 = vshrl.u32 %v2218, 7
    %v2220 = vsub.s32 0, %v2219
    %v2221 = vrot.slane %v2049, %v2220
    %v2222 = vlaneseq
    %v2223 = vshrl.u32 %v2222, 7
    %v2224 = vsub.s32 0, %v2223
    %v2225 = vrot.slane %v2051, %v2224
    %v2226 = vlaneseq
    %v2227 = vshrl.u32 %v2226, 7
    %v2228 = vsub.s32 0, %v2227
    %v2229 = vrot.slane %v2034, %v2228
    %v2230 = vlaneseq
    %v2231 = vshrl.u32 %v2230, 7
    %v2232 = vsub.s32 0, %v2231
    %v2233 = vrot.slane %v2048, %v2232
    %v2234 = vlaneseq
    %v2235 = vshrl.u32 %v2234, 7
    %v2236 = vsub.s32 0, %v2235
    %v2237 = vrot.slane %v2050, %v2236
    %v2238 = vlaneseq
    %v2239 = vshrl.u32 %v2238, 7
    %v2240 = vsub.s32 0, %v2239
    %v2241 = vrot.slane %v2052, %v2240
    %2242 = vrot.lane.b32.xlu0 %v2213, 110
    %v2243 = vpop.permute.xlu0 %2242
    %2244 = vrot.lane.b32.xlu0 %v2217, 110
    %v2245 = vpop.permute.xlu0 %2244
    %2246 = vrot.lane.b32.xlu0 %v2221, 110
    %v2247 = vpop.permute.xlu0 %2246
    %2248 = vrot.lane.b32.xlu0 %v2225, 110
    %v2249 = vpop.permute.xlu0 %2248
    %2250 = vrot.lane.b32.xlu0 %v2229, 110
    %v2251 = vpop.permute.xlu0 %2250
    %2252 = vrot.lane.b32.xlu0 %v2233, 110
    %v2253 = vpop.permute.xlu0 %2252
    %2254 = vrot.lane.b32.xlu0 %v2237, 110
    %v2255 = vpop.permute.xlu0 %2254
    %2256 = vrot.lane.b32.xlu0 %v2241, 110
    %v2257 = vpop.permute.xlu0 %2256
    %2266 = vst.msk [vmem:[#allocation4 + $0x1] sm:$0x1] %vm1986, %v2243
    %2267 = vst.msk [vmem:[#allocation4 + $0x11] sm:$0x1] %vm1986, %v2245
    %2268 = vst.msk [vmem:[#allocation4 + $0x21] sm:$0x1] %vm1986, %v2247
    %2269 = vst.msk [vmem:[#allocation4 + $0x31] sm:$0x1] %vm1986, %v2249
    %2270 = vst.msk [vmem:[#allocation4 + $0x41] sm:$0x1] %vm1986, %v2251
    %2271 = vst.msk [vmem:[#allocation4 + $0x51] sm:$0x1] %vm1986, %v2253
    %2272 = vst.msk [vmem:[#allocation4 + $0x61] sm:$0x1] %vm1986, %v2255
    %2273 = vst.msk [vmem:[#allocation4 + $0x71] sm:$0x1] %vm1986, %v2257
    %2274 = vrot.lane.b32.xlu0 %v1861, 110
    %v2275 = vpop.permute.xlu0 %2274
    %2276 = vrot.lane.b32.xlu0 %v1864, 110
    %v2277 = vpop.permute.xlu0 %2276
    %2278 = vrot.lane.b32.xlu0 %v1867, 110
    %v2279 = vpop.permute.xlu0 %2278
    %v2283 = vsel %vm2069, %v2275, 0.0
    %2284 = vadd.xlane.f32.xlu0 %v2283
    %v2285 = vpop.xlane.xlu0 %2284
    %v2286 = vsel %vm2069, %v2277, 0.0
    %2287 = vadd.xlane.f32.xlu0 %v2286
    %v2288 = vpop.xlane.xlu0 %2287
    %v2289 = vsel %vm2069, %v2279, 0.0
    %2290 = vadd.xlane.f32.xlu0 %v2289
    %v2291 = vpop.xlane.xlu0 %2290
    %v2292 = vadd.f32 %v2079, %v2285
    %v2293 = vadd.f32 %v2080, %v2288
    %v2294 = vadd.f32 %v2081, %v2291
    %2295 = vrot.lane.b32.xlu0 %v2085, 92
    %v2296 = vpop.permute.xlu0 %2295
    %2297 = vrot.lane.b32.xlu0 %v2089, 92
    %v2298 = vpop.permute.xlu0 %2297
    %2299 = vrot.lane.b32.xlu0 %v2093, 92
    %v2300 = vpop.permute.xlu0 %2299
    %2301 = vrot.lane.b32.xlu0 %v2097, 92
    %v2302 = vpop.permute.xlu0 %2301
    %2303 = vrot.lane.b32.xlu0 %v2101, 92
    %v2304 = vpop.permute.xlu0 %2303
    %2305 = vrot.lane.b32.xlu0 %v2105, 92
    %v2306 = vpop.permute.xlu0 %2305
    %2307 = vrot.lane.b32.xlu0 %v2109, 92
    %v2308 = vpop.permute.xlu0 %2307
    %2309 = vrot.lane.b32.xlu0 %v2113, 92
    %v2310 = vpop.permute.xlu0 %2309
    %2311 = vrot.lane.b32.xlu0 %v2117, 92
    %v2312 = vpop.permute.xlu0 %2311
    %2313 = vrot.lane.b32.xlu0 %v2121, 92
    %v2314 = vpop.permute.xlu0 %2313
    %2315 = vrot.lane.b32.xlu0 %v2125, 92
    %v2316 = vpop.permute.xlu0 %2315
    %2317 = vrot.lane.b32.xlu0 %v2129, 92
    %v2318 = vpop.permute.xlu0 %2317
    %2319 = vrot.lane.b32.xlu0 %v2133, 92
    %v2320 = vpop.permute.xlu0 %2319
    %2321 = vrot.lane.b32.xlu0 %v2137, 92
    %v2322 = vpop.permute.xlu0 %2321
    %2323 = vrot.lane.b32.xlu0 %v2141, 92
    %v2324 = vpop.permute.xlu0 %2323
    %2325 = vrot.lane.b32.xlu0 %v2145, 92
    %v2326 = vpop.permute.xlu0 %2325
    %2343 = vst.msk [vmem:[#allocation2 + $0x2] sm:$0x1] %vm1986, %v2296
    %2344 = vst.msk [vmem:[#allocation2 + $0x12] sm:$0x1] %vm1986, %v2298
    %2345 = vst.msk [vmem:[#allocation2 + $0x22] sm:$0x1] %vm1986, %v2300
    %2346 = vst.msk [vmem:[#allocation2 + $0x32] sm:$0x1] %vm1986, %v2302
    %2347 = vst.msk [vmem:[#allocation2 + $0x42] sm:$0x1] %vm1986, %v2304
    %2348 = vst.msk [vmem:[#allocation2 + $0x52] sm:$0x1] %vm1986, %v2306
    %2349 = vst.msk [vmem:[#allocation2 + $0x62] sm:$0x1] %vm1986, %v2308
    %2350 = vst.msk [vmem:[#allocation2 + $0x72] sm:$0x1] %vm1986, %v2310
    %2351 = vst.msk [vmem:[#allocation2 + $0x82] sm:$0x1] %vm1986, %v2312
    %2352 = vst.msk [vmem:[#allocation2 + $0x92] sm:$0x1] %vm1986, %v2314
    %2353 = vst.msk [vmem:[#allocation2 + $0xa2] sm:$0x1] %vm1986, %v2316
    %2354 = vst.msk [vmem:[#allocation2 + $0xb2] sm:$0x1] %vm1986, %v2318
    %2355 = vst.msk [vmem:[#allocation2 + $0xc2] sm:$0x1] %vm1986, %v2320
    %2356 = vst.msk [vmem:[#allocation2 + $0xd2] sm:$0x1] %vm1986, %v2322
    %2357 = vst.msk [vmem:[#allocation2 + $0xe2] sm:$0x1] %vm1986, %v2324
    %2358 = vst.msk [vmem:[#allocation2 + $0xf2] sm:$0x1] %vm1986, %v2326
    %2359 = vrot.lane.b32.xlu0 %v2213, 92
    %v2360 = vpop.permute.xlu0 %2359
    %2361 = vrot.lane.b32.xlu0 %v2217, 92
    %v2362 = vpop.permute.xlu0 %2361
    %2363 = vrot.lane.b32.xlu0 %v2221, 92
    %v2364 = vpop.permute.xlu0 %2363
    %2365 = vrot.lane.b32.xlu0 %v2225, 92
    %v2366 = vpop.permute.xlu0 %2365
    %2367 = vrot.lane.b32.xlu0 %v2229, 92
    %v2368 = vpop.permute.xlu0 %2367
    %2369 = vrot.lane.b32.xlu0 %v2233, 92
    %v2370 = vpop.permute.xlu0 %2369
    %2371 = vrot.lane.b32.xlu0 %v2237, 92
    %v2372 = vpop.permute.xlu0 %2371
    %2373 = vrot.lane.b32.xlu0 %v2241, 92
    %v2374 = vpop.permute.xlu0 %2373
    %2383 = vst.msk [vmem:[#allocation4 + $0x2] sm:$0x1] %vm1986, %v2360
    %2384 = vst.msk [vmem:[#allocation4 + $0x12] sm:$0x1] %vm1986, %v2362
    %2385 = vst.msk [vmem:[#allocation4 + $0x22] sm:$0x1] %vm1986, %v2364
    %2386 = vst.msk [vmem:[#allocation4 + $0x32] sm:$0x1] %vm1986, %v2366
    %2387 = vst.msk [vmem:[#allocation4 + $0x42] sm:$0x1] %vm1986, %v2368
    %2388 = vst.msk [vmem:[#allocation4 + $0x52] sm:$0x1] %vm1986, %v2370
    %2389 = vst.msk [vmem:[#allocation4 + $0x62] sm:$0x1] %vm1986, %v2372
    %2390 = vst.msk [vmem:[#allocation4 + $0x72] sm:$0x1] %vm1986, %v2374
    %2391 = vrot.lane.b32.xlu0 %v1861, 92
    %v2392 = vpop.permute.xlu0 %2391
    %2393 = vrot.lane.b32.xlu0 %v1864, 92
    %v2394 = vpop.permute.xlu0 %2393
    %2395 = vrot.lane.b32.xlu0 %v1867, 92
    %v2396 = vpop.permute.xlu0 %2395
    %v2400 = vsel %vm2069, %v2392, 0.0
    %2401 = vadd.xlane.f32.xlu0 %v2400
    %v2402 = vpop.xlane.xlu0 %2401
    %v2403 = vsel %vm2069, %v2394, 0.0
    %2404 = vadd.xlane.f32.xlu0 %v2403
    %v2405 = vpop.xlane.xlu0 %2404
    %v2406 = vsel %vm2069, %v2396, 0.0
    %2407 = vadd.xlane.f32.xlu0 %v2406
    %v2408 = vpop.xlane.xlu0 %2407
    %v2409 = vadd.f32 %v2292, %v2402
    %v2410 = vadd.f32 %v2293, %v2405
    %v2411 = vadd.f32 %v2294, %v2408
    %2412 = vrot.lane.b32.xlu0 %v2085, 74
    %v2413 = vpop.permute.xlu0 %2412
    %2414 = vrot.lane.b32.xlu0 %v2089, 74
    %v2415 = vpop.permute.xlu0 %2414
    %2416 = vrot.lane.b32.xlu0 %v2093, 74
    %v2417 = vpop.permute.xlu0 %2416
    %2418 = vrot.lane.b32.xlu0 %v2097, 74
    %v2419 = vpop.permute.xlu0 %2418
    %2420 = vrot.lane.b32.xlu0 %v2101, 74
    %v2421 = vpop.permute.xlu0 %2420
    %2422 = vrot.lane.b32.xlu0 %v2105, 74
    %v2423 = vpop.permute.xlu0 %2422
    %2424 = vrot.lane.b32.xlu0 %v2109, 74
    %v2425 = vpop.permute.xlu0 %2424
    %2426 = vrot.lane.b32.xlu0 %v2113, 74
    %v2427 = vpop.permute.xlu0 %2426
    %2428 = vrot.lane.b32.xlu0 %v2117, 74
    %v2429 = vpop.permute.xlu0 %2428
    %2430 = vrot.lane.b32.xlu0 %v2121, 74
    %v2431 = vpop.permute.xlu0 %2430
    %2432 = vrot.lane.b32.xlu0 %v2125, 74
    %v2433 = vpop.permute.xlu0 %2432
    %2434 = vrot.lane.b32.xlu0 %v2129, 74
    %v2435 = vpop.permute.xlu0 %2434
    %2436 = vrot.lane.b32.xlu0 %v2133, 74
    %v2437 = vpop.permute.xlu0 %2436
    %2438 = vrot.lane.b32.xlu0 %v2137, 74
    %v2439 = vpop.permute.xlu0 %2438
    %2440 = vrot.lane.b32.xlu0 %v2141, 74
    %v2441 = vpop.permute.xlu0 %2440
    %2442 = vrot.lane.b32.xlu0 %v2145, 74
    %v2443 = vpop.permute.xlu0 %2442
    %2460 = vst.msk [vmem:[#allocation2 + $0x3] sm:$0x1] %vm1986, %v2413
    %2461 = vst.msk [vmem:[#allocation2 + $0x13] sm:$0x1] %vm1986, %v2415
    %2462 = vst.msk [vmem:[#allocation2 + $0x23] sm:$0x1] %vm1986, %v2417
    %2463 = vst.msk [vmem:[#allocation2 + $0x33] sm:$0x1] %vm1986, %v2419
    %2464 = vst.msk [vmem:[#allocation2 + $0x43] sm:$0x1] %vm1986, %v2421
    %2465 = vst.msk [vmem:[#allocation2 + $0x53] sm:$0x1] %vm1986, %v2423
    %2466 = vst.msk [vmem:[#allocation2 + $0x63] sm:$0x1] %vm1986, %v2425
    %2467 = vst.msk [vmem:[#allocation2 + $0x73] sm:$0x1] %vm1986, %v2427
    %2468 = vst.msk [vmem:[#allocation2 + $0x83] sm:$0x1] %vm1986, %v2429
    %2469 = vst.msk [vmem:[#allocation2 + $0x93] sm:$0x1] %vm1986, %v2431
    %2470 = vst.msk [vmem:[#allocation2 + $0xa3] sm:$0x1] %vm1986, %v2433
    %2471 = vst.msk [vmem:[#allocation2 + $0xb3] sm:$0x1] %vm1986, %v2435
    %2472 = vst.msk [vmem:[#allocation2 + $0xc3] sm:$0x1] %vm1986, %v2437
    %2473 = vst.msk [vmem:[#allocation2 + $0xd3] sm:$0x1] %vm1986, %v2439
    %2474 = vst.msk [vmem:[#allocation2 + $0xe3] sm:$0x1] %vm1986, %v2441
    %2475 = vst.msk [vmem:[#allocation2 + $0xf3] sm:$0x1] %vm1986, %v2443
    %2476 = vrot.lane.b32.xlu0 %v2213, 74
    %v2477 = vpop.permute.xlu0 %2476
    %2478 = vrot.lane.b32.xlu0 %v2217, 74
    %v2479 = vpop.permute.xlu0 %2478
    %2480 = vrot.lane.b32.xlu0 %v2221, 74
    %v2481 = vpop.permute.xlu0 %2480
    %2482 = vrot.lane.b32.xlu0 %v2225, 74
    %v2483 = vpop.permute.xlu0 %2482
    %2484 = vrot.lane.b32.xlu0 %v2229, 74
    %v2485 = vpop.permute.xlu0 %2484
    %2486 = vrot.lane.b32.xlu0 %v2233, 74
    %v2487 = vpop.permute.xlu0 %2486
    %2488 = vrot.lane.b32.xlu0 %v2237, 74
    %v2489 = vpop.permute.xlu0 %2488
    %2490 = vrot.lane.b32.xlu0 %v2241, 74
    %v2491 = vpop.permute.xlu0 %2490
    %2500 = vst.msk [vmem:[#allocation4 + $0x3] sm:$0x1] %vm1986, %v2477
    %2501 = vst.msk [vmem:[#allocation4 + $0x13] sm:$0x1] %vm1986, %v2479
    %2502 = vst.msk [vmem:[#allocation4 + $0x23] sm:$0x1] %vm1986, %v2481
    %2503 = vst.msk [vmem:[#allocation4 + $0x33] sm:$0x1] %vm1986, %v2483
    %2504 = vst.msk [vmem:[#allocation4 + $0x43] sm:$0x1] %vm1986, %v2485
    %2505 = vst.msk [vmem:[#allocation4 + $0x53] sm:$0x1] %vm1986, %v2487
    %2506 = vst.msk [vmem:[#allocation4 + $0x63] sm:$0x1] %vm1986, %v2489
    %2507 = vst.msk [vmem:[#allocation4 + $0x73] sm:$0x1] %vm1986, %v2491
    %2508 = vrot.lane.b32.xlu0 %v1861, 74
    %v2509 = vpop.permute.xlu0 %2508
    %2510 = vrot.lane.b32.xlu0 %v1864, 74
    %v2511 = vpop.permute.xlu0 %2510
    %2512 = vrot.lane.b32.xlu0 %v1867, 74
    %v2513 = vpop.permute.xlu0 %2512
    %v2517 = vsel %vm2069, %v2509, 0.0
    %2518 = vadd.xlane.f32.xlu0 %v2517
    %v2519 = vpop.xlane.xlu0 %2518
    %v2520 = vsel %vm2069, %v2511, 0.0
    %2521 = vadd.xlane.f32.xlu0 %v2520
    %v2522 = vpop.xlane.xlu0 %2521
    %v2523 = vsel %vm2069, %v2513, 0.0
    %2524 = vadd.xlane.f32.xlu0 %v2523
    %v2525 = vpop.xlane.xlu0 %2524
    %v2526 = vadd.f32 %v2409, %v2519
    %v2527 = vadd.f32 %v2410, %v2522
    %v2528 = vadd.f32 %v2411, %v2525
    %2529 = vrot.lane.b32.xlu0 %v2085, 56
    %v2530 = vpop.permute.xlu0 %2529
    %2531 = vrot.lane.b32.xlu0 %v2089, 56
    %v2532 = vpop.permute.xlu0 %2531
    %2533 = vrot.lane.b32.xlu0 %v2093, 56
    %v2534 = vpop.permute.xlu0 %2533
    %2535 = vrot.lane.b32.xlu0 %v2097, 56
    %v2536 = vpop.permute.xlu0 %2535
    %2537 = vrot.lane.b32.xlu0 %v2101, 56
    %v2538 = vpop.permute.xlu0 %2537
    %2539 = vrot.lane.b32.xlu0 %v2105, 56
    %v2540 = vpop.permute.xlu0 %2539
    %2541 = vrot.lane.b32.xlu0 %v2109, 56
    %v2542 = vpop.permute.xlu0 %2541
    %2543 = vrot.lane.b32.xlu0 %v2113, 56
    %v2544 = vpop.permute.xlu0 %2543
    %2545 = vrot.lane.b32.xlu0 %v2117, 56
    %v2546 = vpop.permute.xlu0 %2545
    %2547 = vrot.lane.b32.xlu0 %v2121, 56
    %v2548 = vpop.permute.xlu0 %2547
    %2549 = vrot.lane.b32.xlu0 %v2125, 56
    %v2550 = vpop.permute.xlu0 %2549
    %2551 = vrot.lane.b32.xlu0 %v2129, 56
    %v2552 = vpop.permute.xlu0 %2551
    %2553 = vrot.lane.b32.xlu0 %v2133, 56
    %v2554 = vpop.permute.xlu0 %2553
    %2555 = vrot.lane.b32.xlu0 %v2137, 56
    %v2556 = vpop.permute.xlu0 %2555
    %2557 = vrot.lane.b32.xlu0 %v2141, 56
    %v2558 = vpop.permute.xlu0 %2557
    %2559 = vrot.lane.b32.xlu0 %v2145, 56
    %v2560 = vpop.permute.xlu0 %2559
    %2577 = vst.msk [vmem:[#allocation2 + $0x4] sm:$0x1] %vm1986, %v2530
    %2578 = vst.msk [vmem:[#allocation2 + $0x14] sm:$0x1] %vm1986, %v2532
    %2579 = vst.msk [vmem:[#allocation2 + $0x24] sm:$0x1] %vm1986, %v2534
    %2580 = vst.msk [vmem:[#allocation2 + $0x34] sm:$0x1] %vm1986, %v2536
    %2581 = vst.msk [vmem:[#allocation2 + $0x44] sm:$0x1] %vm1986, %v2538
    %2582 = vst.msk [vmem:[#allocation2 + $0x54] sm:$0x1] %vm1986, %v2540
    %2583 = vst.msk [vmem:[#allocation2 + $0x64] sm:$0x1] %vm1986, %v2542
    %2584 = vst.msk [vmem:[#allocation2 + $0x74] sm:$0x1] %vm1986, %v2544
    %2585 = vst.msk [vmem:[#allocation2 + $0x84] sm:$0x1] %vm1986, %v2546
    %2586 = vst.msk [vmem:[#allocation2 + $0x94] sm:$0x1] %vm1986, %v2548
    %2587 = vst.msk [vmem:[#allocation2 + $0xa4] sm:$0x1] %vm1986, %v2550
    %2588 = vst.msk [vmem:[#allocation2 + $0xb4] sm:$0x1] %vm1986, %v2552
    %2589 = vst.msk [vmem:[#allocation2 + $0xc4] sm:$0x1] %vm1986, %v2554
    %2590 = vst.msk [vmem:[#allocation2 + $0xd4] sm:$0x1] %vm1986, %v2556
    %2591 = vst.msk [vmem:[#allocation2 + $0xe4] sm:$0x1] %vm1986, %v2558
    %2592 = vst.msk [vmem:[#allocation2 + $0xf4] sm:$0x1] %vm1986, %v2560
    %2593 = vrot.lane.b32.xlu0 %v2213, 56
    %v2594 = vpop.permute.xlu0 %2593
    %2595 = vrot.lane.b32.xlu0 %v2217, 56
    %v2596 = vpop.permute.xlu0 %2595
    %2597 = vrot.lane.b32.xlu0 %v2221, 56
    %v2598 = vpop.permute.xlu0 %2597
    %2599 = vrot.lane.b32.xlu0 %v2225, 56
    %v2600 = vpop.permute.xlu0 %2599
    %2601 = vrot.lane.b32.xlu0 %v2229, 56
    %v2602 = vpop.permute.xlu0 %2601
    %2603 = vrot.lane.b32.xlu0 %v2233, 56
    %v2604 = vpop.permute.xlu0 %2603
    %2605 = vrot.lane.b32.xlu0 %v2237, 56
    %v2606 = vpop.permute.xlu0 %2605
    %2607 = vrot.lane.b32.xlu0 %v2241, 56
    %v2608 = vpop.permute.xlu0 %2607
    %2617 = vst.msk [vmem:[#allocation4 + $0x4] sm:$0x1] %vm1986, %v2594
    %2618 = vst.msk [vmem:[#allocation4 + $0x14] sm:$0x1] %vm1986, %v2596
    %2619 = vst.msk [vmem:[#allocation4 + $0x24] sm:$0x1] %vm1986, %v2598
    %2620 = vst.msk [vmem:[#allocation4 + $0x34] sm:$0x1] %vm1986, %v2600
    %2621 = vst.msk [vmem:[#allocation4 + $0x44] sm:$0x1] %vm1986, %v2602
    %2622 = vst.msk [vmem:[#allocation4 + $0x54] sm:$0x1] %vm1986, %v2604
    %2623 = vst.msk [vmem:[#allocation4 + $0x64] sm:$0x1] %vm1986, %v2606
    %2624 = vst.msk [vmem:[#allocation4 + $0x74] sm:$0x1] %vm1986, %v2608
    %2625 = vrot.lane.b32.xlu0 %v1861, 56
    %v2626 = vpop.permute.xlu0 %2625
    %2627 = vrot.lane.b32.xlu0 %v1864, 56
    %v2628 = vpop.permute.xlu0 %2627
    %2629 = vrot.lane.b32.xlu0 %v1867, 56
    %v2630 = vpop.permute.xlu0 %2629
    %v2634 = vsel %vm2069, %v2626, 0.0
    %2635 = vadd.xlane.f32.xlu0 %v2634
    %v2636 = vpop.xlane.xlu0 %2635
    %v2637 = vsel %vm2069, %v2628, 0.0
    %2638 = vadd.xlane.f32.xlu0 %v2637
    %v2639 = vpop.xlane.xlu0 %2638
    %v2640 = vsel %vm2069, %v2630, 0.0
    %2641 = vadd.xlane.f32.xlu0 %v2640
    %v2642 = vpop.xlane.xlu0 %2641
    %v2643 = vadd.f32 %v2526, %v2636
    %v2644 = vadd.f32 %v2527, %v2639
    %v2645 = vadd.f32 %v2528, %v2642
    %2646 = vrot.lane.b32.xlu0 %v2085, 38
    %v2647 = vpop.permute.xlu0 %2646
    %2648 = vrot.lane.b32.xlu0 %v2089, 38
    %v2649 = vpop.permute.xlu0 %2648
    %2650 = vrot.lane.b32.xlu0 %v2093, 38
    %v2651 = vpop.permute.xlu0 %2650
    %2652 = vrot.lane.b32.xlu0 %v2097, 38
    %v2653 = vpop.permute.xlu0 %2652
    %2654 = vrot.lane.b32.xlu0 %v2101, 38
    %v2655 = vpop.permute.xlu0 %2654
    %2656 = vrot.lane.b32.xlu0 %v2105, 38
    %v2657 = vpop.permute.xlu0 %2656
    %2658 = vrot.lane.b32.xlu0 %v2109, 38
    %v2659 = vpop.permute.xlu0 %2658
    %2660 = vrot.lane.b32.xlu0 %v2113, 38
    %v2661 = vpop.permute.xlu0 %2660
    %2662 = vrot.lane.b32.xlu0 %v2117, 38
    %v2663 = vpop.permute.xlu0 %2662
    %2664 = vrot.lane.b32.xlu0 %v2121, 38
    %v2665 = vpop.permute.xlu0 %2664
    %2666 = vrot.lane.b32.xlu0 %v2125, 38
    %v2667 = vpop.permute.xlu0 %2666
    %2668 = vrot.lane.b32.xlu0 %v2129, 38
    %v2669 = vpop.permute.xlu0 %2668
    %2670 = vrot.lane.b32.xlu0 %v2133, 38
    %v2671 = vpop.permute.xlu0 %2670
    %2672 = vrot.lane.b32.xlu0 %v2137, 38
    %v2673 = vpop.permute.xlu0 %2672
    %2674 = vrot.lane.b32.xlu0 %v2141, 38
    %v2675 = vpop.permute.xlu0 %2674
    %2676 = vrot.lane.b32.xlu0 %v2145, 38
    %v2677 = vpop.permute.xlu0 %2676
    %2694 = vst.msk [vmem:[#allocation2 + $0x5] sm:$0x1] %vm1986, %v2647
    %2695 = vst.msk [vmem:[#allocation2 + $0x15] sm:$0x1] %vm1986, %v2649
    %2696 = vst.msk [vmem:[#allocation2 + $0x25] sm:$0x1] %vm1986, %v2651
    %2697 = vst.msk [vmem:[#allocation2 + $0x35] sm:$0x1] %vm1986, %v2653
    %2698 = vst.msk [vmem:[#allocation2 + $0x45] sm:$0x1] %vm1986, %v2655
    %2699 = vst.msk [vmem:[#allocation2 + $0x55] sm:$0x1] %vm1986, %v2657
    %2700 = vst.msk [vmem:[#allocation2 + $0x65] sm:$0x1] %vm1986, %v2659
    %2701 = vst.msk [vmem:[#allocation2 + $0x75] sm:$0x1] %vm1986, %v2661
    %2702 = vst.msk [vmem:[#allocation2 + $0x85] sm:$0x1] %vm1986, %v2663
    %2703 = vst.msk [vmem:[#allocation2 + $0x95] sm:$0x1] %vm1986, %v2665
    %2704 = vst.msk [vmem:[#allocation2 + $0xa5] sm:$0x1] %vm1986, %v2667
    %2705 = vst.msk [vmem:[#allocation2 + $0xb5] sm:$0x1] %vm1986, %v2669
    %2706 = vst.msk [vmem:[#allocation2 + $0xc5] sm:$0x1] %vm1986, %v2671
    %2707 = vst.msk [vmem:[#allocation2 + $0xd5] sm:$0x1] %vm1986, %v2673
    %2708 = vst.msk [vmem:[#allocation2 + $0xe5] sm:$0x1] %vm1986, %v2675
    %2709 = vst.msk [vmem:[#allocation2 + $0xf5] sm:$0x1] %vm1986, %v2677
    %2710 = vrot.lane.b32.xlu0 %v2213, 38
    %v2711 = vpop.permute.xlu0 %2710
    %2712 = vrot.lane.b32.xlu0 %v2217, 38
    %v2713 = vpop.permute.xlu0 %2712
    %2714 = vrot.lane.b32.xlu0 %v2221, 38
    %v2715 = vpop.permute.xlu0 %2714
    %2716 = vrot.lane.b32.xlu0 %v2225, 38
    %v2717 = vpop.permute.xlu0 %2716
    %2718 = vrot.lane.b32.xlu0 %v2229, 38
    %v2719 = vpop.permute.xlu0 %2718
    %2720 = vrot.lane.b32.xlu0 %v2233, 38
    %v2721 = vpop.permute.xlu0 %2720
    %2722 = vrot.lane.b32.xlu0 %v2237, 38
    %v2723 = vpop.permute.xlu0 %2722
    %2724 = vrot.lane.b32.xlu0 %v2241, 38
    %v2725 = vpop.permute.xlu0 %2724
    %2734 = vst.msk [vmem:[#allocation4 + $0x5] sm:$0x1] %vm1986, %v2711
    %2735 = vst.msk [vmem:[#allocation4 + $0x15] sm:$0x1] %vm1986, %v2713
    %2736 = vst.msk [vmem:[#allocation4 + $0x25] sm:$0x1] %vm1986, %v2715
    %2737 = vst.msk [vmem:[#allocation4 + $0x35] sm:$0x1] %vm1986, %v2717
    %2738 = vst.msk [vmem:[#allocation4 + $0x45] sm:$0x1] %vm1986, %v2719
    %2739 = vst.msk [vmem:[#allocation4 + $0x55] sm:$0x1] %vm1986, %v2721
    %2740 = vst.msk [vmem:[#allocation4 + $0x65] sm:$0x1] %vm1986, %v2723
    %2741 = vst.msk [vmem:[#allocation4 + $0x75] sm:$0x1] %vm1986, %v2725
    %2742 = vrot.lane.b32.xlu0 %v1861, 38
    %v2743 = vpop.permute.xlu0 %2742
    %2744 = vrot.lane.b32.xlu0 %v1864, 38
    %v2745 = vpop.permute.xlu0 %2744
    %2746 = vrot.lane.b32.xlu0 %v1867, 38
    %v2747 = vpop.permute.xlu0 %2746
    %v2751 = vsel %vm2069, %v2743, 0.0
    %2752 = vadd.xlane.f32.xlu0 %v2751
    %v2753 = vpop.xlane.xlu0 %2752
    %v2754 = vsel %vm2069, %v2745, 0.0
    %2755 = vadd.xlane.f32.xlu0 %v2754
    %v2756 = vpop.xlane.xlu0 %2755
    %v2757 = vsel %vm2069, %v2747, 0.0
    %2758 = vadd.xlane.f32.xlu0 %v2757
    %v2759 = vpop.xlane.xlu0 %2758
    %v2760 = vadd.f32 %v2643, %v2753
    %v2761 = vadd.f32 %v2644, %v2756
    %v2762 = vadd.f32 %v2645, %v2759
    %2763 = vrot.lane.b32.xlu0 %v2085, 20
    %v2764 = vpop.permute.xlu0 %2763
    %2765 = vrot.lane.b32.xlu0 %v2089, 20
    %v2766 = vpop.permute.xlu0 %2765
    %2767 = vrot.lane.b32.xlu0 %v2093, 20
    %v2768 = vpop.permute.xlu0 %2767
    %2769 = vrot.lane.b32.xlu0 %v2097, 20
    %v2770 = vpop.permute.xlu0 %2769
    %2771 = vrot.lane.b32.xlu0 %v2101, 20
    %v2772 = vpop.permute.xlu0 %2771
    %2773 = vrot.lane.b32.xlu0 %v2105, 20
    %v2774 = vpop.permute.xlu0 %2773
    %2775 = vrot.lane.b32.xlu0 %v2109, 20
    %v2776 = vpop.permute.xlu0 %2775
    %2777 = vrot.lane.b32.xlu0 %v2113, 20
    %v2778 = vpop.permute.xlu0 %2777
    %2779 = vrot.lane.b32.xlu0 %v2117, 20
    %v2780 = vpop.permute.xlu0 %2779
    %2781 = vrot.lane.b32.xlu0 %v2121, 20
    %v2782 = vpop.permute.xlu0 %2781
    %2783 = vrot.lane.b32.xlu0 %v2125, 20
    %v2784 = vpop.permute.xlu0 %2783
    %2785 = vrot.lane.b32.xlu0 %v2129, 20
    %v2786 = vpop.permute.xlu0 %2785
    %2787 = vrot.lane.b32.xlu0 %v2133, 20
    %v2788 = vpop.permute.xlu0 %2787
    %2789 = vrot.lane.b32.xlu0 %v2137, 20
    %v2790 = vpop.permute.xlu0 %2789
    %2791 = vrot.lane.b32.xlu0 %v2141, 20
    %v2792 = vpop.permute.xlu0 %2791
    %2793 = vrot.lane.b32.xlu0 %v2145, 20
    %v2794 = vpop.permute.xlu0 %2793
    %2811 = vst.msk [vmem:[#allocation2 + $0x6] sm:$0x1] %vm1986, %v2764
    %2812 = vst.msk [vmem:[#allocation2 + $0x16] sm:$0x1] %vm1986, %v2766
    %2813 = vst.msk [vmem:[#allocation2 + $0x26] sm:$0x1] %vm1986, %v2768
    %2814 = vst.msk [vmem:[#allocation2 + $0x36] sm:$0x1] %vm1986, %v2770
    %2815 = vst.msk [vmem:[#allocation2 + $0x46] sm:$0x1] %vm1986, %v2772
    %2816 = vst.msk [vmem:[#allocation2 + $0x56] sm:$0x1] %vm1986, %v2774
    %2817 = vst.msk [vmem:[#allocation2 + $0x66] sm:$0x1] %vm1986, %v2776
    %2818 = vst.msk [vmem:[#allocation2 + $0x76] sm:$0x1] %vm1986, %v2778
    %2819 = vst.msk [vmem:[#allocation2 + $0x86] sm:$0x1] %vm1986, %v2780
    %2820 = vst.msk [vmem:[#allocation2 + $0x96] sm:$0x1] %vm1986, %v2782
    %2821 = vst.msk [vmem:[#allocation2 + $0xa6] sm:$0x1] %vm1986, %v2784
    %2822 = vst.msk [vmem:[#allocation2 + $0xb6] sm:$0x1] %vm1986, %v2786
    %2823 = vst.msk [vmem:[#allocation2 + $0xc6] sm:$0x1] %vm1986, %v2788
    %2824 = vst.msk [vmem:[#allocation2 + $0xd6] sm:$0x1] %vm1986, %v2790
    %2825 = vst.msk [vmem:[#allocation2 + $0xe6] sm:$0x1] %vm1986, %v2792
    %2826 = vst.msk [vmem:[#allocation2 + $0xf6] sm:$0x1] %vm1986, %v2794
    %2827 = vrot.lane.b32.xlu0 %v2213, 20
    %v2828 = vpop.permute.xlu0 %2827
    %2829 = vrot.lane.b32.xlu0 %v2217, 20
    %v2830 = vpop.permute.xlu0 %2829
    %2831 = vrot.lane.b32.xlu0 %v2221, 20
    %v2832 = vpop.permute.xlu0 %2831
    %2833 = vrot.lane.b32.xlu0 %v2225, 20
    %v2834 = vpop.permute.xlu0 %2833
    %2835 = vrot.lane.b32.xlu0 %v2229, 20
    %v2836 = vpop.permute.xlu0 %2835
    %2837 = vrot.lane.b32.xlu0 %v2233, 20
    %v2838 = vpop.permute.xlu0 %2837
    %2839 = vrot.lane.b32.xlu0 %v2237, 20
    %v2840 = vpop.permute.xlu0 %2839
    %2841 = vrot.lane.b32.xlu0 %v2241, 20
    %v2842 = vpop.permute.xlu0 %2841
    %2851 = vst.msk [vmem:[#allocation4 + $0x6] sm:$0x1] %vm1986, %v2828
    %2852 = vst.msk [vmem:[#allocation4 + $0x16] sm:$0x1] %vm1986, %v2830
    %2853 = vst.msk [vmem:[#allocation4 + $0x26] sm:$0x1] %vm1986, %v2832
    %2854 = vst.msk [vmem:[#allocation4 + $0x36] sm:$0x1] %vm1986, %v2834
    %2855 = vst.msk [vmem:[#allocation4 + $0x46] sm:$0x1] %vm1986, %v2836
    %2856 = vst.msk [vmem:[#allocation4 + $0x56] sm:$0x1] %vm1986, %v2838
    %2857 = vst.msk [vmem:[#allocation4 + $0x66] sm:$0x1] %vm1986, %v2840
    %2858 = vst.msk [vmem:[#allocation4 + $0x76] sm:$0x1] %vm1986, %v2842
    %2859 = vrot.lane.b32.xlu0 %v1861, 20
    %v2860 = vpop.permute.xlu0 %2859
    %2861 = vrot.lane.b32.xlu0 %v1864, 20
    %v2862 = vpop.permute.xlu0 %2861
    %2863 = vrot.lane.b32.xlu0 %v1867, 20
    %v2864 = vpop.permute.xlu0 %2863
    %v2868 = vsel %vm2069, %v2860, 0.0
    %2869 = vadd.xlane.f32.xlu0 %v2868
    %v2870 = vpop.xlane.xlu0 %2869
    %v2871 = vsel %vm2069, %v2862, 0.0
    %2872 = vadd.xlane.f32.xlu0 %v2871
    %v2873 = vpop.xlane.xlu0 %2872
    %v2874 = vsel %vm2069, %v2864, 0.0
    %2875 = vadd.xlane.f32.xlu0 %v2874
    %v2876 = vpop.xlane.xlu0 %2875
    %v2877 = vadd.f32 %v2760, %v2870
    %v2878 = vadd.f32 %v2761, %v2873
    %v2879 = vadd.f32 %v2762, %v2876
    %v2882 = vcombine.low %v1861, %v1862
    %v2883 = vcombine.high %v1861, %v1862
    %v2885 = vunpack.c.l.s4 1966171168
    %v2886 = vunpack.c.0.s8 %v2885
    %v2887 = vlaneseq
    %v2888 = vshrl.u32 %v2887, 7
    %v2889 = vsub.s32 %v2886, %v2888
    %v2890 = vrot.slane %v2882, %v2889
    %v2892 = vunpack.c.l.s4 1966171168
    %v2893 = vunpack.c.0.s8 %v2892
    %v2894 = vlaneseq
    %v2895 = vshrl.u32 %v2894, 7
    %v2896 = vsub.s32 %v2893, %v2895
    %v2897 = vrot.slane %v2883, %v2896
    %v2898 = vcombine.high %v2890, %v2890
    %v2899 = vcombine.high %v2897, %v2897
    %v2901 = vunpack.c.l.s4 1966171168
    %v2902 = vunpack.c.0.s8 %v2901
    %v2903 = vlaneseq
    %v2904 = vshrl.u32 %v2903, 7
    %v2905 = vsub.s32 %v2902, %v2904
    %v2906 = vrot.slane %v2890, %v2905
    %v2908 = vunpack.c.l.s4 1966171168
    %v2909 = vunpack.c.0.s8 %v2908
    %v2910 = vlaneseq
    %v2911 = vshrl.u32 %v2910, 7
    %v2912 = vsub.s32 %v2909, %v2911
    %v2913 = vrot.slane %v2897, %v2912
    %v2915 = vunpack.c.l.s4 1966171168
    %v2916 = vunpack.c.0.s8 %v2915
    %v2917 = vlaneseq
    %v2918 = vshrl.u32 %v2917, 7
    %v2919 = vsub.s32 %v2916, %v2918
    %v2920 = vrot.slane %v2898, %v2919
    %v2922 = vunpack.c.l.s4 1966171168
    %v2923 = vunpack.c.0.s8 %v2922
    %v2924 = vlaneseq
    %v2925 = vshrl.u32 %v2924, 7
    %v2926 = vsub.s32 %v2923, %v2925
    %v2927 = vrot.slane %v2899, %v2926
    %v2928 = vcombine.high %v2906, %v2906
    %v2929 = vcombine.high %v2913, %v2913
    %v2930 = vcombine.high %v2920, %v2920
    %v2931 = vcombine.high %v2927, %v2927
    %v2932 = vcombine.low %v1864, %v1865
    %v2933 = vcombine.high %v1864, %v1865
    %v2935 = vunpack.c.l.s4 1966171168
    %v2936 = vunpack.c.0.s8 %v2935
    %v2937 = vlaneseq
    %v2938 = vshrl.u32 %v2937, 7
    %v2939 = vsub.s32 %v2936, %v2938
    %v2940 = vrot.slane %v2932, %v2939
    %v2942 = vunpack.c.l.s4 1966171168
    %v2943 = vunpack.c.0.s8 %v2942
    %v2944 = vlaneseq
    %v2945 = vshrl.u32 %v2944, 7
    %v2946 = vsub.s32 %v2943, %v2945
    %v2947 = vrot.slane %v2933, %v2946
    %v2948 = vcombine.high %v2940, %v2940
    %v2949 = vcombine.high %v2947, %v2947
    %v2951 = vunpack.c.l.s4 1966171168
    %v2952 = vunpack.c.0.s8 %v2951
    %v2953 = vlaneseq
    %v2954 = vshrl.u32 %v2953, 7
    %v2955 = vsub.s32 %v2952, %v2954
    %v2956 = vrot.slane %v2940, %v2955
    %v2958 = vunpack.c.l.s4 1966171168
    %v2959 = vunpack.c.0.s8 %v2958
    %v2960 = vlaneseq
    %v2961 = vshrl.u32 %v2960, 7
    %v2962 = vsub.s32 %v2959, %v2961
    %v2963 = vrot.slane %v2947, %v2962
    %v2965 = vunpack.c.l.s4 1966171168
    %v2966 = vunpack.c.0.s8 %v2965
    %v2967 = vlaneseq
    %v2968 = vshrl.u32 %v2967, 7
    %v2969 = vsub.s32 %v2966, %v2968
    %v2970 = vrot.slane %v2948, %v2969
    %v2972 = vunpack.c.l.s4 1966171168
    %v2973 = vunpack.c.0.s8 %v2972
    %v2974 = vlaneseq
    %v2975 = vshrl.u32 %v2974, 7
    %v2976 = vsub.s32 %v2973, %v2975
    %v2977 = vrot.slane %v2949, %v2976
    %v2978 = vcombine.high %v2956, %v2956
    %v2979 = vcombine.high %v2963, %v2963
    %v2980 = vcombine.high %v2970, %v2970
    %v2981 = vcombine.high %v2977, %v2977
    %v2982 = vlaneseq
    %v2983 = vshrl.u32 %v2982, 7
    %v2984 = vsub.s32 0, %v2983
    %v2985 = vrot.slane %v2906, %v2984
    %v2986 = vlaneseq
    %v2987 = vshrl.u32 %v2986, 7
    %v2988 = vsub.s32 1, %v2987
    %v2989 = vrot.slane %v2906, %v2988
    %v2990 = vlaneseq
    %v2991 = vshrl.u32 %v2990, 7
    %v2992 = vsub.s32 0, %v2991
    %v2993 = vrot.slane %v2920, %v2992
    %v2994 = vlaneseq
    %v2995 = vshrl.u32 %v2994, 7
    %v2996 = vsub.s32 1, %v2995
    %v2997 = vrot.slane %v2920, %v2996
    %v2998 = vlaneseq
    %v2999 = vshrl.u32 %v2998, 7
    %v3000 = vsub.s32 0, %v2999
    %v3001 = vrot.slane %v2928, %v3000
    %v3002 = vlaneseq
    %v3003 = vshrl.u32 %v3002, 7
    %v3004 = vsub.s32 1, %v3003
    %v3005 = vrot.slane %v2928, %v3004
    %v3006 = vlaneseq
    %v3007 = vshrl.u32 %v3006, 7
    %v3008 = vsub.s32 0, %v3007
    %v3009 = vrot.slane %v2930, %v3008
    %v3010 = vlaneseq
    %v3011 = vshrl.u32 %v3010, 7
    %v3012 = vsub.s32 1, %v3011
    %v3013 = vrot.slane %v2930, %v3012
    %v3014 = vlaneseq
    %v3015 = vshrl.u32 %v3014, 7
    %v3016 = vsub.s32 0, %v3015
    %v3017 = vrot.slane %v2913, %v3016
    %v3018 = vlaneseq
    %v3019 = vshrl.u32 %v3018, 7
    %v3020 = vsub.s32 1, %v3019
    %v3021 = vrot.slane %v2913, %v3020
    %v3022 = vlaneseq
    %v3023 = vshrl.u32 %v3022, 7
    %v3024 = vsub.s32 0, %v3023
    %v3025 = vrot.slane %v2927, %v3024
    %v3026 = vlaneseq
    %v3027 = vshrl.u32 %v3026, 7
    %v3028 = vsub.s32 1, %v3027
    %v3029 = vrot.slane %v2927, %v3028
    %v3030 = vlaneseq
    %v3031 = vshrl.u32 %v3030, 7
    %v3032 = vsub.s32 0, %v3031
    %v3033 = vrot.slane %v2929, %v3032
    %v3034 = vlaneseq
    %v3035 = vshrl.u32 %v3034, 7
    %v3036 = vsub.s32 1, %v3035
    %v3037 = vrot.slane %v2929, %v3036
    %v3038 = vlaneseq
    %v3039 = vshrl.u32 %v3038, 7
    %v3040 = vsub.s32 0, %v3039
    %v3041 = vrot.slane %v2931, %v3040
    %v3042 = vlaneseq
    %v3043 = vshrl.u32 %v3042, 7
    %v3044 = vsub.s32 1, %v3043
    %v3045 = vrot.slane %v2931, %v3044
    %v3046 = vlaneseq
    %v3047 = vshrl.u32 %v3046, 7
    %v3048 = vsub.s32 0, %v3047
    %v3049 = vrot.slane %v2956, %v3048
    %v3050 = vlaneseq
    %v3051 = vshrl.u32 %v3050, 7
    %v3052 = vsub.s32 1, %v3051
    %v3053 = vrot.slane %v2956, %v3052
    %v3054 = vlaneseq
    %v3055 = vshrl.u32 %v3054, 7
    %v3056 = vsub.s32 0, %v3055
    %v3057 = vrot.slane %v2970, %v3056
    %v3058 = vlaneseq
    %v3059 = vshrl.u32 %v3058, 7
    %v3060 = vsub.s32 1, %v3059
    %v3061 = vrot.slane %v2970, %v3060
    %v3062 = vlaneseq
    %v3063 = vshrl.u32 %v3062, 7
    %v3064 = vsub.s32 0, %v3063
    %v3065 = vrot.slane %v2978, %v3064
    %v3066 = vlaneseq
    %v3067 = vshrl.u32 %v3066, 7
    %v3068 = vsub.s32 1, %v3067
    %v3069 = vrot.slane %v2978, %v3068
    %v3070 = vlaneseq
    %v3071 = vshrl.u32 %v3070, 7
    %v3072 = vsub.s32 0, %v3071
    %v3073 = vrot.slane %v2980, %v3072
    %v3074 = vlaneseq
    %v3075 = vshrl.u32 %v3074, 7
    %v3076 = vsub.s32 1, %v3075
    %v3077 = vrot.slane %v2980, %v3076
    %v3078 = vlaneseq
    %v3079 = vshrl.u32 %v3078, 7
    %v3080 = vsub.s32 0, %v3079
    %v3081 = vrot.slane %v2963, %v3080
    %v3082 = vlaneseq
    %v3083 = vshrl.u32 %v3082, 7
    %v3084 = vsub.s32 1, %v3083
    %v3085 = vrot.slane %v2963, %v3084
    %v3086 = vlaneseq
    %v3087 = vshrl.u32 %v3086, 7
    %v3088 = vsub.s32 0, %v3087
    %v3089 = vrot.slane %v2977, %v3088
    %v3090 = vlaneseq
    %v3091 = vshrl.u32 %v3090, 7
    %v3092 = vsub.s32 1, %v3091
    %v3093 = vrot.slane %v2977, %v3092
    %v3094 = vlaneseq
    %v3095 = vshrl.u32 %v3094, 7
    %v3096 = vsub.s32 0, %v3095
    %v3097 = vrot.slane %v2979, %v3096
    %v3098 = vlaneseq
    %v3099 = vshrl.u32 %v3098, 7
    %v3100 = vsub.s32 1, %v3099
    %v3101 = vrot.slane %v2979, %v3100
    %v3102 = vlaneseq
    %v3103 = vshrl.u32 %v3102, 7
    %v3104 = vsub.s32 0, %v3103
    %v3105 = vrot.slane %v2981, %v3104
    %v3106 = vlaneseq
    %v3107 = vshrl.u32 %v3106, 7
    %v3108 = vsub.s32 1, %v3107
    %v3109 = vrot.slane %v2981, %v3108
    %3110 = vrot.lane.b32.xlu0 %v2985, 2
    %v3111 = vpop.permute.xlu0 %3110
    %3112 = vrot.lane.b32.xlu0 %v2989, 2
    %v3113 = vpop.permute.xlu0 %3112
    %3114 = vrot.lane.b32.xlu0 %v2993, 2
    %v3115 = vpop.permute.xlu0 %3114
    %3116 = vrot.lane.b32.xlu0 %v2997, 2
    %v3117 = vpop.permute.xlu0 %3116
    %3118 = vrot.lane.b32.xlu0 %v3001, 2
    %v3119 = vpop.permute.xlu0 %3118
    %3120 = vrot.lane.b32.xlu0 %v3005, 2
    %v3121 = vpop.permute.xlu0 %3120
    %3122 = vrot.lane.b32.xlu0 %v3009, 2
    %v3123 = vpop.permute.xlu0 %3122
    %3124 = vrot.lane.b32.xlu0 %v3013, 2
    %v3125 = vpop.permute.xlu0 %3124
    %3126 = vrot.lane.b32.xlu0 %v3017, 2
    %v3127 = vpop.permute.xlu0 %3126
    %3128 = vrot.lane.b32.xlu0 %v3021, 2
    %v3129 = vpop.permute.xlu0 %3128
    %3130 = vrot.lane.b32.xlu0 %v3025, 2
    %v3131 = vpop.permute.xlu0 %3130
    %3132 = vrot.lane.b32.xlu0 %v3029, 2
    %v3133 = vpop.permute.xlu0 %3132
    %3134 = vrot.lane.b32.xlu0 %v3033, 2
    %v3135 = vpop.permute.xlu0 %3134
    %3136 = vrot.lane.b32.xlu0 %v3037, 2
    %v3137 = vpop.permute.xlu0 %3136
    %3138 = vrot.lane.b32.xlu0 %v3041, 2
    %v3139 = vpop.permute.xlu0 %3138
    %3140 = vrot.lane.b32.xlu0 %v3045, 2
    %v3141 = vpop.permute.xlu0 %3140
    %3142 = vrot.lane.b32.xlu0 %v3049, 2
    %v3143 = vpop.permute.xlu0 %3142
    %3144 = vrot.lane.b32.xlu0 %v3053, 2
    %v3145 = vpop.permute.xlu0 %3144
    %3146 = vrot.lane.b32.xlu0 %v3057, 2
    %v3147 = vpop.permute.xlu0 %3146
    %3148 = vrot.lane.b32.xlu0 %v3061, 2
    %v3149 = vpop.permute.xlu0 %3148
    %3150 = vrot.lane.b32.xlu0 %v3065, 2
    %v3151 = vpop.permute.xlu0 %3150
    %3152 = vrot.lane.b32.xlu0 %v3069, 2
    %v3153 = vpop.permute.xlu0 %3152
    %3154 = vrot.lane.b32.xlu0 %v3073, 2
    %v3155 = vpop.permute.xlu0 %3154
    %3156 = vrot.lane.b32.xlu0 %v3077, 2
    %v3157 = vpop.permute.xlu0 %3156
    %3158 = vrot.lane.b32.xlu0 %v3081, 2
    %v3159 = vpop.permute.xlu0 %3158
    %3160 = vrot.lane.b32.xlu0 %v3085, 2
    %v3161 = vpop.permute.xlu0 %3160
    %3162 = vrot.lane.b32.xlu0 %v3089, 2
    %v3163 = vpop.permute.xlu0 %3162
    %3164 = vrot.lane.b32.xlu0 %v3093, 2
    %v3165 = vpop.permute.xlu0 %3164
    %3166 = vrot.lane.b32.xlu0 %v3097, 2
    %v3167 = vpop.permute.xlu0 %3166
    %3168 = vrot.lane.b32.xlu0 %v3101, 2
    %v3169 = vpop.permute.xlu0 %3168
    %3170 = vrot.lane.b32.xlu0 %v3105, 2
    %v3171 = vpop.permute.xlu0 %3170
    %3172 = vrot.lane.b32.xlu0 %v3109, 2
    %v3173 = vpop.permute.xlu0 %3172
    %vm3174 = vcmask 15360
    %v3175 = vsel %vm3174, %v3111, %v3113
    %v3176 = vsel %vm3174, %v3115, %v3117
    %v3177 = vsel %vm3174, %v3119, %v3121
    %v3178 = vsel %vm3174, %v3123, %v3125
    %v3179 = vsel %vm3174, %v3127, %v3129
    %v3180 = vsel %vm3174, %v3131, %v3133
    %v3181 = vsel %vm3174, %v3135, %v3137
    %v3182 = vsel %vm3174, %v3139, %v3141
    %v3183 = vsel %vm3174, %v3143, %v3145
    %v3184 = vsel %vm3174, %v3147, %v3149
    %v3185 = vsel %vm3174, %v3151, %v3153
    %v3186 = vsel %vm3174, %v3155, %v3157
    %v3187 = vsel %vm3174, %v3159, %v3161
    %v3188 = vsel %vm3174, %v3163, %v3165
    %v3189 = vsel %vm3174, %v3167, %v3169
    %v3190 = vsel %vm3174, %v3171, %v3173
    %3207 = vst.msk [vmem:[#allocation2 + $0x7] sm:$0x1] %vm1986, %v3175
    %3208 = vst.msk [vmem:[#allocation2 + $0x17] sm:$0x1] %vm1986, %v3176
    %3209 = vst.msk [vmem:[#allocation2 + $0x27] sm:$0x1] %vm1986, %v3177
    %3210 = vst.msk [vmem:[#allocation2 + $0x37] sm:$0x1] %vm1986, %v3178
    %3211 = vst.msk [vmem:[#allocation2 + $0x47] sm:$0x1] %vm1986, %v3179
    %3212 = vst.msk [vmem:[#allocation2 + $0x57] sm:$0x1] %vm1986, %v3180
    %3213 = vst.msk [vmem:[#allocation2 + $0x67] sm:$0x1] %vm1986, %v3181
    %3214 = vst.msk [vmem:[#allocation2 + $0x77] sm:$0x1] %vm1986, %v3182
    %3215 = vst.msk [vmem:[#allocation2 + $0x87] sm:$0x1] %vm1986, %v3183
    %3216 = vst.msk [vmem:[#allocation2 + $0x97] sm:$0x1] %vm1986, %v3184
    %3217 = vst.msk [vmem:[#allocation2 + $0xa7] sm:$0x1] %vm1986, %v3185
    %3218 = vst.msk [vmem:[#allocation2 + $0xb7] sm:$0x1] %vm1986, %v3186
    %3219 = vst.msk [vmem:[#allocation2 + $0xc7] sm:$0x1] %vm1986, %v3187
    %3220 = vst.msk [vmem:[#allocation2 + $0xd7] sm:$0x1] %vm1986, %v3188
    %3221 = vst.msk [vmem:[#allocation2 + $0xe7] sm:$0x1] %vm1986, %v3189
    %3222 = vst.msk [vmem:[#allocation2 + $0xf7] sm:$0x1] %vm1986, %v3190
    %v3224 = vcombine.low %v1867, %v1868
    %v3225 = vcombine.high %v1867, %v1868
    %v3227 = vunpack.c.l.s4 1966171168
    %v3228 = vunpack.c.0.s8 %v3227
    %v3229 = vlaneseq
    %v3230 = vshrl.u32 %v3229, 7
    %v3231 = vsub.s32 %v3228, %v3230
    %v3232 = vrot.slane %v3224, %v3231
    %v3234 = vunpack.c.l.s4 1966171168
    %v3235 = vunpack.c.0.s8 %v3234
    %v3236 = vlaneseq
    %v3237 = vshrl.u32 %v3236, 7
    %v3238 = vsub.s32 %v3235, %v3237
    %v3239 = vrot.slane %v3225, %v3238
    %v3240 = vcombine.high %v3232, %v3232
    %v3241 = vcombine.high %v3239, %v3239
    %v3243 = vunpack.c.l.s4 1966171168
    %v3244 = vunpack.c.0.s8 %v3243
    %v3245 = vlaneseq
    %v3246 = vshrl.u32 %v3245, 7
    %v3247 = vsub.s32 %v3244, %v3246
    %v3248 = vrot.slane %v3232, %v3247
    %v3250 = vunpack.c.l.s4 1966171168
    %v3251 = vunpack.c.0.s8 %v3250
    %v3252 = vlaneseq
    %v3253 = vshrl.u32 %v3252, 7
    %v3254 = vsub.s32 %v3251, %v3253
    %v3255 = vrot.slane %v3239, %v3254
    %v3257 = vunpack.c.l.s4 1966171168
    %v3258 = vunpack.c.0.s8 %v3257
    %v3259 = vlaneseq
    %v3260 = vshrl.u32 %v3259, 7
    %v3261 = vsub.s32 %v3258, %v3260
    %v3262 = vrot.slane %v3240, %v3261
    %v3264 = vunpack.c.l.s4 1966171168
    %v3265 = vunpack.c.0.s8 %v3264
    %v3266 = vlaneseq
    %v3267 = vshrl.u32 %v3266, 7
    %v3268 = vsub.s32 %v3265, %v3267
    %v3269 = vrot.slane %v3241, %v3268
    %v3270 = vcombine.high %v3248, %v3248
    %v3271 = vcombine.high %v3255, %v3255
    %v3272 = vcombine.high %v3262, %v3262
    %v3273 = vcombine.high %v3269, %v3269
    %v3274 = vlaneseq
    %v3275 = vshrl.u32 %v3274, 7
    %v3276 = vsub.s32 0, %v3275
    %v3277 = vrot.slane %v3248, %v3276
    %v3278 = vlaneseq
    %v3279 = vshrl.u32 %v3278, 7
    %v3280 = vsub.s32 1, %v3279
    %v3281 = vrot.slane %v3248, %v3280
    %v3282 = vlaneseq
    %v3283 = vshrl.u32 %v3282, 7
    %v3284 = vsub.s32 0, %v3283
    %v3285 = vrot.slane %v3262, %v3284
    %v3286 = vlaneseq
    %v3287 = vshrl.u32 %v3286, 7
    %v3288 = vsub.s32 1, %v3287
    %v3289 = vrot.slane %v3262, %v3288
    %v3290 = vlaneseq
    %v3291 = vshrl.u32 %v3290, 7
    %v3292 = vsub.s32 0, %v3291
    %v3293 = vrot.slane %v3270, %v3292
    %v3294 = vlaneseq
    %v3295 = vshrl.u32 %v3294, 7
    %v3296 = vsub.s32 1, %v3295
    %v3297 = vrot.slane %v3270, %v3296
    %v3298 = vlaneseq
    %v3299 = vshrl.u32 %v3298, 7
    %v3300 = vsub.s32 0, %v3299
    %v3301 = vrot.slane %v3272, %v3300
    %v3302 = vlaneseq
    %v3303 = vshrl.u32 %v3302, 7
    %v3304 = vsub.s32 1, %v3303
    %v3305 = vrot.slane %v3272, %v3304
    %v3306 = vlaneseq
    %v3307 = vshrl.u32 %v3306, 7
    %v3308 = vsub.s32 0, %v3307
    %v3309 = vrot.slane %v3255, %v3308
    %v3310 = vlaneseq
    %v3311 = vshrl.u32 %v3310, 7
    %v3312 = vsub.s32 1, %v3311
    %v3313 = vrot.slane %v3255, %v3312
    %v3314 = vlaneseq
    %v3315 = vshrl.u32 %v3314, 7
    %v3316 = vsub.s32 0, %v3315
    %v3317 = vrot.slane %v3269, %v3316
    %v3318 = vlaneseq
    %v3319 = vshrl.u32 %v3318, 7
    %v3320 = vsub.s32 1, %v3319
    %v3321 = vrot.slane %v3269, %v3320
    %v3322 = vlaneseq
    %v3323 = vshrl.u32 %v3322, 7
    %v3324 = vsub.s32 0, %v3323
    %v3325 = vrot.slane %v3271, %v3324
    %v3326 = vlaneseq
    %v3327 = vshrl.u32 %v3326, 7
    %v3328 = vsub.s32 1, %v3327
    %v3329 = vrot.slane %v3271, %v3328
    %v3330 = vlaneseq
    %v3331 = vshrl.u32 %v3330, 7
    %v3332 = vsub.s32 0, %v3331
    %v3333 = vrot.slane %v3273, %v3332
    %v3334 = vlaneseq
    %v3335 = vshrl.u32 %v3334, 7
    %v3336 = vsub.s32 1, %v3335
    %v3337 = vrot.slane %v3273, %v3336
    %3338 = vrot.lane.b32.xlu0 %v3277, 2
    %v3339 = vpop.permute.xlu0 %3338
    %3340 = vrot.lane.b32.xlu0 %v3281, 2
    %v3341 = vpop.permute.xlu0 %3340
    %3342 = vrot.lane.b32.xlu0 %v3285, 2
    %v3343 = vpop.permute.xlu0 %3342
    %3344 = vrot.lane.b32.xlu0 %v3289, 2
    %v3345 = vpop.permute.xlu0 %3344
    %3346 = vrot.lane.b32.xlu0 %v3293, 2
    %v3347 = vpop.permute.xlu0 %3346
    %3348 = vrot.lane.b32.xlu0 %v3297, 2
    %v3349 = vpop.permute.xlu0 %3348
    %3350 = vrot.lane.b32.xlu0 %v3301, 2
    %v3351 = vpop.permute.xlu0 %3350
    %3352 = vrot.lane.b32.xlu0 %v3305, 2
    %v3353 = vpop.permute.xlu0 %3352
    %3354 = vrot.lane.b32.xlu0 %v3309, 2
    %v3355 = vpop.permute.xlu0 %3354
    %3356 = vrot.lane.b32.xlu0 %v3313, 2
    %v3357 = vpop.permute.xlu0 %3356
    %3358 = vrot.lane.b32.xlu0 %v3317, 2
    %v3359 = vpop.permute.xlu0 %3358
    %3360 = vrot.lane.b32.xlu0 %v3321, 2
    %v3361 = vpop.permute.xlu0 %3360
    %3362 = vrot.lane.b32.xlu0 %v3325, 2
    %v3363 = vpop.permute.xlu0 %3362
    %3364 = vrot.lane.b32.xlu0 %v3329, 2
    %v3365 = vpop.permute.xlu0 %3364
    %3366 = vrot.lane.b32.xlu0 %v3333, 2
    %v3367 = vpop.permute.xlu0 %3366
    %3368 = vrot.lane.b32.xlu0 %v3337, 2
    %v3369 = vpop.permute.xlu0 %3368
    %v3370 = vsel %vm3174, %v3339, %v3341
    %v3371 = vsel %vm3174, %v3343, %v3345
    %v3372 = vsel %vm3174, %v3347, %v3349
    %v3373 = vsel %vm3174, %v3351, %v3353
    %v3374 = vsel %vm3174, %v3355, %v3357
    %v3375 = vsel %vm3174, %v3359, %v3361
    %v3376 = vsel %vm3174, %v3363, %v3365
    %v3377 = vsel %vm3174, %v3367, %v3369
    %3386 = vst.msk [vmem:[#allocation4 + $0x7] sm:$0x1] %vm1986, %v3370
    %3387 = vst.msk [vmem:[#allocation4 + $0x17] sm:$0x1] %vm1986, %v3371
    %3388 = vst.msk [vmem:[#allocation4 + $0x27] sm:$0x1] %vm1986, %v3372
    %3389 = vst.msk [vmem:[#allocation4 + $0x37] sm:$0x1] %vm1986, %v3373
    %3390 = vst.msk [vmem:[#allocation4 + $0x47] sm:$0x1] %vm1986, %v3374
    %3391 = vst.msk [vmem:[#allocation4 + $0x57] sm:$0x1] %vm1986, %v3375
    %3392 = vst.msk [vmem:[#allocation4 + $0x67] sm:$0x1] %vm1986, %v3376
    %3393 = vst.msk [vmem:[#allocation4 + $0x77] sm:$0x1] %vm1986, %v3377
    %3394 = vrot.lane.b32.xlu0 %v1861, 2
    %v3395 = vpop.permute.xlu0 %3394
    %3396 = vrot.lane.b32.xlu0 %v1862, 2
    %v3397 = vpop.permute.xlu0 %3396
    %3398 = vrot.lane.b32.xlu0 %v1864, 2
    %v3399 = vpop.permute.xlu0 %3398
    %3400 = vrot.lane.b32.xlu0 %v1865, 2
    %v3401 = vpop.permute.xlu0 %3400
    %3402 = vrot.lane.b32.xlu0 %v1867, 2
    %v3403 = vpop.permute.xlu0 %3402
    %3404 = vrot.lane.b32.xlu0 %v1868, 2
    %v3405 = vpop.permute.xlu0 %3404
    %v3406 = vsel %vm3174, %v3395, %v3397
    %v3407 = vsel %vm3174, %v3399, %v3401
    %v3408 = vsel %vm3174, %v3403, %v3405
    %v3412 = vsel %vm2069, %v3406, 0.0
    %3413 = vadd.xlane.f32.xlu0 %v3412
    %v3414 = vpop.xlane.xlu0 %3413
    %v3415 = vsel %vm2069, %v3407, 0.0
    %3416 = vadd.xlane.f32.xlu0 %v3415
    %v3417 = vpop.xlane.xlu0 %3416
    %v3418 = vsel %vm2069, %v3408, 0.0
    %3419 = vadd.xlane.f32.xlu0 %v3418
    %v3420 = vpop.xlane.xlu0 %3419
    %v3421 = vadd.f32 %v2877, %v3414
    %v3422 = vadd.f32 %v2878, %v3417
    %v3423 = vadd.f32 %v2879, %v3420
    %v3424 = vcombine.high %v1862, %v1862
    %v3426 = vunpack.c.l.s4 1966171168
    %v3427 = vunpack.c.0.s8 %v3426
    %v3428 = vlaneseq
    %v3429 = vshrl.u32 %v3428, 7
    %v3430 = vsub.s32 %v3427, %v3429
    %v3431 = vrot.slane %v1862, %v3430
    %v3433 = vunpack.c.l.s4 1966171168
    %v3434 = vunpack.c.0.s8 %v3433
    %v3435 = vlaneseq
    %v3436 = vshrl.u32 %v3435, 7
    %v3437 = vsub.s32 %v3434, %v3436
    %v3438 = vrot.slane %v3424, %v3437
    %v3439 = vcombine.high %v3431, %v3431
    %v3440 = vcombine.high %v3438, %v3438
    %v3442 = vunpack.c.l.s4 1966171168
    %v3443 = vunpack.c.0.s8 %v3442
    %v3444 = vlaneseq
    %v3445 = vshrl.u32 %v3444, 7
    %v3446 = vsub.s32 %v3443, %v3445
    %v3447 = vrot.slane %v3431, %v3446
    %v3449 = vunpack.c.l.s4 1966171168
    %v3450 = vunpack.c.0.s8 %v3449
    %v3451 = vlaneseq
    %v3452 = vshrl.u32 %v3451, 7
    %v3453 = vsub.s32 %v3450, %v3452
    %v3454 = vrot.slane %v3438, %v3453
    %v3456 = vunpack.c.l.s4 1966171168
    %v3457 = vunpack.c.0.s8 %v3456
    %v3458 = vlaneseq
    %v3459 = vshrl.u32 %v3458, 7
    %v3460 = vsub.s32 %v3457, %v3459
    %v3461 = vrot.slane %v3439, %v3460
    %v3463 = vunpack.c.l.s4 1966171168
    %v3464 = vunpack.c.0.s8 %v3463
    %v3465 = vlaneseq
    %v3466 = vshrl.u32 %v3465, 7
    %v3467 = vsub.s32 %v3464, %v3466
    %v3468 = vrot.slane %v3440, %v3467
    %v3469 = vcombine.high %v3447, %v3447
    %v3470 = vcombine.high %v3454, %v3454
    %v3471 = vcombine.high %v3461, %v3461
    %v3472 = vcombine.high %v3468, %v3468
    %v3473 = vcombine.high %v1865, %v1865
    %v3475 = vunpack.c.l.s4 1966171168
    %v3476 = vunpack.c.0.s8 %v3475
    %v3477 = vlaneseq
    %v3478 = vshrl.u32 %v3477, 7
    %v3479 = vsub.s32 %v3476, %v3478
    %v3480 = vrot.slane %v1865, %v3479
    %v3482 = vunpack.c.l.s4 1966171168
    %v3483 = vunpack.c.0.s8 %v3482
    %v3484 = vlaneseq
    %v3485 = vshrl.u32 %v3484, 7
    %v3486 = vsub.s32 %v3483, %v3485
    %v3487 = vrot.slane %v3473, %v3486
    %v3488 = vcombine.high %v3480, %v3480
    %v3489 = vcombine.high %v3487, %v3487
    %v3491 = vunpack.c.l.s4 1966171168
    %v3492 = vunpack.c.0.s8 %v3491
    %v3493 = vlaneseq
    %v3494 = vshrl.u32 %v3493, 7
    %v3495 = vsub.s32 %v3492, %v3494
    %v3496 = vrot.slane %v3480, %v3495
    %v3498 = vunpack.c.l.s4 1966171168
    %v3499 = vunpack.c.0.s8 %v3498
    %v3500 = vlaneseq
    %v3501 = vshrl.u32 %v3500, 7
    %v3502 = vsub.s32 %v3499, %v3501
    %v3503 = vrot.slane %v3487, %v3502
    %v3505 = vunpack.c.l.s4 1966171168
    %v3506 = vunpack.c.0.s8 %v3505
    %v3507 = vlaneseq
    %v3508 = vshrl.u32 %v3507, 7
    %v3509 = vsub.s32 %v3506, %v3508
    %v3510 = vrot.slane %v3488, %v3509
    %v3512 = vunpack.c.l.s4 1966171168
    %v3513 = vunpack.c.0.s8 %v3512
    %v3514 = vlaneseq
    %v3515 = vshrl.u32 %v3514, 7
    %v3516 = vsub.s32 %v3513, %v3515
    %v3517 = vrot.slane %v3489, %v3516
    %v3518 = vcombine.high %v3496, %v3496
    %v3519 = vcombine.high %v3503, %v3503
    %v3520 = vcombine.high %v3510, %v3510
    %v3521 = vcombine.high %v3517, %v3517
    %v3522 = vlaneseq
    %v3523 = vshrl.u32 %v3522, 7
    %v3524 = vsub.s32 0, %v3523
    %v3525 = vrot.slane %v3447, %v3524
    %v3526 = vlaneseq
    %v3527 = vshrl.u32 %v3526, 7
    %v3528 = vsub.s32 0, %v3527
    %v3529 = vrot.slane %v3461, %v3528
    %v3530 = vlaneseq
    %v3531 = vshrl.u32 %v3530, 7
    %v3532 = vsub.s32 0, %v3531
    %v3533 = vrot.slane %v3469, %v3532
    %v3534 = vlaneseq
    %v3535 = vshrl.u32 %v3534, 7
    %v3536 = vsub.s32 0, %v3535
    %v3537 = vrot.slane %v3471, %v3536
    %v3538 = vlaneseq
    %v3539 = vshrl.u32 %v3538, 7
    %v3540 = vsub.s32 0, %v3539
    %v3541 = vrot.slane %v3454, %v3540
    %v3542 = vlaneseq
    %v3543 = vshrl.u32 %v3542, 7
    %v3544 = vsub.s32 0, %v3543
    %v3545 = vrot.slane %v3468, %v3544
    %v3546 = vlaneseq
    %v3547 = vshrl.u32 %v3546, 7
    %v3548 = vsub.s32 0, %v3547
    %v3549 = vrot.slane %v3470, %v3548
    %v3550 = vlaneseq
    %v3551 = vshrl.u32 %v3550, 7
    %v3552 = vsub.s32 0, %v3551
    %v3553 = vrot.slane %v3472, %v3552
    %v3554 = vlaneseq
    %v3555 = vshrl.u32 %v3554, 7
    %v3556 = vsub.s32 0, %v3555
    %v3557 = vrot.slane %v3496, %v3556
    %v3558 = vlaneseq
    %v3559 = vshrl.u32 %v3558, 7
    %v3560 = vsub.s32 0, %v3559
    %v3561 = vrot.slane %v3510, %v3560
    %v3562 = vlaneseq
    %v3563 = vshrl.u32 %v3562, 7
    %v3564 = vsub.s32 0, %v3563
    %v3565 = vrot.slane %v3518, %v3564
    %v3566 = vlaneseq
    %v3567 = vshrl.u32 %v3566, 7
    %v3568 = vsub.s32 0, %v3567
    %v3569 = vrot.slane %v3520, %v3568
    %v3570 = vlaneseq
    %v3571 = vshrl.u32 %v3570, 7
    %v3572 = vsub.s32 0, %v3571
    %v3573 = vrot.slane %v3503, %v3572
    %v3574 = vlaneseq
    %v3575 = vshrl.u32 %v3574, 7
    %v3576 = vsub.s32 0, %v3575
    %v3577 = vrot.slane %v3517, %v3576
    %v3578 = vlaneseq
    %v3579 = vshrl.u32 %v3578, 7
    %v3580 = vsub.s32 0, %v3579
    %v3581 = vrot.slane %v3519, %v3580
    %v3582 = vlaneseq
    %v3583 = vshrl.u32 %v3582, 7
    %v3584 = vsub.s32 0, %v3583
    %v3585 = vrot.slane %v3521, %v3584
    %3586 = vrot.lane.b32.xlu0 %v3525, 112
    %v3587 = vpop.permute.xlu0 %3586
    %3588 = vrot.lane.b32.xlu0 %v3529, 112
    %v3589 = vpop.permute.xlu0 %3588
    %3590 = vrot.lane.b32.xlu0 %v3533, 112
    %v3591 = vpop.permute.xlu0 %3590
    %3592 = vrot.lane.b32.xlu0 %v3537, 112
    %v3593 = vpop.permute.xlu0 %3592
    %3594 = vrot.lane.b32.xlu0 %v3541, 112
    %v3595 = vpop.permute.xlu0 %3594
    %3596 = vrot.lane.b32.xlu0 %v3545, 112
    %v3597 = vpop.permute.xlu0 %3596
    %3598 = vrot.lane.b32.xlu0 %v3549, 112
    %v3599 = vpop.permute.xlu0 %3598
    %3600 = vrot.lane.b32.xlu0 %v3553, 112
    %v3601 = vpop.permute.xlu0 %3600
    %3602 = vrot.lane.b32.xlu0 %v3557, 112
    %v3603 = vpop.permute.xlu0 %3602
    %3604 = vrot.lane.b32.xlu0 %v3561, 112
    %v3605 = vpop.permute.xlu0 %3604
    %3606 = vrot.lane.b32.xlu0 %v3565, 112
    %v3607 = vpop.permute.xlu0 %3606
    %3608 = vrot.lane.b32.xlu0 %v3569, 112
    %v3609 = vpop.permute.xlu0 %3608
    %3610 = vrot.lane.b32.xlu0 %v3573, 112
    %v3611 = vpop.permute.xlu0 %3610
    %3612 = vrot.lane.b32.xlu0 %v3577, 112
    %v3613 = vpop.permute.xlu0 %3612
    %3614 = vrot.lane.b32.xlu0 %v3581, 112
    %v3615 = vpop.permute.xlu0 %3614
    %3616 = vrot.lane.b32.xlu0 %v3585, 112
    %v3617 = vpop.permute.xlu0 %3616
    %3634 = vst.msk [vmem:[#allocation2 + $0x8] sm:$0x1] %vm1986, %v3587
    %3635 = vst.msk [vmem:[#allocation2 + $0x18] sm:$0x1] %vm1986, %v3589
    %3636 = vst.msk [vmem:[#allocation2 + $0x28] sm:$0x1] %vm1986, %v3591
    %3637 = vst.msk [vmem:[#allocation2 + $0x38] sm:$0x1] %vm1986, %v3593
    %3638 = vst.msk [vmem:[#allocation2 + $0x48] sm:$0x1] %vm1986, %v3595
    %3639 = vst.msk [vmem:[#allocation2 + $0x58] sm:$0x1] %vm1986, %v3597
    %3640 = vst.msk [vmem:[#allocation2 + $0x68] sm:$0x1] %vm1986, %v3599
    %3641 = vst.msk [vmem:[#allocation2 + $0x78] sm:$0x1] %vm1986, %v3601
    %3642 = vst.msk [vmem:[#allocation2 + $0x88] sm:$0x1] %vm1986, %v3603
    %3643 = vst.msk [vmem:[#allocation2 + $0x98] sm:$0x1] %vm1986, %v3605
    %3644 = vst.msk [vmem:[#allocation2 + $0xa8] sm:$0x1] %vm1986, %v3607
    %3645 = vst.msk [vmem:[#allocation2 + $0xb8] sm:$0x1] %vm1986, %v3609
    %3646 = vst.msk [vmem:[#allocation2 + $0xc8] sm:$0x1] %vm1986, %v3611
    %3647 = vst.msk [vmem:[#allocation2 + $0xd8] sm:$0x1] %vm1986, %v3613
    %3648 = vst.msk [vmem:[#allocation2 + $0xe8] sm:$0x1] %vm1986, %v3615
    %3649 = vst.msk [vmem:[#allocation2 + $0xf8] sm:$0x1] %vm1986, %v3617
    %v3650 = vcombine.high %v1868, %v1868
    %v3652 = vunpack.c.l.s4 1966171168
    %v3653 = vunpack.c.0.s8 %v3652
    %v3654 = vlaneseq
    %v3655 = vshrl.u32 %v3654, 7
    %v3656 = vsub.s32 %v3653, %v3655
    %v3657 = vrot.slane %v1868, %v3656
    %v3659 = vunpack.c.l.s4 1966171168
    %v3660 = vunpack.c.0.s8 %v3659
    %v3661 = vlaneseq
    %v3662 = vshrl.u32 %v3661, 7
    %v3663 = vsub.s32 %v3660, %v3662
    %v3664 = vrot.slane %v3650, %v3663
    %v3665 = vcombine.high %v3657, %v3657
    %v3666 = vcombine.high %v3664, %v3664
    %v3668 = vunpack.c.l.s4 1966171168
    %v3669 = vunpack.c.0.s8 %v3668
    %v3670 = vlaneseq
    %v3671 = vshrl.u32 %v3670, 7
    %v3672 = vsub.s32 %v3669, %v3671
    %v3673 = vrot.slane %v3657, %v3672
    %v3675 = vunpack.c.l.s4 1966171168
    %v3676 = vunpack.c.0.s8 %v3675
    %v3677 = vlaneseq
    %v3678 = vshrl.u32 %v3677, 7
    %v3679 = vsub.s32 %v3676, %v3678
    %v3680 = vrot.slane %v3664, %v3679
    %v3682 = vunpack.c.l.s4 1966171168
    %v3683 = vunpack.c.0.s8 %v3682
    %v3684 = vlaneseq
    %v3685 = vshrl.u32 %v3684, 7
    %v3686 = vsub.s32 %v3683, %v3685
    %v3687 = vrot.slane %v3665, %v3686
    %v3689 = vunpack.c.l.s4 1966171168
    %v3690 = vunpack.c.0.s8 %v3689
    %v3691 = vlaneseq
    %v3692 = vshrl.u32 %v3691, 7
    %v3693 = vsub.s32 %v3690, %v3692
    %v3694 = vrot.slane %v3666, %v3693
    %v3695 = vcombine.high %v3673, %v3673
    %v3696 = vcombine.high %v3680, %v3680
    %v3697 = vcombine.high %v3687, %v3687
    %v3698 = vcombine.high %v3694, %v3694
    %v3699 = vlaneseq
    %v3700 = vshrl.u32 %v3699, 7
    %v3701 = vsub.s32 0, %v3700
    %v3702 = vrot.slane %v3673, %v3701
    %v3703 = vlaneseq
    %v3704 = vshrl.u32 %v3703, 7
    %v3705 = vsub.s32 0, %v3704
    %v3706 = vrot.slane %v3687, %v3705
    %v3707 = vlaneseq
    %v3708 = vshrl.u32 %v3707, 7
    %v3709 = vsub.s32 0, %v3708
    %v3710 = vrot.slane %v3695, %v3709
    %v3711 = vlaneseq
    %v3712 = vshrl.u32 %v3711, 7
    %v3713 = vsub.s32 0, %v3712
    %v3714 = vrot.slane %v3697, %v3713
    %v3715 = vlaneseq
    %v3716 = vshrl.u32 %v3715, 7
    %v3717 = vsub.s32 0, %v3716
    %v3718 = vrot.slane %v3680, %v3717
    %v3719 = vlaneseq
    %v3720 = vshrl.u32 %v3719, 7
    %v3721 = vsub.s32 0, %v3720
    %v3722 = vrot.slane %v3694, %v3721
    %v3723 = vlaneseq
    %v3724 = vshrl.u32 %v3723, 7
    %v3725 = vsub.s32 0, %v3724
    %v3726 = vrot.slane %v3696, %v3725
    %v3727 = vlaneseq
    %v3728 = vshrl.u32 %v3727, 7
    %v3729 = vsub.s32 0, %v3728
    %v3730 = vrot.slane %v3698, %v3729
    %3731 = vrot.lane.b32.xlu0 %v3702, 112
    %v3732 = vpop.permute.xlu0 %3731
    %3733 = vrot.lane.b32.xlu0 %v3706, 112
    %v3734 = vpop.permute.xlu0 %3733
    %3735 = vrot.lane.b32.xlu0 %v3710, 112
    %v3736 = vpop.permute.xlu0 %3735
    %3737 = vrot.lane.b32.xlu0 %v3714, 112
    %v3738 = vpop.permute.xlu0 %3737
    %3739 = vrot.lane.b32.xlu0 %v3718, 112
    %v3740 = vpop.permute.xlu0 %3739
    %3741 = vrot.lane.b32.xlu0 %v3722, 112
    %v3742 = vpop.permute.xlu0 %3741
    %3743 = vrot.lane.b32.xlu0 %v3726, 112
    %v3744 = vpop.permute.xlu0 %3743
    %3745 = vrot.lane.b32.xlu0 %v3730, 112
    %v3746 = vpop.permute.xlu0 %3745
    %3755 = vst.msk [vmem:[#allocation4 + $0x8] sm:$0x1] %vm1986, %v3732
    %3756 = vst.msk [vmem:[#allocation4 + $0x18] sm:$0x1] %vm1986, %v3734
    %3757 = vst.msk [vmem:[#allocation4 + $0x28] sm:$0x1] %vm1986, %v3736
    %3758 = vst.msk [vmem:[#allocation4 + $0x38] sm:$0x1] %vm1986, %v3738
    %3759 = vst.msk [vmem:[#allocation4 + $0x48] sm:$0x1] %vm1986, %v3740
    %3760 = vst.msk [vmem:[#allocation4 + $0x58] sm:$0x1] %vm1986, %v3742
    %3761 = vst.msk [vmem:[#allocation4 + $0x68] sm:$0x1] %vm1986, %v3744
    %3762 = vst.msk [vmem:[#allocation4 + $0x78] sm:$0x1] %vm1986, %v3746
    %3763 = vrot.lane.b32.xlu0 %v1862, 112
    %v3764 = vpop.permute.xlu0 %3763
    %3765 = vrot.lane.b32.xlu0 %v1865, 112
    %v3766 = vpop.permute.xlu0 %3765
    %3767 = vrot.lane.b32.xlu0 %v1868, 112
    %v3768 = vpop.permute.xlu0 %3767
    %v3772 = vsel %vm2069, %v3764, 0.0
    %3773 = vadd.xlane.f32.xlu0 %v3772
    %v3774 = vpop.xlane.xlu0 %3773
    %v3775 = vsel %vm2069, %v3766, 0.0
    %3776 = vadd.xlane.f32.xlu0 %v3775
    %v3777 = vpop.xlane.xlu0 %3776
    %v3778 = vsel %vm2069, %v3768, 0.0
    %3779 = vadd.xlane.f32.xlu0 %v3778
    %v3780 = vpop.xlane.xlu0 %3779
    %v3781 = vadd.f32 %v3421, %v3774
    %v3782 = vadd.f32 %v3422, %v3777
    %v3783 = vadd.f32 %v3423, %v3780
    %3784 = vrot.lane.b32.xlu0 %v3525, 94
    %v3785 = vpop.permute.xlu0 %3784
    %3786 = vrot.lane.b32.xlu0 %v3529, 94
    %v3787 = vpop.permute.xlu0 %3786
    %3788 = vrot.lane.b32.xlu0 %v3533, 94
    %v3789 = vpop.permute.xlu0 %3788
    %3790 = vrot.lane.b32.xlu0 %v3537, 94
    %v3791 = vpop.permute.xlu0 %3790
    %3792 = vrot.lane.b32.xlu0 %v3541, 94
    %v3793 = vpop.permute.xlu0 %3792
    %3794 = vrot.lane.b32.xlu0 %v3545, 94
    %v3795 = vpop.permute.xlu0 %3794
    %3796 = vrot.lane.b32.xlu0 %v3549, 94
    %v3797 = vpop.permute.xlu0 %3796
    %3798 = vrot.lane.b32.xlu0 %v3553, 94
    %v3799 = vpop.permute.xlu0 %3798
    %3800 = vrot.lane.b32.xlu0 %v3557, 94
    %v3801 = vpop.permute.xlu0 %3800
    %3802 = vrot.lane.b32.xlu0 %v3561, 94
    %v3803 = vpop.permute.xlu0 %3802
    %3804 = vrot.lane.b32.xlu0 %v3565, 94
    %v3805 = vpop.permute.xlu0 %3804
    %3806 = vrot.lane.b32.xlu0 %v3569, 94
    %v3807 = vpop.permute.xlu0 %3806
    %3808 = vrot.lane.b32.xlu0 %v3573, 94
    %v3809 = vpop.permute.xlu0 %3808
    %3810 = vrot.lane.b32.xlu0 %v3577, 94
    %v3811 = vpop.permute.xlu0 %3810
    %3812 = vrot.lane.b32.xlu0 %v3581, 94
    %v3813 = vpop.permute.xlu0 %3812
    %3814 = vrot.lane.b32.xlu0 %v3585, 94
    %v3815 = vpop.permute.xlu0 %3814
    %3832 = vst.msk [vmem:[#allocation2 + $0x9] sm:$0x1] %vm1986, %v3785
    %3833 = vst.msk [vmem:[#allocation2 + $0x19] sm:$0x1] %vm1986, %v3787
    %3834 = vst.msk [vmem:[#allocation2 + $0x29] sm:$0x1] %vm1986, %v3789
    %3835 = vst.msk [vmem:[#allocation2 + $0x39] sm:$0x1] %vm1986, %v3791
    %3836 = vst.msk [vmem:[#allocation2 + $0x49] sm:$0x1] %vm1986, %v3793
    %3837 = vst.msk [vmem:[#allocation2 + $0x59] sm:$0x1] %vm1986, %v3795
    %3838 = vst.msk [vmem:[#allocation2 + $0x69] sm:$0x1] %vm1986, %v3797
    %3839 = vst.msk [vmem:[#allocation2 + $0x79] sm:$0x1] %vm1986, %v3799
    %3840 = vst.msk [vmem:[#allocation2 + $0x89] sm:$0x1] %vm1986, %v3801
    %3841 = vst.msk [vmem:[#allocation2 + $0x99] sm:$0x1] %vm1986, %v3803
    %3842 = vst.msk [vmem:[#allocation2 + $0xa9] sm:$0x1] %vm1986, %v3805
    %3843 = vst.msk [vmem:[#allocation2 + $0xb9] sm:$0x1] %vm1986, %v3807
    %3844 = vst.msk [vmem:[#allocation2 + $0xc9] sm:$0x1] %vm1986, %v3809
    %3845 = vst.msk [vmem:[#allocation2 + $0xd9] sm:$0x1] %vm1986, %v3811
    %3846 = vst.msk [vmem:[#allocation2 + $0xe9] sm:$0x1] %vm1986, %v3813
    %3847 = vst.msk [vmem:[#allocation2 + $0xf9] sm:$0x1] %vm1986, %v3815
    %3848 = vrot.lane.b32.xlu0 %v3702, 94
    %v3849 = vpop.permute.xlu0 %3848
    %3850 = vrot.lane.b32.xlu0 %v3706, 94
    %v3851 = vpop.permute.xlu0 %3850
    %3852 = vrot.lane.b32.xlu0 %v3710, 94
    %v3853 = vpop.permute.xlu0 %3852
    %3854 = vrot.lane.b32.xlu0 %v3714, 94
    %v3855 = vpop.permute.xlu0 %3854
    %3856 = vrot.lane.b32.xlu0 %v3718, 94
    %v3857 = vpop.permute.xlu0 %3856
    %3858 = vrot.lane.b32.xlu0 %v3722, 94
    %v3859 = vpop.permute.xlu0 %3858
    %3860 = vrot.lane.b32.xlu0 %v3726, 94
    %v3861 = vpop.permute.xlu0 %3860
    %3862 = vrot.lane.b32.xlu0 %v3730, 94
    %v3863 = vpop.permute.xlu0 %3862
    %3872 = vst.msk [vmem:[#allocation4 + $0x9] sm:$0x1] %vm1986, %v3849
    %3873 = vst.msk [vmem:[#allocation4 + $0x19] sm:$0x1] %vm1986, %v3851
    %3874 = vst.msk [vmem:[#allocation4 + $0x29] sm:$0x1] %vm1986, %v3853
    %3875 = vst.msk [vmem:[#allocation4 + $0x39] sm:$0x1] %vm1986, %v3855
    %3876 = vst.msk [vmem:[#allocation4 + $0x49] sm:$0x1] %vm1986, %v3857
    %3877 = vst.msk [vmem:[#allocation4 + $0x59] sm:$0x1] %vm1986, %v3859
    %3878 = vst.msk [vmem:[#allocation4 + $0x69] sm:$0x1] %vm1986, %v3861
    %3879 = vst.msk [vmem:[#allocation4 + $0x79] sm:$0x1] %vm1986, %v3863
    %3880 = vrot.lane.b32.xlu0 %v1862, 94
    %v3881 = vpop.permute.xlu0 %3880
    %3882 = vrot.lane.b32.xlu0 %v1865, 94
    %v3883 = vpop.permute.xlu0 %3882
    %3884 = vrot.lane.b32.xlu0 %v1868, 94
    %v3885 = vpop.permute.xlu0 %3884
    %v3889 = vsel %vm2069, %v3881, 0.0
    %3890 = vadd.xlane.f32.xlu0 %v3889
    %v3891 = vpop.xlane.xlu0 %3890
    %v3892 = vsel %vm2069, %v3883, 0.0
    %3893 = vadd.xlane.f32.xlu0 %v3892
    %v3894 = vpop.xlane.xlu0 %3893
    %v3895 = vsel %vm2069, %v3885, 0.0
    %3896 = vadd.xlane.f32.xlu0 %v3895
    %v3897 = vpop.xlane.xlu0 %3896
    %v3898 = vadd.f32 %v3781, %v3891
    %v3899 = vadd.f32 %v3782, %v3894
    %v3900 = vadd.f32 %v3783, %v3897
    %3901 = vrot.lane.b32.xlu0 %v3525, 76
    %v3902 = vpop.permute.xlu0 %3901
    %3903 = vrot.lane.b32.xlu0 %v3529, 76
    %v3904 = vpop.permute.xlu0 %3903
    %3905 = vrot.lane.b32.xlu0 %v3533, 76
    %v3906 = vpop.permute.xlu0 %3905
    %3907 = vrot.lane.b32.xlu0 %v3537, 76
    %v3908 = vpop.permute.xlu0 %3907
    %3909 = vrot.lane.b32.xlu0 %v3541, 76
    %v3910 = vpop.permute.xlu0 %3909
    %3911 = vrot.lane.b32.xlu0 %v3545, 76
    %v3912 = vpop.permute.xlu0 %3911
    %3913 = vrot.lane.b32.xlu0 %v3549, 76
    %v3914 = vpop.permute.xlu0 %3913
    %3915 = vrot.lane.b32.xlu0 %v3553, 76
    %v3916 = vpop.permute.xlu0 %3915
    %3917 = vrot.lane.b32.xlu0 %v3557, 76
    %v3918 = vpop.permute.xlu0 %3917
    %3919 = vrot.lane.b32.xlu0 %v3561, 76
    %v3920 = vpop.permute.xlu0 %3919
    %3921 = vrot.lane.b32.xlu0 %v3565, 76
    %v3922 = vpop.permute.xlu0 %3921
    %3923 = vrot.lane.b32.xlu0 %v3569, 76
    %v3924 = vpop.permute.xlu0 %3923
    %3925 = vrot.lane.b32.xlu0 %v3573, 76
    %v3926 = vpop.permute.xlu0 %3925
    %3927 = vrot.lane.b32.xlu0 %v3577, 76
    %v3928 = vpop.permute.xlu0 %3927
    %3929 = vrot.lane.b32.xlu0 %v3581, 76
    %v3930 = vpop.permute.xlu0 %3929
    %3931 = vrot.lane.b32.xlu0 %v3585, 76
    %v3932 = vpop.permute.xlu0 %3931
    %3949 = vst.msk [vmem:[#allocation2 + $0xa] sm:$0x1] %vm1986, %v3902
    %3950 = vst.msk [vmem:[#allocation2 + $0x1a] sm:$0x1] %vm1986, %v3904
    %3951 = vst.msk [vmem:[#allocation2 + $0x2a] sm:$0x1] %vm1986, %v3906
    %3952 = vst.msk [vmem:[#allocation2 + $0x3a] sm:$0x1] %vm1986, %v3908
    %3953 = vst.msk [vmem:[#allocation2 + $0x4a] sm:$0x1] %vm1986, %v3910
    %3954 = vst.msk [vmem:[#allocation2 + $0x5a] sm:$0x1] %vm1986, %v3912
    %3955 = vst.msk [vmem:[#allocation2 + $0x6a] sm:$0x1] %vm1986, %v3914
    %3956 = vst.msk [vmem:[#allocation2 + $0x7a] sm:$0x1] %vm1986, %v3916
    %3957 = vst.msk [vmem:[#allocation2 + $0x8a] sm:$0x1] %vm1986, %v3918
    %3958 = vst.msk [vmem:[#allocation2 + $0x9a] sm:$0x1] %vm1986, %v3920
    %3959 = vst.msk [vmem:[#allocation2 + $0xaa] sm:$0x1] %vm1986, %v3922
    %3960 = vst.msk [vmem:[#allocation2 + $0xba] sm:$0x1] %vm1986, %v3924
    %3961 = vst.msk [vmem:[#allocation2 + $0xca] sm:$0x1] %vm1986, %v3926
    %3962 = vst.msk [vmem:[#allocation2 + $0xda] sm:$0x1] %vm1986, %v3928
    %3963 = vst.msk [vmem:[#allocation2 + $0xea] sm:$0x1] %vm1986, %v3930
    %3964 = vst.msk [vmem:[#allocation2 + $0xfa] sm:$0x1] %vm1986, %v3932
    %3965 = vrot.lane.b32.xlu0 %v3702, 76
    %v3966 = vpop.permute.xlu0 %3965
    %3967 = vrot.lane.b32.xlu0 %v3706, 76
    %v3968 = vpop.permute.xlu0 %3967
    %3969 = vrot.lane.b32.xlu0 %v3710, 76
    %v3970 = vpop.permute.xlu0 %3969
    %3971 = vrot.lane.b32.xlu0 %v3714, 76
    %v3972 = vpop.permute.xlu0 %3971
    %3973 = vrot.lane.b32.xlu0 %v3718, 76
    %v3974 = vpop.permute.xlu0 %3973
    %3975 = vrot.lane.b32.xlu0 %v3722, 76
    %v3976 = vpop.permute.xlu0 %3975
    %3977 = vrot.lane.b32.xlu0 %v3726, 76
    %v3978 = vpop.permute.xlu0 %3977
    %3979 = vrot.lane.b32.xlu0 %v3730, 76
    %v3980 = vpop.permute.xlu0 %3979
    %3989 = vst.msk [vmem:[#allocation4 + $0xa] sm:$0x1] %vm1986, %v3966
    %3990 = vst.msk [vmem:[#allocation4 + $0x1a] sm:$0x1] %vm1986, %v3968
    %3991 = vst.msk [vmem:[#allocation4 + $0x2a] sm:$0x1] %vm1986, %v3970
    %3992 = vst.msk [vmem:[#allocation4 + $0x3a] sm:$0x1] %vm1986, %v3972
    %3993 = vst.msk [vmem:[#allocation4 + $0x4a] sm:$0x1] %vm1986, %v3974
    %3994 = vst.msk [vmem:[#allocation4 + $0x5a] sm:$0x1] %vm1986, %v3976
    %3995 = vst.msk [vmem:[#allocation4 + $0x6a] sm:$0x1] %vm1986, %v3978
    %3996 = vst.msk [vmem:[#allocation4 + $0x7a] sm:$0x1] %vm1986, %v3980
    %3997 = vrot.lane.b32.xlu0 %v1862, 76
    %v3998 = vpop.permute.xlu0 %3997
    %3999 = vrot.lane.b32.xlu0 %v1865, 76
    %v4000 = vpop.permute.xlu0 %3999
    %4001 = vrot.lane.b32.xlu0 %v1868, 76
    %v4002 = vpop.permute.xlu0 %4001
    %v4006 = vsel %vm2069, %v3998, 0.0
    %4007 = vadd.xlane.f32.xlu0 %v4006
    %v4008 = vpop.xlane.xlu0 %4007
    %v4009 = vsel %vm2069, %v4000, 0.0
    %4010 = vadd.xlane.f32.xlu0 %v4009
    %v4011 = vpop.xlane.xlu0 %4010
    %v4012 = vsel %vm2069, %v4002, 0.0
    %4013 = vadd.xlane.f32.xlu0 %v4012
    %v4014 = vpop.xlane.xlu0 %4013
    %v4015 = vadd.f32 %v3898, %v4008
    %v4016 = vadd.f32 %v3899, %v4011
    %v4017 = vadd.f32 %v3900, %v4014
    %4018 = vrot.lane.b32.xlu0 %v3525, 58
    %v4019 = vpop.permute.xlu0 %4018
    %4020 = vrot.lane.b32.xlu0 %v3529, 58
    %v4021 = vpop.permute.xlu0 %4020
    %4022 = vrot.lane.b32.xlu0 %v3533, 58
    %v4023 = vpop.permute.xlu0 %4022
    %4024 = vrot.lane.b32.xlu0 %v3537, 58
    %v4025 = vpop.permute.xlu0 %4024
    %4026 = vrot.lane.b32.xlu0 %v3541, 58
    %v4027 = vpop.permute.xlu0 %4026
    %4028 = vrot.lane.b32.xlu0 %v3545, 58
    %v4029 = vpop.permute.xlu0 %4028
    %4030 = vrot.lane.b32.xlu0 %v3549, 58
    %v4031 = vpop.permute.xlu0 %4030
    %4032 = vrot.lane.b32.xlu0 %v3553, 58
    %v4033 = vpop.permute.xlu0 %4032
    %4034 = vrot.lane.b32.xlu0 %v3557, 58
    %v4035 = vpop.permute.xlu0 %4034
    %4036 = vrot.lane.b32.xlu0 %v3561, 58
    %v4037 = vpop.permute.xlu0 %4036
    %4038 = vrot.lane.b32.xlu0 %v3565, 58
    %v4039 = vpop.permute.xlu0 %4038
    %4040 = vrot.lane.b32.xlu0 %v3569, 58
    %v4041 = vpop.permute.xlu0 %4040
    %4042 = vrot.lane.b32.xlu0 %v3573, 58
    %v4043 = vpop.permute.xlu0 %4042
    %4044 = vrot.lane.b32.xlu0 %v3577, 58
    %v4045 = vpop.permute.xlu0 %4044
    %4046 = vrot.lane.b32.xlu0 %v3581, 58
    %v4047 = vpop.permute.xlu0 %4046
    %4048 = vrot.lane.b32.xlu0 %v3585, 58
    %v4049 = vpop.permute.xlu0 %4048
    %4066 = vst.msk [vmem:[#allocation2 + $0xb] sm:$0x1] %vm1986, %v4019
    %4067 = vst.msk [vmem:[#allocation2 + $0x1b] sm:$0x1] %vm1986, %v4021
    %4068 = vst.msk [vmem:[#allocation2 + $0x2b] sm:$0x1] %vm1986, %v4023
    %4069 = vst.msk [vmem:[#allocation2 + $0x3b] sm:$0x1] %vm1986, %v4025
    %4070 = vst.msk [vmem:[#allocation2 + $0x4b] sm:$0x1] %vm1986, %v4027
    %4071 = vst.msk [vmem:[#allocation2 + $0x5b] sm:$0x1] %vm1986, %v4029
    %4072 = vst.msk [vmem:[#allocation2 + $0x6b] sm:$0x1] %vm1986, %v4031
    %4073 = vst.msk [vmem:[#allocation2 + $0x7b] sm:$0x1] %vm1986, %v4033
    %4074 = vst.msk [vmem:[#allocation2 + $0x8b] sm:$0x1] %vm1986, %v4035
    %4075 = vst.msk [vmem:[#allocation2 + $0x9b] sm:$0x1] %vm1986, %v4037
    %4076 = vst.msk [vmem:[#allocation2 + $0xab] sm:$0x1] %vm1986, %v4039
    %4077 = vst.msk [vmem:[#allocation2 + $0xbb] sm:$0x1] %vm1986, %v4041
    %4078 = vst.msk [vmem:[#allocation2 + $0xcb] sm:$0x1] %vm1986, %v4043
    %4079 = vst.msk [vmem:[#allocation2 + $0xdb] sm:$0x1] %vm1986, %v4045
    %4080 = vst.msk [vmem:[#allocation2 + $0xeb] sm:$0x1] %vm1986, %v4047
    %4081 = vst.msk [vmem:[#allocation2 + $0xfb] sm:$0x1] %vm1986, %v4049
    %4082 = vrot.lane.b32.xlu0 %v3702, 58
    %v4083 = vpop.permute.xlu0 %4082
    %4084 = vrot.lane.b32.xlu0 %v3706, 58
    %v4085 = vpop.permute.xlu0 %4084
    %4086 = vrot.lane.b32.xlu0 %v3710, 58
    %v4087 = vpop.permute.xlu0 %4086
    %4088 = vrot.lane.b32.xlu0 %v3714, 58
    %v4089 = vpop.permute.xlu0 %4088
    %4090 = vrot.lane.b32.xlu0 %v3718, 58
    %v4091 = vpop.permute.xlu0 %4090
    %4092 = vrot.lane.b32.xlu0 %v3722, 58
    %v4093 = vpop.permute.xlu0 %4092
    %4094 = vrot.lane.b32.xlu0 %v3726, 58
    %v4095 = vpop.permute.xlu0 %4094
    %4096 = vrot.lane.b32.xlu0 %v3730, 58
    %v4097 = vpop.permute.xlu0 %4096
    %4106 = vst.msk [vmem:[#allocation4 + $0xb] sm:$0x1] %vm1986, %v4083
    %4107 = vst.msk [vmem:[#allocation4 + $0x1b] sm:$0x1] %vm1986, %v4085
    %4108 = vst.msk [vmem:[#allocation4 + $0x2b] sm:$0x1] %vm1986, %v4087
    %4109 = vst.msk [vmem:[#allocation4 + $0x3b] sm:$0x1] %vm1986, %v4089
    %4110 = vst.msk [vmem:[#allocation4 + $0x4b] sm:$0x1] %vm1986, %v4091
    %4111 = vst.msk [vmem:[#allocation4 + $0x5b] sm:$0x1] %vm1986, %v4093
    %4112 = vst.msk [vmem:[#allocation4 + $0x6b] sm:$0x1] %vm1986, %v4095
    %4113 = vst.msk [vmem:[#allocation4 + $0x7b] sm:$0x1] %vm1986, %v4097
    %4114 = vrot.lane.b32.xlu0 %v1862, 58
    %v4115 = vpop.permute.xlu0 %4114
    %4116 = vrot.lane.b32.xlu0 %v1865, 58
    %v4117 = vpop.permute.xlu0 %4116
    %4118 = vrot.lane.b32.xlu0 %v1868, 58
    %v4119 = vpop.permute.xlu0 %4118
    %v4123 = vsel %vm2069, %v4115, 0.0
    %4124 = vadd.xlane.f32.xlu0 %v4123
    %v4125 = vpop.xlane.xlu0 %4124
    %v4126 = vsel %vm2069, %v4117, 0.0
    %4127 = vadd.xlane.f32.xlu0 %v4126
    %v4128 = vpop.xlane.xlu0 %4127
    %v4129 = vsel %vm2069, %v4119, 0.0
    %4130 = vadd.xlane.f32.xlu0 %v4129
    %v4131 = vpop.xlane.xlu0 %4130
    %v4132 = vadd.f32 %v4015, %v4125
    %v4133 = vadd.f32 %v4016, %v4128
    %v4134 = vadd.f32 %v4017, %v4131
    %4135 = vrot.lane.b32.xlu0 %v3525, 40
    %v4136 = vpop.permute.xlu0 %4135
    %4137 = vrot.lane.b32.xlu0 %v3529, 40
    %v4138 = vpop.permute.xlu0 %4137
    %4139 = vrot.lane.b32.xlu0 %v3533, 40
    %v4140 = vpop.permute.xlu0 %4139
    %4141 = vrot.lane.b32.xlu0 %v3537, 40
    %v4142 = vpop.permute.xlu0 %4141
    %4143 = vrot.lane.b32.xlu0 %v3541, 40
    %v4144 = vpop.permute.xlu0 %4143
    %4145 = vrot.lane.b32.xlu0 %v3545, 40
    %v4146 = vpop.permute.xlu0 %4145
    %4147 = vrot.lane.b32.xlu0 %v3549, 40
    %v4148 = vpop.permute.xlu0 %4147
    %4149 = vrot.lane.b32.xlu0 %v3553, 40
    %v4150 = vpop.permute.xlu0 %4149
    %4151 = vrot.lane.b32.xlu0 %v3557, 40
    %v4152 = vpop.permute.xlu0 %4151
    %4153 = vrot.lane.b32.xlu0 %v3561, 40
    %v4154 = vpop.permute.xlu0 %4153
    %4155 = vrot.lane.b32.xlu0 %v3565, 40
    %v4156 = vpop.permute.xlu0 %4155
    %4157 = vrot.lane.b32.xlu0 %v3569, 40
    %v4158 = vpop.permute.xlu0 %4157
    %4159 = vrot.lane.b32.xlu0 %v3573, 40
    %v4160 = vpop.permute.xlu0 %4159
    %4161 = vrot.lane.b32.xlu0 %v3577, 40
    %v4162 = vpop.permute.xlu0 %4161
    %4163 = vrot.lane.b32.xlu0 %v3581, 40
    %v4164 = vpop.permute.xlu0 %4163
    %4165 = vrot.lane.b32.xlu0 %v3585, 40
    %v4166 = vpop.permute.xlu0 %4165
    %4183 = vst.msk [vmem:[#allocation2 + $0xc] sm:$0x1] %vm1986, %v4136
    %4184 = vst.msk [vmem:[#allocation2 + $0x1c] sm:$0x1] %vm1986, %v4138
    %4185 = vst.msk [vmem:[#allocation2 + $0x2c] sm:$0x1] %vm1986, %v4140
    %4186 = vst.msk [vmem:[#allocation2 + $0x3c] sm:$0x1] %vm1986, %v4142
    %4187 = vst.msk [vmem:[#allocation2 + $0x4c] sm:$0x1] %vm1986, %v4144
    %4188 = vst.msk [vmem:[#allocation2 + $0x5c] sm:$0x1] %vm1986, %v4146
    %4189 = vst.msk [vmem:[#allocation2 + $0x6c] sm:$0x1] %vm1986, %v4148
    %4190 = vst.msk [vmem:[#allocation2 + $0x7c] sm:$0x1] %vm1986, %v4150
    %4191 = vst.msk [vmem:[#allocation2 + $0x8c] sm:$0x1] %vm1986, %v4152
    %4192 = vst.msk [vmem:[#allocation2 + $0x9c] sm:$0x1] %vm1986, %v4154
    %4193 = vst.msk [vmem:[#allocation2 + $0xac] sm:$0x1] %vm1986, %v4156
    %4194 = vst.msk [vmem:[#allocation2 + $0xbc] sm:$0x1] %vm1986, %v4158
    %4195 = vst.msk [vmem:[#allocation2 + $0xcc] sm:$0x1] %vm1986, %v4160
    %4196 = vst.msk [vmem:[#allocation2 + $0xdc] sm:$0x1] %vm1986, %v4162
    %4197 = vst.msk [vmem:[#allocation2 + $0xec] sm:$0x1] %vm1986, %v4164
    %4198 = vst.msk [vmem:[#allocation2 + $0xfc] sm:$0x1] %vm1986, %v4166
    %4199 = vrot.lane.b32.xlu0 %v3702, 40
    %v4200 = vpop.permute.xlu0 %4199
    %4201 = vrot.lane.b32.xlu0 %v3706, 40
    %v4202 = vpop.permute.xlu0 %4201
    %4203 = vrot.lane.b32.xlu0 %v3710, 40
    %v4204 = vpop.permute.xlu0 %4203
    %4205 = vrot.lane.b32.xlu0 %v3714, 40
    %v4206 = vpop.permute.xlu0 %4205
    %4207 = vrot.lane.b32.xlu0 %v3718, 40
    %v4208 = vpop.permute.xlu0 %4207
    %4209 = vrot.lane.b32.xlu0 %v3722, 40
    %v4210 = vpop.permute.xlu0 %4209
    %4211 = vrot.lane.b32.xlu0 %v3726, 40
    %v4212 = vpop.permute.xlu0 %4211
    %4213 = vrot.lane.b32.xlu0 %v3730, 40
    %v4214 = vpop.permute.xlu0 %4213
    %4223 = vst.msk [vmem:[#allocation4 + $0xc] sm:$0x1] %vm1986, %v4200
    %4224 = vst.msk [vmem:[#allocation4 + $0x1c] sm:$0x1] %vm1986, %v4202
    %4225 = vst.msk [vmem:[#allocation4 + $0x2c] sm:$0x1] %vm1986, %v4204
    %4226 = vst.msk [vmem:[#allocation4 + $0x3c] sm:$0x1] %vm1986, %v4206
    %4227 = vst.msk [vmem:[#allocation4 + $0x4c] sm:$0x1] %vm1986, %v4208
    %4228 = vst.msk [vmem:[#allocation4 + $0x5c] sm:$0x1] %vm1986, %v4210
    %4229 = vst.msk [vmem:[#allocation4 + $0x6c] sm:$0x1] %vm1986, %v4212
    %4230 = vst.msk [vmem:[#allocation4 + $0x7c] sm:$0x1] %vm1986, %v4214
    %4231 = vrot.lane.b32.xlu0 %v1862, 40
    %v4232 = vpop.permute.xlu0 %4231
    %4233 = vrot.lane.b32.xlu0 %v1865, 40
    %v4234 = vpop.permute.xlu0 %4233
    %4235 = vrot.lane.b32.xlu0 %v1868, 40
    %v4236 = vpop.permute.xlu0 %4235
    %v4240 = vsel %vm2069, %v4232, 0.0
    %4241 = vadd.xlane.f32.xlu0 %v4240
    %v4242 = vpop.xlane.xlu0 %4241
    %v4243 = vsel %vm2069, %v4234, 0.0
    %4244 = vadd.xlane.f32.xlu0 %v4243
    %v4245 = vpop.xlane.xlu0 %4244
    %v4246 = vsel %vm2069, %v4236, 0.0
    %4247 = vadd.xlane.f32.xlu0 %v4246
    %v4248 = vpop.xlane.xlu0 %4247
    %v4249 = vadd.f32 %v4132, %v4242
    %v4250 = vadd.f32 %v4133, %v4245
    %v4251 = vadd.f32 %v4134, %v4248
    %4252 = vrot.lane.b32.xlu0 %v3525, 22
    %v4253 = vpop.permute.xlu0 %4252
    %4254 = vrot.lane.b32.xlu0 %v3529, 22
    %v4255 = vpop.permute.xlu0 %4254
    %4256 = vrot.lane.b32.xlu0 %v3533, 22
    %v4257 = vpop.permute.xlu0 %4256
    %4258 = vrot.lane.b32.xlu0 %v3537, 22
    %v4259 = vpop.permute.xlu0 %4258
    %4260 = vrot.lane.b32.xlu0 %v3541, 22
    %v4261 = vpop.permute.xlu0 %4260
    %4262 = vrot.lane.b32.xlu0 %v3545, 22
    %v4263 = vpop.permute.xlu0 %4262
    %4264 = vrot.lane.b32.xlu0 %v3549, 22
    %v4265 = vpop.permute.xlu0 %4264
    %4266 = vrot.lane.b32.xlu0 %v3553, 22
    %v4267 = vpop.permute.xlu0 %4266
    %4268 = vrot.lane.b32.xlu0 %v3557, 22
    %v4269 = vpop.permute.xlu0 %4268
    %4270 = vrot.lane.b32.xlu0 %v3561, 22
    %v4271 = vpop.permute.xlu0 %4270
    %4272 = vrot.lane.b32.xlu0 %v3565, 22
    %v4273 = vpop.permute.xlu0 %4272
    %4274 = vrot.lane.b32.xlu0 %v3569, 22
    %v4275 = vpop.permute.xlu0 %4274
    %4276 = vrot.lane.b32.xlu0 %v3573, 22
    %v4277 = vpop.permute.xlu0 %4276
    %4278 = vrot.lane.b32.xlu0 %v3577, 22
    %v4279 = vpop.permute.xlu0 %4278
    %4280 = vrot.lane.b32.xlu0 %v3581, 22
    %v4281 = vpop.permute.xlu0 %4280
    %4282 = vrot.lane.b32.xlu0 %v3585, 22
    %v4283 = vpop.permute.xlu0 %4282
    %4300 = vst.msk [vmem:[#allocation2 + $0xd] sm:$0x1] %vm1986, %v4253
    %4301 = vst.msk [vmem:[#allocation2 + $0x1d] sm:$0x1] %vm1986, %v4255
    %4302 = vst.msk [vmem:[#allocation2 + $0x2d] sm:$0x1] %vm1986, %v4257
    %4303 = vst.msk [vmem:[#allocation2 + $0x3d] sm:$0x1] %vm1986, %v4259
    %4304 = vst.msk [vmem:[#allocation2 + $0x4d] sm:$0x1] %vm1986, %v4261
    %4305 = vst.msk [vmem:[#allocation2 + $0x5d] sm:$0x1] %vm1986, %v4263
    %4306 = vst.msk [vmem:[#allocation2 + $0x6d] sm:$0x1] %vm1986, %v4265
    %4307 = vst.msk [vmem:[#allocation2 + $0x7d] sm:$0x1] %vm1986, %v4267
    %4308 = vst.msk [vmem:[#allocation2 + $0x8d] sm:$0x1] %vm1986, %v4269
    %4309 = vst.msk [vmem:[#allocation2 + $0x9d] sm:$0x1] %vm1986, %v4271
    %4310 = vst.msk [vmem:[#allocation2 + $0xad] sm:$0x1] %vm1986, %v4273
    %4311 = vst.msk [vmem:[#allocation2 + $0xbd] sm:$0x1] %vm1986, %v4275
    %4312 = vst.msk [vmem:[#allocation2 + $0xcd] sm:$0x1] %vm1986, %v4277
    %4313 = vst.msk [vmem:[#allocation2 + $0xdd] sm:$0x1] %vm1986, %v4279
    %4314 = vst.msk [vmem:[#allocation2 + $0xed] sm:$0x1] %vm1986, %v4281
    %4315 = vst.msk [vmem:[#allocation2 + $0xfd] sm:$0x1] %vm1986, %v4283
    %4316 = vrot.lane.b32.xlu0 %v3702, 22
    %v4317 = vpop.permute.xlu0 %4316
    %4318 = vrot.lane.b32.xlu0 %v3706, 22
    %v4319 = vpop.permute.xlu0 %4318
    %4320 = vrot.lane.b32.xlu0 %v3710, 22
    %v4321 = vpop.permute.xlu0 %4320
    %4322 = vrot.lane.b32.xlu0 %v3714, 22
    %v4323 = vpop.permute.xlu0 %4322
    %4324 = vrot.lane.b32.xlu0 %v3718, 22
    %v4325 = vpop.permute.xlu0 %4324
    %4326 = vrot.lane.b32.xlu0 %v3722, 22
    %v4327 = vpop.permute.xlu0 %4326
    %4328 = vrot.lane.b32.xlu0 %v3726, 22
    %v4329 = vpop.permute.xlu0 %4328
    %4330 = vrot.lane.b32.xlu0 %v3730, 22
    %v4331 = vpop.permute.xlu0 %4330
    %4340 = vst.msk [vmem:[#allocation4 + $0xd] sm:$0x1] %vm1986, %v4317
    %4341 = vst.msk [vmem:[#allocation4 + $0x1d] sm:$0x1] %vm1986, %v4319
    %4342 = vst.msk [vmem:[#allocation4 + $0x2d] sm:$0x1] %vm1986, %v4321
    %4343 = vst.msk [vmem:[#allocation4 + $0x3d] sm:$0x1] %vm1986, %v4323
    %4344 = vst.msk [vmem:[#allocation4 + $0x4d] sm:$0x1] %vm1986, %v4325
    %4345 = vst.msk [vmem:[#allocation4 + $0x5d] sm:$0x1] %vm1986, %v4327
    %4346 = vst.msk [vmem:[#allocation4 + $0x6d] sm:$0x1] %vm1986, %v4329
    %4347 = vst.msk [vmem:[#allocation4 + $0x7d] sm:$0x1] %vm1986, %v4331
    %4348 = vrot.lane.b32.xlu0 %v1862, 22
    %v4349 = vpop.permute.xlu0 %4348
    %4350 = vrot.lane.b32.xlu0 %v1865, 22
    %v4351 = vpop.permute.xlu0 %4350
    %4352 = vrot.lane.b32.xlu0 %v1868, 22
    %v4353 = vpop.permute.xlu0 %4352
    %v4357 = vsel %vm2069, %v4349, 0.0
    %4358 = vadd.xlane.f32.xlu0 %v4357
    %v4359 = vpop.xlane.xlu0 %4358
    %v4360 = vsel %vm2069, %v4351, 0.0
    %4361 = vadd.xlane.f32.xlu0 %v4360
    %v4362 = vpop.xlane.xlu0 %4361
    %v4363 = vsel %vm2069, %v4353, 0.0
    %4364 = vadd.xlane.f32.xlu0 %v4363
    %v4365 = vpop.xlane.xlu0 %4364
    %v4366 = vadd.f32 %v4249, %v4359
    %v4367 = vadd.f32 %v4250, %v4362
    %v4368 = vadd.f32 %v4251, %v4365
    %v4371 = vcombine.low %v1862, %v1863
    %v4372 = vcombine.high %v1862, %v1863
    %v4374 = vunpack.c.l.s4 1966171168
    %v4375 = vunpack.c.0.s8 %v4374
    %v4376 = vlaneseq
    %v4377 = vshrl.u32 %v4376, 7
    %v4378 = vsub.s32 %v4375, %v4377
    %v4379 = vrot.slane %v4371, %v4378
    %v4381 = vunpack.c.l.s4 1966171168
    %v4382 = vunpack.c.0.s8 %v4381
    %v4383 = vlaneseq
    %v4384 = vshrl.u32 %v4383, 7
    %v4385 = vsub.s32 %v4382, %v4384
    %v4386 = vrot.slane %v4372, %v4385
    %v4387 = vcombine.high %v4379, %v4379
    %v4388 = vcombine.high %v4386, %v4386
    %v4390 = vunpack.c.l.s4 1966171168
    %v4391 = vunpack.c.0.s8 %v4390
    %v4392 = vlaneseq
    %v4393 = vshrl.u32 %v4392, 7
    %v4394 = vsub.s32 %v4391, %v4393
    %v4395 = vrot.slane %v4379, %v4394
    %v4397 = vunpack.c.l.s4 1966171168
    %v4398 = vunpack.c.0.s8 %v4397
    %v4399 = vlaneseq
    %v4400 = vshrl.u32 %v4399, 7
    %v4401 = vsub.s32 %v4398, %v4400
    %v4402 = vrot.slane %v4386, %v4401
    %v4404 = vunpack.c.l.s4 1966171168
    %v4405 = vunpack.c.0.s8 %v4404
    %v4406 = vlaneseq
    %v4407 = vshrl.u32 %v4406, 7
    %v4408 = vsub.s32 %v4405, %v4407
    %v4409 = vrot.slane %v4387, %v4408
    %v4411 = vunpack.c.l.s4 1966171168
    %v4412 = vunpack.c.0.s8 %v4411
    %v4413 = vlaneseq
    %v4414 = vshrl.u32 %v4413, 7
    %v4415 = vsub.s32 %v4412, %v4414
    %v4416 = vrot.slane %v4388, %v4415
    %v4417 = vcombine.high %v4395, %v4395
    %v4418 = vcombine.high %v4402, %v4402
    %v4419 = vcombine.high %v4409, %v4409
    %v4420 = vcombine.high %v4416, %v4416
    %v4421 = vcombine.low %v1865, %v1866
    %v4422 = vcombine.high %v1865, %v1866
    %v4424 = vunpack.c.l.s4 1966171168
    %v4425 = vunpack.c.0.s8 %v4424
    %v4426 = vlaneseq
    %v4427 = vshrl.u32 %v4426, 7
    %v4428 = vsub.s32 %v4425, %v4427
    %v4429 = vrot.slane %v4421, %v4428
    %v4431 = vunpack.c.l.s4 1966171168
    %v4432 = vunpack.c.0.s8 %v4431
    %v4433 = vlaneseq
    %v4434 = vshrl.u32 %v4433, 7
    %v4435 = vsub.s32 %v4432, %v4434
    %v4436 = vrot.slane %v4422, %v4435
    %v4437 = vcombine.high %v4429, %v4429
    %v4438 = vcombine.high %v4436, %v4436
    %v4440 = vunpack.c.l.s4 1966171168
    %v4441 = vunpack.c.0.s8 %v4440
    %v4442 = vlaneseq
    %v4443 = vshrl.u32 %v4442, 7
    %v4444 = vsub.s32 %v4441, %v4443
    %v4445 = vrot.slane %v4429, %v4444
    %v4447 = vunpack.c.l.s4 1966171168
    %v4448 = vunpack.c.0.s8 %v4447
    %v4449 = vlaneseq
    %v4450 = vshrl.u32 %v4449, 7
    %v4451 = vsub.s32 %v4448, %v4450
    %v4452 = vrot.slane %v4436, %v4451
    %v4454 = vunpack.c.l.s4 1966171168
    %v4455 = vunpack.c.0.s8 %v4454
    %v4456 = vlaneseq
    %v4457 = vshrl.u32 %v4456, 7
    %v4458 = vsub.s32 %v4455, %v4457
    %v4459 = vrot.slane %v4437, %v4458
    %v4461 = vunpack.c.l.s4 1966171168
    %v4462 = vunpack.c.0.s8 %v4461
    %v4463 = vlaneseq
    %v4464 = vshrl.u32 %v4463, 7
    %v4465 = vsub.s32 %v4462, %v4464
    %v4466 = vrot.slane %v4438, %v4465
    %v4467 = vcombine.high %v4445, %v4445
    %v4468 = vcombine.high %v4452, %v4452
    %v4469 = vcombine.high %v4459, %v4459
    %v4470 = vcombine.high %v4466, %v4466
    %v4471 = vlaneseq
    %v4472 = vshrl.u32 %v4471, 7
    %v4473 = vsub.s32 0, %v4472
    %v4474 = vrot.slane %v4395, %v4473
    %v4475 = vlaneseq
    %v4476 = vshrl.u32 %v4475, 7
    %v4477 = vsub.s32 1, %v4476
    %v4478 = vrot.slane %v4395, %v4477
    %v4479 = vlaneseq
    %v4480 = vshrl.u32 %v4479, 7
    %v4481 = vsub.s32 0, %v4480
    %v4482 = vrot.slane %v4409, %v4481
    %v4483 = vlaneseq
    %v4484 = vshrl.u32 %v4483, 7
    %v4485 = vsub.s32 1, %v4484
    %v4486 = vrot.slane %v4409, %v4485
    %v4487 = vlaneseq
    %v4488 = vshrl.u32 %v4487, 7
    %v4489 = vsub.s32 0, %v4488
    %v4490 = vrot.slane %v4417, %v4489
    %v4491 = vlaneseq
    %v4492 = vshrl.u32 %v4491, 7
    %v4493 = vsub.s32 1, %v4492
    %v4494 = vrot.slane %v4417, %v4493
    %v4495 = vlaneseq
    %v4496 = vshrl.u32 %v4495, 7
    %v4497 = vsub.s32 0, %v4496
    %v4498 = vrot.slane %v4419, %v4497
    %v4499 = vlaneseq
    %v4500 = vshrl.u32 %v4499, 7
    %v4501 = vsub.s32 1, %v4500
    %v4502 = vrot.slane %v4419, %v4501
    %v4503 = vlaneseq
    %v4504 = vshrl.u32 %v4503, 7
    %v4505 = vsub.s32 0, %v4504
    %v4506 = vrot.slane %v4402, %v4505
    %v4507 = vlaneseq
    %v4508 = vshrl.u32 %v4507, 7
    %v4509 = vsub.s32 1, %v4508
    %v4510 = vrot.slane %v4402, %v4509
    %v4511 = vlaneseq
    %v4512 = vshrl.u32 %v4511, 7
    %v4513 = vsub.s32 0, %v4512
    %v4514 = vrot.slane %v4416, %v4513
    %v4515 = vlaneseq
    %v4516 = vshrl.u32 %v4515, 7
    %v4517 = vsub.s32 1, %v4516
    %v4518 = vrot.slane %v4416, %v4517
    %v4519 = vlaneseq
    %v4520 = vshrl.u32 %v4519, 7
    %v4521 = vsub.s32 0, %v4520
    %v4522 = vrot.slane %v4418, %v4521
    %v4523 = vlaneseq
    %v4524 = vshrl.u32 %v4523, 7
    %v4525 = vsub.s32 1, %v4524
    %v4526 = vrot.slane %v4418, %v4525
    %v4527 = vlaneseq
    %v4528 = vshrl.u32 %v4527, 7
    %v4529 = vsub.s32 0, %v4528
    %v4530 = vrot.slane %v4420, %v4529
    %v4531 = vlaneseq
    %v4532 = vshrl.u32 %v4531, 7
    %v4533 = vsub.s32 1, %v4532
    %v4534 = vrot.slane %v4420, %v4533
    %v4535 = vlaneseq
    %v4536 = vshrl.u32 %v4535, 7
    %v4537 = vsub.s32 0, %v4536
    %v4538 = vrot.slane %v4445, %v4537
    %v4539 = vlaneseq
    %v4540 = vshrl.u32 %v4539, 7
    %v4541 = vsub.s32 1, %v4540
    %v4542 = vrot.slane %v4445, %v4541
    %v4543 = vlaneseq
    %v4544 = vshrl.u32 %v4543, 7
    %v4545 = vsub.s32 0, %v4544
    %v4546 = vrot.slane %v4459, %v4545
    %v4547 = vlaneseq
    %v4548 = vshrl.u32 %v4547, 7
    %v4549 = vsub.s32 1, %v4548
    %v4550 = vrot.slane %v4459, %v4549
    %v4551 = vlaneseq
    %v4552 = vshrl.u32 %v4551, 7
    %v4553 = vsub.s32 0, %v4552
    %v4554 = vrot.slane %v4467, %v4553
    %v4555 = vlaneseq
    %v4556 = vshrl.u32 %v4555, 7
    %v4557 = vsub.s32 1, %v4556
    %v4558 = vrot.slane %v4467, %v4557
    %v4559 = vlaneseq
    %v4560 = vshrl.u32 %v4559, 7
    %v4561 = vsub.s32 0, %v4560
    %v4562 = vrot.slane %v4469, %v4561
    %v4563 = vlaneseq
    %v4564 = vshrl.u32 %v4563, 7
    %v4565 = vsub.s32 1, %v4564
    %v4566 = vrot.slane %v4469, %v4565
    %v4567 = vlaneseq
    %v4568 = vshrl.u32 %v4567, 7
    %v4569 = vsub.s32 0, %v4568
    %v4570 = vrot.slane %v4452, %v4569
    %v4571 = vlaneseq
    %v4572 = vshrl.u32 %v4571, 7
    %v4573 = vsub.s32 1, %v4572
    %v4574 = vrot.slane %v4452, %v4573
    %v4575 = vlaneseq
    %v4576 = vshrl.u32 %v4575, 7
    %v4577 = vsub.s32 0, %v4576
    %v4578 = vrot.slane %v4466, %v4577
    %v4579 = vlaneseq
    %v4580 = vshrl.u32 %v4579, 7
    %v4581 = vsub.s32 1, %v4580
    %v4582 = vrot.slane %v4466, %v4581
    %v4583 = vlaneseq
    %v4584 = vshrl.u32 %v4583, 7
    %v4585 = vsub.s32 0, %v4584
    %v4586 = vrot.slane %v4468, %v4585
    %v4587 = vlaneseq
    %v4588 = vshrl.u32 %v4587, 7
    %v4589 = vsub.s32 1, %v4588
    %v4590 = vrot.slane %v4468, %v4589
    %v4591 = vlaneseq
    %v4592 = vshrl.u32 %v4591, 7
    %v4593 = vsub.s32 0, %v4592
    %v4594 = vrot.slane %v4470, %v4593
    %v4595 = vlaneseq
    %v4596 = vshrl.u32 %v4595, 7
    %v4597 = vsub.s32 1, %v4596
    %v4598 = vrot.slane %v4470, %v4597
    %4599 = vrot.lane.b32.xlu0 %v4474, 4
    %v4600 = vpop.permute.xlu0 %4599
    %4601 = vrot.lane.b32.xlu0 %v4478, 4
    %v4602 = vpop.permute.xlu0 %4601
    %4603 = vrot.lane.b32.xlu0 %v4482, 4
    %v4604 = vpop.permute.xlu0 %4603
    %4605 = vrot.lane.b32.xlu0 %v4486, 4
    %v4606 = vpop.permute.xlu0 %4605
    %4607 = vrot.lane.b32.xlu0 %v4490, 4
    %v4608 = vpop.permute.xlu0 %4607
    %4609 = vrot.lane.b32.xlu0 %v4494, 4
    %v4610 = vpop.permute.xlu0 %4609
    %4611 = vrot.lane.b32.xlu0 %v4498, 4
    %v4612 = vpop.permute.xlu0 %4611
    %4613 = vrot.lane.b32.xlu0 %v4502, 4
    %v4614 = vpop.permute.xlu0 %4613
    %4615 = vrot.lane.b32.xlu0 %v4506, 4
    %v4616 = vpop.permute.xlu0 %4615
    %4617 = vrot.lane.b32.xlu0 %v4510, 4
    %v4618 = vpop.permute.xlu0 %4617
    %4619 = vrot.lane.b32.xlu0 %v4514, 4
    %v4620 = vpop.permute.xlu0 %4619
    %4621 = vrot.lane.b32.xlu0 %v4518, 4
    %v4622 = vpop.permute.xlu0 %4621
    %4623 = vrot.lane.b32.xlu0 %v4522, 4
    %v4624 = vpop.permute.xlu0 %4623
    %4625 = vrot.lane.b32.xlu0 %v4526, 4
    %v4626 = vpop.permute.xlu0 %4625
    %4627 = vrot.lane.b32.xlu0 %v4530, 4
    %v4628 = vpop.permute.xlu0 %4627
    %4629 = vrot.lane.b32.xlu0 %v4534, 4
    %v4630 = vpop.permute.xlu0 %4629
    %4631 = vrot.lane.b32.xlu0 %v4538, 4
    %v4632 = vpop.permute.xlu0 %4631
    %4633 = vrot.lane.b32.xlu0 %v4542, 4
    %v4634 = vpop.permute.xlu0 %4633
    %4635 = vrot.lane.b32.xlu0 %v4546, 4
    %v4636 = vpop.permute.xlu0 %4635
    %4637 = vrot.lane.b32.xlu0 %v4550, 4
    %v4638 = vpop.permute.xlu0 %4637
    %4639 = vrot.lane.b32.xlu0 %v4554, 4
    %v4640 = vpop.permute.xlu0 %4639
    %4641 = vrot.lane.b32.xlu0 %v4558, 4
    %v4642 = vpop.permute.xlu0 %4641
    %4643 = vrot.lane.b32.xlu0 %v4562, 4
    %v4644 = vpop.permute.xlu0 %4643
    %4645 = vrot.lane.b32.xlu0 %v4566, 4
    %v4646 = vpop.permute.xlu0 %4645
    %4647 = vrot.lane.b32.xlu0 %v4570, 4
    %v4648 = vpop.permute.xlu0 %4647
    %4649 = vrot.lane.b32.xlu0 %v4574, 4
    %v4650 = vpop.permute.xlu0 %4649
    %4651 = vrot.lane.b32.xlu0 %v4578, 4
    %v4652 = vpop.permute.xlu0 %4651
    %4653 = vrot.lane.b32.xlu0 %v4582, 4
    %v4654 = vpop.permute.xlu0 %4653
    %4655 = vrot.lane.b32.xlu0 %v4586, 4
    %v4656 = vpop.permute.xlu0 %4655
    %4657 = vrot.lane.b32.xlu0 %v4590, 4
    %v4658 = vpop.permute.xlu0 %4657
    %4659 = vrot.lane.b32.xlu0 %v4594, 4
    %v4660 = vpop.permute.xlu0 %4659
    %4661 = vrot.lane.b32.xlu0 %v4598, 4
    %v4662 = vpop.permute.xlu0 %4661
    %v4663 = vsel %vm44, %v4600, %v4602
    %v4664 = vsel %vm44, %v4604, %v4606
    %v4665 = vsel %vm44, %v4608, %v4610
    %v4666 = vsel %vm44, %v4612, %v4614
    %v4667 = vsel %vm44, %v4616, %v4618
    %v4668 = vsel %vm44, %v4620, %v4622
    %v4669 = vsel %vm44, %v4624, %v4626
    %v4670 = vsel %vm44, %v4628, %v4630
    %v4671 = vsel %vm44, %v4632, %v4634
    %v4672 = vsel %vm44, %v4636, %v4638
    %v4673 = vsel %vm44, %v4640, %v4642
    %v4674 = vsel %vm44, %v4644, %v4646
    %v4675 = vsel %vm44, %v4648, %v4650
    %v4676 = vsel %vm44, %v4652, %v4654
    %v4677 = vsel %vm44, %v4656, %v4658
    %v4678 = vsel %vm44, %v4660, %v4662
    %4695 = vst.msk [vmem:[#allocation2 + $0xe] sm:$0x1] %vm1986, %v4663
    %4696 = vst.msk [vmem:[#allocation2 + $0x1e] sm:$0x1] %vm1986, %v4664
    %4697 = vst.msk [vmem:[#allocation2 + $0x2e] sm:$0x1] %vm1986, %v4665
    %4698 = vst.msk [vmem:[#allocation2 + $0x3e] sm:$0x1] %vm1986, %v4666
    %4699 = vst.msk [vmem:[#allocation2 + $0x4e] sm:$0x1] %vm1986, %v4667
    %4700 = vst.msk [vmem:[#allocation2 + $0x5e] sm:$0x1] %vm1986, %v4668
    %4701 = vst.msk [vmem:[#allocation2 + $0x6e] sm:$0x1] %vm1986, %v4669
    %4702 = vst.msk [vmem:[#allocation2 + $0x7e] sm:$0x1] %vm1986, %v4670
    %4703 = vst.msk [vmem:[#allocation2 + $0x8e] sm:$0x1] %vm1986, %v4671
    %4704 = vst.msk [vmem:[#allocation2 + $0x9e] sm:$0x1] %vm1986, %v4672
    %4705 = vst.msk [vmem:[#allocation2 + $0xae] sm:$0x1] %vm1986, %v4673
    %4706 = vst.msk [vmem:[#allocation2 + $0xbe] sm:$0x1] %vm1986, %v4674
    %4707 = vst.msk [vmem:[#allocation2 + $0xce] sm:$0x1] %vm1986, %v4675
    %4708 = vst.msk [vmem:[#allocation2 + $0xde] sm:$0x1] %vm1986, %v4676
    %4709 = vst.msk [vmem:[#allocation2 + $0xee] sm:$0x1] %vm1986, %v4677
    %4710 = vst.msk [vmem:[#allocation2 + $0xfe] sm:$0x1] %vm1986, %v4678
    %v4712 = vcombine.low %v1868, %v1869
    %v4713 = vcombine.high %v1868, %v1869
    %v4715 = vunpack.c.l.s4 1966171168
    %v4716 = vunpack.c.0.s8 %v4715
    %v4717 = vlaneseq
    %v4718 = vshrl.u32 %v4717, 7
    %v4719 = vsub.s32 %v4716, %v4718
    %v4720 = vrot.slane %v4712, %v4719
    %v4722 = vunpack.c.l.s4 1966171168
    %v4723 = vunpack.c.0.s8 %v4722
    %v4724 = vlaneseq
    %v4725 = vshrl.u32 %v4724, 7
    %v4726 = vsub.s32 %v4723, %v4725
    %v4727 = vrot.slane %v4713, %v4726
    %v4728 = vcombine.high %v4720, %v4720
    %v4729 = vcombine.high %v4727, %v4727
    %v4731 = vunpack.c.l.s4 1966171168
    %v4732 = vunpack.c.0.s8 %v4731
    %v4733 = vlaneseq
    %v4734 = vshrl.u32 %v4733, 7
    %v4735 = vsub.s32 %v4732, %v4734
    %v4736 = vrot.slane %v4720, %v4735
    %v4738 = vunpack.c.l.s4 1966171168
    %v4739 = vunpack.c.0.s8 %v4738
    %v4740 = vlaneseq
    %v4741 = vshrl.u32 %v4740, 7
    %v4742 = vsub.s32 %v4739, %v4741
    %v4743 = vrot.slane %v4727, %v4742
    %v4745 = vunpack.c.l.s4 1966171168
    %v4746 = vunpack.c.0.s8 %v4745
    %v4747 = vlaneseq
    %v4748 = vshrl.u32 %v4747, 7
    %v4749 = vsub.s32 %v4746, %v4748
    %v4750 = vrot.slane %v4728, %v4749
    %v4752 = vunpack.c.l.s4 1966171168
    %v4753 = vunpack.c.0.s8 %v4752
    %v4754 = vlaneseq
    %v4755 = vshrl.u32 %v4754, 7
    %v4756 = vsub.s32 %v4753, %v4755
    %v4757 = vrot.slane %v4729, %v4756
    %v4758 = vcombine.high %v4736, %v4736
    %v4759 = vcombine.high %v4743, %v4743
    %v4760 = vcombine.high %v4750, %v4750
    %v4761 = vcombine.high %v4757, %v4757
    %v4762 = vlaneseq
    %v4763 = vshrl.u32 %v4762, 7
    %v4764 = vsub.s32 0, %v4763
    %v4765 = vrot.slane %v4736, %v4764
    %v4766 = vlaneseq
    %v4767 = vshrl.u32 %v4766, 7
    %v4768 = vsub.s32 1, %v4767
    %v4769 = vrot.slane %v4736, %v4768
    %v4770 = vlaneseq
    %v4771 = vshrl.u32 %v4770, 7
    %v4772 = vsub.s32 0, %v4771
    %v4773 = vrot.slane %v4750, %v4772
    %v4774 = vlaneseq
    %v4775 = vshrl.u32 %v4774, 7
    %v4776 = vsub.s32 1, %v4775
    %v4777 = vrot.slane %v4750, %v4776
    %v4778 = vlaneseq
    %v4779 = vshrl.u32 %v4778, 7
    %v4780 = vsub.s32 0, %v4779
    %v4781 = vrot.slane %v4758, %v4780
    %v4782 = vlaneseq
    %v4783 = vshrl.u32 %v4782, 7
    %v4784 = vsub.s32 1, %v4783
    %v4785 = vrot.slane %v4758, %v4784
    %v4786 = vlaneseq
    %v4787 = vshrl.u32 %v4786, 7
    %v4788 = vsub.s32 0, %v4787
    %v4789 = vrot.slane %v4760, %v4788
    %v4790 = vlaneseq
    %v4791 = vshrl.u32 %v4790, 7
    %v4792 = vsub.s32 1, %v4791
    %v4793 = vrot.slane %v4760, %v4792
    %v4794 = vlaneseq
    %v4795 = vshrl.u32 %v4794, 7
    %v4796 = vsub.s32 0, %v4795
    %v4797 = vrot.slane %v4743, %v4796
    %v4798 = vlaneseq
    %v4799 = vshrl.u32 %v4798, 7
    %v4800 = vsub.s32 1, %v4799
    %v4801 = vrot.slane %v4743, %v4800
    %v4802 = vlaneseq
    %v4803 = vshrl.u32 %v4802, 7
    %v4804 = vsub.s32 0, %v4803
    %v4805 = vrot.slane %v4757, %v4804
    %v4806 = vlaneseq
    %v4807 = vshrl.u32 %v4806, 7
    %v4808 = vsub.s32 1, %v4807
    %v4809 = vrot.slane %v4757, %v4808
    %v4810 = vlaneseq
    %v4811 = vshrl.u32 %v4810, 7
    %v4812 = vsub.s32 0, %v4811
    %v4813 = vrot.slane %v4759, %v4812
    %v4814 = vlaneseq
    %v4815 = vshrl.u32 %v4814, 7
    %v4816 = vsub.s32 1, %v4815
    %v4817 = vrot.slane %v4759, %v4816
    %v4818 = vlaneseq
    %v4819 = vshrl.u32 %v4818, 7
    %v4820 = vsub.s32 0, %v4819
    %v4821 = vrot.slane %v4761, %v4820
    %v4822 = vlaneseq
    %v4823 = vshrl.u32 %v4822, 7
    %v4824 = vsub.s32 1, %v4823
    %v4825 = vrot.slane %v4761, %v4824
    %4826 = vrot.lane.b32.xlu0 %v4765, 4
    %v4827 = vpop.permute.xlu0 %4826
    %4828 = vrot.lane.b32.xlu0 %v4769, 4
    %v4829 = vpop.permute.xlu0 %4828
    %4830 = vrot.lane.b32.xlu0 %v4773, 4
    %v4831 = vpop.permute.xlu0 %4830
    %4832 = vrot.lane.b32.xlu0 %v4777, 4
    %v4833 = vpop.permute.xlu0 %4832
    %4834 = vrot.lane.b32.xlu0 %v4781, 4
    %v4835 = vpop.permute.xlu0 %4834
    %4836 = vrot.lane.b32.xlu0 %v4785, 4
    %v4837 = vpop.permute.xlu0 %4836
    %4838 = vrot.lane.b32.xlu0 %v4789, 4
    %v4839 = vpop.permute.xlu0 %4838
    %4840 = vrot.lane.b32.xlu0 %v4793, 4
    %v4841 = vpop.permute.xlu0 %4840
    %4842 = vrot.lane.b32.xlu0 %v4797, 4
    %v4843 = vpop.permute.xlu0 %4842
    %4844 = vrot.lane.b32.xlu0 %v4801, 4
    %v4845 = vpop.permute.xlu0 %4844
    %4846 = vrot.lane.b32.xlu0 %v4805, 4
    %v4847 = vpop.permute.xlu0 %4846
    %4848 = vrot.lane.b32.xlu0 %v4809, 4
    %v4849 = vpop.permute.xlu0 %4848
    %4850 = vrot.lane.b32.xlu0 %v4813, 4
    %v4851 = vpop.permute.xlu0 %4850
    %4852 = vrot.lane.b32.xlu0 %v4817, 4
    %v4853 = vpop.permute.xlu0 %4852
    %4854 = vrot.lane.b32.xlu0 %v4821, 4
    %v4855 = vpop.permute.xlu0 %4854
    %4856 = vrot.lane.b32.xlu0 %v4825, 4
    %v4857 = vpop.permute.xlu0 %4856
    %v4858 = vsel %vm44, %v4827, %v4829
    %v4859 = vsel %vm44, %v4831, %v4833
    %v4860 = vsel %vm44, %v4835, %v4837
    %v4861 = vsel %vm44, %v4839, %v4841
    %v4862 = vsel %vm44, %v4843, %v4845
    %v4863 = vsel %vm44, %v4847, %v4849
    %v4864 = vsel %vm44, %v4851, %v4853
    %v4865 = vsel %vm44, %v4855, %v4857
    %4874 = vst.msk [vmem:[#allocation4 + $0xe] sm:$0x1] %vm1986, %v4858
    %4875 = vst.msk [vmem:[#allocation4 + $0x1e] sm:$0x1] %vm1986, %v4859
    %4876 = vst.msk [vmem:[#allocation4 + $0x2e] sm:$0x1] %vm1986, %v4860
    %4877 = vst.msk [vmem:[#allocation4 + $0x3e] sm:$0x1] %vm1986, %v4861
    %4878 = vst.msk [vmem:[#allocation4 + $0x4e] sm:$0x1] %vm1986, %v4862
    %4879 = vst.msk [vmem:[#allocation4 + $0x5e] sm:$0x1] %vm1986, %v4863
    %4880 = vst.msk [vmem:[#allocation4 + $0x6e] sm:$0x1] %vm1986, %v4864
    %4881 = vst.msk [vmem:[#allocation4 + $0x7e] sm:$0x1] %vm1986, %v4865
    %4882 = vrot.lane.b32.xlu0 %v1862, 4
    %v4883 = vpop.permute.xlu0 %4882
    %4884 = vrot.lane.b32.xlu0 %v1863, 4
    %v4885 = vpop.permute.xlu0 %4884
    %4886 = vrot.lane.b32.xlu0 %v1865, 4
    %v4887 = vpop.permute.xlu0 %4886
    %4888 = vrot.lane.b32.xlu0 %v1866, 4
    %v4889 = vpop.permute.xlu0 %4888
    %4890 = vrot.lane.b32.xlu0 %v1868, 4
    %v4891 = vpop.permute.xlu0 %4890
    %4892 = vrot.lane.b32.xlu0 %v1869, 4
    %v4893 = vpop.permute.xlu0 %4892
    %v4894 = vsel %vm44, %v4883, %v4885
    %v4895 = vsel %vm44, %v4887, %v4889
    %v4896 = vsel %vm44, %v4891, %v4893
    %v4900 = vsel %vm2069, %v4894, 0.0
    %4901 = vadd.xlane.f32.xlu0 %v4900
    %v4902 = vpop.xlane.xlu0 %4901
    %v4903 = vsel %vm2069, %v4895, 0.0
    %4904 = vadd.xlane.f32.xlu0 %v4903
    %v4905 = vpop.xlane.xlu0 %4904
    %v4906 = vsel %vm2069, %v4896, 0.0
    %4907 = vadd.xlane.f32.xlu0 %v4906
    %v4908 = vpop.xlane.xlu0 %4907
    %v4909 = vadd.f32 %v4366, %v4902
    %v4910 = vadd.f32 %v4367, %v4905
    %v4911 = vadd.f32 %v4368, %v4908
    %v4912 = vcombine.high %v1863, %v1863
    %v4914 = vunpack.c.l.s4 1966171168
    %v4915 = vunpack.c.0.s8 %v4914
    %v4916 = vlaneseq
    %v4917 = vshrl.u32 %v4916, 7
    %v4918 = vsub.s32 %v4915, %v4917
    %v4919 = vrot.slane %v1863, %v4918
    %v4921 = vunpack.c.l.s4 1966171168
    %v4922 = vunpack.c.0.s8 %v4921
    %v4923 = vlaneseq
    %v4924 = vshrl.u32 %v4923, 7
    %v4925 = vsub.s32 %v4922, %v4924
    %v4926 = vrot.slane %v4912, %v4925
    %v4927 = vcombine.high %v4919, %v4919
    %v4928 = vcombine.high %v4926, %v4926
    %v4930 = vunpack.c.l.s4 1966171168
    %v4931 = vunpack.c.0.s8 %v4930
    %v4932 = vlaneseq
    %v4933 = vshrl.u32 %v4932, 7
    %v4934 = vsub.s32 %v4931, %v4933
    %v4935 = vrot.slane %v4919, %v4934
    %v4937 = vunpack.c.l.s4 1966171168
    %v4938 = vunpack.c.0.s8 %v4937
    %v4939 = vlaneseq
    %v4940 = vshrl.u32 %v4939, 7
    %v4941 = vsub.s32 %v4938, %v4940
    %v4942 = vrot.slane %v4926, %v4941
    %v4944 = vunpack.c.l.s4 1966171168
    %v4945 = vunpack.c.0.s8 %v4944
    %v4946 = vlaneseq
    %v4947 = vshrl.u32 %v4946, 7
    %v4948 = vsub.s32 %v4945, %v4947
    %v4949 = vrot.slane %v4927, %v4948
    %v4951 = vunpack.c.l.s4 1966171168
    %v4952 = vunpack.c.0.s8 %v4951
    %v4953 = vlaneseq
    %v4954 = vshrl.u32 %v4953, 7
    %v4955 = vsub.s32 %v4952, %v4954
    %v4956 = vrot.slane %v4928, %v4955
    %v4957 = vcombine.high %v4935, %v4935
    %v4958 = vcombine.high %v4942, %v4942
    %v4959 = vcombine.high %v4949, %v4949
    %v4960 = vcombine.high %v4956, %v4956
    %v4961 = vcombine.high %v1866, %v1866
    %v4963 = vunpack.c.l.s4 1966171168
    %v4964 = vunpack.c.0.s8 %v4963
    %v4965 = vlaneseq
    %v4966 = vshrl.u32 %v4965, 7
    %v4967 = vsub.s32 %v4964, %v4966
    %v4968 = vrot.slane %v1866, %v4967
    %v4970 = vunpack.c.l.s4 1966171168
    %v4971 = vunpack.c.0.s8 %v4970
    %v4972 = vlaneseq
    %v4973 = vshrl.u32 %v4972, 7
    %v4974 = vsub.s32 %v4971, %v4973
    %v4975 = vrot.slane %v4961, %v4974
    %v4976 = vcombine.high %v4968, %v4968
    %v4977 = vcombine.high %v4975, %v4975
    %v4979 = vunpack.c.l.s4 1966171168
    %v4980 = vunpack.c.0.s8 %v4979
    %v4981 = vlaneseq
    %v4982 = vshrl.u32 %v4981, 7
    %v4983 = vsub.s32 %v4980, %v4982
    %v4984 = vrot.slane %v4968, %v4983
    %v4986 = vunpack.c.l.s4 1966171168
    %v4987 = vunpack.c.0.s8 %v4986
    %v4988 = vlaneseq
    %v4989 = vshrl.u32 %v4988, 7
    %v4990 = vsub.s32 %v4987, %v4989
    %v4991 = vrot.slane %v4975, %v4990
    %v4993 = vunpack.c.l.s4 1966171168
    %v4994 = vunpack.c.0.s8 %v4993
    %v4995 = vlaneseq
    %v4996 = vshrl.u32 %v4995, 7
    %v4997 = vsub.s32 %v4994, %v4996
    %v4998 = vrot.slane %v4976, %v4997
    %v5000 = vunpack.c.l.s4 1966171168
    %v5001 = vunpack.c.0.s8 %v5000
    %v5002 = vlaneseq
    %v5003 = vshrl.u32 %v5002, 7
    %v5004 = vsub.s32 %v5001, %v5003
    %v5005 = vrot.slane %v4977, %v5004
    %v5006 = vcombine.high %v4984, %v4984
    %v5007 = vcombine.high %v4991, %v4991
    %v5008 = vcombine.high %v4998, %v4998
    %v5009 = vcombine.high %v5005, %v5005
    %v5010 = vlaneseq
    %v5011 = vshrl.u32 %v5010, 7
    %v5012 = vsub.s32 0, %v5011
    %v5013 = vrot.slane %v4935, %v5012
    %v5014 = vlaneseq
    %v5015 = vshrl.u32 %v5014, 7
    %v5016 = vsub.s32 0, %v5015
    %v5017 = vrot.slane %v4949, %v5016
    %v5018 = vlaneseq
    %v5019 = vshrl.u32 %v5018, 7
    %v5020 = vsub.s32 0, %v5019
    %v5021 = vrot.slane %v4957, %v5020
    %v5022 = vlaneseq
    %v5023 = vshrl.u32 %v5022, 7
    %v5024 = vsub.s32 0, %v5023
    %v5025 = vrot.slane %v4959, %v5024
    %v5026 = vlaneseq
    %v5027 = vshrl.u32 %v5026, 7
    %v5028 = vsub.s32 0, %v5027
    %v5029 = vrot.slane %v4942, %v5028
    %v5030 = vlaneseq
    %v5031 = vshrl.u32 %v5030, 7
    %v5032 = vsub.s32 0, %v5031
    %v5033 = vrot.slane %v4956, %v5032
    %v5034 = vlaneseq
    %v5035 = vshrl.u32 %v5034, 7
    %v5036 = vsub.s32 0, %v5035
    %v5037 = vrot.slane %v4958, %v5036
    %v5038 = vlaneseq
    %v5039 = vshrl.u32 %v5038, 7
    %v5040 = vsub.s32 0, %v5039
    %v5041 = vrot.slane %v4960, %v5040
    %v5042 = vlaneseq
    %v5043 = vshrl.u32 %v5042, 7
    %v5044 = vsub.s32 0, %v5043
    %v5045 = vrot.slane %v4984, %v5044
    %v5046 = vlaneseq
    %v5047 = vshrl.u32 %v5046, 7
    %v5048 = vsub.s32 0, %v5047
    %v5049 = vrot.slane %v4998, %v5048
    %v5050 = vlaneseq
    %v5051 = vshrl.u32 %v5050, 7
    %v5052 = vsub.s32 0, %v5051
    %v5053 = vrot.slane %v5006, %v5052
    %v5054 = vlaneseq
    %v5055 = vshrl.u32 %v5054, 7
    %v5056 = vsub.s32 0, %v5055
    %v5057 = vrot.slane %v5008, %v5056
    %v5058 = vlaneseq
    %v5059 = vshrl.u32 %v5058, 7
    %v5060 = vsub.s32 0, %v5059
    %v5061 = vrot.slane %v4991, %v5060
    %v5062 = vlaneseq
    %v5063 = vshrl.u32 %v5062, 7
    %v5064 = vsub.s32 0, %v5063
    %v5065 = vrot.slane %v5005, %v5064
    %v5066 = vlaneseq
    %v5067 = vshrl.u32 %v5066, 7
    %v5068 = vsub.s32 0, %v5067
    %v5069 = vrot.slane %v5007, %v5068
    %v5070 = vlaneseq
    %v5071 = vshrl.u32 %v5070, 7
    %v5072 = vsub.s32 0, %v5071
    %v5073 = vrot.slane %v5009, %v5072
    %5074 = vrot.lane.b32.xlu0 %v5013, 114
    %v5075 = vpop.permute.xlu0 %5074
    %5076 = vrot.lane.b32.xlu0 %v5017, 114
    %v5077 = vpop.permute.xlu0 %5076
    %5078 = vrot.lane.b32.xlu0 %v5021, 114
    %v5079 = vpop.permute.xlu0 %5078
    %5080 = vrot.lane.b32.xlu0 %v5025, 114
    %v5081 = vpop.permute.xlu0 %5080
    %5082 = vrot.lane.b32.xlu0 %v5029, 114
    %v5083 = vpop.permute.xlu0 %5082
    %5084 = vrot.lane.b32.xlu0 %v5033, 114
    %v5085 = vpop.permute.xlu0 %5084
    %5086 = vrot.lane.b32.xlu0 %v5037, 114
    %v5087 = vpop.permute.xlu0 %5086
    %5088 = vrot.lane.b32.xlu0 %v5041, 114
    %v5089 = vpop.permute.xlu0 %5088
    %5090 = vrot.lane.b32.xlu0 %v5045, 114
    %v5091 = vpop.permute.xlu0 %5090
    %5092 = vrot.lane.b32.xlu0 %v5049, 114
    %v5093 = vpop.permute.xlu0 %5092
    %5094 = vrot.lane.b32.xlu0 %v5053, 114
    %v5095 = vpop.permute.xlu0 %5094
    %5096 = vrot.lane.b32.xlu0 %v5057, 114
    %v5097 = vpop.permute.xlu0 %5096
    %5098 = vrot.lane.b32.xlu0 %v5061, 114
    %v5099 = vpop.permute.xlu0 %5098
    %5100 = vrot.lane.b32.xlu0 %v5065, 114
    %v5101 = vpop.permute.xlu0 %5100
    %5102 = vrot.lane.b32.xlu0 %v5069, 114
    %v5103 = vpop.permute.xlu0 %5102
    %5104 = vrot.lane.b32.xlu0 %v5073, 114
    %v5105 = vpop.permute.xlu0 %5104
    %5122 = vst.msk [vmem:[#allocation2 + $0xf] sm:$0x1] %vm1986, %v5075
    %5123 = vst.msk [vmem:[#allocation2 + $0x1f] sm:$0x1] %vm1986, %v5077
    %5124 = vst.msk [vmem:[#allocation2 + $0x2f] sm:$0x1] %vm1986, %v5079
    %5125 = vst.msk [vmem:[#allocation2 + $0x3f] sm:$0x1] %vm1986, %v5081
    %5126 = vst.msk [vmem:[#allocation2 + $0x4f] sm:$0x1] %vm1986, %v5083
    %5127 = vst.msk [vmem:[#allocation2 + $0x5f] sm:$0x1] %vm1986, %v5085
    %5128 = vst.msk [vmem:[#allocation2 + $0x6f] sm:$0x1] %vm1986, %v5087
    %5129 = vst.msk [vmem:[#allocation2 + $0x7f] sm:$0x1] %vm1986, %v5089
    %5130 = vst.msk [vmem:[#allocation2 + $0x8f] sm:$0x1] %vm1986, %v5091
    %5131 = vst.msk [vmem:[#allocation2 + $0x9f] sm:$0x1] %vm1986, %v5093
    %5132 = vst.msk [vmem:[#allocation2 + $0xaf] sm:$0x1] %vm1986, %v5095
    %5133 = vst.msk [vmem:[#allocation2 + $0xbf] sm:$0x1] %vm1986, %v5097
    %5134 = vst.msk [vmem:[#allocation2 + $0xcf] sm:$0x1] %vm1986, %v5099
    %5135 = vst.msk [vmem:[#allocation2 + $0xdf] sm:$0x1] %vm1986, %v5101
    %5136 = vst.msk [vmem:[#allocation2 + $0xef] sm:$0x1] %vm1986, %v5103
    %5137 = vst.msk [vmem:[#allocation2 + $0xff] sm:$0x1] %vm1986, %v5105
    %v5138 = vcombine.high %v1869, %v1869
    %v5140 = vunpack.c.l.s4 1966171168
    %v5141 = vunpack.c.0.s8 %v5140
    %v5142 = vlaneseq
    %v5143 = vshrl.u32 %v5142, 7
    %v5144 = vsub.s32 %v5141, %v5143
    %v5145 = vrot.slane %v1869, %v5144
    %v5147 = vunpack.c.l.s4 1966171168
    %v5148 = vunpack.c.0.s8 %v5147
    %v5149 = vlaneseq
    %v5150 = vshrl.u32 %v5149, 7
    %v5151 = vsub.s32 %v5148, %v5150
    %v5152 = vrot.slane %v5138, %v5151
    %v5153 = vcombine.high %v5145, %v5145
    %v5154 = vcombine.high %v5152, %v5152
    %v5156 = vunpack.c.l.s4 1966171168
    %v5157 = vunpack.c.0.s8 %v5156
    %v5158 = vlaneseq
    %v5159 = vshrl.u32 %v5158, 7
    %v5160 = vsub.s32 %v5157, %v5159
    %v5161 = vrot.slane %v5145, %v5160
    %v5163 = vunpack.c.l.s4 1966171168
    %v5164 = vunpack.c.0.s8 %v5163
    %v5165 = vlaneseq
    %v5166 = vshrl.u32 %v5165, 7
    %v5167 = vsub.s32 %v5164, %v5166
    %v5168 = vrot.slane %v5152, %v5167
    %v5170 = vunpack.c.l.s4 1966171168
    %v5171 = vunpack.c.0.s8 %v5170
    %v5172 = vlaneseq
    %v5173 = vshrl.u32 %v5172, 7
    %v5174 = vsub.s32 %v5171, %v5173
    %v5175 = vrot.slane %v5153, %v5174
    %v5177 = vunpack.c.l.s4 1966171168
    %v5178 = vunpack.c.0.s8 %v5177
    %v5179 = vlaneseq
    %v5180 = vshrl.u32 %v5179, 7
    %v5181 = vsub.s32 %v5178, %v5180
    %v5182 = vrot.slane %v5154, %v5181
    %v5183 = vcombine.high %v5161, %v5161
    %v5184 = vcombine.high %v5168, %v5168
    %v5185 = vcombine.high %v5175, %v5175
    %v5186 = vcombine.high %v5182, %v5182
    %v5187 = vlaneseq
    %v5188 = vshrl.u32 %v5187, 7
    %v5189 = vsub.s32 0, %v5188
    %v5190 = vrot.slane %v5161, %v5189
    %v5191 = vlaneseq
    %v5192 = vshrl.u32 %v5191, 7
    %v5193 = vsub.s32 0, %v5192
    %v5194 = vrot.slane %v5175, %v5193
    %v5195 = vlaneseq
    %v5196 = vshrl.u32 %v5195, 7
    %v5197 = vsub.s32 0, %v5196
    %v5198 = vrot.slane %v5183, %v5197
    %v5199 = vlaneseq
    %v5200 = vshrl.u32 %v5199, 7
    %v5201 = vsub.s32 0, %v5200
    %v5202 = vrot.slane %v5185, %v5201
    %v5203 = vlaneseq
    %v5204 = vshrl.u32 %v5203, 7
    %v5205 = vsub.s32 0, %v5204
    %v5206 = vrot.slane %v5168, %v5205
    %v5207 = vlaneseq
    %v5208 = vshrl.u32 %v5207, 7
    %v5209 = vsub.s32 0, %v5208
    %v5210 = vrot.slane %v5182, %v5209
    %v5211 = vlaneseq
    %v5212 = vshrl.u32 %v5211, 7
    %v5213 = vsub.s32 0, %v5212
    %v5214 = vrot.slane %v5184, %v5213
    %v5215 = vlaneseq
    %v5216 = vshrl.u32 %v5215, 7
    %v5217 = vsub.s32 0, %v5216
    %v5218 = vrot.slane %v5186, %v5217
    %5219 = vrot.lane.b32.xlu0 %v5190, 114
    %v5220 = vpop.permute.xlu0 %5219
    %5221 = vrot.lane.b32.xlu0 %v5194, 114
    %v5222 = vpop.permute.xlu0 %5221
    %5223 = vrot.lane.b32.xlu0 %v5198, 114
    %v5224 = vpop.permute.xlu0 %5223
    %5225 = vrot.lane.b32.xlu0 %v5202, 114
    %v5226 = vpop.permute.xlu0 %5225
    %5227 = vrot.lane.b32.xlu0 %v5206, 114
    %v5228 = vpop.permute.xlu0 %5227
    %5229 = vrot.lane.b32.xlu0 %v5210, 114
    %v5230 = vpop.permute.xlu0 %5229
    %5231 = vrot.lane.b32.xlu0 %v5214, 114
    %v5232 = vpop.permute.xlu0 %5231
    %5233 = vrot.lane.b32.xlu0 %v5218, 114
    %v5234 = vpop.permute.xlu0 %5233
    %5243 = vst.msk [vmem:[#allocation4 + $0xf] sm:$0x1] %vm1986, %v5220
    %5244 = vst.msk [vmem:[#allocation4 + $0x1f] sm:$0x1] %vm1986, %v5222
    %5245 = vst.msk [vmem:[#allocation4 + $0x2f] sm:$0x1] %vm1986, %v5224
    %5246 = vst.msk [vmem:[#allocation4 + $0x3f] sm:$0x1] %vm1986, %v5226
    %5247 = vst.msk [vmem:[#allocation4 + $0x4f] sm:$0x1] %vm1986, %v5228
    %5248 = vst.msk [vmem:[#allocation4 + $0x5f] sm:$0x1] %vm1986, %v5230
    %5249 = vst.msk [vmem:[#allocation4 + $0x6f] sm:$0x1] %vm1986, %v5232
    %5250 = vst.msk [vmem:[#allocation4 + $0x7f] sm:$0x1] %vm1986, %v5234
    %5251 = vrot.lane.b32.xlu0 %v1863, 114
    %v5252 = vpop.permute.xlu0 %5251
    %5253 = vrot.lane.b32.xlu0 %v1866, 114
    %v5254 = vpop.permute.xlu0 %5253
    %5255 = vrot.lane.b32.xlu0 %v1869, 114
    %v5256 = vpop.permute.xlu0 %5255
    %v5260 = vsel %vm2069, %v5252, 0.0
    %5261 = vadd.xlane.f32.xlu0 %v5260
    %v5262 = vpop.xlane.xlu0 %5261
    %v5263 = vsel %vm2069, %v5254, 0.0
    %5264 = vadd.xlane.f32.xlu0 %v5263
    %v5265 = vpop.xlane.xlu0 %5264
    %v5266 = vsel %vm2069, %v5256, 0.0
    %5267 = vadd.xlane.f32.xlu0 %v5266
    %v5268 = vpop.xlane.xlu0 %5267
    %v5269 = vadd.f32 %v4909, %v5262
    %v5270 = vadd.f32 %v4910, %v5265
    %v5271 = vadd.f32 %v4911, %v5268
    %v5272 = vmul.f32 %v5269, 0.00390625
    %v5273 = vmul.f32 %v5270, 0.00390625
    %v5274 = vmul.f32 %v5271, 0.00390625
    %vm5275 = vcmask 7168
    %5276 = vst.msk [vmem:[%s5] sm:$0xff] %vm5275, %v5272
    %5277 = vst.msk [vmem:[%s5 + $0x8] sm:$0xff] %vm5275, %v5273
    %5278 = vst.msk [vmem:[%s6] sm:$0xff] %vm5275, %v5274
    %s5279 = scalar_lea.vmem %s0, 12
    %v5280 = vld [vmem:[%s5279] sm:$0xff]
    %v5281 = vld [vmem:[%s5279 + $0x8] sm:$0xf]
    %v5282 = vld [vmem:[%s1] sm:$0xff]
    %v5283 = vld [vmem:[%s1 + $0x8] sm:$0xff]
    %v5284 = vld [vmem:[%s1 + $0x10] sm:$0xff]
    %v5285 = vld [vmem:[%s28] sm:$0xff]
    %v5286 = vld [vmem:[%s28 + $0x8] sm:$0xff]
    %v5287 = vld [vmem:[%s28 + $0x10] sm:$0xff]
    %v5290 = vcombine.high %v5280, %v5280
    %5291 = vrot.lane.b32.xlu0 %v5280, 127
    %v5292 = vpop.permute.xlu0 %5291
    %5293 = vrot.lane.b32.xlu0 %v5290, 127
    %v5294 = vpop.permute.xlu0 %5293
    %5295 = vrot.lane.b32.xlu0 %v5281, 127
    %v5296 = vpop.permute.xlu0 %5295
    %v5297 = vsel %vm41, %v5292, %v5294
    %v5298 = vsel %vm41, %v5294, %v5296
    %v5300 = vsel %vm44, %v5285, 0
    %v5303 = vsel %vm44, %v5286, 0
    %v5306 = vsel %vm44, %v5287, 0
    %v5308 = vsel %vm54, %v5297, 0
    %v5310 = vsel %vm54, %v5298, 0
    %v5312 = vsel %vm54, %v5296, 0
    %5314 = vmatprep.subr.mxu0 0.0
    %5315 = vmatpush1.msra.mxu0 0.0
    %5316 = vmatprep.subr.mxu0 0.0
    %5317 = vmatpush1.msra.mxu0 0.0
    %5318 = vmatprep.subr.mxu0 0.0
    %5319 = vmatpush1.msra.mxu0 0.0
    %5320 = vmatprep.subr.mxu0 0.0
    %5321 = vmatpush1.msra.mxu0 0.0
    %5322 = vmatprep.subr.mxu0 0.0
    %5323 = vmatpush1.msra.mxu0 0.0
    %5324 = vmatprep.subr.mxu0 0.0
    %5325 = vmatpush1.msra.mxu0 0.0
    %5326 = vmatprep.subr.mxu0 0.0
    %5327 = vmatpush1.msra.mxu0 0.0
    %5328 = vmatprep.subr.mxu0 0.0
    %5329 = vmatpush1.msra.mxu0 0.0
    %5330 = vmatprep.subr.mxu0 0.0
    %5331 = vmatpush1.msra.mxu0 0.0
    %5332 = vmatprep.subr.mxu0 0.0
    %5333 = vmatpush1.msra.mxu0 0.0
    %5334 = vmatprep.subr.mxu0 0.0
    %5335 = vmatpush1.msra.mxu0 0.0
    %5336 = vmatprep.subr.mxu0 0.0
    %5337 = vmatpush1.msra.mxu0 0.0
    %5338 = vmatprep.subr.mxu0 0.0
    %5339 = vmatpush1.msra.mxu0 0.0
    %5340 = vmatprep.subr.mxu0 0.0
    %5341 = vmatpush1.msra.mxu0 0.0
    %5342 = vmatprep.subr.mxu0 0.0
    %5343 = vmatpush1.msra.mxu0 0.0
    %5344 = vmatprep.subr.mxu0 %v5310
    %5345 = vmatpush1.msra.mxu0 %v5308
    %5346 = vmatprep.subr.mxu0 0.0
    %5347 = vmatpush2.msra.mxu0 0.0
    %5348 = vmatprep.subr.mxu0 0.0
    %5349 = vmatpush2.msra.mxu0 0.0
    %5350 = vmatprep.subr.mxu0 0.0
    %5351 = vmatpush2.msra.mxu0 0.0
    %5352 = vmatprep.subr.mxu0 0.0
    %5353 = vmatpush2.msra.mxu0 0.0
    %5354 = vmatprep.subr.mxu0 0.0
    %5355 = vmatpush2.msra.mxu0 0.0
    %5356 = vmatprep.subr.mxu0 0.0
    %5357 = vmatpush2.msra.mxu0 0.0
    %5358 = vmatprep.subr.mxu0 0.0
    %5359 = vmatpush2.msra.mxu0 0.0
    %5360 = vmatprep.subr.mxu0 0.0
    %5361 = vmatpush2.msra.mxu0 0.0
    %5362 = vmatprep.subr.mxu0 0.0
    %5363 = vmatpush2.msra.mxu0 0.0
    %5364 = vmatprep.subr.mxu0 0.0
    %5365 = vmatpush2.msra.mxu0 0.0
    %5366 = vmatprep.subr.mxu0 0.0
    %5367 = vmatpush2.msra.mxu0 0.0
    %5368 = vmatprep.subr.mxu0 0.0
    %5369 = vmatpush2.msra.mxu0 0.0
    %5370 = vmatprep.subr.mxu0 0.0
    %5371 = vmatpush2.msra.mxu0 0.0
    %5372 = vmatprep.subr.mxu0 0.0
    %5373 = vmatpush2.msra.mxu0 0.0
    %5374 = vmatprep.subr.mxu0 0.0
    %5375 = vmatpush2.msra.mxu0 0.0
    %5376 = vmatprep.subr.mxu0 0.0
    %5377 = vmatpush2.msra.mxu0 0.0
    %5378 = vmatprep.mubr.f32.mxu0 0.0
    %5379 = vmatmul.mubr.f32.gmra.mxu0 %v5300
    %v5380 = vpop.f32.mrf.mxu0
    %v5381 = vadd.f32 0.0, %v5380
    %v5382 = vpop.f32.mrf.mxu0
    %v5383 = vadd.f32 0.0, %v5382
    %5384 = vmatprep.mubr.f32.mxu0 0.0
    %5385 = vmatmul.mubr.f32.gmra.mxu0 %v5303
    %v5386 = vpop.f32.mrf.mxu0
    %v5387 = vadd.f32 0.0, %v5386
    %v5388 = vpop.f32.mrf.mxu0
    %v5389 = vadd.f32 0.0, %v5388
    %5390 = vmatprep.mubr.f32.mxu0 0.0
    %5391 = vmatmul.mubr.f32.gmra.mxu0 %v5306
    %v5392 = vpop.f32.mrf.mxu0
    %v5393 = vadd.f32 0.0, %v5392
    %v5394 = vpop.f32.mrf.mxu0
    %v5395 = vadd.f32 0.0, %v5394
    %5396 = vdwg.mxu0
    %5397 = vmatprep.subr.mxu0 0.0
    %5398 = vmatpush1.msra.mxu0 0.0
    %5399 = vmatprep.subr.mxu0 0.0
    %5400 = vmatpush1.msra.mxu0 0.0
    %5401 = vmatprep.subr.mxu0 0.0
    %5402 = vmatpush1.msra.mxu0 0.0
    %5403 = vmatprep.subr.mxu0 0.0
    %5404 = vmatpush1.msra.mxu0 0.0
    %5405 = vmatprep.subr.mxu0 0.0
    %5406 = vmatpush1.msra.mxu0 0.0
    %5407 = vmatprep.subr.mxu0 0.0
    %5408 = vmatpush1.msra.mxu0 0.0
    %5409 = vmatprep.subr.mxu0 0.0
    %5410 = vmatpush1.msra.mxu0 0.0
    %5411 = vmatprep.subr.mxu0 0.0
    %5412 = vmatpush1.msra.mxu0 0.0
    %5413 = vmatprep.subr.mxu0 0.0
    %5414 = vmatpush1.msra.mxu0 0.0
    %5415 = vmatprep.subr.mxu0 0.0
    %5416 = vmatpush1.msra.mxu0 0.0
    %5417 = vmatprep.subr.mxu0 0.0
    %5418 = vmatpush1.msra.mxu0 0.0
    %5419 = vmatprep.subr.mxu0 0.0
    %5420 = vmatpush1.msra.mxu0 0.0
    %5421 = vmatprep.subr.mxu0 0.0
    %5422 = vmatpush1.msra.mxu0 0.0
    %5423 = vmatprep.subr.mxu0 0.0
    %5424 = vmatpush1.msra.mxu0 0.0
    %5425 = vmatprep.subr.mxu0 0.0
    %5426 = vmatpush1.msra.mxu0 0.0
    %5427 = vmatprep.subr.mxu0 0.0
    %5428 = vmatpush1.msra.mxu0 %v5312
    %5429 = vmatprep.subr.mxu0 0.0
    %5430 = vmatpush2.msra.mxu0 0.0
    %5431 = vmatprep.subr.mxu0 0.0
    %5432 = vmatpush2.msra.mxu0 0.0
    %5433 = vmatprep.subr.mxu0 0.0
    %5434 = vmatpush2.msra.mxu0 0.0
    %5435 = vmatprep.subr.mxu0 0.0
    %5436 = vmatpush2.msra.mxu0 0.0
    %5437 = vmatprep.subr.mxu0 0.0
    %5438 = vmatpush2.msra.mxu0 0.0
    %5439 = vmatprep.subr.mxu0 0.0
    %5440 = vmatpush2.msra.mxu0 0.0
    %5441 = vmatprep.subr.mxu0 0.0
    %5442 = vmatpush2.msra.mxu0 0.0
    %5443 = vmatprep.subr.mxu0 0.0
    %5444 = vmatpush2.msra.mxu0 0.0
    %5445 = vmatprep.subr.mxu0 0.0
    %5446 = vmatpush2.msra.mxu0 0.0
    %5447 = vmatprep.subr.mxu0 0.0
    %5448 = vmatpush2.msra.mxu0 0.0
    %5449 = vmatprep.subr.mxu0 0.0
    %5450 = vmatpush2.msra.mxu0 0.0
    %5451 = vmatprep.subr.mxu0 0.0
    %5452 = vmatpush2.msra.mxu0 0.0
    %5453 = vmatprep.subr.mxu0 0.0
    %5454 = vmatpush2.msra.mxu0 0.0
    %5455 = vmatprep.subr.mxu0 0.0
    %5456 = vmatpush2.msra.mxu0 0.0
    %5457 = vmatprep.subr.mxu0 0.0
    %5458 = vmatpush2.msra.mxu0 0.0
    %5459 = vmatprep.subr.mxu0 0.0
    %5460 = vmatpush2.msra.mxu0 0.0
    %5461 = vmatprep.mubr.f32.mxu0 0.0
    %5462 = vmatmul.mubr.f32.gmra.mxu0 %v5300
    %v5463 = vpop.f32.mrf.mxu0
    %v5464 = vadd.f32 0.0, %v5463
    %v5465 = vpop.f32.mrf.mxu0
    %5466 = vmatprep.mubr.f32.mxu0 0.0
    %5467 = vmatmul.mubr.f32.gmra.mxu0 %v5303
    %v5468 = vpop.f32.mrf.mxu0
    %v5469 = vadd.f32 0.0, %v5468
    %v5470 = vpop.f32.mrf.mxu0
    %5471 = vmatprep.mubr.f32.mxu0 0.0
    %5472 = vmatmul.mubr.f32.gmra.mxu0 %v5306
    %v5473 = vpop.f32.mrf.mxu0
    %v5474 = vadd.f32 0.0, %v5473
    %v5475 = vpop.f32.mrf.mxu0
    %5476 = vdwg.mxu0
    %v5478 = vsel %vm44, %v5282, 0
    %v5481 = vsel %vm44, %v5283, 0
    %v5484 = vsel %vm44, %v5284, 0
    %v5486 = vsel %vm54, %v5280, 0
    %v5488 = vsel %vm54, %v5290, 0
    %v5490 = vsel %vm54, %v5281, 0
    %5492 = vmatprep.subr.mxu0 0.0
    %5493 = vmatpush1.msra.mxu0 0.0
    %5494 = vmatprep.subr.mxu0 0.0
    %5495 = vmatpush1.msra.mxu0 0.0
    %5496 = vmatprep.subr.mxu0 0.0
    %5497 = vmatpush1.msra.mxu0 0.0
    %5498 = vmatprep.subr.mxu0 0.0
    %5499 = vmatpush1.msra.mxu0 0.0
    %5500 = vmatprep.subr.mxu0 0.0
    %5501 = vmatpush1.msra.mxu0 0.0
    %5502 = vmatprep.subr.mxu0 0.0
    %5503 = vmatpush1.msra.mxu0 0.0
    %5504 = vmatprep.subr.mxu0 0.0
    %5505 = vmatpush1.msra.mxu0 0.0
    %5506 = vmatprep.subr.mxu0 0.0
    %5507 = vmatpush1.msra.mxu0 0.0
    %5508 = vmatprep.subr.mxu0 0.0
    %5509 = vmatpush1.msra.mxu0 0.0
    %5510 = vmatprep.subr.mxu0 0.0
    %5511 = vmatpush1.msra.mxu0 0.0
    %5512 = vmatprep.subr.mxu0 0.0
    %5513 = vmatpush1.msra.mxu0 0.0
    %5514 = vmatprep.subr.mxu0 0.0
    %5515 = vmatpush1.msra.mxu0 0.0
    %5516 = vmatprep.subr.mxu0 0.0
    %5517 = vmatpush1.msra.mxu0 0.0
    %5518 = vmatprep.subr.mxu0 0.0
    %5519 = vmatpush1.msra.mxu0 0.0
    %5520 = vmatprep.subr.mxu0 0.0
    %5521 = vmatpush1.msra.mxu0 0.0
    %5522 = vmatprep.subr.mxu0 %v5488
    %5523 = vmatpush1.msra.mxu0 %v5486
    %5524 = vmatprep.subr.mxu0 0.0
    %5525 = vmatpush2.msra.mxu0 0.0
    %5526 = vmatprep.subr.mxu0 0.0
    %5527 = vmatpush2.msra.mxu0 0.0
    %5528 = vmatprep.subr.mxu0 0.0
    %5529 = vmatpush2.msra.mxu0 0.0
    %5530 = vmatprep.subr.mxu0 0.0
    %5531 = vmatpush2.msra.mxu0 0.0
    %5532 = vmatprep.subr.mxu0 0.0
    %5533 = vmatpush2.msra.mxu0 0.0
    %5534 = vmatprep.subr.mxu0 0.0
    %5535 = vmatpush2.msra.mxu0 0.0
    %5536 = vmatprep.subr.mxu0 0.0
    %5537 = vmatpush2.msra.mxu0 0.0
    %5538 = vmatprep.subr.mxu0 0.0
    %5539 = vmatpush2.msra.mxu0 0.0
    %5540 = vmatprep.subr.mxu0 0.0
    %5541 = vmatpush2.msra.mxu0 0.0
    %5542 = vmatprep.subr.mxu0 0.0
    %5543 = vmatpush2.msra.mxu0 0.0
    %5544 = vmatprep.subr.mxu0 0.0
    %5545 = vmatpush2.msra.mxu0 0.0
    %5546 = vmatprep.subr.mxu0 0.0
    %5547 = vmatpush2.msra.mxu0 0.0
    %5548 = vmatprep.subr.mxu0 0.0
    %5549 = vmatpush2.msra.mxu0 0.0
    %5550 = vmatprep.subr.mxu0 0.0
    %5551 = vmatpush2.msra.mxu0 0.0
    %5552 = vmatprep.subr.mxu0 0.0
    %5553 = vmatpush2.msra.mxu0 0.0
    %5554 = vmatprep.subr.mxu0 0.0
    %5555 = vmatpush2.msra.mxu0 0.0
    %5556 = vmatprep.mubr.f32.mxu0 0.0
    %5557 = vmatmul.mubr.f32.gmra.mxu0 %v5478
    %v5558 = vpop.f32.mrf.mxu0
    %v5559 = vadd.f32 %v5381, %v5558
    %v5560 = vpop.f32.mrf.mxu0
    %v5561 = vadd.f32 %v5383, %v5560
    %5562 = vmatprep.mubr.f32.mxu0 0.0
    %5563 = vmatmul.mubr.f32.gmra.mxu0 %v5481
    %v5564 = vpop.f32.mrf.mxu0
    %v5565 = vadd.f32 %v5387, %v5564
    %v5566 = vpop.f32.mrf.mxu0
    %v5567 = vadd.f32 %v5389, %v5566
    %5568 = vmatprep.mubr.f32.mxu0 0.0
    %5569 = vmatmul.mubr.f32.gmra.mxu0 %v5484
    %v5570 = vpop.f32.mrf.mxu0
    %v5571 = vadd.f32 %v5393, %v5570
    %v5572 = vpop.f32.mrf.mxu0
    %v5573 = vadd.f32 %v5395, %v5572
    %5574 = vdwg.mxu0
    %5575 = vmatprep.subr.mxu0 0.0
    %5576 = vmatpush1.msra.mxu0 0.0
    %5577 = vmatprep.subr.mxu0 0.0
    %5578 = vmatpush1.msra.mxu0 0.0
    %5579 = vmatprep.subr.mxu0 0.0
    %5580 = vmatpush1.msra.mxu0 0.0
    %5581 = vmatprep.subr.mxu0 0.0
    %5582 = vmatpush1.msra.mxu0 0.0
    %5583 = vmatprep.subr.mxu0 0.0
    %5584 = vmatpush1.msra.mxu0 0.0
    %5585 = vmatprep.subr.mxu0 0.0
    %5586 = vmatpush1.msra.mxu0 0.0
    %5587 = vmatprep.subr.mxu0 0.0
    %5588 = vmatpush1.msra.mxu0 0.0
    %5589 = vmatprep.subr.mxu0 0.0
    %5590 = vmatpush1.msra.mxu0 0.0
    %5591 = vmatprep.subr.mxu0 0.0
    %5592 = vmatpush1.msra.mxu0 0.0
    %5593 = vmatprep.subr.mxu0 0.0
    %5594 = vmatpush1.msra.mxu0 0.0
    %5595 = vmatprep.subr.mxu0 0.0
    %5596 = vmatpush1.msra.mxu0 0.0
    %5597 = vmatprep.subr.mxu0 0.0
    %5598 = vmatpush1.msra.mxu0 0.0
    %5599 = vmatprep.subr.mxu0 0.0
    %5600 = vmatpush1.msra.mxu0 0.0
    %5601 = vmatprep.subr.mxu0 0.0
    %5602 = vmatpush1.msra.mxu0 0.0
    %5603 = vmatprep.subr.mxu0 0.0
    %5604 = vmatpush1.msra.mxu0 0.0
    %5605 = vmatprep.subr.mxu0 0.0
    %5606 = vmatpush1.msra.mxu0 %v5490
    %5607 = vmatprep.subr.mxu0 0.0
    %5608 = vmatpush2.msra.mxu0 0.0
    %5609 = vmatprep.subr.mxu0 0.0
    %5610 = vmatpush2.msra.mxu0 0.0
    %5611 = vmatprep.subr.mxu0 0.0
    %5612 = vmatpush2.msra.mxu0 0.0
    %5613 = vmatprep.subr.mxu0 0.0
    %5614 = vmatpush2.msra.mxu0 0.0
    %5615 = vmatprep.subr.mxu0 0.0
    %5616 = vmatpush2.msra.mxu0 0.0
    %5617 = vmatprep.subr.mxu0 0.0
    %5618 = vmatpush2.msra.mxu0 0.0
    %5619 = vmatprep.subr.mxu0 0.0
    %5620 = vmatpush2.msra.mxu0 0.0
    %5621 = vmatprep.subr.mxu0 0.0
    %5622 = vmatpush2.msra.mxu0 0.0
    %5623 = vmatprep.subr.mxu0 0.0
    %5624 = vmatpush2.msra.mxu0 0.0
    %5625 = vmatprep.subr.mxu0 0.0
    %5626 = vmatpush2.msra.mxu0 0.0
    %5627 = vmatprep.subr.mxu0 0.0
    %5628 = vmatpush2.msra.mxu0 0.0
    %5629 = vmatprep.subr.mxu0 0.0
    %5630 = vmatpush2.msra.mxu0 0.0
    %5631 = vmatprep.subr.mxu0 0.0
    %5632 = vmatpush2.msra.mxu0 0.0
    %5633 = vmatprep.subr.mxu0 0.0
    %5634 = vmatpush2.msra.mxu0 0.0
    %5635 = vmatprep.subr.mxu0 0.0
    %5636 = vmatpush2.msra.mxu0 0.0
    %5637 = vmatprep.subr.mxu0 0.0
    %5638 = vmatpush2.msra.mxu0 0.0
    %5639 = vmatprep.mubr.f32.mxu0 0.0
    %5640 = vmatmul.mubr.f32.gmra.mxu0 %v5478
    %v5641 = vpop.f32.mrf.mxu0
    %v5642 = vadd.f32 %v5464, %v5641
    %v5643 = vpop.f32.mrf.mxu0
    %5644 = vmatprep.mubr.f32.mxu0 0.0
    %5645 = vmatmul.mubr.f32.gmra.mxu0 %v5481
    %v5646 = vpop.f32.mrf.mxu0
    %v5647 = vadd.f32 %v5469, %v5646
    %v5648 = vpop.f32.mrf.mxu0
    %5649 = vmatprep.mubr.f32.mxu0 0.0
    %5650 = vmatmul.mubr.f32.gmra.mxu0 %v5484
    %v5651 = vpop.f32.mrf.mxu0
    %v5652 = vadd.f32 %v5474, %v5651
    %v5653 = vpop.f32.mrf.mxu0
    %5654 = vdwg.mxu0
    %v5655 = vld [vmem:[%s5279] sm:$0xff]
    %v5656 = vld [vmem:[%s5279 + $0x8] sm:$0xf]
    %v5657 = vld [vmem:[%s404] sm:$0xff]
    %v5658 = vld [vmem:[%s404 + $0x8] sm:$0xff]
    %v5659 = vld [vmem:[%s404 + $0x10] sm:$0xff]
    %v5662 = vcombine.high %v5655, %v5655
    %5663 = vrot.lane.b32.xlu0 %v5655, 126
    %v5664 = vpop.permute.xlu0 %5663
    %5665 = vrot.lane.b32.xlu0 %v5662, 126
    %v5666 = vpop.permute.xlu0 %5665
    %5667 = vrot.lane.b32.xlu0 %v5656, 126
    %v5668 = vpop.permute.xlu0 %5667
    %v5669 = vsel %vm417, %v5664, %v5666
    %v5670 = vsel %vm417, %v5666, %v5668
    %v5672 = vsel %vm44, %v5657, 0
    %v5675 = vsel %vm44, %v5658, 0
    %v5678 = vsel %vm44, %v5659, 0
    %v5680 = vsel %vm54, %v5669, 0
    %v5682 = vsel %vm54, %v5670, 0
    %v5684 = vsel %vm54, %v5668, 0
    %5686 = vmatprep.subr.mxu0 0.0
    %5687 = vmatpush1.msra.mxu0 0.0
    %5688 = vmatprep.subr.mxu0 0.0
    %5689 = vmatpush1.msra.mxu0 0.0
    %5690 = vmatprep.subr.mxu0 0.0
    %5691 = vmatpush1.msra.mxu0 0.0
    %5692 = vmatprep.subr.mxu0 0.0
    %5693 = vmatpush1.msra.mxu0 0.0
    %5694 = vmatprep.subr.mxu0 0.0
    %5695 = vmatpush1.msra.mxu0 0.0
    %5696 = vmatprep.subr.mxu0 0.0
    %5697 = vmatpush1.msra.mxu0 0.0
    %5698 = vmatprep.subr.mxu0 0.0
    %5699 = vmatpush1.msra.mxu0 0.0
    %5700 = vmatprep.subr.mxu0 0.0
    %5701 = vmatpush1.msra.mxu0 0.0
    %5702 = vmatprep.subr.mxu0 0.0
    %5703 = vmatpush1.msra.mxu0 0.0
    %5704 = vmatprep.subr.mxu0 0.0
    %5705 = vmatpush1.msra.mxu0 0.0
    %5706 = vmatprep.subr.mxu0 0.0
    %5707 = vmatpush1.msra.mxu0 0.0
    %5708 = vmatprep.subr.mxu0 0.0
    %5709 = vmatpush1.msra.mxu0 0.0
    %5710 = vmatprep.subr.mxu0 0.0
    %5711 = vmatpush1.msra.mxu0 0.0
    %5712 = vmatprep.subr.mxu0 0.0
    %5713 = vmatpush1.msra.mxu0 0.0
    %5714 = vmatprep.subr.mxu0 0.0
    %5715 = vmatpush1.msra.mxu0 0.0
    %5716 = vmatprep.subr.mxu0 %v5682
    %5717 = vmatpush1.msra.mxu0 %v5680
    %5718 = vmatprep.subr.mxu0 0.0
    %5719 = vmatpush2.msra.mxu0 0.0
    %5720 = vmatprep.subr.mxu0 0.0
    %5721 = vmatpush2.msra.mxu0 0.0
    %5722 = vmatprep.subr.mxu0 0.0
    %5723 = vmatpush2.msra.mxu0 0.0
    %5724 = vmatprep.subr.mxu0 0.0
    %5725 = vmatpush2.msra.mxu0 0.0
    %5726 = vmatprep.subr.mxu0 0.0
    %5727 = vmatpush2.msra.mxu0 0.0
    %5728 = vmatprep.subr.mxu0 0.0
    %5729 = vmatpush2.msra.mxu0 0.0
    %5730 = vmatprep.subr.mxu0 0.0
    %5731 = vmatpush2.msra.mxu0 0.0
    %5732 = vmatprep.subr.mxu0 0.0
    %5733 = vmatpush2.msra.mxu0 0.0
    %5734 = vmatprep.subr.mxu0 0.0
    %5735 = vmatpush2.msra.mxu0 0.0
    %5736 = vmatprep.subr.mxu0 0.0
    %5737 = vmatpush2.msra.mxu0 0.0
    %5738 = vmatprep.subr.mxu0 0.0
    %5739 = vmatpush2.msra.mxu0 0.0
    %5740 = vmatprep.subr.mxu0 0.0
    %5741 = vmatpush2.msra.mxu0 0.0
    %5742 = vmatprep.subr.mxu0 0.0
    %5743 = vmatpush2.msra.mxu0 0.0
    %5744 = vmatprep.subr.mxu0 0.0
    %5745 = vmatpush2.msra.mxu0 0.0
    %5746 = vmatprep.subr.mxu0 0.0
    %5747 = vmatpush2.msra.mxu0 0.0
    %5748 = vmatprep.subr.mxu0 0.0
    %5749 = vmatpush2.msra.mxu0 0.0
    %5750 = vmatprep.mubr.f32.mxu0 0.0
    %5751 = vmatmul.mubr.f32.gmra.mxu0 %v5672
    %v5752 = vpop.f32.mrf.mxu0
    %v5753 = vadd.f32 0.0, %v5752
    %v5754 = vpop.f32.mrf.mxu0
    %v5755 = vadd.f32 0.0, %v5754
    %5756 = vmatprep.mubr.f32.mxu0 0.0
    %5757 = vmatmul.mubr.f32.gmra.mxu0 %v5675
    %v5758 = vpop.f32.mrf.mxu0
    %v5759 = vadd.f32 0.0, %v5758
    %v5760 = vpop.f32.mrf.mxu0
    %v5761 = vadd.f32 0.0, %v5760
    %5762 = vmatprep.mubr.f32.mxu0 0.0
    %5763 = vmatmul.mubr.f32.gmra.mxu0 %v5678
    %v5764 = vpop.f32.mrf.mxu0
    %v5765 = vadd.f32 0.0, %v5764
    %v5766 = vpop.f32.mrf.mxu0
    %v5767 = vadd.f32 0.0, %v5766
    %5768 = vdwg.mxu0
    %5769 = vmatprep.subr.mxu0 0.0
    %5770 = vmatpush1.msra.mxu0 0.0
    %5771 = vmatprep.subr.mxu0 0.0
    %5772 = vmatpush1.msra.mxu0 0.0
    %5773 = vmatprep.subr.mxu0 0.0
    %5774 = vmatpush1.msra.mxu0 0.0
    %5775 = vmatprep.subr.mxu0 0.0
    %5776 = vmatpush1.msra.mxu0 0.0
    %5777 = vmatprep.subr.mxu0 0.0
    %5778 = vmatpush1.msra.mxu0 0.0
    %5779 = vmatprep.subr.mxu0 0.0
    %5780 = vmatpush1.msra.mxu0 0.0
    %5781 = vmatprep.subr.mxu0 0.0
    %5782 = vmatpush1.msra.mxu0 0.0
    %5783 = vmatprep.subr.mxu0 0.0
    %5784 = vmatpush1.msra.mxu0 0.0
    %5785 = vmatprep.subr.mxu0 0.0
    %5786 = vmatpush1.msra.mxu0 0.0
    %5787 = vmatprep.subr.mxu0 0.0
    %5788 = vmatpush1.msra.mxu0 0.0
    %5789 = vmatprep.subr.mxu0 0.0
    %5790 = vmatpush1.msra.mxu0 0.0
    %5791 = vmatprep.subr.mxu0 0.0
    %5792 = vmatpush1.msra.mxu0 0.0
    %5793 = vmatprep.subr.mxu0 0.0
    %5794 = vmatpush1.msra.mxu0 0.0
    %5795 = vmatprep.subr.mxu0 0.0
    %5796 = vmatpush1.msra.mxu0 0.0
    %5797 = vmatprep.subr.mxu0 0.0
    %5798 = vmatpush1.msra.mxu0 0.0
    %5799 = vmatprep.subr.mxu0 0.0
    %5800 = vmatpush1.msra.mxu0 %v5684
    %5801 = vmatprep.subr.mxu0 0.0
    %5802 = vmatpush2.msra.mxu0 0.0
    %5803 = vmatprep.subr.mxu0 0.0
    %5804 = vmatpush2.msra.mxu0 0.0
    %5805 = vmatprep.subr.mxu0 0.0
    %5806 = vmatpush2.msra.mxu0 0.0
    %5807 = vmatprep.subr.mxu0 0.0
    %5808 = vmatpush2.msra.mxu0 0.0
    %5809 = vmatprep.subr.mxu0 0.0
    %5810 = vmatpush2.msra.mxu0 0.0
    %5811 = vmatprep.subr.mxu0 0.0
    %5812 = vmatpush2.msra.mxu0 0.0
    %5813 = vmatprep.subr.mxu0 0.0
    %5814 = vmatpush2.msra.mxu0 0.0
    %5815 = vmatprep.subr.mxu0 0.0
    %5816 = vmatpush2.msra.mxu0 0.0
    %5817 = vmatprep.subr.mxu0 0.0
    %5818 = vmatpush2.msra.mxu0 0.0
    %5819 = vmatprep.subr.mxu0 0.0
    %5820 = vmatpush2.msra.mxu0 0.0
    %5821 = vmatprep.subr.mxu0 0.0
    %5822 = vmatpush2.msra.mxu0 0.0
    %5823 = vmatprep.subr.mxu0 0.0
    %5824 = vmatpush2.msra.mxu0 0.0
    %5825 = vmatprep.subr.mxu0 0.0
    %5826 = vmatpush2.msra.mxu0 0.0
    %5827 = vmatprep.subr.mxu0 0.0
    %5828 = vmatpush2.msra.mxu0 0.0
    %5829 = vmatprep.subr.mxu0 0.0
    %5830 = vmatpush2.msra.mxu0 0.0
    %5831 = vmatprep.subr.mxu0 0.0
    %5832 = vmatpush2.msra.mxu0 0.0
    %5833 = vmatprep.mubr.f32.mxu0 0.0
    %5834 = vmatmul.mubr.f32.gmra.mxu0 %v5672
    %v5835 = vpop.f32.mrf.mxu0
    %v5836 = vadd.f32 0.0, %v5835
    %v5837 = vpop.f32.mrf.mxu0
    %5838 = vmatprep.mubr.f32.mxu0 0.0
    %5839 = vmatmul.mubr.f32.gmra.mxu0 %v5675
    %v5840 = vpop.f32.mrf.mxu0
    %v5841 = vadd.f32 0.0, %v5840
    %v5842 = vpop.f32.mrf.mxu0
    %5843 = vmatprep.mubr.f32.mxu0 0.0
    %5844 = vmatmul.mubr.f32.gmra.mxu0 %v5678
    %v5845 = vpop.f32.mrf.mxu0
    %v5846 = vadd.f32 0.0, %v5845
    %v5847 = vpop.f32.mrf.mxu0
    %5848 = vdwg.mxu0
    %v5849 = vadd.f32 %v5559, %v5753
    %v5850 = vadd.f32 %v5561, %v5755
    %v5851 = vadd.f32 %v5642, %v5836
    %v5852 = vadd.f32 %v5565, %v5759
    %v5853 = vadd.f32 %v5567, %v5761
    %v5854 = vadd.f32 %v5647, %v5841
    %v5855 = vadd.f32 %v5571, %v5765
    %v5856 = vadd.f32 %v5573, %v5767
    %v5857 = vadd.f32 %v5652, %v5846
    %v5858 = vld [vmem:[%s5279] sm:$0xff]
    %v5859 = vld [vmem:[%s5279 + $0x8] sm:$0xf]
    %v5860 = vld [vmem:[%s609] sm:$0xff]
    %v5861 = vld [vmem:[%s609 + $0x8] sm:$0xff]
    %v5862 = vld [vmem:[%s609 + $0x10] sm:$0xff]
    %v5865 = vcombine.high %v5858, %v5858
    %5866 = vrot.lane.b32.xlu0 %v5858, 110
    %v5867 = vpop.permute.xlu0 %5866
    %5868 = vrot.lane.b32.xlu0 %v5865, 110
    %v5869 = vpop.permute.xlu0 %5868
    %5870 = vrot.lane.b32.xlu0 %v5859, 110
    %v5871 = vpop.permute.xlu0 %5870
    %v5872 = vsel %vm622, %v5867, %v5869
    %v5873 = vsel %vm622, %v5869, %v5871
    %v5875 = vsel %vm44, %v5860, 0
    %v5878 = vsel %vm44, %v5861, 0
    %v5881 = vsel %vm44, %v5862, 0
    %v5883 = vsel %vm54, %v5872, 0
    %v5885 = vsel %vm54, %v5873, 0
    %v5887 = vsel %vm54, %v5871, 0
    %5889 = vmatprep.subr.mxu0 0.0
    %5890 = vmatpush1.msra.mxu0 0.0
    %5891 = vmatprep.subr.mxu0 0.0
    %5892 = vmatpush1.msra.mxu0 0.0
    %5893 = vmatprep.subr.mxu0 0.0
    %5894 = vmatpush1.msra.mxu0 0.0
    %5895 = vmatprep.subr.mxu0 0.0
    %5896 = vmatpush1.msra.mxu0 0.0
    %5897 = vmatprep.subr.mxu0 0.0
    %5898 = vmatpush1.msra.mxu0 0.0
    %5899 = vmatprep.subr.mxu0 0.0
    %5900 = vmatpush1.msra.mxu0 0.0
    %5901 = vmatprep.subr.mxu0 0.0
    %5902 = vmatpush1.msra.mxu0 0.0
    %5903 = vmatprep.subr.mxu0 0.0
    %5904 = vmatpush1.msra.mxu0 0.0
    %5905 = vmatprep.subr.mxu0 0.0
    %5906 = vmatpush1.msra.mxu0 0.0
    %5907 = vmatprep.subr.mxu0 0.0
    %5908 = vmatpush1.msra.mxu0 0.0
    %5909 = vmatprep.subr.mxu0 0.0
    %5910 = vmatpush1.msra.mxu0 0.0
    %5911 = vmatprep.subr.mxu0 0.0
    %5912 = vmatpush1.msra.mxu0 0.0
    %5913 = vmatprep.subr.mxu0 0.0
    %5914 = vmatpush1.msra.mxu0 0.0
    %5915 = vmatprep.subr.mxu0 0.0
    %5916 = vmatpush1.msra.mxu0 0.0
    %5917 = vmatprep.subr.mxu0 0.0
    %5918 = vmatpush1.msra.mxu0 0.0
    %5919 = vmatprep.subr.mxu0 %v5885
    %5920 = vmatpush1.msra.mxu0 %v5883
    %5921 = vmatprep.subr.mxu0 0.0
    %5922 = vmatpush2.msra.mxu0 0.0
    %5923 = vmatprep.subr.mxu0 0.0
    %5924 = vmatpush2.msra.mxu0 0.0
    %5925 = vmatprep.subr.mxu0 0.0
    %5926 = vmatpush2.msra.mxu0 0.0
    %5927 = vmatprep.subr.mxu0 0.0
    %5928 = vmatpush2.msra.mxu0 0.0
    %5929 = vmatprep.subr.mxu0 0.0
    %5930 = vmatpush2.msra.mxu0 0.0
    %5931 = vmatprep.subr.mxu0 0.0
    %5932 = vmatpush2.msra.mxu0 0.0
    %5933 = vmatprep.subr.mxu0 0.0
    %5934 = vmatpush2.msra.mxu0 0.0
    %5935 = vmatprep.subr.mxu0 0.0
    %5936 = vmatpush2.msra.mxu0 0.0
    %5937 = vmatprep.subr.mxu0 0.0
    %5938 = vmatpush2.msra.mxu0 0.0
    %5939 = vmatprep.subr.mxu0 0.0
    %5940 = vmatpush2.msra.mxu0 0.0
    %5941 = vmatprep.subr.mxu0 0.0
    %5942 = vmatpush2.msra.mxu0 0.0
    %5943 = vmatprep.subr.mxu0 0.0
    %5944 = vmatpush2.msra.mxu0 0.0
    %5945 = vmatprep.subr.mxu0 0.0
    %5946 = vmatpush2.msra.mxu0 0.0
    %5947 = vmatprep.subr.mxu0 0.0
    %5948 = vmatpush2.msra.mxu0 0.0
    %5949 = vmatprep.subr.mxu0 0.0
    %5950 = vmatpush2.msra.mxu0 0.0
    %5951 = vmatprep.subr.mxu0 0.0
    %5952 = vmatpush2.msra.mxu0 0.0
    %5953 = vmatprep.mubr.f32.mxu0 0.0
    %5954 = vmatmul.mubr.f32.gmra.mxu0 %v5875
    %v5955 = vpop.f32.mrf.mxu0
    %v5956 = vadd.f32 0.0, %v5955
    %v5957 = vpop.f32.mrf.mxu0
    %v5958 = vadd.f32 0.0, %v5957
    %5959 = vmatprep.mubr.f32.mxu0 0.0
    %5960 = vmatmul.mubr.f32.gmra.mxu0 %v5878
    %v5961 = vpop.f32.mrf.mxu0
    %v5962 = vadd.f32 0.0, %v5961
    %v5963 = vpop.f32.mrf.mxu0
    %v5964 = vadd.f32 0.0, %v5963
    %5965 = vmatprep.mubr.f32.mxu0 0.0
    %5966 = vmatmul.mubr.f32.gmra.mxu0 %v5881
    %v5967 = vpop.f32.mrf.mxu0
    %v5968 = vadd.f32 0.0, %v5967
    %v5969 = vpop.f32.mrf.mxu0
    %v5970 = vadd.f32 0.0, %v5969
    %5971 = vdwg.mxu0
    %5972 = vmatprep.subr.mxu0 0.0
    %5973 = vmatpush1.msra.mxu0 0.0
    %5974 = vmatprep.subr.mxu0 0.0
    %5975 = vmatpush1.msra.mxu0 0.0
    %5976 = vmatprep.subr.mxu0 0.0
    %5977 = vmatpush1.msra.mxu0 0.0
    %5978 = vmatprep.subr.mxu0 0.0
    %5979 = vmatpush1.msra.mxu0 0.0
    %5980 = vmatprep.subr.mxu0 0.0
    %5981 = vmatpush1.msra.mxu0 0.0
    %5982 = vmatprep.subr.mxu0 0.0
    %5983 = vmatpush1.msra.mxu0 0.0
    %5984 = vmatprep.subr.mxu0 0.0
    %5985 = vmatpush1.msra.mxu0 0.0
    %5986 = vmatprep.subr.mxu0 0.0
    %5987 = vmatpush1.msra.mxu0 0.0
    %5988 = vmatprep.subr.mxu0 0.0
    %5989 = vmatpush1.msra.mxu0 0.0
    %5990 = vmatprep.subr.mxu0 0.0
    %5991 = vmatpush1.msra.mxu0 0.0
    %5992 = vmatprep.subr.mxu0 0.0
    %5993 = vmatpush1.msra.mxu0 0.0
    %5994 = vmatprep.subr.mxu0 0.0
    %5995 = vmatpush1.msra.mxu0 0.0
    %5996 = vmatprep.subr.mxu0 0.0
    %5997 = vmatpush1.msra.mxu0 0.0
    %5998 = vmatprep.subr.mxu0 0.0
    %5999 = vmatpush1.msra.mxu0 0.0
    %6000 = vmatprep.subr.mxu0 0.0
    %6001 = vmatpush1.msra.mxu0 0.0
    %6002 = vmatprep.subr.mxu0 0.0
    %6003 = vmatpush1.msra.mxu0 %v5887
    %6004 = vmatprep.subr.mxu0 0.0
    %6005 = vmatpush2.msra.mxu0 0.0
    %6006 = vmatprep.subr.mxu0 0.0
    %6007 = vmatpush2.msra.mxu0 0.0
    %6008 = vmatprep.subr.mxu0 0.0
    %6009 = vmatpush2.msra.mxu0 0.0
    %6010 = vmatprep.subr.mxu0 0.0
    %6011 = vmatpush2.msra.mxu0 0.0
    %6012 = vmatprep.subr.mxu0 0.0
    %6013 = vmatpush2.msra.mxu0 0.0
    %6014 = vmatprep.subr.mxu0 0.0
    %6015 = vmatpush2.msra.mxu0 0.0
    %6016 = vmatprep.subr.mxu0 0.0
    %6017 = vmatpush2.msra.mxu0 0.0
    %6018 = vmatprep.subr.mxu0 0.0
    %6019 = vmatpush2.msra.mxu0 0.0
    %6020 = vmatprep.subr.mxu0 0.0
    %6021 = vmatpush2.msra.mxu0 0.0
    %6022 = vmatprep.subr.mxu0 0.0
    %6023 = vmatpush2.msra.mxu0 0.0
    %6024 = vmatprep.subr.mxu0 0.0
    %6025 = vmatpush2.msra.mxu0 0.0
    %6026 = vmatprep.subr.mxu0 0.0
    %6027 = vmatpush2.msra.mxu0 0.0
    %6028 = vmatprep.subr.mxu0 0.0
    %6029 = vmatpush2.msra.mxu0 0.0
    %6030 = vmatprep.subr.mxu0 0.0
    %6031 = vmatpush2.msra.mxu0 0.0
    %6032 = vmatprep.subr.mxu0 0.0
    %6033 = vmatpush2.msra.mxu0 0.0
    %6034 = vmatprep.subr.mxu0 0.0
    %6035 = vmatpush2.msra.mxu0 0.0
    %6036 = vmatprep.mubr.f32.mxu0 0.0
    %6037 = vmatmul.mubr.f32.gmra.mxu0 %v5875
    %v6038 = vpop.f32.mrf.mxu0
    %v6039 = vadd.f32 0.0, %v6038
    %v6040 = vpop.f32.mrf.mxu0
    %6041 = vmatprep.mubr.f32.mxu0 0.0
    %6042 = vmatmul.mubr.f32.gmra.mxu0 %v5878
    %v6043 = vpop.f32.mrf.mxu0
    %v6044 = vadd.f32 0.0, %v6043
    %v6045 = vpop.f32.mrf.mxu0
    %6046 = vmatprep.mubr.f32.mxu0 0.0
    %6047 = vmatmul.mubr.f32.gmra.mxu0 %v5881
    %v6048 = vpop.f32.mrf.mxu0
    %v6049 = vadd.f32 0.0, %v6048
    %v6050 = vpop.f32.mrf.mxu0
    %6051 = vdwg.mxu0
    %v6052 = vadd.f32 %v5849, %v5956
    %v6053 = vadd.f32 %v5850, %v5958
    %v6054 = vadd.f32 %v5851, %v6039
    %v6055 = vadd.f32 %v5852, %v5962
    %v6056 = vadd.f32 %v5853, %v5964
    %v6057 = vadd.f32 %v5854, %v6044
    %v6058 = vadd.f32 %v5855, %v5968
    %v6059 = vadd.f32 %v5856, %v5970
    %v6060 = vadd.f32 %v5857, %v6049
    %v6061 = vld [vmem:[%s5279] sm:$0xff]
    %v6062 = vld [vmem:[%s5279 + $0x8] sm:$0xf]
    %v6063 = vld [vmem:[%s814] sm:$0xff]
    %v6064 = vld [vmem:[%s814 + $0x8] sm:$0xff]
    %v6065 = vld [vmem:[%s814 + $0x10] sm:$0xff]
    %v6068 = vcombine.high %v6061, %v6061
    %6069 = vrot.lane.b32.xlu0 %v6061, 109
    %v6070 = vpop.permute.xlu0 %6069
    %6071 = vrot.lane.b32.xlu0 %v6068, 109
    %v6072 = vpop.permute.xlu0 %6071
    %6073 = vrot.lane.b32.xlu0 %v6062, 109
    %v6074 = vpop.permute.xlu0 %6073
    %v6075 = vsel %vm827, %v6070, %v6072
    %v6076 = vsel %vm827, %v6072, %v6074
    %v6078 = vsel %vm44, %v6063, 0
    %v6081 = vsel %vm44, %v6064, 0
    %v6084 = vsel %vm44, %v6065, 0
    %v6086 = vsel %vm54, %v6075, 0
    %v6088 = vsel %vm54, %v6076, 0
    %v6090 = vsel %vm54, %v6074, 0
    %6092 = vmatprep.subr.mxu0 0.0
    %6093 = vmatpush1.msra.mxu0 0.0
    %6094 = vmatprep.subr.mxu0 0.0
    %6095 = vmatpush1.msra.mxu0 0.0
    %6096 = vmatprep.subr.mxu0 0.0
    %6097 = vmatpush1.msra.mxu0 0.0
    %6098 = vmatprep.subr.mxu0 0.0
    %6099 = vmatpush1.msra.mxu0 0.0
    %6100 = vmatprep.subr.mxu0 0.0
    %6101 = vmatpush1.msra.mxu0 0.0
    %6102 = vmatprep.subr.mxu0 0.0
    %6103 = vmatpush1.msra.mxu0 0.0
    %6104 = vmatprep.subr.mxu0 0.0
    %6105 = vmatpush1.msra.mxu0 0.0
    %6106 = vmatprep.subr.mxu0 0.0
    %6107 = vmatpush1.msra.mxu0 0.0
    %6108 = vmatprep.subr.mxu0 0.0
    %6109 = vmatpush1.msra.mxu0 0.0
    %6110 = vmatprep.subr.mxu0 0.0
    %6111 = vmatpush1.msra.mxu0 0.0
    %6112 = vmatprep.subr.mxu0 0.0
    %6113 = vmatpush1.msra.mxu0 0.0
    %6114 = vmatprep.subr.mxu0 0.0
    %6115 = vmatpush1.msra.mxu0 0.0
    %6116 = vmatprep.subr.mxu0 0.0
    %6117 = vmatpush1.msra.mxu0 0.0
    %6118 = vmatprep.subr.mxu0 0.0
    %6119 = vmatpush1.msra.mxu0 0.0
    %6120 = vmatprep.subr.mxu0 0.0
    %6121 = vmatpush1.msra.mxu0 0.0
    %6122 = vmatprep.subr.mxu0 %v6088
    %6123 = vmatpush1.msra.mxu0 %v6086
    %6124 = vmatprep.subr.mxu0 0.0
    %6125 = vmatpush2.msra.mxu0 0.0
    %6126 = vmatprep.subr.mxu0 0.0
    %6127 = vmatpush2.msra.mxu0 0.0
    %6128 = vmatprep.subr.mxu0 0.0
    %6129 = vmatpush2.msra.mxu0 0.0
    %6130 = vmatprep.subr.mxu0 0.0
    %6131 = vmatpush2.msra.mxu0 0.0
    %6132 = vmatprep.subr.mxu0 0.0
    %6133 = vmatpush2.msra.mxu0 0.0
    %6134 = vmatprep.subr.mxu0 0.0
    %6135 = vmatpush2.msra.mxu0 0.0
    %6136 = vmatprep.subr.mxu0 0.0
    %6137 = vmatpush2.msra.mxu0 0.0
    %6138 = vmatprep.subr.mxu0 0.0
    %6139 = vmatpush2.msra.mxu0 0.0
    %6140 = vmatprep.subr.mxu0 0.0
    %6141 = vmatpush2.msra.mxu0 0.0
    %6142 = vmatprep.subr.mxu0 0.0
    %6143 = vmatpush2.msra.mxu0 0.0
    %6144 = vmatprep.subr.mxu0 0.0
    %6145 = vmatpush2.msra.mxu0 0.0
    %6146 = vmatprep.subr.mxu0 0.0
    %6147 = vmatpush2.msra.mxu0 0.0
    %6148 = vmatprep.subr.mxu0 0.0
    %6149 = vmatpush2.msra.mxu0 0.0
    %6150 = vmatprep.subr.mxu0 0.0
    %6151 = vmatpush2.msra.mxu0 0.0
    %6152 = vmatprep.subr.mxu0 0.0
    %6153 = vmatpush2.msra.mxu0 0.0
    %6154 = vmatprep.subr.mxu0 0.0
    %6155 = vmatpush2.msra.mxu0 0.0
    %6156 = vmatprep.mubr.f32.mxu0 0.0
    %6157 = vmatmul.mubr.f32.gmra.mxu0 %v6078
    %v6158 = vpop.f32.mrf.mxu0
    %v6159 = vadd.f32 0.0, %v6158
    %v6160 = vpop.f32.mrf.mxu0
    %v6161 = vadd.f32 0.0, %v6160
    %6162 = vmatprep.mubr.f32.mxu0 0.0
    %6163 = vmatmul.mubr.f32.gmra.mxu0 %v6081
    %v6164 = vpop.f32.mrf.mxu0
    %v6165 = vadd.f32 0.0, %v6164
    %v6166 = vpop.f32.mrf.mxu0
    %v6167 = vadd.f32 0.0, %v6166
    %6168 = vmatprep.mubr.f32.mxu0 0.0
    %6169 = vmatmul.mubr.f32.gmra.mxu0 %v6084
    %v6170 = vpop.f32.mrf.mxu0
    %v6171 = vadd.f32 0.0, %v6170
    %v6172 = vpop.f32.mrf.mxu0
    %v6173 = vadd.f32 0.0, %v6172
    %6174 = vdwg.mxu0
    %6175 = vmatprep.subr.mxu0 0.0
    %6176 = vmatpush1.msra.mxu0 0.0
    %6177 = vmatprep.subr.mxu0 0.0
    %6178 = vmatpush1.msra.mxu0 0.0
    %6179 = vmatprep.subr.mxu0 0.0
    %6180 = vmatpush1.msra.mxu0 0.0
    %6181 = vmatprep.subr.mxu0 0.0
    %6182 = vmatpush1.msra.mxu0 0.0
    %6183 = vmatprep.subr.mxu0 0.0
    %6184 = vmatpush1.msra.mxu0 0.0
    %6185 = vmatprep.subr.mxu0 0.0
    %6186 = vmatpush1.msra.mxu0 0.0
    %6187 = vmatprep.subr.mxu0 0.0
    %6188 = vmatpush1.msra.mxu0 0.0
    %6189 = vmatprep.subr.mxu0 0.0
    %6190 = vmatpush1.msra.mxu0 0.0
    %6191 = vmatprep.subr.mxu0 0.0
    %6192 = vmatpush1.msra.mxu0 0.0
    %6193 = vmatprep.subr.mxu0 0.0
    %6194 = vmatpush1.msra.mxu0 0.0
    %6195 = vmatprep.subr.mxu0 0.0
    %6196 = vmatpush1.msra.mxu0 0.0
    %6197 = vmatprep.subr.mxu0 0.0
    %6198 = vmatpush1.msra.mxu0 0.0
    %6199 = vmatprep.subr.mxu0 0.0
    %6200 = vmatpush1.msra.mxu0 0.0
    %6201 = vmatprep.subr.mxu0 0.0
    %6202 = vmatpush1.msra.mxu0 0.0
    %6203 = vmatprep.subr.mxu0 0.0
    %6204 = vmatpush1.msra.mxu0 0.0
    %6205 = vmatprep.subr.mxu0 0.0
    %6206 = vmatpush1.msra.mxu0 %v6090
    %6207 = vmatprep.subr.mxu0 0.0
    %6208 = vmatpush2.msra.mxu0 0.0
    %6209 = vmatprep.subr.mxu0 0.0
    %6210 = vmatpush2.msra.mxu0 0.0
    %6211 = vmatprep.subr.mxu0 0.0
    %6212 = vmatpush2.msra.mxu0 0.0
    %6213 = vmatprep.subr.mxu0 0.0
    %6214 = vmatpush2.msra.mxu0 0.0
    %6215 = vmatprep.subr.mxu0 0.0
    %6216 = vmatpush2.msra.mxu0 0.0
    %6217 = vmatprep.subr.mxu0 0.0
    %6218 = vmatpush2.msra.mxu0 0.0
    %6219 = vmatprep.subr.mxu0 0.0
    %6220 = vmatpush2.msra.mxu0 0.0
    %6221 = vmatprep.subr.mxu0 0.0
    %6222 = vmatpush2.msra.mxu0 0.0
    %6223 = vmatprep.subr.mxu0 0.0
    %6224 = vmatpush2.msra.mxu0 0.0
    %6225 = vmatprep.subr.mxu0 0.0
    %6226 = vmatpush2.msra.mxu0 0.0
    %6227 = vmatprep.subr.mxu0 0.0
    %6228 = vmatpush2.msra.mxu0 0.0
    %6229 = vmatprep.subr.mxu0 0.0
    %6230 = vmatpush2.msra.mxu0 0.0
    %6231 = vmatprep.subr.mxu0 0.0
    %6232 = vmatpush2.msra.mxu0 0.0
    %6233 = vmatprep.subr.mxu0 0.0
    %6234 = vmatpush2.msra.mxu0 0.0
    %6235 = vmatprep.subr.mxu0 0.0
    %6236 = vmatpush2.msra.mxu0 0.0
    %6237 = vmatprep.subr.mxu0 0.0
    %6238 = vmatpush2.msra.mxu0 0.0
    %6239 = vmatprep.mubr.f32.mxu0 0.0
    %6240 = vmatmul.mubr.f32.gmra.mxu0 %v6078
    %v6241 = vpop.f32.mrf.mxu0
    %v6242 = vadd.f32 0.0, %v6241
    %v6243 = vpop.f32.mrf.mxu0
    %6244 = vmatprep.mubr.f32.mxu0 0.0
    %6245 = vmatmul.mubr.f32.gmra.mxu0 %v6081
    %v6246 = vpop.f32.mrf.mxu0
    %v6247 = vadd.f32 0.0, %v6246
    %v6248 = vpop.f32.mrf.mxu0
    %6249 = vmatprep.mubr.f32.mxu0 0.0
    %6250 = vmatmul.mubr.f32.gmra.mxu0 %v6084
    %v6251 = vpop.f32.mrf.mxu0
    %v6252 = vadd.f32 0.0, %v6251
    %v6253 = vpop.f32.mrf.mxu0
    %6254 = vdwg.mxu0
    %v6255 = vadd.f32 %v6052, %v6159
    %v6256 = vadd.f32 %v6053, %v6161
    %v6257 = vadd.f32 %v6054, %v6242
    %v6258 = vadd.f32 %v6055, %v6165
    %v6259 = vadd.f32 %v6056, %v6167
    %v6260 = vadd.f32 %v6057, %v6247
    %v6261 = vadd.f32 %v6058, %v6171
    %v6262 = vadd.f32 %v6059, %v6173
    %v6263 = vadd.f32 %v6060, %v6252
    %v6264 = vld [vmem:[%s5279] sm:$0xff]
    %v6265 = vld [vmem:[%s5279 + $0x8] sm:$0xf]
    %v6266 = vld [vmem:[%s1019] sm:$0xff]
    %v6267 = vld [vmem:[%s1019 + $0x8] sm:$0xff]
    %v6268 = vld [vmem:[%s1019 + $0x10] sm:$0xff]
    %v6271 = vcombine.high %v6264, %v6264
    %6272 = vrot.lane.b32.xlu0 %v6264, 108
    %v6273 = vpop.permute.xlu0 %6272
    %6274 = vrot.lane.b32.xlu0 %v6271, 108
    %v6275 = vpop.permute.xlu0 %6274
    %6276 = vrot.lane.b32.xlu0 %v6265, 108
    %v6277 = vpop.permute.xlu0 %6276
    %v6278 = vsel %vm1032, %v6273, %v6275
    %v6279 = vsel %vm1032, %v6275, %v6277
    %v6281 = vsel %vm44, %v6266, 0
    %v6284 = vsel %vm44, %v6267, 0
    %v6287 = vsel %vm44, %v6268, 0
    %v6289 = vsel %vm54, %v6278, 0
    %v6291 = vsel %vm54, %v6279, 0
    %v6293 = vsel %vm54, %v6277, 0
    %6295 = vmatprep.subr.mxu0 0.0
    %6296 = vmatpush1.msra.mxu0 0.0
    %6297 = vmatprep.subr.mxu0 0.0
    %6298 = vmatpush1.msra.mxu0 0.0
    %6299 = vmatprep.subr.mxu0 0.0
    %6300 = vmatpush1.msra.mxu0 0.0
    %6301 = vmatprep.subr.mxu0 0.0
    %6302 = vmatpush1.msra.mxu0 0.0
    %6303 = vmatprep.subr.mxu0 0.0
    %6304 = vmatpush1.msra.mxu0 0.0
    %6305 = vmatprep.subr.mxu0 0.0
    %6306 = vmatpush1.msra.mxu0 0.0
    %6307 = vmatprep.subr.mxu0 0.0
    %6308 = vmatpush1.msra.mxu0 0.0
    %6309 = vmatprep.subr.mxu0 0.0
    %6310 = vmatpush1.msra.mxu0 0.0
    %6311 = vmatprep.subr.mxu0 0.0
    %6312 = vmatpush1.msra.mxu0 0.0
    %6313 = vmatprep.subr.mxu0 0.0
    %6314 = vmatpush1.msra.mxu0 0.0
    %6315 = vmatprep.subr.mxu0 0.0
    %6316 = vmatpush1.msra.mxu0 0.0
    %6317 = vmatprep.subr.mxu0 0.0
    %6318 = vmatpush1.msra.mxu0 0.0
    %6319 = vmatprep.subr.mxu0 0.0
    %6320 = vmatpush1.msra.mxu0 0.0
    %6321 = vmatprep.subr.mxu0 0.0
    %6322 = vmatpush1.msra.mxu0 0.0
    %6323 = vmatprep.subr.mxu0 0.0
    %6324 = vmatpush1.msra.mxu0 0.0
    %6325 = vmatprep.subr.mxu0 %v6291
    %6326 = vmatpush1.msra.mxu0 %v6289
    %6327 = vmatprep.subr.mxu0 0.0
    %6328 = vmatpush2.msra.mxu0 0.0
    %6329 = vmatprep.subr.mxu0 0.0
    %6330 = vmatpush2.msra.mxu0 0.0
    %6331 = vmatprep.subr.mxu0 0.0
    %6332 = vmatpush2.msra.mxu0 0.0
    %6333 = vmatprep.subr.mxu0 0.0
    %6334 = vmatpush2.msra.mxu0 0.0
    %6335 = vmatprep.subr.mxu0 0.0
    %6336 = vmatpush2.msra.mxu0 0.0
    %6337 = vmatprep.subr.mxu0 0.0
    %6338 = vmatpush2.msra.mxu0 0.0
    %6339 = vmatprep.subr.mxu0 0.0
    %6340 = vmatpush2.msra.mxu0 0.0
    %6341 = vmatprep.subr.mxu0 0.0
    %6342 = vmatpush2.msra.mxu0 0.0
    %6343 = vmatprep.subr.mxu0 0.0
    %6344 = vmatpush2.msra.mxu0 0.0
    %6345 = vmatprep.subr.mxu0 0.0
    %6346 = vmatpush2.msra.mxu0 0.0
    %6347 = vmatprep.subr.mxu0 0.0
    %6348 = vmatpush2.msra.mxu0 0.0
    %6349 = vmatprep.subr.mxu0 0.0
    %6350 = vmatpush2.msra.mxu0 0.0
    %6351 = vmatprep.subr.mxu0 0.0
    %6352 = vmatpush2.msra.mxu0 0.0
    %6353 = vmatprep.subr.mxu0 0.0
    %6354 = vmatpush2.msra.mxu0 0.0
    %6355 = vmatprep.subr.mxu0 0.0
    %6356 = vmatpush2.msra.mxu0 0.0
    %6357 = vmatprep.subr.mxu0 0.0
    %6358 = vmatpush2.msra.mxu0 0.0
    %6359 = vmatprep.mubr.f32.mxu0 0.0
    %6360 = vmatmul.mubr.f32.gmra.mxu0 %v6281
    %v6361 = vpop.f32.mrf.mxu0
    %v6362 = vadd.f32 0.0, %v6361
    %v6363 = vpop.f32.mrf.mxu0
    %v6364 = vadd.f32 0.0, %v6363
    %6365 = vmatprep.mubr.f32.mxu0 0.0
    %6366 = vmatmul.mubr.f32.gmra.mxu0 %v6284
    %v6367 = vpop.f32.mrf.mxu0
    %v6368 = vadd.f32 0.0, %v6367
    %v6369 = vpop.f32.mrf.mxu0
    %v6370 = vadd.f32 0.0, %v6369
    %6371 = vmatprep.mubr.f32.mxu0 0.0
    %6372 = vmatmul.mubr.f32.gmra.mxu0 %v6287
    %v6373 = vpop.f32.mrf.mxu0
    %v6374 = vadd.f32 0.0, %v6373
    %v6375 = vpop.f32.mrf.mxu0
    %v6376 = vadd.f32 0.0, %v6375
    %6377 = vdwg.mxu0
    %6378 = vmatprep.subr.mxu0 0.0
    %6379 = vmatpush1.msra.mxu0 0.0
    %6380 = vmatprep.subr.mxu0 0.0
    %6381 = vmatpush1.msra.mxu0 0.0
    %6382 = vmatprep.subr.mxu0 0.0
    %6383 = vmatpush1.msra.mxu0 0.0
    %6384 = vmatprep.subr.mxu0 0.0
    %6385 = vmatpush1.msra.mxu0 0.0
    %6386 = vmatprep.subr.mxu0 0.0
    %6387 = vmatpush1.msra.mxu0 0.0
    %6388 = vmatprep.subr.mxu0 0.0
    %6389 = vmatpush1.msra.mxu0 0.0
    %6390 = vmatprep.subr.mxu0 0.0
    %6391 = vmatpush1.msra.mxu0 0.0
    %6392 = vmatprep.subr.mxu0 0.0
    %6393 = vmatpush1.msra.mxu0 0.0
    %6394 = vmatprep.subr.mxu0 0.0
    %6395 = vmatpush1.msra.mxu0 0.0
    %6396 = vmatprep.subr.mxu0 0.0
    %6397 = vmatpush1.msra.mxu0 0.0
    %6398 = vmatprep.subr.mxu0 0.0
    %6399 = vmatpush1.msra.mxu0 0.0
    %6400 = vmatprep.subr.mxu0 0.0
    %6401 = vmatpush1.msra.mxu0 0.0
    %6402 = vmatprep.subr.mxu0 0.0
    %6403 = vmatpush1.msra.mxu0 0.0
    %6404 = vmatprep.subr.mxu0 0.0
    %6405 = vmatpush1.msra.mxu0 0.0
    %6406 = vmatprep.subr.mxu0 0.0
    %6407 = vmatpush1.msra.mxu0 0.0
    %6408 = vmatprep.subr.mxu0 0.0
    %6409 = vmatpush1.msra.mxu0 %v6293
    %6410 = vmatprep.subr.mxu0 0.0
    %6411 = vmatpush2.msra.mxu0 0.0
    %6412 = vmatprep.subr.mxu0 0.0
    %6413 = vmatpush2.msra.mxu0 0.0
    %6414 = vmatprep.subr.mxu0 0.0
    %6415 = vmatpush2.msra.mxu0 0.0
    %6416 = vmatprep.subr.mxu0 0.0
    %6417 = vmatpush2.msra.mxu0 0.0
    %6418 = vmatprep.subr.mxu0 0.0
    %6419 = vmatpush2.msra.mxu0 0.0
    %6420 = vmatprep.subr.mxu0 0.0
    %6421 = vmatpush2.msra.mxu0 0.0
    %6422 = vmatprep.subr.mxu0 0.0
    %6423 = vmatpush2.msra.mxu0 0.0
    %6424 = vmatprep.subr.mxu0 0.0
    %6425 = vmatpush2.msra.mxu0 0.0
    %6426 = vmatprep.subr.mxu0 0.0
    %6427 = vmatpush2.msra.mxu0 0.0
    %6428 = vmatprep.subr.mxu0 0.0
    %6429 = vmatpush2.msra.mxu0 0.0
    %6430 = vmatprep.subr.mxu0 0.0
    %6431 = vmatpush2.msra.mxu0 0.0
    %6432 = vmatprep.subr.mxu0 0.0
    %6433 = vmatpush2.msra.mxu0 0.0
    %6434 = vmatprep.subr.mxu0 0.0
    %6435 = vmatpush2.msra.mxu0 0.0
    %6436 = vmatprep.subr.mxu0 0.0
    %6437 = vmatpush2.msra.mxu0 0.0
    %6438 = vmatprep.subr.mxu0 0.0
    %6439 = vmatpush2.msra.mxu0 0.0
    %6440 = vmatprep.subr.mxu0 0.0
    %6441 = vmatpush2.msra.mxu0 0.0
    %6442 = vmatprep.mubr.f32.mxu0 0.0
    %6443 = vmatmul.mubr.f32.gmra.mxu0 %v6281
    %v6444 = vpop.f32.mrf.mxu0
    %v6445 = vadd.f32 0.0, %v6444
    %v6446 = vpop.f32.mrf.mxu0
    %6447 = vmatprep.mubr.f32.mxu0 0.0
    %6448 = vmatmul.mubr.f32.gmra.mxu0 %v6284
    %v6449 = vpop.f32.mrf.mxu0
    %v6450 = vadd.f32 0.0, %v6449
    %v6451 = vpop.f32.mrf.mxu0
    %6452 = vmatprep.mubr.f32.mxu0 0.0
    %6453 = vmatmul.mubr.f32.gmra.mxu0 %v6287
    %v6454 = vpop.f32.mrf.mxu0
    %v6455 = vadd.f32 0.0, %v6454
    %v6456 = vpop.f32.mrf.mxu0
    %6457 = vdwg.mxu0
    %v6458 = vadd.f32 %v6255, %v6362
    %v6459 = vadd.f32 %v6256, %v6364
    %v6460 = vadd.f32 %v6257, %v6445
    %v6461 = vadd.f32 %v6258, %v6368
    %v6462 = vadd.f32 %v6259, %v6370
    %v6463 = vadd.f32 %v6260, %v6450
    %v6464 = vadd.f32 %v6261, %v6374
    %v6465 = vadd.f32 %v6262, %v6376
    %v6466 = vadd.f32 %v6263, %v6455
    %v6467 = vld [vmem:[%s5279] sm:$0xff]
    %v6468 = vld [vmem:[%s5279 + $0x8] sm:$0xf]
    %v6469 = vld [vmem:[%s1224] sm:$0xff]
    %v6470 = vld [vmem:[%s1224 + $0x8] sm:$0xff]
    %v6471 = vld [vmem:[%s1224 + $0x10] sm:$0xff]
    %v6474 = vcombine.high %v6467, %v6467
    %6475 = vrot.lane.b32.xlu0 %v6467, 92
    %v6476 = vpop.permute.xlu0 %6475
    %6477 = vrot.lane.b32.xlu0 %v6474, 92
    %v6478 = vpop.permute.xlu0 %6477
    %6479 = vrot.lane.b32.xlu0 %v6468, 92
    %v6480 = vpop.permute.xlu0 %6479
    %v6481 = vsel %vm1237, %v6476, %v6478
    %v6482 = vsel %vm1237, %v6478, %v6480
    %v6484 = vsel %vm44, %v6469, 0
    %v6487 = vsel %vm44, %v6470, 0
    %v6490 = vsel %vm44, %v6471, 0
    %v6492 = vsel %vm54, %v6481, 0
    %v6494 = vsel %vm54, %v6482, 0
    %v6496 = vsel %vm54, %v6480, 0
    %6498 = vmatprep.subr.mxu0 0.0
    %6499 = vmatpush1.msra.mxu0 0.0
    %6500 = vmatprep.subr.mxu0 0.0
    %6501 = vmatpush1.msra.mxu0 0.0
    %6502 = vmatprep.subr.mxu0 0.0
    %6503 = vmatpush1.msra.mxu0 0.0
    %6504 = vmatprep.subr.mxu0 0.0
    %6505 = vmatpush1.msra.mxu0 0.0
    %6506 = vmatprep.subr.mxu0 0.0
    %6507 = vmatpush1.msra.mxu0 0.0
    %6508 = vmatprep.subr.mxu0 0.0
    %6509 = vmatpush1.msra.mxu0 0.0
    %6510 = vmatprep.subr.mxu0 0.0
    %6511 = vmatpush1.msra.mxu0 0.0
    %6512 = vmatprep.subr.mxu0 0.0
    %6513 = vmatpush1.msra.mxu0 0.0
    %6514 = vmatprep.subr.mxu0 0.0
    %6515 = vmatpush1.msra.mxu0 0.0
    %6516 = vmatprep.subr.mxu0 0.0
    %6517 = vmatpush1.msra.mxu0 0.0
    %6518 = vmatprep.subr.mxu0 0.0
    %6519 = vmatpush1.msra.mxu0 0.0
    %6520 = vmatprep.subr.mxu0 0.0
    %6521 = vmatpush1.msra.mxu0 0.0
    %6522 = vmatprep.subr.mxu0 0.0
    %6523 = vmatpush1.msra.mxu0 0.0
    %6524 = vmatprep.subr.mxu0 0.0
    %6525 = vmatpush1.msra.mxu0 0.0
    %6526 = vmatprep.subr.mxu0 0.0
    %6527 = vmatpush1.msra.mxu0 0.0
    %6528 = vmatprep.subr.mxu0 %v6494
    %6529 = vmatpush1.msra.mxu0 %v6492
    %6530 = vmatprep.subr.mxu0 0.0
    %6531 = vmatpush2.msra.mxu0 0.0
    %6532 = vmatprep.subr.mxu0 0.0
    %6533 = vmatpush2.msra.mxu0 0.0
    %6534 = vmatprep.subr.mxu0 0.0
    %6535 = vmatpush2.msra.mxu0 0.0
    %6536 = vmatprep.subr.mxu0 0.0
    %6537 = vmatpush2.msra.mxu0 0.0
    %6538 = vmatprep.subr.mxu0 0.0
    %6539 = vmatpush2.msra.mxu0 0.0
    %6540 = vmatprep.subr.mxu0 0.0
    %6541 = vmatpush2.msra.mxu0 0.0
    %6542 = vmatprep.subr.mxu0 0.0
    %6543 = vmatpush2.msra.mxu0 0.0
    %6544 = vmatprep.subr.mxu0 0.0
    %6545 = vmatpush2.msra.mxu0 0.0
    %6546 = vmatprep.subr.mxu0 0.0
    %6547 = vmatpush2.msra.mxu0 0.0
    %6548 = vmatprep.subr.mxu0 0.0
    %6549 = vmatpush2.msra.mxu0 0.0
    %6550 = vmatprep.subr.mxu0 0.0
    %6551 = vmatpush2.msra.mxu0 0.0
    %6552 = vmatprep.subr.mxu0 0.0
    %6553 = vmatpush2.msra.mxu0 0.0
    %6554 = vmatprep.subr.mxu0 0.0
    %6555 = vmatpush2.msra.mxu0 0.0
    %6556 = vmatprep.subr.mxu0 0.0
    %6557 = vmatpush2.msra.mxu0 0.0
    %6558 = vmatprep.subr.mxu0 0.0
    %6559 = vmatpush2.msra.mxu0 0.0
    %6560 = vmatprep.subr.mxu0 0.0
    %6561 = vmatpush2.msra.mxu0 0.0
    %6562 = vmatprep.mubr.f32.mxu0 0.0
    %6563 = vmatmul.mubr.f32.gmra.mxu0 %v6484
    %v6564 = vpop.f32.mrf.mxu0
    %v6565 = vadd.f32 0.0, %v6564
    %v6566 = vpop.f32.mrf.mxu0
    %v6567 = vadd.f32 0.0, %v6566
    %6568 = vmatprep.mubr.f32.mxu0 0.0
    %6569 = vmatmul.mubr.f32.gmra.mxu0 %v6487
    %v6570 = vpop.f32.mrf.mxu0
    %v6571 = vadd.f32 0.0, %v6570
    %v6572 = vpop.f32.mrf.mxu0
    %v6573 = vadd.f32 0.0, %v6572
    %6574 = vmatprep.mubr.f32.mxu0 0.0
    %6575 = vmatmul.mubr.f32.gmra.mxu0 %v6490
    %v6576 = vpop.f32.mrf.mxu0
    %v6577 = vadd.f32 0.0, %v6576
    %v6578 = vpop.f32.mrf.mxu0
    %v6579 = vadd.f32 0.0, %v6578
    %6580 = vdwg.mxu0
    %6581 = vmatprep.subr.mxu0 0.0
    %6582 = vmatpush1.msra.mxu0 0.0
    %6583 = vmatprep.subr.mxu0 0.0
    %6584 = vmatpush1.msra.mxu0 0.0
    %6585 = vmatprep.subr.mxu0 0.0
    %6586 = vmatpush1.msra.mxu0 0.0
    %6587 = vmatprep.subr.mxu0 0.0
    %6588 = vmatpush1.msra.mxu0 0.0
    %6589 = vmatprep.subr.mxu0 0.0
    %6590 = vmatpush1.msra.mxu0 0.0
    %6591 = vmatprep.subr.mxu0 0.0
    %6592 = vmatpush1.msra.mxu0 0.0
    %6593 = vmatprep.subr.mxu0 0.0
    %6594 = vmatpush1.msra.mxu0 0.0
    %6595 = vmatprep.subr.mxu0 0.0
    %6596 = vmatpush1.msra.mxu0 0.0
    %6597 = vmatprep.subr.mxu0 0.0
    %6598 = vmatpush1.msra.mxu0 0.0
    %6599 = vmatprep.subr.mxu0 0.0
    %6600 = vmatpush1.msra.mxu0 0.0
    %6601 = vmatprep.subr.mxu0 0.0
    %6602 = vmatpush1.msra.mxu0 0.0
    %6603 = vmatprep.subr.mxu0 0.0
    %6604 = vmatpush1.msra.mxu0 0.0
    %6605 = vmatprep.subr.mxu0 0.0
    %6606 = vmatpush1.msra.mxu0 0.0
    %6607 = vmatprep.subr.mxu0 0.0
    %6608 = vmatpush1.msra.mxu0 0.0
    %6609 = vmatprep.subr.mxu0 0.0
    %6610 = vmatpush1.msra.mxu0 0.0
    %6611 = vmatprep.subr.mxu0 0.0
    %6612 = vmatpush1.msra.mxu0 %v6496
    %6613 = vmatprep.subr.mxu0 0.0
    %6614 = vmatpush2.msra.mxu0 0.0
    %6615 = vmatprep.subr.mxu0 0.0
    %6616 = vmatpush2.msra.mxu0 0.0
    %6617 = vmatprep.subr.mxu0 0.0
    %6618 = vmatpush2.msra.mxu0 0.0
    %6619 = vmatprep.subr.mxu0 0.0
    %6620 = vmatpush2.msra.mxu0 0.0
    %6621 = vmatprep.subr.mxu0 0.0
    %6622 = vmatpush2.msra.mxu0 0.0
    %6623 = vmatprep.subr.mxu0 0.0
    %6624 = vmatpush2.msra.mxu0 0.0
    %6625 = vmatprep.subr.mxu0 0.0
    %6626 = vmatpush2.msra.mxu0 0.0
    %6627 = vmatprep.subr.mxu0 0.0
    %6628 = vmatpush2.msra.mxu0 0.0
    %6629 = vmatprep.subr.mxu0 0.0
    %6630 = vmatpush2.msra.mxu0 0.0
    %6631 = vmatprep.subr.mxu0 0.0
    %6632 = vmatpush2.msra.mxu0 0.0
    %6633 = vmatprep.subr.mxu0 0.0
    %6634 = vmatpush2.msra.mxu0 0.0
    %6635 = vmatprep.subr.mxu0 0.0
    %6636 = vmatpush2.msra.mxu0 0.0
    %6637 = vmatprep.subr.mxu0 0.0
    %6638 = vmatpush2.msra.mxu0 0.0
    %6639 = vmatprep.subr.mxu0 0.0
    %6640 = vmatpush2.msra.mxu0 0.0
    %6641 = vmatprep.subr.mxu0 0.0
    %6642 = vmatpush2.msra.mxu0 0.0
    %6643 = vmatprep.subr.mxu0 0.0
    %6644 = vmatpush2.msra.mxu0 0.0
    %6645 = vmatprep.mubr.f32.mxu0 0.0
    %6646 = vmatmul.mubr.f32.gmra.mxu0 %v6484
    %v6647 = vpop.f32.mrf.mxu0
    %v6648 = vadd.f32 0.0, %v6647
    %v6649 = vpop.f32.mrf.mxu0
    %6650 = vmatprep.mubr.f32.mxu0 0.0
    %6651 = vmatmul.mubr.f32.gmra.mxu0 %v6487
    %v6652 = vpop.f32.mrf.mxu0
    %v6653 = vadd.f32 0.0, %v6652
    %v6654 = vpop.f32.mrf.mxu0
    %6655 = vmatprep.mubr.f32.mxu0 0.0
    %6656 = vmatmul.mubr.f32.gmra.mxu0 %v6490
    %v6657 = vpop.f32.mrf.mxu0
    %v6658 = vadd.f32 0.0, %v6657
    %v6659 = vpop.f32.mrf.mxu0
    %6660 = vdwg.mxu0
    %v6661 = vadd.f32 %v6458, %v6565
    %v6662 = vadd.f32 %v6459, %v6567
    %v6663 = vadd.f32 %v6460, %v6648
    %v6664 = vadd.f32 %v6461, %v6571
    %v6665 = vadd.f32 %v6462, %v6573
    %v6666 = vadd.f32 %v6463, %v6653
    %v6667 = vadd.f32 %v6464, %v6577
    %v6668 = vadd.f32 %v6465, %v6579
    %v6669 = vadd.f32 %v6466, %v6658
    %v6670 = vld [vmem:[%s5279] sm:$0xff]
    %v6671 = vld [vmem:[%s5279 + $0x8] sm:$0xf]
    %v6672 = vld [vmem:[%s1429] sm:$0xff]
    %v6673 = vld [vmem:[%s1429 + $0x8] sm:$0xff]
    %v6674 = vld [vmem:[%s1429 + $0x10] sm:$0xff]
    %v6677 = vcombine.high %v6670, %v6670
    %6678 = vrot.lane.b32.xlu0 %v6670, 91
    %v6679 = vpop.permute.xlu0 %6678
    %6680 = vrot.lane.b32.xlu0 %v6677, 91
    %v6681 = vpop.permute.xlu0 %6680
    %6682 = vrot.lane.b32.xlu0 %v6671, 91
    %v6683 = vpop.permute.xlu0 %6682
    %v6684 = vsel %vm1442, %v6679, %v6681
    %v6685 = vsel %vm1442, %v6681, %v6683
    %v6687 = vsel %vm44, %v6672, 0
    %v6690 = vsel %vm44, %v6673, 0
    %v6693 = vsel %vm44, %v6674, 0
    %v6695 = vsel %vm54, %v6684, 0
    %v6697 = vsel %vm54, %v6685, 0
    %v6699 = vsel %vm54, %v6683, 0
    %6701 = vmatprep.subr.mxu0 0.0
    %6702 = vmatpush1.msra.mxu0 0.0
    %6703 = vmatprep.subr.mxu0 0.0
    %6704 = vmatpush1.msra.mxu0 0.0
    %6705 = vmatprep.subr.mxu0 0.0
    %6706 = vmatpush1.msra.mxu0 0.0
    %6707 = vmatprep.subr.mxu0 0.0
    %6708 = vmatpush1.msra.mxu0 0.0
    %6709 = vmatprep.subr.mxu0 0.0
    %6710 = vmatpush1.msra.mxu0 0.0
    %6711 = vmatprep.subr.mxu0 0.0
    %6712 = vmatpush1.msra.mxu0 0.0
    %6713 = vmatprep.subr.mxu0 0.0
    %6714 = vmatpush1.msra.mxu0 0.0
    %6715 = vmatprep.subr.mxu0 0.0
    %6716 = vmatpush1.msra.mxu0 0.0
    %6717 = vmatprep.subr.mxu0 0.0
    %6718 = vmatpush1.msra.mxu0 0.0
    %6719 = vmatprep.subr.mxu0 0.0
    %6720 = vmatpush1.msra.mxu0 0.0
    %6721 = vmatprep.subr.mxu0 0.0
    %6722 = vmatpush1.msra.mxu0 0.0
    %6723 = vmatprep.subr.mxu0 0.0
    %6724 = vmatpush1.msra.mxu0 0.0
    %6725 = vmatprep.subr.mxu0 0.0
    %6726 = vmatpush1.msra.mxu0 0.0
    %6727 = vmatprep.subr.mxu0 0.0
    %6728 = vmatpush1.msra.mxu0 0.0
    %6729 = vmatprep.subr.mxu0 0.0
    %6730 = vmatpush1.msra.mxu0 0.0
    %6731 = vmatprep.subr.mxu0 %v6697
    %6732 = vmatpush1.msra.mxu0 %v6695
    %6733 = vmatprep.subr.mxu0 0.0
    %6734 = vmatpush2.msra.mxu0 0.0
    %6735 = vmatprep.subr.mxu0 0.0
    %6736 = vmatpush2.msra.mxu0 0.0
    %6737 = vmatprep.subr.mxu0 0.0
    %6738 = vmatpush2.msra.mxu0 0.0
    %6739 = vmatprep.subr.mxu0 0.0
    %6740 = vmatpush2.msra.mxu0 0.0
    %6741 = vmatprep.subr.mxu0 0.0
    %6742 = vmatpush2.msra.mxu0 0.0
    %6743 = vmatprep.subr.mxu0 0.0
    %6744 = vmatpush2.msra.mxu0 0.0
    %6745 = vmatprep.subr.mxu0 0.0
    %6746 = vmatpush2.msra.mxu0 0.0
    %6747 = vmatprep.subr.mxu0 0.0
    %6748 = vmatpush2.msra.mxu0 0.0
    %6749 = vmatprep.subr.mxu0 0.0
    %6750 = vmatpush2.msra.mxu0 0.0
    %6751 = vmatprep.subr.mxu0 0.0
    %6752 = vmatpush2.msra.mxu0 0.0
    %6753 = vmatprep.subr.mxu0 0.0
    %6754 = vmatpush2.msra.mxu0 0.0
    %6755 = vmatprep.subr.mxu0 0.0
    %6756 = vmatpush2.msra.mxu0 0.0
    %6757 = vmatprep.subr.mxu0 0.0
    %6758 = vmatpush2.msra.mxu0 0.0
    %6759 = vmatprep.subr.mxu0 0.0
    %6760 = vmatpush2.msra.mxu0 0.0
    %6761 = vmatprep.subr.mxu0 0.0
    %6762 = vmatpush2.msra.mxu0 0.0
    %6763 = vmatprep.subr.mxu0 0.0
    %6764 = vmatpush2.msra.mxu0 0.0
    %6765 = vmatprep.mubr.f32.mxu0 0.0
    %6766 = vmatmul.mubr.f32.gmra.mxu0 %v6687
    %v6767 = vpop.f32.mrf.mxu0
    %v6768 = vadd.f32 0.0, %v6767
    %v6769 = vpop.f32.mrf.mxu0
    %v6770 = vadd.f32 0.0, %v6769
    %6771 = vmatprep.mubr.f32.mxu0 0.0
    %6772 = vmatmul.mubr.f32.gmra.mxu0 %v6690
    %v6773 = vpop.f32.mrf.mxu0
    %v6774 = vadd.f32 0.0, %v6773
    %v6775 = vpop.f32.mrf.mxu0
    %v6776 = vadd.f32 0.0, %v6775
    %6777 = vmatprep.mubr.f32.mxu0 0.0
    %6778 = vmatmul.mubr.f32.gmra.mxu0 %v6693
    %v6779 = vpop.f32.mrf.mxu0
    %v6780 = vadd.f32 0.0, %v6779
    %v6781 = vpop.f32.mrf.mxu0
    %v6782 = vadd.f32 0.0, %v6781
    %6783 = vdwg.mxu0
    %6784 = vmatprep.subr.mxu0 0.0
    %6785 = vmatpush1.msra.mxu0 0.0
    %6786 = vmatprep.subr.mxu0 0.0
    %6787 = vmatpush1.msra.mxu0 0.0
    %6788 = vmatprep.subr.mxu0 0.0
    %6789 = vmatpush1.msra.mxu0 0.0
    %6790 = vmatprep.subr.mxu0 0.0
    %6791 = vmatpush1.msra.mxu0 0.0
    %6792 = vmatprep.subr.mxu0 0.0
    %6793 = vmatpush1.msra.mxu0 0.0
    %6794 = vmatprep.subr.mxu0 0.0
    %6795 = vmatpush1.msra.mxu0 0.0
    %6796 = vmatprep.subr.mxu0 0.0
    %6797 = vmatpush1.msra.mxu0 0.0
    %6798 = vmatprep.subr.mxu0 0.0
    %6799 = vmatpush1.msra.mxu0 0.0
    %6800 = vmatprep.subr.mxu0 0.0
    %6801 = vmatpush1.msra.mxu0 0.0
    %6802 = vmatprep.subr.mxu0 0.0
    %6803 = vmatpush1.msra.mxu0 0.0
    %6804 = vmatprep.subr.mxu0 0.0
    %6805 = vmatpush1.msra.mxu0 0.0
    %6806 = vmatprep.subr.mxu0 0.0
    %6807 = vmatpush1.msra.mxu0 0.0
    %6808 = vmatprep.subr.mxu0 0.0
    %6809 = vmatpush1.msra.mxu0 0.0
    %6810 = vmatprep.subr.mxu0 0.0
    %6811 = vmatpush1.msra.mxu0 0.0
    %6812 = vmatprep.subr.mxu0 0.0
    %6813 = vmatpush1.msra.mxu0 0.0
    %6814 = vmatprep.subr.mxu0 0.0
    %6815 = vmatpush1.msra.mxu0 %v6699
    %6816 = vmatprep.subr.mxu0 0.0
    %6817 = vmatpush2.msra.mxu0 0.0
    %6818 = vmatprep.subr.mxu0 0.0
    %6819 = vmatpush2.msra.mxu0 0.0
    %6820 = vmatprep.subr.mxu0 0.0
    %6821 = vmatpush2.msra.mxu0 0.0
    %6822 = vmatprep.subr.mxu0 0.0
    %6823 = vmatpush2.msra.mxu0 0.0
    %6824 = vmatprep.subr.mxu0 0.0
    %6825 = vmatpush2.msra.mxu0 0.0
    %6826 = vmatprep.subr.mxu0 0.0
    %6827 = vmatpush2.msra.mxu0 0.0
    %6828 = vmatprep.subr.mxu0 0.0
    %6829 = vmatpush2.msra.mxu0 0.0
    %6830 = vmatprep.subr.mxu0 0.0
    %6831 = vmatpush2.msra.mxu0 0.0
    %6832 = vmatprep.subr.mxu0 0.0
    %6833 = vmatpush2.msra.mxu0 0.0
    %6834 = vmatprep.subr.mxu0 0.0
    %6835 = vmatpush2.msra.mxu0 0.0
    %6836 = vmatprep.subr.mxu0 0.0
    %6837 = vmatpush2.msra.mxu0 0.0
    %6838 = vmatprep.subr.mxu0 0.0
    %6839 = vmatpush2.msra.mxu0 0.0
    %6840 = vmatprep.subr.mxu0 0.0
    %6841 = vmatpush2.msra.mxu0 0.0
    %6842 = vmatprep.subr.mxu0 0.0
    %6843 = vmatpush2.msra.mxu0 0.0
    %6844 = vmatprep.subr.mxu0 0.0
    %6845 = vmatpush2.msra.mxu0 0.0
    %6846 = vmatprep.subr.mxu0 0.0
    %6847 = vmatpush2.msra.mxu0 0.0
    %6848 = vmatprep.mubr.f32.mxu0 0.0
    %6849 = vmatmul.mubr.f32.gmra.mxu0 %v6687
    %v6850 = vpop.f32.mrf.mxu0
    %v6851 = vadd.f32 0.0, %v6850
    %v6852 = vpop.f32.mrf.mxu0
    %6853 = vmatprep.mubr.f32.mxu0 0.0
    %6854 = vmatmul.mubr.f32.gmra.mxu0 %v6690
    %v6855 = vpop.f32.mrf.mxu0
    %v6856 = vadd.f32 0.0, %v6855
    %v6857 = vpop.f32.mrf.mxu0
    %6858 = vmatprep.mubr.f32.mxu0 0.0
    %6859 = vmatmul.mubr.f32.gmra.mxu0 %v6693
    %v6860 = vpop.f32.mrf.mxu0
    %v6861 = vadd.f32 0.0, %v6860
    %v6862 = vpop.f32.mrf.mxu0
    %6863 = vdwg.mxu0
    %v6864 = vadd.f32 %v6661, %v6768
    %v6865 = vadd.f32 %v6662, %v6770
    %v6866 = vadd.f32 %v6663, %v6851
    %v6867 = vadd.f32 %v6664, %v6774
    %v6868 = vadd.f32 %v6665, %v6776
    %v6869 = vadd.f32 %v6666, %v6856
    %v6870 = vadd.f32 %v6667, %v6780
    %v6871 = vadd.f32 %v6668, %v6782
    %v6872 = vadd.f32 %v6669, %v6861
    %v6873 = vld [vmem:[%s5279] sm:$0xff]
    %v6874 = vld [vmem:[%s5279 + $0x8] sm:$0xf]
    %v6875 = vld [vmem:[%s1634] sm:$0xff]
    %v6876 = vld [vmem:[%s1634 + $0x8] sm:$0xff]
    %v6877 = vld [vmem:[%s1634 + $0x10] sm:$0xff]
    %v6880 = vcombine.high %v6873, %v6873
    %6881 = vrot.lane.b32.xlu0 %v6873, 90
    %v6882 = vpop.permute.xlu0 %6881
    %6883 = vrot.lane.b32.xlu0 %v6880, 90
    %v6884 = vpop.permute.xlu0 %6883
    %6885 = vrot.lane.b32.xlu0 %v6874, 90
    %v6886 = vpop.permute.xlu0 %6885
    %v6887 = vsel %vm1647, %v6882, %v6884
    %v6888 = vsel %vm1647, %v6884, %v6886
    %v6890 = vsel %vm44, %v6875, 0
    %v6893 = vsel %vm44, %v6876, 0
    %v6896 = vsel %vm44, %v6877, 0
    %v6898 = vsel %vm54, %v6887, 0
    %v6900 = vsel %vm54, %v6888, 0
    %v6902 = vsel %vm54, %v6886, 0
    %6904 = vmatprep.subr.mxu0 0.0
    %6905 = vmatpush1.msra.mxu0 0.0
    %6906 = vmatprep.subr.mxu0 0.0
    %6907 = vmatpush1.msra.mxu0 0.0
    %6908 = vmatprep.subr.mxu0 0.0
    %6909 = vmatpush1.msra.mxu0 0.0
    %6910 = vmatprep.subr.mxu0 0.0
    %6911 = vmatpush1.msra.mxu0 0.0
    %6912 = vmatprep.subr.mxu0 0.0
    %6913 = vmatpush1.msra.mxu0 0.0
    %6914 = vmatprep.subr.mxu0 0.0
    %6915 = vmatpush1.msra.mxu0 0.0
    %6916 = vmatprep.subr.mxu0 0.0
    %6917 = vmatpush1.msra.mxu0 0.0
    %6918 = vmatprep.subr.mxu0 0.0
    %6919 = vmatpush1.msra.mxu0 0.0
    %6920 = vmatprep.subr.mxu0 0.0
    %6921 = vmatpush1.msra.mxu0 0.0
    %6922 = vmatprep.subr.mxu0 0.0
    %6923 = vmatpush1.msra.mxu0 0.0
    %6924 = vmatprep.subr.mxu0 0.0
    %6925 = vmatpush1.msra.mxu0 0.0
    %6926 = vmatprep.subr.mxu0 0.0
    %6927 = vmatpush1.msra.mxu0 0.0
    %6928 = vmatprep.subr.mxu0 0.0
    %6929 = vmatpush1.msra.mxu0 0.0
    %6930 = vmatprep.subr.mxu0 0.0
    %6931 = vmatpush1.msra.mxu0 0.0
    %6932 = vmatprep.subr.mxu0 0.0
    %6933 = vmatpush1.msra.mxu0 0.0
    %6934 = vmatprep.subr.mxu0 %v6900
    %6935 = vmatpush1.msra.mxu0 %v6898
    %6936 = vmatprep.subr.mxu0 0.0
    %6937 = vmatpush2.msra.mxu0 0.0
    %6938 = vmatprep.subr.mxu0 0.0
    %6939 = vmatpush2.msra.mxu0 0.0
    %6940 = vmatprep.subr.mxu0 0.0
    %6941 = vmatpush2.msra.mxu0 0.0
    %6942 = vmatprep.subr.mxu0 0.0
    %6943 = vmatpush2.msra.mxu0 0.0
    %6944 = vmatprep.subr.mxu0 0.0
    %6945 = vmatpush2.msra.mxu0 0.0
    %6946 = vmatprep.subr.mxu0 0.0
    %6947 = vmatpush2.msra.mxu0 0.0
    %6948 = vmatprep.subr.mxu0 0.0
    %6949 = vmatpush2.msra.mxu0 0.0
    %6950 = vmatprep.subr.mxu0 0.0
    %6951 = vmatpush2.msra.mxu0 0.0
    %6952 = vmatprep.subr.mxu0 0.0
    %6953 = vmatpush2.msra.mxu0 0.0
    %6954 = vmatprep.subr.mxu0 0.0
    %6955 = vmatpush2.msra.mxu0 0.0
    %6956 = vmatprep.subr.mxu0 0.0
    %6957 = vmatpush2.msra.mxu0 0.0
    %6958 = vmatprep.subr.mxu0 0.0
    %6959 = vmatpush2.msra.mxu0 0.0
    %6960 = vmatprep.subr.mxu0 0.0
    %6961 = vmatpush2.msra.mxu0 0.0
    %6962 = vmatprep.subr.mxu0 0.0
    %6963 = vmatpush2.msra.mxu0 0.0
    %6964 = vmatprep.subr.mxu0 0.0
    %6965 = vmatpush2.msra.mxu0 0.0
    %6966 = vmatprep.subr.mxu0 0.0
    %6967 = vmatpush2.msra.mxu0 0.0
    %6968 = vmatprep.mubr.f32.mxu0 0.0
    %6969 = vmatmul.mubr.f32.gmra.mxu0 %v6890
    %v6970 = vpop.f32.mrf.mxu0
    %v6971 = vadd.f32 0.0, %v6970
    %v6972 = vpop.f32.mrf.mxu0
    %v6973 = vadd.f32 0.0, %v6972
    %6974 = vmatprep.mubr.f32.mxu0 0.0
    %6975 = vmatmul.mubr.f32.gmra.mxu0 %v6893
    %v6976 = vpop.f32.mrf.mxu0
    %v6977 = vadd.f32 0.0, %v6976
    %v6978 = vpop.f32.mrf.mxu0
    %v6979 = vadd.f32 0.0, %v6978
    %6980 = vmatprep.mubr.f32.mxu0 0.0
    %6981 = vmatmul.mubr.f32.gmra.mxu0 %v6896
    %v6982 = vpop.f32.mrf.mxu0
    %v6983 = vadd.f32 0.0, %v6982
    %v6984 = vpop.f32.mrf.mxu0
    %v6985 = vadd.f32 0.0, %v6984
    %6986 = vdwg.mxu0
    %6987 = vmatprep.subr.mxu0 0.0
    %6988 = vmatpush1.msra.mxu0 0.0
    %6989 = vmatprep.subr.mxu0 0.0
    %6990 = vmatpush1.msra.mxu0 0.0
    %6991 = vmatprep.subr.mxu0 0.0
    %6992 = vmatpush1.msra.mxu0 0.0
    %6993 = vmatprep.subr.mxu0 0.0
    %6994 = vmatpush1.msra.mxu0 0.0
    %6995 = vmatprep.subr.mxu0 0.0
    %6996 = vmatpush1.msra.mxu0 0.0
    %6997 = vmatprep.subr.mxu0 0.0
    %6998 = vmatpush1.msra.mxu0 0.0
    %6999 = vmatprep.subr.mxu0 0.0
    %7000 = vmatpush1.msra.mxu0 0.0
    %7001 = vmatprep.subr.mxu0 0.0
    %7002 = vmatpush1.msra.mxu0 0.0
    %7003 = vmatprep.subr.mxu0 0.0
    %7004 = vmatpush1.msra.mxu0 0.0
    %7005 = vmatprep.subr.mxu0 0.0
    %7006 = vmatpush1.msra.mxu0 0.0
    %7007 = vmatprep.subr.mxu0 0.0
    %7008 = vmatpush1.msra.mxu0 0.0
    %7009 = vmatprep.subr.mxu0 0.0
    %7010 = vmatpush1.msra.mxu0 0.0
    %7011 = vmatprep.subr.mxu0 0.0
    %7012 = vmatpush1.msra.mxu0 0.0
    %7013 = vmatprep.subr.mxu0 0.0
    %7014 = vmatpush1.msra.mxu0 0.0
    %7015 = vmatprep.subr.mxu0 0.0
    %7016 = vmatpush1.msra.mxu0 0.0
    %7017 = vmatprep.subr.mxu0 0.0
    %7018 = vmatpush1.msra.mxu0 %v6902
    %7019 = vmatprep.subr.mxu0 0.0
    %7020 = vmatpush2.msra.mxu0 0.0
    %7021 = vmatprep.subr.mxu0 0.0
    %7022 = vmatpush2.msra.mxu0 0.0
    %7023 = vmatprep.subr.mxu0 0.0
    %7024 = vmatpush2.msra.mxu0 0.0
    %7025 = vmatprep.subr.mxu0 0.0
    %7026 = vmatpush2.msra.mxu0 0.0
    %7027 = vmatprep.subr.mxu0 0.0
    %7028 = vmatpush2.msra.mxu0 0.0
    %7029 = vmatprep.subr.mxu0 0.0
    %7030 = vmatpush2.msra.mxu0 0.0
    %7031 = vmatprep.subr.mxu0 0.0
    %7032 = vmatpush2.msra.mxu0 0.0
    %7033 = vmatprep.subr.mxu0 0.0
    %7034 = vmatpush2.msra.mxu0 0.0
    %7035 = vmatprep.subr.mxu0 0.0
    %7036 = vmatpush2.msra.mxu0 0.0
    %7037 = vmatprep.subr.mxu0 0.0
    %7038 = vmatpush2.msra.mxu0 0.0
    %7039 = vmatprep.subr.mxu0 0.0
    %7040 = vmatpush2.msra.mxu0 0.0
    %7041 = vmatprep.subr.mxu0 0.0
    %7042 = vmatpush2.msra.mxu0 0.0
    %7043 = vmatprep.subr.mxu0 0.0
    %7044 = vmatpush2.msra.mxu0 0.0
    %7045 = vmatprep.subr.mxu0 0.0
    %7046 = vmatpush2.msra.mxu0 0.0
    %7047 = vmatprep.subr.mxu0 0.0
    %7048 = vmatpush2.msra.mxu0 0.0
    %7049 = vmatprep.subr.mxu0 0.0
    %7050 = vmatpush2.msra.mxu0 0.0
    %7051 = vmatprep.mubr.f32.mxu0 0.0
    %7052 = vmatmul.mubr.f32.gmra.mxu0 %v6890
    %v7053 = vpop.f32.mrf.mxu0
    %v7054 = vadd.f32 0.0, %v7053
    %v7055 = vpop.f32.mrf.mxu0
    %7056 = vmatprep.mubr.f32.mxu0 0.0
    %7057 = vmatmul.mubr.f32.gmra.mxu0 %v6893
    %v7058 = vpop.f32.mrf.mxu0
    %v7059 = vadd.f32 0.0, %v7058
    %v7060 = vpop.f32.mrf.mxu0
    %7061 = vmatprep.mubr.f32.mxu0 0.0
    %7062 = vmatmul.mubr.f32.gmra.mxu0 %v6896
    %v7063 = vpop.f32.mrf.mxu0
    %v7064 = vadd.f32 0.0, %v7063
    %v7065 = vpop.f32.mrf.mxu0
    %7066 = vdwg.mxu0
    %v7067 = vadd.f32 %v6864, %v6971
    %v7068 = vadd.f32 %v6865, %v6973
    %v7069 = vadd.f32 %v6866, %v7054
    %v7070 = vadd.f32 %v6867, %v6977
    %v7071 = vadd.f32 %v6868, %v6979
    %v7072 = vadd.f32 %v6869, %v7059
    %v7073 = vadd.f32 %v6870, %v6983
    %v7074 = vadd.f32 %v6871, %v6985
    %v7075 = vadd.f32 %v6872, %v7064
    %v7076 = vadd.f32 %v7067, %v1840
    %v7077 = vadd.f32 %v7068, %v1840
    %v7078 = vadd.f32 %v7069, %v1840
    %v7079 = vadd.f32 %v7070, %v1845
    %v7080 = vadd.f32 %v7071, %v1845
    %v7081 = vadd.f32 %v7072, %v1845
    %v7082 = vadd.f32 %v7073, %v1850
    %v7083 = vadd.f32 %v7074, %v1850
    %v7084 = vadd.f32 %v7075, %v1850
    %v7085 = vmax.f32 %v7076, 0.0
    %v7086 = vmax.f32 %v7077, 0.0
    %v7087 = vmax.f32 %v7078, 0.0
    %v7088 = vmax.f32 %v7079, 0.0
    %v7089 = vmax.f32 %v7080, 0.0
    %v7090 = vmax.f32 %v7081, 0.0
    %v7091 = vmax.f32 %v7082, 0.0
    %v7092 = vmax.f32 %v7083, 0.0
    %v7093 = vmax.f32 %v7084, 0.0
    %v7096 = vcombine.high %v7085, %v7085
    %v7098 = vunpack.c.l.s4 1966171168
    %v7099 = vunpack.c.0.s8 %v7098
    %v7100 = vlaneseq
    %v7101 = vshrl.u32 %v7100, 7
    %v7102 = vsub.s32 %v7099, %v7101
    %v7103 = vrot.slane %v7085, %v7102
    %v7105 = vunpack.c.l.s4 1966171168
    %v7106 = vunpack.c.0.s8 %v7105
    %v7107 = vlaneseq
    %v7108 = vshrl.u32 %v7107, 7
    %v7109 = vsub.s32 %v7106, %v7108
    %v7110 = vrot.slane %v7096, %v7109
    %v7111 = vcombine.high %v7103, %v7103
    %v7112 = vcombine.high %v7110, %v7110
    %v7114 = vunpack.c.l.s4 1966171168
    %v7115 = vunpack.c.0.s8 %v7114
    %v7116 = vlaneseq
    %v7117 = vshrl.u32 %v7116, 7
    %v7118 = vsub.s32 %v7115, %v7117
    %v7119 = vrot.slane %v7103, %v7118
    %v7121 = vunpack.c.l.s4 1966171168
    %v7122 = vunpack.c.0.s8 %v7121
    %v7123 = vlaneseq
    %v7124 = vshrl.u32 %v7123, 7
    %v7125 = vsub.s32 %v7122, %v7124
    %v7126 = vrot.slane %v7110, %v7125
    %v7128 = vunpack.c.l.s4 1966171168
    %v7129 = vunpack.c.0.s8 %v7128
    %v7130 = vlaneseq
    %v7131 = vshrl.u32 %v7130, 7
    %v7132 = vsub.s32 %v7129, %v7131
    %v7133 = vrot.slane %v7111, %v7132
    %v7135 = vunpack.c.l.s4 1966171168
    %v7136 = vunpack.c.0.s8 %v7135
    %v7137 = vlaneseq
    %v7138 = vshrl.u32 %v7137, 7
    %v7139 = vsub.s32 %v7136, %v7138
    %v7140 = vrot.slane %v7112, %v7139
    %v7141 = vcombine.high %v7119, %v7119
    %v7142 = vcombine.high %v7126, %v7126
    %v7143 = vcombine.high %v7133, %v7133
    %v7144 = vcombine.high %v7140, %v7140
    %v7145 = vcombine.high %v7088, %v7088
    %v7147 = vunpack.c.l.s4 1966171168
    %v7148 = vunpack.c.0.s8 %v7147
    %v7149 = vlaneseq
    %v7150 = vshrl.u32 %v7149, 7
    %v7151 = vsub.s32 %v7148, %v7150
    %v7152 = vrot.slane %v7088, %v7151
    %v7154 = vunpack.c.l.s4 1966171168
    %v7155 = vunpack.c.0.s8 %v7154
    %v7156 = vlaneseq
    %v7157 = vshrl.u32 %v7156, 7
    %v7158 = vsub.s32 %v7155, %v7157
    %v7159 = vrot.slane %v7145, %v7158
    %v7160 = vcombine.high %v7152, %v7152
    %v7161 = vcombine.high %v7159, %v7159
    %v7163 = vunpack.c.l.s4 1966171168
    %v7164 = vunpack.c.0.s8 %v7163
    %v7165 = vlaneseq
    %v7166 = vshrl.u32 %v7165, 7
    %v7167 = vsub.s32 %v7164, %v7166
    %v7168 = vrot.slane %v7152, %v7167
    %v7170 = vunpack.c.l.s4 1966171168
    %v7171 = vunpack.c.0.s8 %v7170
    %v7172 = vlaneseq
    %v7173 = vshrl.u32 %v7172, 7
    %v7174 = vsub.s32 %v7171, %v7173
    %v7175 = vrot.slane %v7159, %v7174
    %v7177 = vunpack.c.l.s4 1966171168
    %v7178 = vunpack.c.0.s8 %v7177
    %v7179 = vlaneseq
    %v7180 = vshrl.u32 %v7179, 7
    %v7181 = vsub.s32 %v7178, %v7180
    %v7182 = vrot.slane %v7160, %v7181
    %v7184 = vunpack.c.l.s4 1966171168
    %v7185 = vunpack.c.0.s8 %v7184
    %v7186 = vlaneseq
    %v7187 = vshrl.u32 %v7186, 7
    %v7188 = vsub.s32 %v7185, %v7187
    %v7189 = vrot.slane %v7161, %v7188
    %v7190 = vcombine.high %v7168, %v7168
    %v7191 = vcombine.high %v7175, %v7175
    %v7192 = vcombine.high %v7182, %v7182
    %v7193 = vcombine.high %v7189, %v7189
    %s7210 = scalar_lea.vmem [#allocation2], 256
    %7211 = vst.msk [vmem:[%s7210] sm:$0x1] %vm1986, %v7119
    %7212 = vst.msk [vmem:[%s7210 + $0x10] sm:$0x1] %vm1986, %v7133
    %7213 = vst.msk [vmem:[%s7210 + $0x20] sm:$0x1] %vm1986, %v7141
    %7214 = vst.msk [vmem:[%s7210 + $0x30] sm:$0x1] %vm1986, %v7143
    %7215 = vst.msk [vmem:[%s7210 + $0x40] sm:$0x1] %vm1986, %v7126
    %7216 = vst.msk [vmem:[%s7210 + $0x50] sm:$0x1] %vm1986, %v7140
    %7217 = vst.msk [vmem:[%s7210 + $0x60] sm:$0x1] %vm1986, %v7142
    %7218 = vst.msk [vmem:[%s7210 + $0x70] sm:$0x1] %vm1986, %v7144
    %7219 = vst.msk [vmem:[%s7210 + $0x80] sm:$0x1] %vm1986, %v7168
    %7220 = vst.msk [vmem:[%s7210 + $0x90] sm:$0x1] %vm1986, %v7182
    %7221 = vst.msk [vmem:[%s7210 + $0xa0] sm:$0x1] %vm1986, %v7190
    %7222 = vst.msk [vmem:[%s7210 + $0xb0] sm:$0x1] %vm1986, %v7192
    %7223 = vst.msk [vmem:[%s7210 + $0xc0] sm:$0x1] %vm1986, %v7175
    %7224 = vst.msk [vmem:[%s7210 + $0xd0] sm:$0x1] %vm1986, %v7189
    %7225 = vst.msk [vmem:[%s7210 + $0xe0] sm:$0x1] %vm1986, %v7191
    %7226 = vst.msk [vmem:[%s7210 + $0xf0] sm:$0x1] %vm1986, %v7193
    %v7228 = vcombine.high %v7091, %v7091
    %v7230 = vunpack.c.l.s4 1966171168
    %v7231 = vunpack.c.0.s8 %v7230
    %v7232 = vlaneseq
    %v7233 = vshrl.u32 %v7232, 7
    %v7234 = vsub.s32 %v7231, %v7233
    %v7235 = vrot.slane %v7091, %v7234
    %v7237 = vunpack.c.l.s4 1966171168
    %v7238 = vunpack.c.0.s8 %v7237
    %v7239 = vlaneseq
    %v7240 = vshrl.u32 %v7239, 7
    %v7241 = vsub.s32 %v7238, %v7240
    %v7242 = vrot.slane %v7228, %v7241
    %v7243 = vcombine.high %v7235, %v7235
    %v7244 = vcombine.high %v7242, %v7242
    %v7246 = vunpack.c.l.s4 1966171168
    %v7247 = vunpack.c.0.s8 %v7246
    %v7248 = vlaneseq
    %v7249 = vshrl.u32 %v7248, 7
    %v7250 = vsub.s32 %v7247, %v7249
    %v7251 = vrot.slane %v7235, %v7250
    %v7253 = vunpack.c.l.s4 1966171168
    %v7254 = vunpack.c.0.s8 %v7253
    %v7255 = vlaneseq
    %v7256 = vshrl.u32 %v7255, 7
    %v7257 = vsub.s32 %v7254, %v7256
    %v7258 = vrot.slane %v7242, %v7257
    %v7260 = vunpack.c.l.s4 1966171168
    %v7261 = vunpack.c.0.s8 %v7260
    %v7262 = vlaneseq
    %v7263 = vshrl.u32 %v7262, 7
    %v7264 = vsub.s32 %v7261, %v7263
    %v7265 = vrot.slane %v7243, %v7264
    %v7267 = vunpack.c.l.s4 1966171168
    %v7268 = vunpack.c.0.s8 %v7267
    %v7269 = vlaneseq
    %v7270 = vshrl.u32 %v7269, 7
    %v7271 = vsub.s32 %v7268, %v7270
    %v7272 = vrot.slane %v7244, %v7271
    %v7273 = vcombine.high %v7251, %v7251
    %v7274 = vcombine.high %v7258, %v7258
    %v7275 = vcombine.high %v7265, %v7265
    %v7276 = vcombine.high %v7272, %v7272
    %s7285 = scalar_lea.vmem [#allocation4], 128
    %7286 = vst.msk [vmem:[%s7285] sm:$0x1] %vm1986, %v7251
    %7287 = vst.msk [vmem:[%s7285 + $0x10] sm:$0x1] %vm1986, %v7265
    %7288 = vst.msk [vmem:[%s7285 + $0x20] sm:$0x1] %vm1986, %v7273
    %7289 = vst.msk [vmem:[%s7285 + $0x30] sm:$0x1] %vm1986, %v7275
    %7290 = vst.msk [vmem:[%s7285 + $0x40] sm:$0x1] %vm1986, %v7258
    %7291 = vst.msk [vmem:[%s7285 + $0x50] sm:$0x1] %vm1986, %v7272
    %7292 = vst.msk [vmem:[%s7285 + $0x60] sm:$0x1] %vm1986, %v7274
    %7293 = vst.msk [vmem:[%s7285 + $0x70] sm:$0x1] %vm1986, %v7276
    %v7294 = vsel %vm2069, %v7085, 0.0
    %7295 = vadd.xlane.f32.xlu0 %v7294
    %v7296 = vpop.xlane.xlu0 %7295
    %v7297 = vsel %vm2069, %v7088, 0.0
    %7298 = vadd.xlane.f32.xlu0 %v7297
    %v7299 = vpop.xlane.xlu0 %7298
    %v7300 = vsel %vm2069, %v7091, 0.0
    %7301 = vadd.xlane.f32.xlu0 %v7300
    %v7302 = vpop.xlane.xlu0 %7301
    %v7303 = vadd.f32 %v7296, 0.0
    %v7304 = vadd.f32 %v7299, 0.0
    %v7305 = vadd.f32 %v7302, 0.0
    %v7306 = vlaneseq
    %v7307 = vshrl.u32 %v7306, 7
    %v7308 = vsub.s32 0, %v7307
    %v7309 = vrot.slane %v7119, %v7308
    %v7310 = vlaneseq
    %v7311 = vshrl.u32 %v7310, 7
    %v7312 = vsub.s32 0, %v7311
    %v7313 = vrot.slane %v7133, %v7312
    %v7314 = vlaneseq
    %v7315 = vshrl.u32 %v7314, 7
    %v7316 = vsub.s32 0, %v7315
    %v7317 = vrot.slane %v7141, %v7316
    %v7318 = vlaneseq
    %v7319 = vshrl.u32 %v7318, 7
    %v7320 = vsub.s32 0, %v7319
    %v7321 = vrot.slane %v7143, %v7320
    %v7322 = vlaneseq
    %v7323 = vshrl.u32 %v7322, 7
    %v7324 = vsub.s32 0, %v7323
    %v7325 = vrot.slane %v7126, %v7324
    %v7326 = vlaneseq
    %v7327 = vshrl.u32 %v7326, 7
    %v7328 = vsub.s32 0, %v7327
    %v7329 = vrot.slane %v7140, %v7328
    %v7330 = vlaneseq
    %v7331 = vshrl.u32 %v7330, 7
    %v7332 = vsub.s32 0, %v7331
    %v7333 = vrot.slane %v7142, %v7332
    %v7334 = vlaneseq
    %v7335 = vshrl.u32 %v7334, 7
    %v7336 = vsub.s32 0, %v7335
    %v7337 = vrot.slane %v7144, %v7336
    %v7338 = vlaneseq
    %v7339 = vshrl.u32 %v7338, 7
    %v7340 = vsub.s32 0, %v7339
    %v7341 = vrot.slane %v7168, %v7340
    %v7342 = vlaneseq
    %v7343 = vshrl.u32 %v7342, 7
    %v7344 = vsub.s32 0, %v7343
    %v7345 = vrot.slane %v7182, %v7344
    %v7346 = vlaneseq
    %v7347 = vshrl.u32 %v7346, 7
    %v7348 = vsub.s32 0, %v7347
    %v7349 = vrot.slane %v7190, %v7348
    %v7350 = vlaneseq
    %v7351 = vshrl.u32 %v7350, 7
    %v7352 = vsub.s32 0, %v7351
    %v7353 = vrot.slane %v7192, %v7352
    %v7354 = vlaneseq
    %v7355 = vshrl.u32 %v7354, 7
    %v7356 = vsub.s32 0, %v7355
    %v7357 = vrot.slane %v7175, %v7356
    %v7358 = vlaneseq
    %v7359 = vshrl.u32 %v7358, 7
    %v7360 = vsub.s32 0, %v7359
    %v7361 = vrot.slane %v7189, %v7360
    %v7362 = vlaneseq
    %v7363 = vshrl.u32 %v7362, 7
    %v7364 = vsub.s32 0, %v7363
    %v7365 = vrot.slane %v7191, %v7364
    %v7366 = vlaneseq
    %v7367 = vshrl.u32 %v7366, 7
    %v7368 = vsub.s32 0, %v7367
    %v7369 = vrot.slane %v7193, %v7368
    %7370 = vrot.lane.b32.xlu0 %v7309, 110
    %v7371 = vpop.permute.xlu0 %7370
    %7372 = vrot.lane.b32.xlu0 %v7313, 110
    %v7373 = vpop.permute.xlu0 %7372
    %7374 = vrot.lane.b32.xlu0 %v7317, 110
    %v7375 = vpop.permute.xlu0 %7374
    %7376 = vrot.lane.b32.xlu0 %v7321, 110
    %v7377 = vpop.permute.xlu0 %7376
    %7378 = vrot.lane.b32.xlu0 %v7325, 110
    %v7379 = vpop.permute.xlu0 %7378
    %7380 = vrot.lane.b32.xlu0 %v7329, 110
    %v7381 = vpop.permute.xlu0 %7380
    %7382 = vrot.lane.b32.xlu0 %v7333, 110
    %v7383 = vpop.permute.xlu0 %7382
    %7384 = vrot.lane.b32.xlu0 %v7337, 110
    %v7385 = vpop.permute.xlu0 %7384
    %7386 = vrot.lane.b32.xlu0 %v7341, 110
    %v7387 = vpop.permute.xlu0 %7386
    %7388 = vrot.lane.b32.xlu0 %v7345, 110
    %v7389 = vpop.permute.xlu0 %7388
    %7390 = vrot.lane.b32.xlu0 %v7349, 110
    %v7391 = vpop.permute.xlu0 %7390
    %7392 = vrot.lane.b32.xlu0 %v7353, 110
    %v7393 = vpop.permute.xlu0 %7392
    %7394 = vrot.lane.b32.xlu0 %v7357, 110
    %v7395 = vpop.permute.xlu0 %7394
    %7396 = vrot.lane.b32.xlu0 %v7361, 110
    %v7397 = vpop.permute.xlu0 %7396
    %7398 = vrot.lane.b32.xlu0 %v7365, 110
    %v7399 = vpop.permute.xlu0 %7398
    %7400 = vrot.lane.b32.xlu0 %v7369, 110
    %v7401 = vpop.permute.xlu0 %7400
    %7418 = vst.msk [vmem:[%s7210 + $0x1] sm:$0x1] %vm1986, %v7371
    %7419 = vst.msk [vmem:[%s7210 + $0x11] sm:$0x1] %vm1986, %v7373
    %7420 = vst.msk [vmem:[%s7210 + $0x21] sm:$0x1] %vm1986, %v7375
    %7421 = vst.msk [vmem:[%s7210 + $0x31] sm:$0x1] %vm1986, %v7377
    %7422 = vst.msk [vmem:[%s7210 + $0x41] sm:$0x1] %vm1986, %v7379
    %7423 = vst.msk [vmem:[%s7210 + $0x51] sm:$0x1] %vm1986, %v7381
    %7424 = vst.msk [vmem:[%s7210 + $0x61] sm:$0x1] %vm1986, %v7383
    %7425 = vst.msk [vmem:[%s7210 + $0x71] sm:$0x1] %vm1986, %v7385
    %7426 = vst.msk [vmem:[%s7210 + $0x81] sm:$0x1] %vm1986, %v7387
    %7427 = vst.msk [vmem:[%s7210 + $0x91] sm:$0x1] %vm1986, %v7389
    %7428 = vst.msk [vmem:[%s7210 + $0xa1] sm:$0x1] %vm1986, %v7391
    %7429 = vst.msk [vmem:[%s7210 + $0xb1] sm:$0x1] %vm1986, %v7393
    %7430 = vst.msk [vmem:[%s7210 + $0xc1] sm:$0x1] %vm1986, %v7395
    %7431 = vst.msk [vmem:[%s7210 + $0xd1] sm:$0x1] %vm1986, %v7397
    %7432 = vst.msk [vmem:[%s7210 + $0xe1] sm:$0x1] %vm1986, %v7399
    %7433 = vst.msk [vmem:[%s7210 + $0xf1] sm:$0x1] %vm1986, %v7401
    %v7434 = vlaneseq
    %v7435 = vshrl.u32 %v7434, 7
    %v7436 = vsub.s32 0, %v7435
    %v7437 = vrot.slane %v7251, %v7436
    %v7438 = vlaneseq
    %v7439 = vshrl.u32 %v7438, 7
    %v7440 = vsub.s32 0, %v7439
    %v7441 = vrot.slane %v7265, %v7440
    %v7442 = vlaneseq
    %v7443 = vshrl.u32 %v7442, 7
    %v7444 = vsub.s32 0, %v7443
    %v7445 = vrot.slane %v7273, %v7444
    %v7446 = vlaneseq
    %v7447 = vshrl.u32 %v7446, 7
    %v7448 = vsub.s32 0, %v7447
    %v7449 = vrot.slane %v7275, %v7448
    %v7450 = vlaneseq
    %v7451 = vshrl.u32 %v7450, 7
    %v7452 = vsub.s32 0, %v7451
    %v7453 = vrot.slane %v7258, %v7452
    %v7454 = vlaneseq
    %v7455 = vshrl.u32 %v7454, 7
    %v7456 = vsub.s32 0, %v7455
    %v7457 = vrot.slane %v7272, %v7456
    %v7458 = vlaneseq
    %v7459 = vshrl.u32 %v7458, 7
    %v7460 = vsub.s32 0, %v7459
    %v7461 = vrot.slane %v7274, %v7460
    %v7462 = vlaneseq
    %v7463 = vshrl.u32 %v7462, 7
    %v7464 = vsub.s32 0, %v7463
    %v7465 = vrot.slane %v7276, %v7464
    %7466 = vrot.lane.b32.xlu0 %v7437, 110
    %v7467 = vpop.permute.xlu0 %7466
    %7468 = vrot.lane.b32.xlu0 %v7441, 110
    %v7469 = vpop.permute.xlu0 %7468
    %7470 = vrot.lane.b32.xlu0 %v7445, 110
    %v7471 = vpop.permute.xlu0 %7470
    %7472 = vrot.lane.b32.xlu0 %v7449, 110
    %v7473 = vpop.permute.xlu0 %7472
    %7474 = vrot.lane.b32.xlu0 %v7453, 110
    %v7475 = vpop.permute.xlu0 %7474
    %7476 = vrot.lane.b32.xlu0 %v7457, 110
    %v7477 = vpop.permute.xlu0 %7476
    %7478 = vrot.lane.b32.xlu0 %v7461, 110
    %v7479 = vpop.permute.xlu0 %7478
    %7480 = vrot.lane.b32.xlu0 %v7465, 110
    %v7481 = vpop.permute.xlu0 %7480
    %7490 = vst.msk [vmem:[%s7285 + $0x1] sm:$0x1] %vm1986, %v7467
    %7491 = vst.msk [vmem:[%s7285 + $0x11] sm:$0x1] %vm1986, %v7469
    %7492 = vst.msk [vmem:[%s7285 + $0x21] sm:$0x1] %vm1986, %v7471
    %7493 = vst.msk [vmem:[%s7285 + $0x31] sm:$0x1] %vm1986, %v7473
    %7494 = vst.msk [vmem:[%s7285 + $0x41] sm:$0x1] %vm1986, %v7475
    %7495 = vst.msk [vmem:[%s7285 + $0x51] sm:$0x1] %vm1986, %v7477
    %7496 = vst.msk [vmem:[%s7285 + $0x61] sm:$0x1] %vm1986, %v7479
    %7497 = vst.msk [vmem:[%s7285 + $0x71] sm:$0x1] %vm1986, %v7481
    %7498 = vrot.lane.b32.xlu0 %v7085, 110
    %v7499 = vpop.permute.xlu0 %7498
    %7500 = vrot.lane.b32.xlu0 %v7088, 110
    %v7501 = vpop.permute.xlu0 %7500
    %7502 = vrot.lane.b32.xlu0 %v7091, 110
    %v7503 = vpop.permute.xlu0 %7502
    %v7507 = vsel %vm2069, %v7499, 0.0
    %7508 = vadd.xlane.f32.xlu0 %v7507
    %v7509 = vpop.xlane.xlu0 %7508
    %v7510 = vsel %vm2069, %v7501, 0.0
    %7511 = vadd.xlane.f32.xlu0 %v7510
    %v7512 = vpop.xlane.xlu0 %7511
    %v7513 = vsel %vm2069, %v7503, 0.0
    %7514 = vadd.xlane.f32.xlu0 %v7513
    %v7515 = vpop.xlane.xlu0 %7514
    %v7516 = vadd.f32 %v7303, %v7509
    %v7517 = vadd.f32 %v7304, %v7512
    %v7518 = vadd.f32 %v7305, %v7515
    %7519 = vrot.lane.b32.xlu0 %v7309, 92
    %v7520 = vpop.permute.xlu0 %7519
    %7521 = vrot.lane.b32.xlu0 %v7313, 92
    %v7522 = vpop.permute.xlu0 %7521
    %7523 = vrot.lane.b32.xlu0 %v7317, 92
    %v7524 = vpop.permute.xlu0 %7523
    %7525 = vrot.lane.b32.xlu0 %v7321, 92
    %v7526 = vpop.permute.xlu0 %7525
    %7527 = vrot.lane.b32.xlu0 %v7325, 92
    %v7528 = vpop.permute.xlu0 %7527
    %7529 = vrot.lane.b32.xlu0 %v7329, 92
    %v7530 = vpop.permute.xlu0 %7529
    %7531 = vrot.lane.b32.xlu0 %v7333, 92
    %v7532 = vpop.permute.xlu0 %7531
    %7533 = vrot.lane.b32.xlu0 %v7337, 92
    %v7534 = vpop.permute.xlu0 %7533
    %7535 = vrot.lane.b32.xlu0 %v7341, 92
    %v7536 = vpop.permute.xlu0 %7535
    %7537 = vrot.lane.b32.xlu0 %v7345, 92
    %v7538 = vpop.permute.xlu0 %7537
    %7539 = vrot.lane.b32.xlu0 %v7349, 92
    %v7540 = vpop.permute.xlu0 %7539
    %7541 = vrot.lane.b32.xlu0 %v7353, 92
    %v7542 = vpop.permute.xlu0 %7541
    %7543 = vrot.lane.b32.xlu0 %v7357, 92
    %v7544 = vpop.permute.xlu0 %7543
    %7545 = vrot.lane.b32.xlu0 %v7361, 92
    %v7546 = vpop.permute.xlu0 %7545
    %7547 = vrot.lane.b32.xlu0 %v7365, 92
    %v7548 = vpop.permute.xlu0 %7547
    %7549 = vrot.lane.b32.xlu0 %v7369, 92
    %v7550 = vpop.permute.xlu0 %7549
    %7567 = vst.msk [vmem:[%s7210 + $0x2] sm:$0x1] %vm1986, %v7520
    %7568 = vst.msk [vmem:[%s7210 + $0x12] sm:$0x1] %vm1986, %v7522
    %7569 = vst.msk [vmem:[%s7210 + $0x22] sm:$0x1] %vm1986, %v7524
    %7570 = vst.msk [vmem:[%s7210 + $0x32] sm:$0x1] %vm1986, %v7526
    %7571 = vst.msk [vmem:[%s7210 + $0x42] sm:$0x1] %vm1986, %v7528
    %7572 = vst.msk [vmem:[%s7210 + $0x52] sm:$0x1] %vm1986, %v7530
    %7573 = vst.msk [vmem:[%s7210 + $0x62] sm:$0x1] %vm1986, %v7532
    %7574 = vst.msk [vmem:[%s7210 + $0x72] sm:$0x1] %vm1986, %v7534
    %7575 = vst.msk [vmem:[%s7210 + $0x82] sm:$0x1] %vm1986, %v7536
    %7576 = vst.msk [vmem:[%s7210 + $0x92] sm:$0x1] %vm1986, %v7538
    %7577 = vst.msk [vmem:[%s7210 + $0xa2] sm:$0x1] %vm1986, %v7540
    %7578 = vst.msk [vmem:[%s7210 + $0xb2] sm:$0x1] %vm1986, %v7542
    %7579 = vst.msk [vmem:[%s7210 + $0xc2] sm:$0x1] %vm1986, %v7544
    %7580 = vst.msk [vmem:[%s7210 + $0xd2] sm:$0x1] %vm1986, %v7546
    %7581 = vst.msk [vmem:[%s7210 + $0xe2] sm:$0x1] %vm1986, %v7548
    %7582 = vst.msk [vmem:[%s7210 + $0xf2] sm:$0x1] %vm1986, %v7550
    %7583 = vrot.lane.b32.xlu0 %v7437, 92
    %v7584 = vpop.permute.xlu0 %7583
    %7585 = vrot.lane.b32.xlu0 %v7441, 92
    %v7586 = vpop.permute.xlu0 %7585
    %7587 = vrot.lane.b32.xlu0 %v7445, 92
    %v7588 = vpop.permute.xlu0 %7587
    %7589 = vrot.lane.b32.xlu0 %v7449, 92
    %v7590 = vpop.permute.xlu0 %7589
    %7591 = vrot.lane.b32.xlu0 %v7453, 92
    %v7592 = vpop.permute.xlu0 %7591
    %7593 = vrot.lane.b32.xlu0 %v7457, 92
    %v7594 = vpop.permute.xlu0 %7593
    %7595 = vrot.lane.b32.xlu0 %v7461, 92
    %v7596 = vpop.permute.xlu0 %7595
    %7597 = vrot.lane.b32.xlu0 %v7465, 92
    %v7598 = vpop.permute.xlu0 %7597
    %7607 = vst.msk [vmem:[%s7285 + $0x2] sm:$0x1] %vm1986, %v7584
    %7608 = vst.msk [vmem:[%s7285 + $0x12] sm:$0x1] %vm1986, %v7586
    %7609 = vst.msk [vmem:[%s7285 + $0x22] sm:$0x1] %vm1986, %v7588
    %7610 = vst.msk [vmem:[%s7285 + $0x32] sm:$0x1] %vm1986, %v7590
    %7611 = vst.msk [vmem:[%s7285 + $0x42] sm:$0x1] %vm1986, %v7592
    %7612 = vst.msk [vmem:[%s7285 + $0x52] sm:$0x1] %vm1986, %v7594
    %7613 = vst.msk [vmem:[%s7285 + $0x62] sm:$0x1] %vm1986, %v7596
    %7614 = vst.msk [vmem:[%s7285 + $0x72] sm:$0x1] %vm1986, %v7598
    %7615 = vrot.lane.b32.xlu0 %v7085, 92
    %v7616 = vpop.permute.xlu0 %7615
    %7617 = vrot.lane.b32.xlu0 %v7088, 92
    %v7618 = vpop.permute.xlu0 %7617
    %7619 = vrot.lane.b32.xlu0 %v7091, 92
    %v7620 = vpop.permute.xlu0 %7619
    %v7624 = vsel %vm2069, %v7616, 0.0
    %7625 = vadd.xlane.f32.xlu0 %v7624
    %v7626 = vpop.xlane.xlu0 %7625
    %v7627 = vsel %vm2069, %v7618, 0.0
    %7628 = vadd.xlane.f32.xlu0 %v7627
    %v7629 = vpop.xlane.xlu0 %7628
    %v7630 = vsel %vm2069, %v7620, 0.0
    %7631 = vadd.xlane.f32.xlu0 %v7630
    %v7632 = vpop.xlane.xlu0 %7631
    %v7633 = vadd.f32 %v7516, %v7626
    %v7634 = vadd.f32 %v7517, %v7629
    %v7635 = vadd.f32 %v7518, %v7632
    %7636 = vrot.lane.b32.xlu0 %v7309, 74
    %v7637 = vpop.permute.xlu0 %7636
    %7638 = vrot.lane.b32.xlu0 %v7313, 74
    %v7639 = vpop.permute.xlu0 %7638
    %7640 = vrot.lane.b32.xlu0 %v7317, 74
    %v7641 = vpop.permute.xlu0 %7640
    %7642 = vrot.lane.b32.xlu0 %v7321, 74
    %v7643 = vpop.permute.xlu0 %7642
    %7644 = vrot.lane.b32.xlu0 %v7325, 74
    %v7645 = vpop.permute.xlu0 %7644
    %7646 = vrot.lane.b32.xlu0 %v7329, 74
    %v7647 = vpop.permute.xlu0 %7646
    %7648 = vrot.lane.b32.xlu0 %v7333, 74
    %v7649 = vpop.permute.xlu0 %7648
    %7650 = vrot.lane.b32.xlu0 %v7337, 74
    %v7651 = vpop.permute.xlu0 %7650
    %7652 = vrot.lane.b32.xlu0 %v7341, 74
    %v7653 = vpop.permute.xlu0 %7652
    %7654 = vrot.lane.b32.xlu0 %v7345, 74
    %v7655 = vpop.permute.xlu0 %7654
    %7656 = vrot.lane.b32.xlu0 %v7349, 74
    %v7657 = vpop.permute.xlu0 %7656
    %7658 = vrot.lane.b32.xlu0 %v7353, 74
    %v7659 = vpop.permute.xlu0 %7658
    %7660 = vrot.lane.b32.xlu0 %v7357, 74
    %v7661 = vpop.permute.xlu0 %7660
    %7662 = vrot.lane.b32.xlu0 %v7361, 74
    %v7663 = vpop.permute.xlu0 %7662
    %7664 = vrot.lane.b32.xlu0 %v7365, 74
    %v7665 = vpop.permute.xlu0 %7664
    %7666 = vrot.lane.b32.xlu0 %v7369, 74
    %v7667 = vpop.permute.xlu0 %7666
    %7684 = vst.msk [vmem:[%s7210 + $0x3] sm:$0x1] %vm1986, %v7637
    %7685 = vst.msk [vmem:[%s7210 + $0x13] sm:$0x1] %vm1986, %v7639
    %7686 = vst.msk [vmem:[%s7210 + $0x23] sm:$0x1] %vm1986, %v7641
    %7687 = vst.msk [vmem:[%s7210 + $0x33] sm:$0x1] %vm1986, %v7643
    %7688 = vst.msk [vmem:[%s7210 + $0x43] sm:$0x1] %vm1986, %v7645
    %7689 = vst.msk [vmem:[%s7210 + $0x53] sm:$0x1] %vm1986, %v7647
    %7690 = vst.msk [vmem:[%s7210 + $0x63] sm:$0x1] %vm1986, %v7649
    %7691 = vst.msk [vmem:[%s7210 + $0x73] sm:$0x1] %vm1986, %v7651
    %7692 = vst.msk [vmem:[%s7210 + $0x83] sm:$0x1] %vm1986, %v7653
    %7693 = vst.msk [vmem:[%s7210 + $0x93] sm:$0x1] %vm1986, %v7655
    %7694 = vst.msk [vmem:[%s7210 + $0xa3] sm:$0x1] %vm1986, %v7657
    %7695 = vst.msk [vmem:[%s7210 + $0xb3] sm:$0x1] %vm1986, %v7659
    %7696 = vst.msk [vmem:[%s7210 + $0xc3] sm:$0x1] %vm1986, %v7661
    %7697 = vst.msk [vmem:[%s7210 + $0xd3] sm:$0x1] %vm1986, %v7663
    %7698 = vst.msk [vmem:[%s7210 + $0xe3] sm:$0x1] %vm1986, %v7665
    %7699 = vst.msk [vmem:[%s7210 + $0xf3] sm:$0x1] %vm1986, %v7667
    %7700 = vrot.lane.b32.xlu0 %v7437, 74
    %v7701 = vpop.permute.xlu0 %7700
    %7702 = vrot.lane.b32.xlu0 %v7441, 74
    %v7703 = vpop.permute.xlu0 %7702
    %7704 = vrot.lane.b32.xlu0 %v7445, 74
    %v7705 = vpop.permute.xlu0 %7704
    %7706 = vrot.lane.b32.xlu0 %v7449, 74
    %v7707 = vpop.permute.xlu0 %7706
    %7708 = vrot.lane.b32.xlu0 %v7453, 74
    %v7709 = vpop.permute.xlu0 %7708
    %7710 = vrot.lane.b32.xlu0 %v7457, 74
    %v7711 = vpop.permute.xlu0 %7710
    %7712 = vrot.lane.b32.xlu0 %v7461, 74
    %v7713 = vpop.permute.xlu0 %7712
    %7714 = vrot.lane.b32.xlu0 %v7465, 74
    %v7715 = vpop.permute.xlu0 %7714
    %7724 = vst.msk [vmem:[%s7285 + $0x3] sm:$0x1] %vm1986, %v7701
    %7725 = vst.msk [vmem:[%s7285 + $0x13] sm:$0x1] %vm1986, %v7703
    %7726 = vst.msk [vmem:[%s7285 + $0x23] sm:$0x1] %vm1986, %v7705
    %7727 = vst.msk [vmem:[%s7285 + $0x33] sm:$0x1] %vm1986, %v7707
    %7728 = vst.msk [vmem:[%s7285 + $0x43] sm:$0x1] %vm1986, %v7709
    %7729 = vst.msk [vmem:[%s7285 + $0x53] sm:$0x1] %vm1986, %v7711
    %7730 = vst.msk [vmem:[%s7285 + $0x63] sm:$0x1] %vm1986, %v7713
    %7731 = vst.msk [vmem:[%s7285 + $0x73] sm:$0x1] %vm1986, %v7715
    %7732 = vrot.lane.b32.xlu0 %v7085, 74
    %v7733 = vpop.permute.xlu0 %7732
    %7734 = vrot.lane.b32.xlu0 %v7088, 74
    %v7735 = vpop.permute.xlu0 %7734
    %7736 = vrot.lane.b32.xlu0 %v7091, 74
    %v7737 = vpop.permute.xlu0 %7736
    %v7741 = vsel %vm2069, %v7733, 0.0
    %7742 = vadd.xlane.f32.xlu0 %v7741
    %v7743 = vpop.xlane.xlu0 %7742
    %v7744 = vsel %vm2069, %v7735, 0.0
    %7745 = vadd.xlane.f32.xlu0 %v7744
    %v7746 = vpop.xlane.xlu0 %7745
    %v7747 = vsel %vm2069, %v7737, 0.0
    %7748 = vadd.xlane.f32.xlu0 %v7747
    %v7749 = vpop.xlane.xlu0 %7748
    %v7750 = vadd.f32 %v7633, %v7743
    %v7751 = vadd.f32 %v7634, %v7746
    %v7752 = vadd.f32 %v7635, %v7749
    %7753 = vrot.lane.b32.xlu0 %v7309, 56
    %v7754 = vpop.permute.xlu0 %7753
    %7755 = vrot.lane.b32.xlu0 %v7313, 56
    %v7756 = vpop.permute.xlu0 %7755
    %7757 = vrot.lane.b32.xlu0 %v7317, 56
    %v7758 = vpop.permute.xlu0 %7757
    %7759 = vrot.lane.b32.xlu0 %v7321, 56
    %v7760 = vpop.permute.xlu0 %7759
    %7761 = vrot.lane.b32.xlu0 %v7325, 56
    %v7762 = vpop.permute.xlu0 %7761
    %7763 = vrot.lane.b32.xlu0 %v7329, 56
    %v7764 = vpop.permute.xlu0 %7763
    %7765 = vrot.lane.b32.xlu0 %v7333, 56
    %v7766 = vpop.permute.xlu0 %7765
    %7767 = vrot.lane.b32.xlu0 %v7337, 56
    %v7768 = vpop.permute.xlu0 %7767
    %7769 = vrot.lane.b32.xlu0 %v7341, 56
    %v7770 = vpop.permute.xlu0 %7769
    %7771 = vrot.lane.b32.xlu0 %v7345, 56
    %v7772 = vpop.permute.xlu0 %7771
    %7773 = vrot.lane.b32.xlu0 %v7349, 56
    %v7774 = vpop.permute.xlu0 %7773
    %7775 = vrot.lane.b32.xlu0 %v7353, 56
    %v7776 = vpop.permute.xlu0 %7775
    %7777 = vrot.lane.b32.xlu0 %v7357, 56
    %v7778 = vpop.permute.xlu0 %7777
    %7779 = vrot.lane.b32.xlu0 %v7361, 56
    %v7780 = vpop.permute.xlu0 %7779
    %7781 = vrot.lane.b32.xlu0 %v7365, 56
    %v7782 = vpop.permute.xlu0 %7781
    %7783 = vrot.lane.b32.xlu0 %v7369, 56
    %v7784 = vpop.permute.xlu0 %7783
    %7801 = vst.msk [vmem:[%s7210 + $0x4] sm:$0x1] %vm1986, %v7754
    %7802 = vst.msk [vmem:[%s7210 + $0x14] sm:$0x1] %vm1986, %v7756
    %7803 = vst.msk [vmem:[%s7210 + $0x24] sm:$0x1] %vm1986, %v7758
    %7804 = vst.msk [vmem:[%s7210 + $0x34] sm:$0x1] %vm1986, %v7760
    %7805 = vst.msk [vmem:[%s7210 + $0x44] sm:$0x1] %vm1986, %v7762
    %7806 = vst.msk [vmem:[%s7210 + $0x54] sm:$0x1] %vm1986, %v7764
    %7807 = vst.msk [vmem:[%s7210 + $0x64] sm:$0x1] %vm1986, %v7766
    %7808 = vst.msk [vmem:[%s7210 + $0x74] sm:$0x1] %vm1986, %v7768
    %7809 = vst.msk [vmem:[%s7210 + $0x84] sm:$0x1] %vm1986, %v7770
    %7810 = vst.msk [vmem:[%s7210 + $0x94] sm:$0x1] %vm1986, %v7772
    %7811 = vst.msk [vmem:[%s7210 + $0xa4] sm:$0x1] %vm1986, %v7774
    %7812 = vst.msk [vmem:[%s7210 + $0xb4] sm:$0x1] %vm1986, %v7776
    %7813 = vst.msk [vmem:[%s7210 + $0xc4] sm:$0x1] %vm1986, %v7778
    %7814 = vst.msk [vmem:[%s7210 + $0xd4] sm:$0x1] %vm1986, %v7780
    %7815 = vst.msk [vmem:[%s7210 + $0xe4] sm:$0x1] %vm1986, %v7782
    %7816 = vst.msk [vmem:[%s7210 + $0xf4] sm:$0x1] %vm1986, %v7784
    %7817 = vrot.lane.b32.xlu0 %v7437, 56
    %v7818 = vpop.permute.xlu0 %7817
    %7819 = vrot.lane.b32.xlu0 %v7441, 56
    %v7820 = vpop.permute.xlu0 %7819
    %7821 = vrot.lane.b32.xlu0 %v7445, 56
    %v7822 = vpop.permute.xlu0 %7821
    %7823 = vrot.lane.b32.xlu0 %v7449, 56
    %v7824 = vpop.permute.xlu0 %7823
    %7825 = vrot.lane.b32.xlu0 %v7453, 56
    %v7826 = vpop.permute.xlu0 %7825
    %7827 = vrot.lane.b32.xlu0 %v7457, 56
    %v7828 = vpop.permute.xlu0 %7827
    %7829 = vrot.lane.b32.xlu0 %v7461, 56
    %v7830 = vpop.permute.xlu0 %7829
    %7831 = vrot.lane.b32.xlu0 %v7465, 56
    %v7832 = vpop.permute.xlu0 %7831
    %7841 = vst.msk [vmem:[%s7285 + $0x4] sm:$0x1] %vm1986, %v7818
    %7842 = vst.msk [vmem:[%s7285 + $0x14] sm:$0x1] %vm1986, %v7820
    %7843 = vst.msk [vmem:[%s7285 + $0x24] sm:$0x1] %vm1986, %v7822
    %7844 = vst.msk [vmem:[%s7285 + $0x34] sm:$0x1] %vm1986, %v7824
    %7845 = vst.msk [vmem:[%s7285 + $0x44] sm:$0x1] %vm1986, %v7826
    %7846 = vst.msk [vmem:[%s7285 + $0x54] sm:$0x1] %vm1986, %v7828
    %7847 = vst.msk [vmem:[%s7285 + $0x64] sm:$0x1] %vm1986, %v7830
    %7848 = vst.msk [vmem:[%s7285 + $0x74] sm:$0x1] %vm1986, %v7832
    %7849 = vrot.lane.b32.xlu0 %v7085, 56
    %v7850 = vpop.permute.xlu0 %7849
    %7851 = vrot.lane.b32.xlu0 %v7088, 56
    %v7852 = vpop.permute.xlu0 %7851
    %7853 = vrot.lane.b32.xlu0 %v7091, 56
    %v7854 = vpop.permute.xlu0 %7853
    %v7858 = vsel %vm2069, %v7850, 0.0
    %7859 = vadd.xlane.f32.xlu0 %v7858
    %v7860 = vpop.xlane.xlu0 %7859
    %v7861 = vsel %vm2069, %v7852, 0.0
    %7862 = vadd.xlane.f32.xlu0 %v7861
    %v7863 = vpop.xlane.xlu0 %7862
    %v7864 = vsel %vm2069, %v7854, 0.0
    %7865 = vadd.xlane.f32.xlu0 %v7864
    %v7866 = vpop.xlane.xlu0 %7865
    %v7867 = vadd.f32 %v7750, %v7860
    %v7868 = vadd.f32 %v7751, %v7863
    %v7869 = vadd.f32 %v7752, %v7866
    %7870 = vrot.lane.b32.xlu0 %v7309, 38
    %v7871 = vpop.permute.xlu0 %7870
    %7872 = vrot.lane.b32.xlu0 %v7313, 38
    %v7873 = vpop.permute.xlu0 %7872
    %7874 = vrot.lane.b32.xlu0 %v7317, 38
    %v7875 = vpop.permute.xlu0 %7874
    %7876 = vrot.lane.b32.xlu0 %v7321, 38
    %v7877 = vpop.permute.xlu0 %7876
    %7878 = vrot.lane.b32.xlu0 %v7325, 38
    %v7879 = vpop.permute.xlu0 %7878
    %7880 = vrot.lane.b32.xlu0 %v7329, 38
    %v7881 = vpop.permute.xlu0 %7880
    %7882 = vrot.lane.b32.xlu0 %v7333, 38
    %v7883 = vpop.permute.xlu0 %7882
    %7884 = vrot.lane.b32.xlu0 %v7337, 38
    %v7885 = vpop.permute.xlu0 %7884
    %7886 = vrot.lane.b32.xlu0 %v7341, 38
    %v7887 = vpop.permute.xlu0 %7886
    %7888 = vrot.lane.b32.xlu0 %v7345, 38
    %v7889 = vpop.permute.xlu0 %7888
    %7890 = vrot.lane.b32.xlu0 %v7349, 38
    %v7891 = vpop.permute.xlu0 %7890
    %7892 = vrot.lane.b32.xlu0 %v7353, 38
    %v7893 = vpop.permute.xlu0 %7892
    %7894 = vrot.lane.b32.xlu0 %v7357, 38
    %v7895 = vpop.permute.xlu0 %7894
    %7896 = vrot.lane.b32.xlu0 %v7361, 38
    %v7897 = vpop.permute.xlu0 %7896
    %7898 = vrot.lane.b32.xlu0 %v7365, 38
    %v7899 = vpop.permute.xlu0 %7898
    %7900 = vrot.lane.b32.xlu0 %v7369, 38
    %v7901 = vpop.permute.xlu0 %7900
    %7918 = vst.msk [vmem:[%s7210 + $0x5] sm:$0x1] %vm1986, %v7871
    %7919 = vst.msk [vmem:[%s7210 + $0x15] sm:$0x1] %vm1986, %v7873
    %7920 = vst.msk [vmem:[%s7210 + $0x25] sm:$0x1] %vm1986, %v7875
    %7921 = vst.msk [vmem:[%s7210 + $0x35] sm:$0x1] %vm1986, %v7877
    %7922 = vst.msk [vmem:[%s7210 + $0x45] sm:$0x1] %vm1986, %v7879
    %7923 = vst.msk [vmem:[%s7210 + $0x55] sm:$0x1] %vm1986, %v7881
    %7924 = vst.msk [vmem:[%s7210 + $0x65] sm:$0x1] %vm1986, %v7883
    %7925 = vst.msk [vmem:[%s7210 + $0x75] sm:$0x1] %vm1986, %v7885
    %7926 = vst.msk [vmem:[%s7210 + $0x85] sm:$0x1] %vm1986, %v7887
    %7927 = vst.msk [vmem:[%s7210 + $0x95] sm:$0x1] %vm1986, %v7889
    %7928 = vst.msk [vmem:[%s7210 + $0xa5] sm:$0x1] %vm1986, %v7891
    %7929 = vst.msk [vmem:[%s7210 + $0xb5] sm:$0x1] %vm1986, %v7893
    %7930 = vst.msk [vmem:[%s7210 + $0xc5] sm:$0x1] %vm1986, %v7895
    %7931 = vst.msk [vmem:[%s7210 + $0xd5] sm:$0x1] %vm1986, %v7897
    %7932 = vst.msk [vmem:[%s7210 + $0xe5] sm:$0x1] %vm1986, %v7899
    %7933 = vst.msk [vmem:[%s7210 + $0xf5] sm:$0x1] %vm1986, %v7901
    %7934 = vrot.lane.b32.xlu0 %v7437, 38
    %v7935 = vpop.permute.xlu0 %7934
    %7936 = vrot.lane.b32.xlu0 %v7441, 38
    %v7937 = vpop.permute.xlu0 %7936
    %7938 = vrot.lane.b32.xlu0 %v7445, 38
    %v7939 = vpop.permute.xlu0 %7938
    %7940 = vrot.lane.b32.xlu0 %v7449, 38
    %v7941 = vpop.permute.xlu0 %7940
    %7942 = vrot.lane.b32.xlu0 %v7453, 38
    %v7943 = vpop.permute.xlu0 %7942
    %7944 = vrot.lane.b32.xlu0 %v7457, 38
    %v7945 = vpop.permute.xlu0 %7944
    %7946 = vrot.lane.b32.xlu0 %v7461, 38
    %v7947 = vpop.permute.xlu0 %7946
    %7948 = vrot.lane.b32.xlu0 %v7465, 38
    %v7949 = vpop.permute.xlu0 %7948
    %7958 = vst.msk [vmem:[%s7285 + $0x5] sm:$0x1] %vm1986, %v7935
    %7959 = vst.msk [vmem:[%s7285 + $0x15] sm:$0x1] %vm1986, %v7937
    %7960 = vst.msk [vmem:[%s7285 + $0x25] sm:$0x1] %vm1986, %v7939
    %7961 = vst.msk [vmem:[%s7285 + $0x35] sm:$0x1] %vm1986, %v7941
    %7962 = vst.msk [vmem:[%s7285 + $0x45] sm:$0x1] %vm1986, %v7943
    %7963 = vst.msk [vmem:[%s7285 + $0x55] sm:$0x1] %vm1986, %v7945
    %7964 = vst.msk [vmem:[%s7285 + $0x65] sm:$0x1] %vm1986, %v7947
    %7965 = vst.msk [vmem:[%s7285 + $0x75] sm:$0x1] %vm1986, %v7949
    %7966 = vrot.lane.b32.xlu0 %v7085, 38
    %v7967 = vpop.permute.xlu0 %7966
    %7968 = vrot.lane.b32.xlu0 %v7088, 38
    %v7969 = vpop.permute.xlu0 %7968
    %7970 = vrot.lane.b32.xlu0 %v7091, 38
    %v7971 = vpop.permute.xlu0 %7970
    %v7975 = vsel %vm2069, %v7967, 0.0
    %7976 = vadd.xlane.f32.xlu0 %v7975
    %v7977 = vpop.xlane.xlu0 %7976
    %v7978 = vsel %vm2069, %v7969, 0.0
    %7979 = vadd.xlane.f32.xlu0 %v7978
    %v7980 = vpop.xlane.xlu0 %7979
    %v7981 = vsel %vm2069, %v7971, 0.0
    %7982 = vadd.xlane.f32.xlu0 %v7981
    %v7983 = vpop.xlane.xlu0 %7982
    %v7984 = vadd.f32 %v7867, %v7977
    %v7985 = vadd.f32 %v7868, %v7980
    %v7986 = vadd.f32 %v7869, %v7983
    %7987 = vrot.lane.b32.xlu0 %v7309, 20
    %v7988 = vpop.permute.xlu0 %7987
    %7989 = vrot.lane.b32.xlu0 %v7313, 20
    %v7990 = vpop.permute.xlu0 %7989
    %7991 = vrot.lane.b32.xlu0 %v7317, 20
    %v7992 = vpop.permute.xlu0 %7991
    %7993 = vrot.lane.b32.xlu0 %v7321, 20
    %v7994 = vpop.permute.xlu0 %7993
    %7995 = vrot.lane.b32.xlu0 %v7325, 20
    %v7996 = vpop.permute.xlu0 %7995
    %7997 = vrot.lane.b32.xlu0 %v7329, 20
    %v7998 = vpop.permute.xlu0 %7997
    %7999 = vrot.lane.b32.xlu0 %v7333, 20
    %v8000 = vpop.permute.xlu0 %7999
    %8001 = vrot.lane.b32.xlu0 %v7337, 20
    %v8002 = vpop.permute.xlu0 %8001
    %8003 = vrot.lane.b32.xlu0 %v7341, 20
    %v8004 = vpop.permute.xlu0 %8003
    %8005 = vrot.lane.b32.xlu0 %v7345, 20
    %v8006 = vpop.permute.xlu0 %8005
    %8007 = vrot.lane.b32.xlu0 %v7349, 20
    %v8008 = vpop.permute.xlu0 %8007
    %8009 = vrot.lane.b32.xlu0 %v7353, 20
    %v8010 = vpop.permute.xlu0 %8009
    %8011 = vrot.lane.b32.xlu0 %v7357, 20
    %v8012 = vpop.permute.xlu0 %8011
    %8013 = vrot.lane.b32.xlu0 %v7361, 20
    %v8014 = vpop.permute.xlu0 %8013
    %8015 = vrot.lane.b32.xlu0 %v7365, 20
    %v8016 = vpop.permute.xlu0 %8015
    %8017 = vrot.lane.b32.xlu0 %v7369, 20
    %v8018 = vpop.permute.xlu0 %8017
    %8035 = vst.msk [vmem:[%s7210 + $0x6] sm:$0x1] %vm1986, %v7988
    %8036 = vst.msk [vmem:[%s7210 + $0x16] sm:$0x1] %vm1986, %v7990
    %8037 = vst.msk [vmem:[%s7210 + $0x26] sm:$0x1] %vm1986, %v7992
    %8038 = vst.msk [vmem:[%s7210 + $0x36] sm:$0x1] %vm1986, %v7994
    %8039 = vst.msk [vmem:[%s7210 + $0x46] sm:$0x1] %vm1986, %v7996
    %8040 = vst.msk [vmem:[%s7210 + $0x56] sm:$0x1] %vm1986, %v7998
    %8041 = vst.msk [vmem:[%s7210 + $0x66] sm:$0x1] %vm1986, %v8000
    %8042 = vst.msk [vmem:[%s7210 + $0x76] sm:$0x1] %vm1986, %v8002
    %8043 = vst.msk [vmem:[%s7210 + $0x86] sm:$0x1] %vm1986, %v8004
    %8044 = vst.msk [vmem:[%s7210 + $0x96] sm:$0x1] %vm1986, %v8006
    %8045 = vst.msk [vmem:[%s7210 + $0xa6] sm:$0x1] %vm1986, %v8008
    %8046 = vst.msk [vmem:[%s7210 + $0xb6] sm:$0x1] %vm1986, %v8010
    %8047 = vst.msk [vmem:[%s7210 + $0xc6] sm:$0x1] %vm1986, %v8012
    %8048 = vst.msk [vmem:[%s7210 + $0xd6] sm:$0x1] %vm1986, %v8014
    %8049 = vst.msk [vmem:[%s7210 + $0xe6] sm:$0x1] %vm1986, %v8016
    %8050 = vst.msk [vmem:[%s7210 + $0xf6] sm:$0x1] %vm1986, %v8018
    %8051 = vrot.lane.b32.xlu0 %v7437, 20
    %v8052 = vpop.permute.xlu0 %8051
    %8053 = vrot.lane.b32.xlu0 %v7441, 20
    %v8054 = vpop.permute.xlu0 %8053
    %8055 = vrot.lane.b32.xlu0 %v7445, 20
    %v8056 = vpop.permute.xlu0 %8055
    %8057 = vrot.lane.b32.xlu0 %v7449, 20
    %v8058 = vpop.permute.xlu0 %8057
    %8059 = vrot.lane.b32.xlu0 %v7453, 20
    %v8060 = vpop.permute.xlu0 %8059
    %8061 = vrot.lane.b32.xlu0 %v7457, 20
    %v8062 = vpop.permute.xlu0 %8061
    %8063 = vrot.lane.b32.xlu0 %v7461, 20
    %v8064 = vpop.permute.xlu0 %8063
    %8065 = vrot.lane.b32.xlu0 %v7465, 20
    %v8066 = vpop.permute.xlu0 %8065
    %8075 = vst.msk [vmem:[%s7285 + $0x6] sm:$0x1] %vm1986, %v8052
    %8076 = vst.msk [vmem:[%s7285 + $0x16] sm:$0x1] %vm1986, %v8054
    %8077 = vst.msk [vmem:[%s7285 + $0x26] sm:$0x1] %vm1986, %v8056
    %8078 = vst.msk [vmem:[%s7285 + $0x36] sm:$0x1] %vm1986, %v8058
    %8079 = vst.msk [vmem:[%s7285 + $0x46] sm:$0x1] %vm1986, %v8060
    %8080 = vst.msk [vmem:[%s7285 + $0x56] sm:$0x1] %vm1986, %v8062
    %8081 = vst.msk [vmem:[%s7285 + $0x66] sm:$0x1] %vm1986, %v8064
    %8082 = vst.msk [vmem:[%s7285 + $0x76] sm:$0x1] %vm1986, %v8066
    %8083 = vrot.lane.b32.xlu0 %v7085, 20
    %v8084 = vpop.permute.xlu0 %8083
    %8085 = vrot.lane.b32.xlu0 %v7088, 20
    %v8086 = vpop.permute.xlu0 %8085
    %8087 = vrot.lane.b32.xlu0 %v7091, 20
    %v8088 = vpop.permute.xlu0 %8087
    %v8092 = vsel %vm2069, %v8084, 0.0
    %8093 = vadd.xlane.f32.xlu0 %v8092
    %v8094 = vpop.xlane.xlu0 %8093
    %v8095 = vsel %vm2069, %v8086, 0.0
    %8096 = vadd.xlane.f32.xlu0 %v8095
    %v8097 = vpop.xlane.xlu0 %8096
    %v8098 = vsel %vm2069, %v8088, 0.0
    %8099 = vadd.xlane.f32.xlu0 %v8098
    %v8100 = vpop.xlane.xlu0 %8099
    %v8101 = vadd.f32 %v7984, %v8094
    %v8102 = vadd.f32 %v7985, %v8097
    %v8103 = vadd.f32 %v7986, %v8100
    %v8106 = vcombine.low %v7085, %v7086
    %v8107 = vcombine.high %v7085, %v7086
    %v8109 = vunpack.c.l.s4 1966171168
    %v8110 = vunpack.c.0.s8 %v8109
    %v8111 = vlaneseq
    %v8112 = vshrl.u32 %v8111, 7
    %v8113 = vsub.s32 %v8110, %v8112
    %v8114 = vrot.slane %v8106, %v8113
    %v8116 = vunpack.c.l.s4 1966171168
    %v8117 = vunpack.c.0.s8 %v8116
    %v8118 = vlaneseq
    %v8119 = vshrl.u32 %v8118, 7
    %v8120 = vsub.s32 %v8117, %v8119
    %v8121 = vrot.slane %v8107, %v8120
    %v8122 = vcombine.high %v8114, %v8114
    %v8123 = vcombine.high %v8121, %v8121
    %v8125 = vunpack.c.l.s4 1966171168
    %v8126 = vunpack.c.0.s8 %v8125
    %v8127 = vlaneseq
    %v8128 = vshrl.u32 %v8127, 7
    %v8129 = vsub.s32 %v8126, %v8128
    %v8130 = vrot.slane %v8114, %v8129
    %v8132 = vunpack.c.l.s4 1966171168
    %v8133 = vunpack.c.0.s8 %v8132
    %v8134 = vlaneseq
    %v8135 = vshrl.u32 %v8134, 7
    %v8136 = vsub.s32 %v8133, %v8135
    %v8137 = vrot.slane %v8121, %v8136
    %v8139 = vunpack.c.l.s4 1966171168
    %v8140 = vunpack.c.0.s8 %v8139
    %v8141 = vlaneseq
    %v8142 = vshrl.u32 %v8141, 7
    %v8143 = vsub.s32 %v8140, %v8142
    %v8144 = vrot.slane %v8122, %v8143
    %v8146 = vunpack.c.l.s4 1966171168
    %v8147 = vunpack.c.0.s8 %v8146
    %v8148 = vlaneseq
    %v8149 = vshrl.u32 %v8148, 7
    %v8150 = vsub.s32 %v8147, %v8149
    %v8151 = vrot.slane %v8123, %v8150
    %v8152 = vcombine.high %v8130, %v8130
    %v8153 = vcombine.high %v8137, %v8137
    %v8154 = vcombine.high %v8144, %v8144
    %v8155 = vcombine.high %v8151, %v8151
    %v8156 = vcombine.low %v7088, %v7089
    %v8157 = vcombine.high %v7088, %v7089
    %v8159 = vunpack.c.l.s4 1966171168
    %v8160 = vunpack.c.0.s8 %v8159
    %v8161 = vlaneseq
    %v8162 = vshrl.u32 %v8161, 7
    %v8163 = vsub.s32 %v8160, %v8162
    %v8164 = vrot.slane %v8156, %v8163
    %v8166 = vunpack.c.l.s4 1966171168
    %v8167 = vunpack.c.0.s8 %v8166
    %v8168 = vlaneseq
    %v8169 = vshrl.u32 %v8168, 7
    %v8170 = vsub.s32 %v8167, %v8169
    %v8171 = vrot.slane %v8157, %v8170
    %v8172 = vcombine.high %v8164, %v8164
    %v8173 = vcombine.high %v8171, %v8171
    %v8175 = vunpack.c.l.s4 1966171168
    %v8176 = vunpack.c.0.s8 %v8175
    %v8177 = vlaneseq
    %v8178 = vshrl.u32 %v8177, 7
    %v8179 = vsub.s32 %v8176, %v8178
    %v8180 = vrot.slane %v8164, %v8179
    %v8182 = vunpack.c.l.s4 1966171168
    %v8183 = vunpack.c.0.s8 %v8182
    %v8184 = vlaneseq
    %v8185 = vshrl.u32 %v8184, 7
    %v8186 = vsub.s32 %v8183, %v8185
    %v8187 = vrot.slane %v8171, %v8186
    %v8189 = vunpack.c.l.s4 1966171168
    %v8190 = vunpack.c.0.s8 %v8189
    %v8191 = vlaneseq
    %v8192 = vshrl.u32 %v8191, 7
    %v8193 = vsub.s32 %v8190, %v8192
    %v8194 = vrot.slane %v8172, %v8193
    %v8196 = vunpack.c.l.s4 1966171168
    %v8197 = vunpack.c.0.s8 %v8196
    %v8198 = vlaneseq
    %v8199 = vshrl.u32 %v8198, 7
    %v8200 = vsub.s32 %v8197, %v8199
    %v8201 = vrot.slane %v8173, %v8200
    %v8202 = vcombine.high %v8180, %v8180
    %v8203 = vcombine.high %v8187, %v8187
    %v8204 = vcombine.high %v8194, %v8194
    %v8205 = vcombine.high %v8201, %v8201
    %v8206 = vlaneseq
    %v8207 = vshrl.u32 %v8206, 7
    %v8208 = vsub.s32 0, %v8207
    %v8209 = vrot.slane %v8130, %v8208
    %v8210 = vlaneseq
    %v8211 = vshrl.u32 %v8210, 7
    %v8212 = vsub.s32 1, %v8211
    %v8213 = vrot.slane %v8130, %v8212
    %v8214 = vlaneseq
    %v8215 = vshrl.u32 %v8214, 7
    %v8216 = vsub.s32 0, %v8215
    %v8217 = vrot.slane %v8144, %v8216
    %v8218 = vlaneseq
    %v8219 = vshrl.u32 %v8218, 7
    %v8220 = vsub.s32 1, %v8219
    %v8221 = vrot.slane %v8144, %v8220
    %v8222 = vlaneseq
    %v8223 = vshrl.u32 %v8222, 7
    %v8224 = vsub.s32 0, %v8223
    %v8225 = vrot.slane %v8152, %v8224
    %v8226 = vlaneseq
    %v8227 = vshrl.u32 %v8226, 7
    %v8228 = vsub.s32 1, %v8227
    %v8229 = vrot.slane %v8152, %v8228
    %v8230 = vlaneseq
    %v8231 = vshrl.u32 %v8230, 7
    %v8232 = vsub.s32 0, %v8231
    %v8233 = vrot.slane %v8154, %v8232
    %v8234 = vlaneseq
    %v8235 = vshrl.u32 %v8234, 7
    %v8236 = vsub.s32 1, %v8235
    %v8237 = vrot.slane %v8154, %v8236
    %v8238 = vlaneseq
    %v8239 = vshrl.u32 %v8238, 7
    %v8240 = vsub.s32 0, %v8239
    %v8241 = vrot.slane %v8137, %v8240
    %v8242 = vlaneseq
    %v8243 = vshrl.u32 %v8242, 7
    %v8244 = vsub.s32 1, %v8243
    %v8245 = vrot.slane %v8137, %v8244
    %v8246 = vlaneseq
    %v8247 = vshrl.u32 %v8246, 7
    %v8248 = vsub.s32 0, %v8247
    %v8249 = vrot.slane %v8151, %v8248
    %v8250 = vlaneseq
    %v8251 = vshrl.u32 %v8250, 7
    %v8252 = vsub.s32 1, %v8251
    %v8253 = vrot.slane %v8151, %v8252
    %v8254 = vlaneseq
    %v8255 = vshrl.u32 %v8254, 7
    %v8256 = vsub.s32 0, %v8255
    %v8257 = vrot.slane %v8153, %v8256
    %v8258 = vlaneseq
    %v8259 = vshrl.u32 %v8258, 7
    %v8260 = vsub.s32 1, %v8259
    %v8261 = vrot.slane %v8153, %v8260
    %v8262 = vlaneseq
    %v8263 = vshrl.u32 %v8262, 7
    %v8264 = vsub.s32 0, %v8263
    %v8265 = vrot.slane %v8155, %v8264
    %v8266 = vlaneseq
    %v8267 = vshrl.u32 %v8266, 7
    %v8268 = vsub.s32 1, %v8267
    %v8269 = vrot.slane %v8155, %v8268
    %v8270 = vlaneseq
    %v8271 = vshrl.u32 %v8270, 7
    %v8272 = vsub.s32 0, %v8271
    %v8273 = vrot.slane %v8180, %v8272
    %v8274 = vlaneseq
    %v8275 = vshrl.u32 %v8274, 7
    %v8276 = vsub.s32 1, %v8275
    %v8277 = vrot.slane %v8180, %v8276
    %v8278 = vlaneseq
    %v8279 = vshrl.u32 %v8278, 7
    %v8280 = vsub.s32 0, %v8279
    %v8281 = vrot.slane %v8194, %v8280
    %v8282 = vlaneseq
    %v8283 = vshrl.u32 %v8282, 7
    %v8284 = vsub.s32 1, %v8283
    %v8285 = vrot.slane %v8194, %v8284
    %v8286 = vlaneseq
    %v8287 = vshrl.u32 %v8286, 7
    %v8288 = vsub.s32 0, %v8287
    %v8289 = vrot.slane %v8202, %v8288
    %v8290 = vlaneseq
    %v8291 = vshrl.u32 %v8290, 7
    %v8292 = vsub.s32 1, %v8291
    %v8293 = vrot.slane %v8202, %v8292
    %v8294 = vlaneseq
    %v8295 = vshrl.u32 %v8294, 7
    %v8296 = vsub.s32 0, %v8295
    %v8297 = vrot.slane %v8204, %v8296
    %v8298 = vlaneseq
    %v8299 = vshrl.u32 %v8298, 7
    %v8300 = vsub.s32 1, %v8299
    %v8301 = vrot.slane %v8204, %v8300
    %v8302 = vlaneseq
    %v8303 = vshrl.u32 %v8302, 7
    %v8304 = vsub.s32 0, %v8303
    %v8305 = vrot.slane %v8187, %v8304
    %v8306 = vlaneseq
    %v8307 = vshrl.u32 %v8306, 7
    %v8308 = vsub.s32 1, %v8307
    %v8309 = vrot.slane %v8187, %v8308
    %v8310 = vlaneseq
    %v8311 = vshrl.u32 %v8310, 7
    %v8312 = vsub.s32 0, %v8311
    %v8313 = vrot.slane %v8201, %v8312
    %v8314 = vlaneseq
    %v8315 = vshrl.u32 %v8314, 7
    %v8316 = vsub.s32 1, %v8315
    %v8317 = vrot.slane %v8201, %v8316
    %v8318 = vlaneseq
    %v8319 = vshrl.u32 %v8318, 7
    %v8320 = vsub.s32 0, %v8319
    %v8321 = vrot.slane %v8203, %v8320
    %v8322 = vlaneseq
    %v8323 = vshrl.u32 %v8322, 7
    %v8324 = vsub.s32 1, %v8323
    %v8325 = vrot.slane %v8203, %v8324
    %v8326 = vlaneseq
    %v8327 = vshrl.u32 %v8326, 7
    %v8328 = vsub.s32 0, %v8327
    %v8329 = vrot.slane %v8205, %v8328
    %v8330 = vlaneseq
    %v8331 = vshrl.u32 %v8330, 7
    %v8332 = vsub.s32 1, %v8331
    %v8333 = vrot.slane %v8205, %v8332
    %8334 = vrot.lane.b32.xlu0 %v8209, 2
    %v8335 = vpop.permute.xlu0 %8334
    %8336 = vrot.lane.b32.xlu0 %v8213, 2
    %v8337 = vpop.permute.xlu0 %8336
    %8338 = vrot.lane.b32.xlu0 %v8217, 2
    %v8339 = vpop.permute.xlu0 %8338
    %8340 = vrot.lane.b32.xlu0 %v8221, 2
    %v8341 = vpop.permute.xlu0 %8340
    %8342 = vrot.lane.b32.xlu0 %v8225, 2
    %v8343 = vpop.permute.xlu0 %8342
    %8344 = vrot.lane.b32.xlu0 %v8229, 2
    %v8345 = vpop.permute.xlu0 %8344
    %8346 = vrot.lane.b32.xlu0 %v8233, 2
    %v8347 = vpop.permute.xlu0 %8346
    %8348 = vrot.lane.b32.xlu0 %v8237, 2
    %v8349 = vpop.permute.xlu0 %8348
    %8350 = vrot.lane.b32.xlu0 %v8241, 2
    %v8351 = vpop.permute.xlu0 %8350
    %8352 = vrot.lane.b32.xlu0 %v8245, 2
    %v8353 = vpop.permute.xlu0 %8352
    %8354 = vrot.lane.b32.xlu0 %v8249, 2
    %v8355 = vpop.permute.xlu0 %8354
    %8356 = vrot.lane.b32.xlu0 %v8253, 2
    %v8357 = vpop.permute.xlu0 %8356
    %8358 = vrot.lane.b32.xlu0 %v8257, 2
    %v8359 = vpop.permute.xlu0 %8358
    %8360 = vrot.lane.b32.xlu0 %v8261, 2
    %v8361 = vpop.permute.xlu0 %8360
    %8362 = vrot.lane.b32.xlu0 %v8265, 2
    %v8363 = vpop.permute.xlu0 %8362
    %8364 = vrot.lane.b32.xlu0 %v8269, 2
    %v8365 = vpop.permute.xlu0 %8364
    %8366 = vrot.lane.b32.xlu0 %v8273, 2
    %v8367 = vpop.permute.xlu0 %8366
    %8368 = vrot.lane.b32.xlu0 %v8277, 2
    %v8369 = vpop.permute.xlu0 %8368
    %8370 = vrot.lane.b32.xlu0 %v8281, 2
    %v8371 = vpop.permute.xlu0 %8370
    %8372 = vrot.lane.b32.xlu0 %v8285, 2
    %v8373 = vpop.permute.xlu0 %8372
    %8374 = vrot.lane.b32.xlu0 %v8289, 2
    %v8375 = vpop.permute.xlu0 %8374
    %8376 = vrot.lane.b32.xlu0 %v8293, 2
    %v8377 = vpop.permute.xlu0 %8376
    %8378 = vrot.lane.b32.xlu0 %v8297, 2
    %v8379 = vpop.permute.xlu0 %8378
    %8380 = vrot.lane.b32.xlu0 %v8301, 2
    %v8381 = vpop.permute.xlu0 %8380
    %8382 = vrot.lane.b32.xlu0 %v8305, 2
    %v8383 = vpop.permute.xlu0 %8382
    %8384 = vrot.lane.b32.xlu0 %v8309, 2
    %v8385 = vpop.permute.xlu0 %8384
    %8386 = vrot.lane.b32.xlu0 %v8313, 2
    %v8387 = vpop.permute.xlu0 %8386
    %8388 = vrot.lane.b32.xlu0 %v8317, 2
    %v8389 = vpop.permute.xlu0 %8388
    %8390 = vrot.lane.b32.xlu0 %v8321, 2
    %v8391 = vpop.permute.xlu0 %8390
    %8392 = vrot.lane.b32.xlu0 %v8325, 2
    %v8393 = vpop.permute.xlu0 %8392
    %8394 = vrot.lane.b32.xlu0 %v8329, 2
    %v8395 = vpop.permute.xlu0 %8394
    %8396 = vrot.lane.b32.xlu0 %v8333, 2
    %v8397 = vpop.permute.xlu0 %8396
    %v8398 = vsel %vm3174, %v8335, %v8337
    %v8399 = vsel %vm3174, %v8339, %v8341
    %v8400 = vsel %vm3174, %v8343, %v8345
    %v8401 = vsel %vm3174, %v8347, %v8349
    %v8402 = vsel %vm3174, %v8351, %v8353
    %v8403 = vsel %vm3174, %v8355, %v8357
    %v8404 = vsel %vm3174, %v8359, %v8361
    %v8405 = vsel %vm3174, %v8363, %v8365
    %v8406 = vsel %vm3174, %v8367, %v8369
    %v8407 = vsel %vm3174, %v8371, %v8373
    %v8408 = vsel %vm3174, %v8375, %v8377
    %v8409 = vsel %vm3174, %v8379, %v8381
    %v8410 = vsel %vm3174, %v8383, %v8385
    %v8411 = vsel %vm3174, %v8387, %v8389
    %v8412 = vsel %vm3174, %v8391, %v8393
    %v8413 = vsel %vm3174, %v8395, %v8397
    %8430 = vst.msk [vmem:[%s7210 + $0x7] sm:$0x1] %vm1986, %v8398
    %8431 = vst.msk [vmem:[%s7210 + $0x17] sm:$0x1] %vm1986, %v8399
    %8432 = vst.msk [vmem:[%s7210 + $0x27] sm:$0x1] %vm1986, %v8400
    %8433 = vst.msk [vmem:[%s7210 + $0x37] sm:$0x1] %vm1986, %v8401
    %8434 = vst.msk [vmem:[%s7210 + $0x47] sm:$0x1] %vm1986, %v8402
    %8435 = vst.msk [vmem:[%s7210 + $0x57] sm:$0x1] %vm1986, %v8403
    %8436 = vst.msk [vmem:[%s7210 + $0x67] sm:$0x1] %vm1986, %v8404
    %8437 = vst.msk [vmem:[%s7210 + $0x77] sm:$0x1] %vm1986, %v8405
    %8438 = vst.msk [vmem:[%s7210 + $0x87] sm:$0x1] %vm1986, %v8406
    %8439 = vst.msk [vmem:[%s7210 + $0x97] sm:$0x1] %vm1986, %v8407
    %8440 = vst.msk [vmem:[%s7210 + $0xa7] sm:$0x1] %vm1986, %v8408
    %8441 = vst.msk [vmem:[%s7210 + $0xb7] sm:$0x1] %vm1986, %v8409
    %8442 = vst.msk [vmem:[%s7210 + $0xc7] sm:$0x1] %vm1986, %v8410
    %8443 = vst.msk [vmem:[%s7210 + $0xd7] sm:$0x1] %vm1986, %v8411
    %8444 = vst.msk [vmem:[%s7210 + $0xe7] sm:$0x1] %vm1986, %v8412
    %8445 = vst.msk [vmem:[%s7210 + $0xf7] sm:$0x1] %vm1986, %v8413
    %v8447 = vcombine.low %v7091, %v7092
    %v8448 = vcombine.high %v7091, %v7092
    %v8450 = vunpack.c.l.s4 1966171168
    %v8451 = vunpack.c.0.s8 %v8450
    %v8452 = vlaneseq
    %v8453 = vshrl.u32 %v8452, 7
    %v8454 = vsub.s32 %v8451, %v8453
    %v8455 = vrot.slane %v8447, %v8454
    %v8457 = vunpack.c.l.s4 1966171168
    %v8458 = vunpack.c.0.s8 %v8457
    %v8459 = vlaneseq
    %v8460 = vshrl.u32 %v8459, 7
    %v8461 = vsub.s32 %v8458, %v8460
    %v8462 = vrot.slane %v8448, %v8461
    %v8463 = vcombine.high %v8455, %v8455
    %v8464 = vcombine.high %v8462, %v8462
    %v8466 = vunpack.c.l.s4 1966171168
    %v8467 = vunpack.c.0.s8 %v8466
    %v8468 = vlaneseq
    %v8469 = vshrl.u32 %v8468, 7
    %v8470 = vsub.s32 %v8467, %v8469
    %v8471 = vrot.slane %v8455, %v8470
    %v8473 = vunpack.c.l.s4 1966171168
    %v8474 = vunpack.c.0.s8 %v8473
    %v8475 = vlaneseq
    %v8476 = vshrl.u32 %v8475, 7
    %v8477 = vsub.s32 %v8474, %v8476
    %v8478 = vrot.slane %v8462, %v8477
    %v8480 = vunpack.c.l.s4 1966171168
    %v8481 = vunpack.c.0.s8 %v8480
    %v8482 = vlaneseq
    %v8483 = vshrl.u32 %v8482, 7
    %v8484 = vsub.s32 %v8481, %v8483
    %v8485 = vrot.slane %v8463, %v8484
    %v8487 = vunpack.c.l.s4 1966171168
    %v8488 = vunpack.c.0.s8 %v8487
    %v8489 = vlaneseq
    %v8490 = vshrl.u32 %v8489, 7
    %v8491 = vsub.s32 %v8488, %v8490
    %v8492 = vrot.slane %v8464, %v8491
    %v8493 = vcombine.high %v8471, %v8471
    %v8494 = vcombine.high %v8478, %v8478
    %v8495 = vcombine.high %v8485, %v8485
    %v8496 = vcombine.high %v8492, %v8492
    %v8497 = vlaneseq
    %v8498 = vshrl.u32 %v8497, 7
    %v8499 = vsub.s32 0, %v8498
    %v8500 = vrot.slane %v8471, %v8499
    %v8501 = vlaneseq
    %v8502 = vshrl.u32 %v8501, 7
    %v8503 = vsub.s32 1, %v8502
    %v8504 = vrot.slane %v8471, %v8503
    %v8505 = vlaneseq
    %v8506 = vshrl.u32 %v8505, 7
    %v8507 = vsub.s32 0, %v8506
    %v8508 = vrot.slane %v8485, %v8507
    %v8509 = vlaneseq
    %v8510 = vshrl.u32 %v8509, 7
    %v8511 = vsub.s32 1, %v8510
    %v8512 = vrot.slane %v8485, %v8511
    %v8513 = vlaneseq
    %v8514 = vshrl.u32 %v8513, 7
    %v8515 = vsub.s32 0, %v8514
    %v8516 = vrot.slane %v8493, %v8515
    %v8517 = vlaneseq
    %v8518 = vshrl.u32 %v8517, 7
    %v8519 = vsub.s32 1, %v8518
    %v8520 = vrot.slane %v8493, %v8519
    %v8521 = vlaneseq
    %v8522 = vshrl.u32 %v8521, 7
    %v8523 = vsub.s32 0, %v8522
    %v8524 = vrot.slane %v8495, %v8523
    %v8525 = vlaneseq
    %v8526 = vshrl.u32 %v8525, 7
    %v8527 = vsub.s32 1, %v8526
    %v8528 = vrot.slane %v8495, %v8527
    %v8529 = vlaneseq
    %v8530 = vshrl.u32 %v8529, 7
    %v8531 = vsub.s32 0, %v8530
    %v8532 = vrot.slane %v8478, %v8531
    %v8533 = vlaneseq
    %v8534 = vshrl.u32 %v8533, 7
    %v8535 = vsub.s32 1, %v8534
    %v8536 = vrot.slane %v8478, %v8535
    %v8537 = vlaneseq
    %v8538 = vshrl.u32 %v8537, 7
    %v8539 = vsub.s32 0, %v8538
    %v8540 = vrot.slane %v8492, %v8539
    %v8541 = vlaneseq
    %v8542 = vshrl.u32 %v8541, 7
    %v8543 = vsub.s32 1, %v8542
    %v8544 = vrot.slane %v8492, %v8543
    %v8545 = vlaneseq
    %v8546 = vshrl.u32 %v8545, 7
    %v8547 = vsub.s32 0, %v8546
    %v8548 = vrot.slane %v8494, %v8547
    %v8549 = vlaneseq
    %v8550 = vshrl.u32 %v8549, 7
    %v8551 = vsub.s32 1, %v8550
    %v8552 = vrot.slane %v8494, %v8551
    %v8553 = vlaneseq
    %v8554 = vshrl.u32 %v8553, 7
    %v8555 = vsub.s32 0, %v8554
    %v8556 = vrot.slane %v8496, %v8555
    %v8557 = vlaneseq
    %v8558 = vshrl.u32 %v8557, 7
    %v8559 = vsub.s32 1, %v8558
    %v8560 = vrot.slane %v8496, %v8559
    %8561 = vrot.lane.b32.xlu0 %v8500, 2
    %v8562 = vpop.permute.xlu0 %8561
    %8563 = vrot.lane.b32.xlu0 %v8504, 2
    %v8564 = vpop.permute.xlu0 %8563
    %8565 = vrot.lane.b32.xlu0 %v8508, 2
    %v8566 = vpop.permute.xlu0 %8565
    %8567 = vrot.lane.b32.xlu0 %v8512, 2
    %v8568 = vpop.permute.xlu0 %8567
    %8569 = vrot.lane.b32.xlu0 %v8516, 2
    %v8570 = vpop.permute.xlu0 %8569
    %8571 = vrot.lane.b32.xlu0 %v8520, 2
    %v8572 = vpop.permute.xlu0 %8571
    %8573 = vrot.lane.b32.xlu0 %v8524, 2
    %v8574 = vpop.permute.xlu0 %8573
    %8575 = vrot.lane.b32.xlu0 %v8528, 2
    %v8576 = vpop.permute.xlu0 %8575
    %8577 = vrot.lane.b32.xlu0 %v8532, 2
    %v8578 = vpop.permute.xlu0 %8577
    %8579 = vrot.lane.b32.xlu0 %v8536, 2
    %v8580 = vpop.permute.xlu0 %8579
    %8581 = vrot.lane.b32.xlu0 %v8540, 2
    %v8582 = vpop.permute.xlu0 %8581
    %8583 = vrot.lane.b32.xlu0 %v8544, 2
    %v8584 = vpop.permute.xlu0 %8583
    %8585 = vrot.lane.b32.xlu0 %v8548, 2
    %v8586 = vpop.permute.xlu0 %8585
    %8587 = vrot.lane.b32.xlu0 %v8552, 2
    %v8588 = vpop.permute.xlu0 %8587
    %8589 = vrot.lane.b32.xlu0 %v8556, 2
    %v8590 = vpop.permute.xlu0 %8589
    %8591 = vrot.lane.b32.xlu0 %v8560, 2
    %v8592 = vpop.permute.xlu0 %8591
    %v8593 = vsel %vm3174, %v8562, %v8564
    %v8594 = vsel %vm3174, %v8566, %v8568
    %v8595 = vsel %vm3174, %v8570, %v8572
    %v8596 = vsel %vm3174, %v8574, %v8576
    %v8597 = vsel %vm3174, %v8578, %v8580
    %v8598 = vsel %vm3174, %v8582, %v8584
    %v8599 = vsel %vm3174, %v8586, %v8588
    %v8600 = vsel %vm3174, %v8590, %v8592
    %8609 = vst.msk [vmem:[%s7285 + $0x7] sm:$0x1] %vm1986, %v8593
    %8610 = vst.msk [vmem:[%s7285 + $0x17] sm:$0x1] %vm1986, %v8594
    %8611 = vst.msk [vmem:[%s7285 + $0x27] sm:$0x1] %vm1986, %v8595
    %8612 = vst.msk [vmem:[%s7285 + $0x37] sm:$0x1] %vm1986, %v8596
    %8613 = vst.msk [vmem:[%s7285 + $0x47] sm:$0x1] %vm1986, %v8597
    %8614 = vst.msk [vmem:[%s7285 + $0x57] sm:$0x1] %vm1986, %v8598
    %8615 = vst.msk [vmem:[%s7285 + $0x67] sm:$0x1] %vm1986, %v8599
    %8616 = vst.msk [vmem:[%s7285 + $0x77] sm:$0x1] %vm1986, %v8600
    %8617 = vrot.lane.b32.xlu0 %v7085, 2
    %v8618 = vpop.permute.xlu0 %8617
    %8619 = vrot.lane.b32.xlu0 %v7086, 2
    %v8620 = vpop.permute.xlu0 %8619
    %8621 = vrot.lane.b32.xlu0 %v7088, 2
    %v8622 = vpop.permute.xlu0 %8621
    %8623 = vrot.lane.b32.xlu0 %v7089, 2
    %v8624 = vpop.permute.xlu0 %8623
    %8625 = vrot.lane.b32.xlu0 %v7091, 2
    %v8626 = vpop.permute.xlu0 %8625
    %8627 = vrot.lane.b32.xlu0 %v7092, 2
    %v8628 = vpop.permute.xlu0 %8627
    %v8629 = vsel %vm3174, %v8618, %v8620
    %v8630 = vsel %vm3174, %v8622, %v8624
    %v8631 = vsel %vm3174, %v8626, %v8628
    %v8635 = vsel %vm2069, %v8629, 0.0
    %8636 = vadd.xlane.f32.xlu0 %v8635
    %v8637 = vpop.xlane.xlu0 %8636
    %v8638 = vsel %vm2069, %v8630, 0.0
    %8639 = vadd.xlane.f32.xlu0 %v8638
    %v8640 = vpop.xlane.xlu0 %8639
    %v8641 = vsel %vm2069, %v8631, 0.0
    %8642 = vadd.xlane.f32.xlu0 %v8641
    %v8643 = vpop.xlane.xlu0 %8642
    %v8644 = vadd.f32 %v8101, %v8637
    %v8645 = vadd.f32 %v8102, %v8640
    %v8646 = vadd.f32 %v8103, %v8643
    %v8647 = vcombine.high %v7086, %v7086
    %v8649 = vunpack.c.l.s4 1966171168
    %v8650 = vunpack.c.0.s8 %v8649
    %v8651 = vlaneseq
    %v8652 = vshrl.u32 %v8651, 7
    %v8653 = vsub.s32 %v8650, %v8652
    %v8654 = vrot.slane %v7086, %v8653
    %v8656 = vunpack.c.l.s4 1966171168
    %v8657 = vunpack.c.0.s8 %v8656
    %v8658 = vlaneseq
    %v8659 = vshrl.u32 %v8658, 7
    %v8660 = vsub.s32 %v8657, %v8659
    %v8661 = vrot.slane %v8647, %v8660
    %v8662 = vcombine.high %v8654, %v8654
    %v8663 = vcombine.high %v8661, %v8661
    %v8665 = vunpack.c.l.s4 1966171168
    %v8666 = vunpack.c.0.s8 %v8665
    %v8667 = vlaneseq
    %v8668 = vshrl.u32 %v8667, 7
    %v8669 = vsub.s32 %v8666, %v8668
    %v8670 = vrot.slane %v8654, %v8669
    %v8672 = vunpack.c.l.s4 1966171168
    %v8673 = vunpack.c.0.s8 %v8672
    %v8674 = vlaneseq
    %v8675 = vshrl.u32 %v8674, 7
    %v8676 = vsub.s32 %v8673, %v8675
    %v8677 = vrot.slane %v8661, %v8676
    %v8679 = vunpack.c.l.s4 1966171168
    %v8680 = vunpack.c.0.s8 %v8679
    %v8681 = vlaneseq
    %v8682 = vshrl.u32 %v8681, 7
    %v8683 = vsub.s32 %v8680, %v8682
    %v8684 = vrot.slane %v8662, %v8683
    %v8686 = vunpack.c.l.s4 1966171168
    %v8687 = vunpack.c.0.s8 %v8686
    %v8688 = vlaneseq
    %v8689 = vshrl.u32 %v8688, 7
    %v8690 = vsub.s32 %v8687, %v8689
    %v8691 = vrot.slane %v8663, %v8690
    %v8692 = vcombine.high %v8670, %v8670
    %v8693 = vcombine.high %v8677, %v8677
    %v8694 = vcombine.high %v8684, %v8684
    %v8695 = vcombine.high %v8691, %v8691
    %v8696 = vcombine.high %v7089, %v7089
    %v8698 = vunpack.c.l.s4 1966171168
    %v8699 = vunpack.c.0.s8 %v8698
    %v8700 = vlaneseq
    %v8701 = vshrl.u32 %v8700, 7
    %v8702 = vsub.s32 %v8699, %v8701
    %v8703 = vrot.slane %v7089, %v8702
    %v8705 = vunpack.c.l.s4 1966171168
    %v8706 = vunpack.c.0.s8 %v8705
    %v8707 = vlaneseq
    %v8708 = vshrl.u32 %v8707, 7
    %v8709 = vsub.s32 %v8706, %v8708
    %v8710 = vrot.slane %v8696, %v8709
    %v8711 = vcombine.high %v8703, %v8703
    %v8712 = vcombine.high %v8710, %v8710
    %v8714 = vunpack.c.l.s4 1966171168
    %v8715 = vunpack.c.0.s8 %v8714
    %v8716 = vlaneseq
    %v8717 = vshrl.u32 %v8716, 7
    %v8718 = vsub.s32 %v8715, %v8717
    %v8719 = vrot.slane %v8703, %v8718
    %v8721 = vunpack.c.l.s4 1966171168
    %v8722 = vunpack.c.0.s8 %v8721
    %v8723 = vlaneseq
    %v8724 = vshrl.u32 %v8723, 7
    %v8725 = vsub.s32 %v8722, %v8724
    %v8726 = vrot.slane %v8710, %v8725
    %v8728 = vunpack.c.l.s4 1966171168
    %v8729 = vunpack.c.0.s8 %v8728
    %v8730 = vlaneseq
    %v8731 = vshrl.u32 %v8730, 7
    %v8732 = vsub.s32 %v8729, %v8731
    %v8733 = vrot.slane %v8711, %v8732
    %v8735 = vunpack.c.l.s4 1966171168
    %v8736 = vunpack.c.0.s8 %v8735
    %v8737 = vlaneseq
    %v8738 = vshrl.u32 %v8737, 7
    %v8739 = vsub.s32 %v8736, %v8738
    %v8740 = vrot.slane %v8712, %v8739
    %v8741 = vcombine.high %v8719, %v8719
    %v8742 = vcombine.high %v8726, %v8726
    %v8743 = vcombine.high %v8733, %v8733
    %v8744 = vcombine.high %v8740, %v8740
    %v8745 = vlaneseq
    %v8746 = vshrl.u32 %v8745, 7
    %v8747 = vsub.s32 0, %v8746
    %v8748 = vrot.slane %v8670, %v8747
    %v8749 = vlaneseq
    %v8750 = vshrl.u32 %v8749, 7
    %v8751 = vsub.s32 0, %v8750
    %v8752 = vrot.slane %v8684, %v8751
    %v8753 = vlaneseq
    %v8754 = vshrl.u32 %v8753, 7
    %v8755 = vsub.s32 0, %v8754
    %v8756 = vrot.slane %v8692, %v8755
    %v8757 = vlaneseq
    %v8758 = vshrl.u32 %v8757, 7
    %v8759 = vsub.s32 0, %v8758
    %v8760 = vrot.slane %v8694, %v8759
    %v8761 = vlaneseq
    %v8762 = vshrl.u32 %v8761, 7
    %v8763 = vsub.s32 0, %v8762
    %v8764 = vrot.slane %v8677, %v8763
    %v8765 = vlaneseq
    %v8766 = vshrl.u32 %v8765, 7
    %v8767 = vsub.s32 0, %v8766
    %v8768 = vrot.slane %v8691, %v8767
    %v8769 = vlaneseq
    %v8770 = vshrl.u32 %v8769, 7
    %v8771 = vsub.s32 0, %v8770
    %v8772 = vrot.slane %v8693, %v8771
    %v8773 = vlaneseq
    %v8774 = vshrl.u32 %v8773, 7
    %v8775 = vsub.s32 0, %v8774
    %v8776 = vrot.slane %v8695, %v8775
    %v8777 = vlaneseq
    %v8778 = vshrl.u32 %v8777, 7
    %v8779 = vsub.s32 0, %v8778
    %v8780 = vrot.slane %v8719, %v8779
    %v8781 = vlaneseq
    %v8782 = vshrl.u32 %v8781, 7
    %v8783 = vsub.s32 0, %v8782
    %v8784 = vrot.slane %v8733, %v8783
    %v8785 = vlaneseq
    %v8786 = vshrl.u32 %v8785, 7
    %v8787 = vsub.s32 0, %v8786
    %v8788 = vrot.slane %v8741, %v8787
    %v8789 = vlaneseq
    %v8790 = vshrl.u32 %v8789, 7
    %v8791 = vsub.s32 0, %v8790
    %v8792 = vrot.slane %v8743, %v8791
    %v8793 = vlaneseq
    %v8794 = vshrl.u32 %v8793, 7
    %v8795 = vsub.s32 0, %v8794
    %v8796 = vrot.slane %v8726, %v8795
    %v8797 = vlaneseq
    %v8798 = vshrl.u32 %v8797, 7
    %v8799 = vsub.s32 0, %v8798
    %v8800 = vrot.slane %v8740, %v8799
    %v8801 = vlaneseq
    %v8802 = vshrl.u32 %v8801, 7
    %v8803 = vsub.s32 0, %v8802
    %v8804 = vrot.slane %v8742, %v8803
    %v8805 = vlaneseq
    %v8806 = vshrl.u32 %v8805, 7
    %v8807 = vsub.s32 0, %v8806
    %v8808 = vrot.slane %v8744, %v8807
    %8809 = vrot.lane.b32.xlu0 %v8748, 112
    %v8810 = vpop.permute.xlu0 %8809
    %8811 = vrot.lane.b32.xlu0 %v8752, 112
    %v8812 = vpop.permute.xlu0 %8811
    %8813 = vrot.lane.b32.xlu0 %v8756, 112
    %v8814 = vpop.permute.xlu0 %8813
    %8815 = vrot.lane.b32.xlu0 %v8760, 112
    %v8816 = vpop.permute.xlu0 %8815
    %8817 = vrot.lane.b32.xlu0 %v8764, 112
    %v8818 = vpop.permute.xlu0 %8817
    %8819 = vrot.lane.b32.xlu0 %v8768, 112
    %v8820 = vpop.permute.xlu0 %8819
    %8821 = vrot.lane.b32.xlu0 %v8772, 112
    %v8822 = vpop.permute.xlu0 %8821
    %8823 = vrot.lane.b32.xlu0 %v8776, 112
    %v8824 = vpop.permute.xlu0 %8823
    %8825 = vrot.lane.b32.xlu0 %v8780, 112
    %v8826 = vpop.permute.xlu0 %8825
    %8827 = vrot.lane.b32.xlu0 %v8784, 112
    %v8828 = vpop.permute.xlu0 %8827
    %8829 = vrot.lane.b32.xlu0 %v8788, 112
    %v8830 = vpop.permute.xlu0 %8829
    %8831 = vrot.lane.b32.xlu0 %v8792, 112
    %v8832 = vpop.permute.xlu0 %8831
    %8833 = vrot.lane.b32.xlu0 %v8796, 112
    %v8834 = vpop.permute.xlu0 %8833
    %8835 = vrot.lane.b32.xlu0 %v8800, 112
    %v8836 = vpop.permute.xlu0 %8835
    %8837 = vrot.lane.b32.xlu0 %v8804, 112
    %v8838 = vpop.permute.xlu0 %8837
    %8839 = vrot.lane.b32.xlu0 %v8808, 112
    %v8840 = vpop.permute.xlu0 %8839
    %8857 = vst.msk [vmem:[%s7210 + $0x8] sm:$0x1] %vm1986, %v8810
    %8858 = vst.msk [vmem:[%s7210 + $0x18] sm:$0x1] %vm1986, %v8812
    %8859 = vst.msk [vmem:[%s7210 + $0x28] sm:$0x1] %vm1986, %v8814
    %8860 = vst.msk [vmem:[%s7210 + $0x38] sm:$0x1] %vm1986, %v8816
    %8861 = vst.msk [vmem:[%s7210 + $0x48] sm:$0x1] %vm1986, %v8818
    %8862 = vst.msk [vmem:[%s7210 + $0x58] sm:$0x1] %vm1986, %v8820
    %8863 = vst.msk [vmem:[%s7210 + $0x68] sm:$0x1] %vm1986, %v8822
    %8864 = vst.msk [vmem:[%s7210 + $0x78] sm:$0x1] %vm1986, %v8824
    %8865 = vst.msk [vmem:[%s7210 + $0x88] sm:$0x1] %vm1986, %v8826
    %8866 = vst.msk [vmem:[%s7210 + $0x98] sm:$0x1] %vm1986, %v8828
    %8867 = vst.msk [vmem:[%s7210 + $0xa8] sm:$0x1] %vm1986, %v8830
    %8868 = vst.msk [vmem:[%s7210 + $0xb8] sm:$0x1] %vm1986, %v8832
    %8869 = vst.msk [vmem:[%s7210 + $0xc8] sm:$0x1] %vm1986, %v8834
    %8870 = vst.msk [vmem:[%s7210 + $0xd8] sm:$0x1] %vm1986, %v8836
    %8871 = vst.msk [vmem:[%s7210 + $0xe8] sm:$0x1] %vm1986, %v8838
    %8872 = vst.msk [vmem:[%s7210 + $0xf8] sm:$0x1] %vm1986, %v8840
    %v8873 = vcombine.high %v7092, %v7092
    %v8875 = vunpack.c.l.s4 1966171168
    %v8876 = vunpack.c.0.s8 %v8875
    %v8877 = vlaneseq
    %v8878 = vshrl.u32 %v8877, 7
    %v8879 = vsub.s32 %v8876, %v8878
    %v8880 = vrot.slane %v7092, %v8879
    %v8882 = vunpack.c.l.s4 1966171168
    %v8883 = vunpack.c.0.s8 %v8882
    %v8884 = vlaneseq
    %v8885 = vshrl.u32 %v8884, 7
    %v8886 = vsub.s32 %v8883, %v8885
    %v8887 = vrot.slane %v8873, %v8886
    %v8888 = vcombine.high %v8880, %v8880
    %v8889 = vcombine.high %v8887, %v8887
    %v8891 = vunpack.c.l.s4 1966171168
    %v8892 = vunpack.c.0.s8 %v8891
    %v8893 = vlaneseq
    %v8894 = vshrl.u32 %v8893, 7
    %v8895 = vsub.s32 %v8892, %v8894
    %v8896 = vrot.slane %v8880, %v8895
    %v8898 = vunpack.c.l.s4 1966171168
    %v8899 = vunpack.c.0.s8 %v8898
    %v8900 = vlaneseq
    %v8901 = vshrl.u32 %v8900, 7
    %v8902 = vsub.s32 %v8899, %v8901
    %v8903 = vrot.slane %v8887, %v8902
    %v8905 = vunpack.c.l.s4 1966171168
    %v8906 = vunpack.c.0.s8 %v8905
    %v8907 = vlaneseq
    %v8908 = vshrl.u32 %v8907, 7
    %v8909 = vsub.s32 %v8906, %v8908
    %v8910 = vrot.slane %v8888, %v8909
    %v8912 = vunpack.c.l.s4 1966171168
    %v8913 = vunpack.c.0.s8 %v8912
    %v8914 = vlaneseq
    %v8915 = vshrl.u32 %v8914, 7
    %v8916 = vsub.s32 %v8913, %v8915
    %v8917 = vrot.slane %v8889, %v8916
    %v8918 = vcombine.high %v8896, %v8896
    %v8919 = vcombine.high %v8903, %v8903
    %v8920 = vcombine.high %v8910, %v8910
    %v8921 = vcombine.high %v8917, %v8917
    %v8922 = vlaneseq
    %v8923 = vshrl.u32 %v8922, 7
    %v8924 = vsub.s32 0, %v8923
    %v8925 = vrot.slane %v8896, %v8924
    %v8926 = vlaneseq
    %v8927 = vshrl.u32 %v8926, 7
    %v8928 = vsub.s32 0, %v8927
    %v8929 = vrot.slane %v8910, %v8928
    %v8930 = vlaneseq
    %v8931 = vshrl.u32 %v8930, 7
    %v8932 = vsub.s32 0, %v8931
    %v8933 = vrot.slane %v8918, %v8932
    %v8934 = vlaneseq
    %v8935 = vshrl.u32 %v8934, 7
    %v8936 = vsub.s32 0, %v8935
    %v8937 = vrot.slane %v8920, %v8936
    %v8938 = vlaneseq
    %v8939 = vshrl.u32 %v8938, 7
    %v8940 = vsub.s32 0, %v8939
    %v8941 = vrot.slane %v8903, %v8940
    %v8942 = vlaneseq
    %v8943 = vshrl.u32 %v8942, 7
    %v8944 = vsub.s32 0, %v8943
    %v8945 = vrot.slane %v8917, %v8944
    %v8946 = vlaneseq
    %v8947 = vshrl.u32 %v8946, 7
    %v8948 = vsub.s32 0, %v8947
    %v8949 = vrot.slane %v8919, %v8948
    %v8950 = vlaneseq
    %v8951 = vshrl.u32 %v8950, 7
    %v8952 = vsub.s32 0, %v8951
    %v8953 = vrot.slane %v8921, %v8952
    %8954 = vrot.lane.b32.xlu0 %v8925, 112
    %v8955 = vpop.permute.xlu0 %8954
    %8956 = vrot.lane.b32.xlu0 %v8929, 112
    %v8957 = vpop.permute.xlu0 %8956
    %8958 = vrot.lane.b32.xlu0 %v8933, 112
    %v8959 = vpop.permute.xlu0 %8958
    %8960 = vrot.lane.b32.xlu0 %v8937, 112
    %v8961 = vpop.permute.xlu0 %8960
    %8962 = vrot.lane.b32.xlu0 %v8941, 112
    %v8963 = vpop.permute.xlu0 %8962
    %8964 = vrot.lane.b32.xlu0 %v8945, 112
    %v8965 = vpop.permute.xlu0 %8964
    %8966 = vrot.lane.b32.xlu0 %v8949, 112
    %v8967 = vpop.permute.xlu0 %8966
    %8968 = vrot.lane.b32.xlu0 %v8953, 112
    %v8969 = vpop.permute.xlu0 %8968
    %8978 = vst.msk [vmem:[%s7285 + $0x8] sm:$0x1] %vm1986, %v8955
    %8979 = vst.msk [vmem:[%s7285 + $0x18] sm:$0x1] %vm1986, %v8957
    %8980 = vst.msk [vmem:[%s7285 + $0x28] sm:$0x1] %vm1986, %v8959
    %8981 = vst.msk [vmem:[%s7285 + $0x38] sm:$0x1] %vm1986, %v8961
    %8982 = vst.msk [vmem:[%s7285 + $0x48] sm:$0x1] %vm1986, %v8963
    %8983 = vst.msk [vmem:[%s7285 + $0x58] sm:$0x1] %vm1986, %v8965
    %8984 = vst.msk [vmem:[%s7285 + $0x68] sm:$0x1] %vm1986, %v8967
    %8985 = vst.msk [vmem:[%s7285 + $0x78] sm:$0x1] %vm1986, %v8969
    %8986 = vrot.lane.b32.xlu0 %v7086, 112
    %v8987 = vpop.permute.xlu0 %8986
    %8988 = vrot.lane.b32.xlu0 %v7089, 112
    %v8989 = vpop.permute.xlu0 %8988
    %8990 = vrot.lane.b32.xlu0 %v7092, 112
    %v8991 = vpop.permute.xlu0 %8990
    %v8995 = vsel %vm2069, %v8987, 0.0
    %8996 = vadd.xlane.f32.xlu0 %v8995
    %v8997 = vpop.xlane.xlu0 %8996
    %v8998 = vsel %vm2069, %v8989, 0.0
    %8999 = vadd.xlane.f32.xlu0 %v8998
    %v9000 = vpop.xlane.xlu0 %8999
    %v9001 = vsel %vm2069, %v8991, 0.0
    %9002 = vadd.xlane.f32.xlu0 %v9001
    %v9003 = vpop.xlane.xlu0 %9002
    %v9004 = vadd.f32 %v8644, %v8997
    %v9005 = vadd.f32 %v8645, %v9000
    %v9006 = vadd.f32 %v8646, %v9003
    %9007 = vrot.lane.b32.xlu0 %v8748, 94
    %v9008 = vpop.permute.xlu0 %9007
    %9009 = vrot.lane.b32.xlu0 %v8752, 94
    %v9010 = vpop.permute.xlu0 %9009
    %9011 = vrot.lane.b32.xlu0 %v8756, 94
    %v9012 = vpop.permute.xlu0 %9011
    %9013 = vrot.lane.b32.xlu0 %v8760, 94
    %v9014 = vpop.permute.xlu0 %9013
    %9015 = vrot.lane.b32.xlu0 %v8764, 94
    %v9016 = vpop.permute.xlu0 %9015
    %9017 = vrot.lane.b32.xlu0 %v8768, 94
    %v9018 = vpop.permute.xlu0 %9017
    %9019 = vrot.lane.b32.xlu0 %v8772, 94
    %v9020 = vpop.permute.xlu0 %9019
    %9021 = vrot.lane.b32.xlu0 %v8776, 94
    %v9022 = vpop.permute.xlu0 %9021
    %9023 = vrot.lane.b32.xlu0 %v8780, 94
    %v9024 = vpop.permute.xlu0 %9023
    %9025 = vrot.lane.b32.xlu0 %v8784, 94
    %v9026 = vpop.permute.xlu0 %9025
    %9027 = vrot.lane.b32.xlu0 %v8788, 94
    %v9028 = vpop.permute.xlu0 %9027
    %9029 = vrot.lane.b32.xlu0 %v8792, 94
    %v9030 = vpop.permute.xlu0 %9029
    %9031 = vrot.lane.b32.xlu0 %v8796, 94
    %v9032 = vpop.permute.xlu0 %9031
    %9033 = vrot.lane.b32.xlu0 %v8800, 94
    %v9034 = vpop.permute.xlu0 %9033
    %9035 = vrot.lane.b32.xlu0 %v8804, 94
    %v9036 = vpop.permute.xlu0 %9035
    %9037 = vrot.lane.b32.xlu0 %v8808, 94
    %v9038 = vpop.permute.xlu0 %9037
    %9055 = vst.msk [vmem:[%s7210 + $0x9] sm:$0x1] %vm1986, %v9008
    %9056 = vst.msk [vmem:[%s7210 + $0x19] sm:$0x1] %vm1986, %v9010
    %9057 = vst.msk [vmem:[%s7210 + $0x29] sm:$0x1] %vm1986, %v9012
    %9058 = vst.msk [vmem:[%s7210 + $0x39] sm:$0x1] %vm1986, %v9014
    %9059 = vst.msk [vmem:[%s7210 + $0x49] sm:$0x1] %vm1986, %v9016
    %9060 = vst.msk [vmem:[%s7210 + $0x59] sm:$0x1] %vm1986, %v9018
    %9061 = vst.msk [vmem:[%s7210 + $0x69] sm:$0x1] %vm1986, %v9020
    %9062 = vst.msk [vmem:[%s7210 + $0x79] sm:$0x1] %vm1986, %v9022
    %9063 = vst.msk [vmem:[%s7210 + $0x89] sm:$0x1] %vm1986, %v9024
    %9064 = vst.msk [vmem:[%s7210 + $0x99] sm:$0x1] %vm1986, %v9026
    %9065 = vst.msk [vmem:[%s7210 + $0xa9] sm:$0x1] %vm1986, %v9028
    %9066 = vst.msk [vmem:[%s7210 + $0xb9] sm:$0x1] %vm1986, %v9030
    %9067 = vst.msk [vmem:[%s7210 + $0xc9] sm:$0x1] %vm1986, %v9032
    %9068 = vst.msk [vmem:[%s7210 + $0xd9] sm:$0x1] %vm1986, %v9034
    %9069 = vst.msk [vmem:[%s7210 + $0xe9] sm:$0x1] %vm1986, %v9036
    %9070 = vst.msk [vmem:[%s7210 + $0xf9] sm:$0x1] %vm1986, %v9038
    %9071 = vrot.lane.b32.xlu0 %v8925, 94
    %v9072 = vpop.permute.xlu0 %9071
    %9073 = vrot.lane.b32.xlu0 %v8929, 94
    %v9074 = vpop.permute.xlu0 %9073
    %9075 = vrot.lane.b32.xlu0 %v8933, 94
    %v9076 = vpop.permute.xlu0 %9075
    %9077 = vrot.lane.b32.xlu0 %v8937, 94
    %v9078 = vpop.permute.xlu0 %9077
    %9079 = vrot.lane.b32.xlu0 %v8941, 94
    %v9080 = vpop.permute.xlu0 %9079
    %9081 = vrot.lane.b32.xlu0 %v8945, 94
    %v9082 = vpop.permute.xlu0 %9081
    %9083 = vrot.lane.b32.xlu0 %v8949, 94
    %v9084 = vpop.permute.xlu0 %9083
    %9085 = vrot.lane.b32.xlu0 %v8953, 94
    %v9086 = vpop.permute.xlu0 %9085
    %9095 = vst.msk [vmem:[%s7285 + $0x9] sm:$0x1] %vm1986, %v9072
    %9096 = vst.msk [vmem:[%s7285 + $0x19] sm:$0x1] %vm1986, %v9074
    %9097 = vst.msk [vmem:[%s7285 + $0x29] sm:$0x1] %vm1986, %v9076
    %9098 = vst.msk [vmem:[%s7285 + $0x39] sm:$0x1] %vm1986, %v9078
    %9099 = vst.msk [vmem:[%s7285 + $0x49] sm:$0x1] %vm1986, %v9080
    %9100 = vst.msk [vmem:[%s7285 + $0x59] sm:$0x1] %vm1986, %v9082
    %9101 = vst.msk [vmem:[%s7285 + $0x69] sm:$0x1] %vm1986, %v9084
    %9102 = vst.msk [vmem:[%s7285 + $0x79] sm:$0x1] %vm1986, %v9086
    %9103 = vrot.lane.b32.xlu0 %v7086, 94
    %v9104 = vpop.permute.xlu0 %9103
    %9105 = vrot.lane.b32.xlu0 %v7089, 94
    %v9106 = vpop.permute.xlu0 %9105
    %9107 = vrot.lane.b32.xlu0 %v7092, 94
    %v9108 = vpop.permute.xlu0 %9107
    %v9112 = vsel %vm2069, %v9104, 0.0
    %9113 = vadd.xlane.f32.xlu0 %v9112
    %v9114 = vpop.xlane.xlu0 %9113
    %v9115 = vsel %vm2069, %v9106, 0.0
    %9116 = vadd.xlane.f32.xlu0 %v9115
    %v9117 = vpop.xlane.xlu0 %9116
    %v9118 = vsel %vm2069, %v9108, 0.0
    %9119 = vadd.xlane.f32.xlu0 %v9118
    %v9120 = vpop.xlane.xlu0 %9119
    %v9121 = vadd.f32 %v9004, %v9114
    %v9122 = vadd.f32 %v9005, %v9117
    %v9123 = vadd.f32 %v9006, %v9120
    %9124 = vrot.lane.b32.xlu0 %v8748, 76
    %v9125 = vpop.permute.xlu0 %9124
    %9126 = vrot.lane.b32.xlu0 %v8752, 76
    %v9127 = vpop.permute.xlu0 %9126
    %9128 = vrot.lane.b32.xlu0 %v8756, 76
    %v9129 = vpop.permute.xlu0 %9128
    %9130 = vrot.lane.b32.xlu0 %v8760, 76
    %v9131 = vpop.permute.xlu0 %9130
    %9132 = vrot.lane.b32.xlu0 %v8764, 76
    %v9133 = vpop.permute.xlu0 %9132
    %9134 = vrot.lane.b32.xlu0 %v8768, 76
    %v9135 = vpop.permute.xlu0 %9134
    %9136 = vrot.lane.b32.xlu0 %v8772, 76
    %v9137 = vpop.permute.xlu0 %9136
    %9138 = vrot.lane.b32.xlu0 %v8776, 76
    %v9139 = vpop.permute.xlu0 %9138
    %9140 = vrot.lane.b32.xlu0 %v8780, 76
    %v9141 = vpop.permute.xlu0 %9140
    %9142 = vrot.lane.b32.xlu0 %v8784, 76
    %v9143 = vpop.permute.xlu0 %9142
    %9144 = vrot.lane.b32.xlu0 %v8788, 76
    %v9145 = vpop.permute.xlu0 %9144
    %9146 = vrot.lane.b32.xlu0 %v8792, 76
    %v9147 = vpop.permute.xlu0 %9146
    %9148 = vrot.lane.b32.xlu0 %v8796, 76
    %v9149 = vpop.permute.xlu0 %9148
    %9150 = vrot.lane.b32.xlu0 %v8800, 76
    %v9151 = vpop.permute.xlu0 %9150
    %9152 = vrot.lane.b32.xlu0 %v8804, 76
    %v9153 = vpop.permute.xlu0 %9152
    %9154 = vrot.lane.b32.xlu0 %v8808, 76
    %v9155 = vpop.permute.xlu0 %9154
    %9172 = vst.msk [vmem:[%s7210 + $0xa] sm:$0x1] %vm1986, %v9125
    %9173 = vst.msk [vmem:[%s7210 + $0x1a] sm:$0x1] %vm1986, %v9127
    %9174 = vst.msk [vmem:[%s7210 + $0x2a] sm:$0x1] %vm1986, %v9129
    %9175 = vst.msk [vmem:[%s7210 + $0x3a] sm:$0x1] %vm1986, %v9131
    %9176 = vst.msk [vmem:[%s7210 + $0x4a] sm:$0x1] %vm1986, %v9133
    %9177 = vst.msk [vmem:[%s7210 + $0x5a] sm:$0x1] %vm1986, %v9135
    %9178 = vst.msk [vmem:[%s7210 + $0x6a] sm:$0x1] %vm1986, %v9137
    %9179 = vst.msk [vmem:[%s7210 + $0x7a] sm:$0x1] %vm1986, %v9139
    %9180 = vst.msk [vmem:[%s7210 + $0x8a] sm:$0x1] %vm1986, %v9141
    %9181 = vst.msk [vmem:[%s7210 + $0x9a] sm:$0x1] %vm1986, %v9143
    %9182 = vst.msk [vmem:[%s7210 + $0xaa] sm:$0x1] %vm1986, %v9145
    %9183 = vst.msk [vmem:[%s7210 + $0xba] sm:$0x1] %vm1986, %v9147
    %9184 = vst.msk [vmem:[%s7210 + $0xca] sm:$0x1] %vm1986, %v9149
    %9185 = vst.msk [vmem:[%s7210 + $0xda] sm:$0x1] %vm1986, %v9151
    %9186 = vst.msk [vmem:[%s7210 + $0xea] sm:$0x1] %vm1986, %v9153
    %9187 = vst.msk [vmem:[%s7210 + $0xfa] sm:$0x1] %vm1986, %v9155
    %9188 = vrot.lane.b32.xlu0 %v8925, 76
    %v9189 = vpop.permute.xlu0 %9188
    %9190 = vrot.lane.b32.xlu0 %v8929, 76
    %v9191 = vpop.permute.xlu0 %9190
    %9192 = vrot.lane.b32.xlu0 %v8933, 76
    %v9193 = vpop.permute.xlu0 %9192
    %9194 = vrot.lane.b32.xlu0 %v8937, 76
    %v9195 = vpop.permute.xlu0 %9194
    %9196 = vrot.lane.b32.xlu0 %v8941, 76
    %v9197 = vpop.permute.xlu0 %9196
    %9198 = vrot.lane.b32.xlu0 %v8945, 76
    %v9199 = vpop.permute.xlu0 %9198
    %9200 = vrot.lane.b32.xlu0 %v8949, 76
    %v9201 = vpop.permute.xlu0 %9200
    %9202 = vrot.lane.b32.xlu0 %v8953, 76
    %v9203 = vpop.permute.xlu0 %9202
    %9212 = vst.msk [vmem:[%s7285 + $0xa] sm:$0x1] %vm1986, %v9189
    %9213 = vst.msk [vmem:[%s7285 + $0x1a] sm:$0x1] %vm1986, %v9191
    %9214 = vst.msk [vmem:[%s7285 + $0x2a] sm:$0x1] %vm1986, %v9193
    %9215 = vst.msk [vmem:[%s7285 + $0x3a] sm:$0x1] %vm1986, %v9195
    %9216 = vst.msk [vmem:[%s7285 + $0x4a] sm:$0x1] %vm1986, %v9197
    %9217 = vst.msk [vmem:[%s7285 + $0x5a] sm:$0x1] %vm1986, %v9199
    %9218 = vst.msk [vmem:[%s7285 + $0x6a] sm:$0x1] %vm1986, %v9201
    %9219 = vst.msk [vmem:[%s7285 + $0x7a] sm:$0x1] %vm1986, %v9203
    %9220 = vrot.lane.b32.xlu0 %v7086, 76
    %v9221 = vpop.permute.xlu0 %9220
    %9222 = vrot.lane.b32.xlu0 %v7089, 76
    %v9223 = vpop.permute.xlu0 %9222
    %9224 = vrot.lane.b32.xlu0 %v7092, 76
    %v9225 = vpop.permute.xlu0 %9224
    %v9229 = vsel %vm2069, %v9221, 0.0
    %9230 = vadd.xlane.f32.xlu0 %v9229
    %v9231 = vpop.xlane.xlu0 %9230
    %v9232 = vsel %vm2069, %v9223, 0.0
    %9233 = vadd.xlane.f32.xlu0 %v9232
    %v9234 = vpop.xlane.xlu0 %9233
    %v9235 = vsel %vm2069, %v9225, 0.0
    %9236 = vadd.xlane.f32.xlu0 %v9235
    %v9237 = vpop.xlane.xlu0 %9236
    %v9238 = vadd.f32 %v9121, %v9231
    %v9239 = vadd.f32 %v9122, %v9234
    %v9240 = vadd.f32 %v9123, %v9237
    %9241 = vrot.lane.b32.xlu0 %v8748, 58
    %v9242 = vpop.permute.xlu0 %9241
    %9243 = vrot.lane.b32.xlu0 %v8752, 58
    %v9244 = vpop.permute.xlu0 %9243
    %9245 = vrot.lane.b32.xlu0 %v8756, 58
    %v9246 = vpop.permute.xlu0 %9245
    %9247 = vrot.lane.b32.xlu0 %v8760, 58
    %v9248 = vpop.permute.xlu0 %9247
    %9249 = vrot.lane.b32.xlu0 %v8764, 58
    %v9250 = vpop.permute.xlu0 %9249
    %9251 = vrot.lane.b32.xlu0 %v8768, 58
    %v9252 = vpop.permute.xlu0 %9251
    %9253 = vrot.lane.b32.xlu0 %v8772, 58
    %v9254 = vpop.permute.xlu0 %9253
    %9255 = vrot.lane.b32.xlu0 %v8776, 58
    %v9256 = vpop.permute.xlu0 %9255
    %9257 = vrot.lane.b32.xlu0 %v8780, 58
    %v9258 = vpop.permute.xlu0 %9257
    %9259 = vrot.lane.b32.xlu0 %v8784, 58
    %v9260 = vpop.permute.xlu0 %9259
    %9261 = vrot.lane.b32.xlu0 %v8788, 58
    %v9262 = vpop.permute.xlu0 %9261
    %9263 = vrot.lane.b32.xlu0 %v8792, 58
    %v9264 = vpop.permute.xlu0 %9263
    %9265 = vrot.lane.b32.xlu0 %v8796, 58
    %v9266 = vpop.permute.xlu0 %9265
    %9267 = vrot.lane.b32.xlu0 %v8800, 58
    %v9268 = vpop.permute.xlu0 %9267
    %9269 = vrot.lane.b32.xlu0 %v8804, 58
    %v9270 = vpop.permute.xlu0 %9269
    %9271 = vrot.lane.b32.xlu0 %v8808, 58
    %v9272 = vpop.permute.xlu0 %9271
    %9289 = vst.msk [vmem:[%s7210 + $0xb] sm:$0x1] %vm1986, %v9242
    %9290 = vst.msk [vmem:[%s7210 + $0x1b] sm:$0x1] %vm1986, %v9244
    %9291 = vst.msk [vmem:[%s7210 + $0x2b] sm:$0x1] %vm1986, %v9246
    %9292 = vst.msk [vmem:[%s7210 + $0x3b] sm:$0x1] %vm1986, %v9248
    %9293 = vst.msk [vmem:[%s7210 + $0x4b] sm:$0x1] %vm1986, %v9250
    %9294 = vst.msk [vmem:[%s7210 + $0x5b] sm:$0x1] %vm1986, %v9252
    %9295 = vst.msk [vmem:[%s7210 + $0x6b] sm:$0x1] %vm1986, %v9254
    %9296 = vst.msk [vmem:[%s7210 + $0x7b] sm:$0x1] %vm1986, %v9256
    %9297 = vst.msk [vmem:[%s7210 + $0x8b] sm:$0x1] %vm1986, %v9258
    %9298 = vst.msk [vmem:[%s7210 + $0x9b] sm:$0x1] %vm1986, %v9260
    %9299 = vst.msk [vmem:[%s7210 + $0xab] sm:$0x1] %vm1986, %v9262
    %9300 = vst.msk [vmem:[%s7210 + $0xbb] sm:$0x1] %vm1986, %v9264
    %9301 = vst.msk [vmem:[%s7210 + $0xcb] sm:$0x1] %vm1986, %v9266
    %9302 = vst.msk [vmem:[%s7210 + $0xdb] sm:$0x1] %vm1986, %v9268
    %9303 = vst.msk [vmem:[%s7210 + $0xeb] sm:$0x1] %vm1986, %v9270
    %9304 = vst.msk [vmem:[%s7210 + $0xfb] sm:$0x1] %vm1986, %v9272
    %9305 = vrot.lane.b32.xlu0 %v8925, 58
    %v9306 = vpop.permute.xlu0 %9305
    %9307 = vrot.lane.b32.xlu0 %v8929, 58
    %v9308 = vpop.permute.xlu0 %9307
    %9309 = vrot.lane.b32.xlu0 %v8933, 58
    %v9310 = vpop.permute.xlu0 %9309
    %9311 = vrot.lane.b32.xlu0 %v8937, 58
    %v9312 = vpop.permute.xlu0 %9311
    %9313 = vrot.lane.b32.xlu0 %v8941, 58
    %v9314 = vpop.permute.xlu0 %9313
    %9315 = vrot.lane.b32.xlu0 %v8945, 58
    %v9316 = vpop.permute.xlu0 %9315
    %9317 = vrot.lane.b32.xlu0 %v8949, 58
    %v9318 = vpop.permute.xlu0 %9317
    %9319 = vrot.lane.b32.xlu0 %v8953, 58
    %v9320 = vpop.permute.xlu0 %9319
    %9329 = vst.msk [vmem:[%s7285 + $0xb] sm:$0x1] %vm1986, %v9306
    %9330 = vst.msk [vmem:[%s7285 + $0x1b] sm:$0x1] %vm1986, %v9308
    %9331 = vst.msk [vmem:[%s7285 + $0x2b] sm:$0x1] %vm1986, %v9310
    %9332 = vst.msk [vmem:[%s7285 + $0x3b] sm:$0x1] %vm1986, %v9312
    %9333 = vst.msk [vmem:[%s7285 + $0x4b] sm:$0x1] %vm1986, %v9314
    %9334 = vst.msk [vmem:[%s7285 + $0x5b] sm:$0x1] %vm1986, %v9316
    %9335 = vst.msk [vmem:[%s7285 + $0x6b] sm:$0x1] %vm1986, %v9318
    %9336 = vst.msk [vmem:[%s7285 + $0x7b] sm:$0x1] %vm1986, %v9320
    %9337 = vrot.lane.b32.xlu0 %v7086, 58
    %v9338 = vpop.permute.xlu0 %9337
    %9339 = vrot.lane.b32.xlu0 %v7089, 58
    %v9340 = vpop.permute.xlu0 %9339
    %9341 = vrot.lane.b32.xlu0 %v7092, 58
    %v9342 = vpop.permute.xlu0 %9341
    %v9346 = vsel %vm2069, %v9338, 0.0
    %9347 = vadd.xlane.f32.xlu0 %v9346
    %v9348 = vpop.xlane.xlu0 %9347
    %v9349 = vsel %vm2069, %v9340, 0.0
    %9350 = vadd.xlane.f32.xlu0 %v9349
    %v9351 = vpop.xlane.xlu0 %9350
    %v9352 = vsel %vm2069, %v9342, 0.0
    %9353 = vadd.xlane.f32.xlu0 %v9352
    %v9354 = vpop.xlane.xlu0 %9353
    %v9355 = vadd.f32 %v9238, %v9348
    %v9356 = vadd.f32 %v9239, %v9351
    %v9357 = vadd.f32 %v9240, %v9354
    %9358 = vrot.lane.b32.xlu0 %v8748, 40
    %v9359 = vpop.permute.xlu0 %9358
    %9360 = vrot.lane.b32.xlu0 %v8752, 40
    %v9361 = vpop.permute.xlu0 %9360
    %9362 = vrot.lane.b32.xlu0 %v8756, 40
    %v9363 = vpop.permute.xlu0 %9362
    %9364 = vrot.lane.b32.xlu0 %v8760, 40
    %v9365 = vpop.permute.xlu0 %9364
    %9366 = vrot.lane.b32.xlu0 %v8764, 40
    %v9367 = vpop.permute.xlu0 %9366
    %9368 = vrot.lane.b32.xlu0 %v8768, 40
    %v9369 = vpop.permute.xlu0 %9368
    %9370 = vrot.lane.b32.xlu0 %v8772, 40
    %v9371 = vpop.permute.xlu0 %9370
    %9372 = vrot.lane.b32.xlu0 %v8776, 40
    %v9373 = vpop.permute.xlu0 %9372
    %9374 = vrot.lane.b32.xlu0 %v8780, 40
    %v9375 = vpop.permute.xlu0 %9374
    %9376 = vrot.lane.b32.xlu0 %v8784, 40
    %v9377 = vpop.permute.xlu0 %9376
    %9378 = vrot.lane.b32.xlu0 %v8788, 40
    %v9379 = vpop.permute.xlu0 %9378
    %9380 = vrot.lane.b32.xlu0 %v8792, 40
    %v9381 = vpop.permute.xlu0 %9380
    %9382 = vrot.lane.b32.xlu0 %v8796, 40
    %v9383 = vpop.permute.xlu0 %9382
    %9384 = vrot.lane.b32.xlu0 %v8800, 40
    %v9385 = vpop.permute.xlu0 %9384
    %9386 = vrot.lane.b32.xlu0 %v8804, 40
    %v9387 = vpop.permute.xlu0 %9386
    %9388 = vrot.lane.b32.xlu0 %v8808, 40
    %v9389 = vpop.permute.xlu0 %9388
    %9406 = vst.msk [vmem:[%s7210 + $0xc] sm:$0x1] %vm1986, %v9359
    %9407 = vst.msk [vmem:[%s7210 + $0x1c] sm:$0x1] %vm1986, %v9361
    %9408 = vst.msk [vmem:[%s7210 + $0x2c] sm:$0x1] %vm1986, %v9363
    %9409 = vst.msk [vmem:[%s7210 + $0x3c] sm:$0x1] %vm1986, %v9365
    %9410 = vst.msk [vmem:[%s7210 + $0x4c] sm:$0x1] %vm1986, %v9367
    %9411 = vst.msk [vmem:[%s7210 + $0x5c] sm:$0x1] %vm1986, %v9369
    %9412 = vst.msk [vmem:[%s7210 + $0x6c] sm:$0x1] %vm1986, %v9371
    %9413 = vst.msk [vmem:[%s7210 + $0x7c] sm:$0x1] %vm1986, %v9373
    %9414 = vst.msk [vmem:[%s7210 + $0x8c] sm:$0x1] %vm1986, %v9375
    %9415 = vst.msk [vmem:[%s7210 + $0x9c] sm:$0x1] %vm1986, %v9377
    %9416 = vst.msk [vmem:[%s7210 + $0xac] sm:$0x1] %vm1986, %v9379
    %9417 = vst.msk [vmem:[%s7210 + $0xbc] sm:$0x1] %vm1986, %v9381
    %9418 = vst.msk [vmem:[%s7210 + $0xcc] sm:$0x1] %vm1986, %v9383
    %9419 = vst.msk [vmem:[%s7210 + $0xdc] sm:$0x1] %vm1986, %v9385
    %9420 = vst.msk [vmem:[%s7210 + $0xec] sm:$0x1] %vm1986, %v9387
    %9421 = vst.msk [vmem:[%s7210 + $0xfc] sm:$0x1] %vm1986, %v9389
    %9422 = vrot.lane.b32.xlu0 %v8925, 40
    %v9423 = vpop.permute.xlu0 %9422
    %9424 = vrot.lane.b32.xlu0 %v8929, 40
    %v9425 = vpop.permute.xlu0 %9424
    %9426 = vrot.lane.b32.xlu0 %v8933, 40
    %v9427 = vpop.permute.xlu0 %9426
    %9428 = vrot.lane.b32.xlu0 %v8937, 40
    %v9429 = vpop.permute.xlu0 %9428
    %9430 = vrot.lane.b32.xlu0 %v8941, 40
    %v9431 = vpop.permute.xlu0 %9430
    %9432 = vrot.lane.b32.xlu0 %v8945, 40
    %v9433 = vpop.permute.xlu0 %9432
    %9434 = vrot.lane.b32.xlu0 %v8949, 40
    %v9435 = vpop.permute.xlu0 %9434
    %9436 = vrot.lane.b32.xlu0 %v8953, 40
    %v9437 = vpop.permute.xlu0 %9436
    %9446 = vst.msk [vmem:[%s7285 + $0xc] sm:$0x1] %vm1986, %v9423
    %9447 = vst.msk [vmem:[%s7285 + $0x1c] sm:$0x1] %vm1986, %v9425
    %9448 = vst.msk [vmem:[%s7285 + $0x2c] sm:$0x1] %vm1986, %v9427
    %9449 = vst.msk [vmem:[%s7285 + $0x3c] sm:$0x1] %vm1986, %v9429
    %9450 = vst.msk [vmem:[%s7285 + $0x4c] sm:$0x1] %vm1986, %v9431
    %9451 = vst.msk [vmem:[%s7285 + $0x5c] sm:$0x1] %vm1986, %v9433
    %9452 = vst.msk [vmem:[%s7285 + $0x6c] sm:$0x1] %vm1986, %v9435
    %9453 = vst.msk [vmem:[%s7285 + $0x7c] sm:$0x1] %vm1986, %v9437
    %9454 = vrot.lane.b32.xlu0 %v7086, 40
    %v9455 = vpop.permute.xlu0 %9454
    %9456 = vrot.lane.b32.xlu0 %v7089, 40
    %v9457 = vpop.permute.xlu0 %9456
    %9458 = vrot.lane.b32.xlu0 %v7092, 40
    %v9459 = vpop.permute.xlu0 %9458
    %v9463 = vsel %vm2069, %v9455, 0.0
    %9464 = vadd.xlane.f32.xlu0 %v9463
    %v9465 = vpop.xlane.xlu0 %9464
    %v9466 = vsel %vm2069, %v9457, 0.0
    %9467 = vadd.xlane.f32.xlu0 %v9466
    %v9468 = vpop.xlane.xlu0 %9467
    %v9469 = vsel %vm2069, %v9459, 0.0
    %9470 = vadd.xlane.f32.xlu0 %v9469
    %v9471 = vpop.xlane.xlu0 %9470
    %v9472 = vadd.f32 %v9355, %v9465
    %v9473 = vadd.f32 %v9356, %v9468
    %v9474 = vadd.f32 %v9357, %v9471
    %9475 = vrot.lane.b32.xlu0 %v8748, 22
    %v9476 = vpop.permute.xlu0 %9475
    %9477 = vrot.lane.b32.xlu0 %v8752, 22
    %v9478 = vpop.permute.xlu0 %9477
    %9479 = vrot.lane.b32.xlu0 %v8756, 22
    %v9480 = vpop.permute.xlu0 %9479
    %9481 = vrot.lane.b32.xlu0 %v8760, 22
    %v9482 = vpop.permute.xlu0 %9481
    %9483 = vrot.lane.b32.xlu0 %v8764, 22
    %v9484 = vpop.permute.xlu0 %9483
    %9485 = vrot.lane.b32.xlu0 %v8768, 22
    %v9486 = vpop.permute.xlu0 %9485
    %9487 = vrot.lane.b32.xlu0 %v8772, 22
    %v9488 = vpop.permute.xlu0 %9487
    %9489 = vrot.lane.b32.xlu0 %v8776, 22
    %v9490 = vpop.permute.xlu0 %9489
    %9491 = vrot.lane.b32.xlu0 %v8780, 22
    %v9492 = vpop.permute.xlu0 %9491
    %9493 = vrot.lane.b32.xlu0 %v8784, 22
    %v9494 = vpop.permute.xlu0 %9493
    %9495 = vrot.lane.b32.xlu0 %v8788, 22
    %v9496 = vpop.permute.xlu0 %9495
    %9497 = vrot.lane.b32.xlu0 %v8792, 22
    %v9498 = vpop.permute.xlu0 %9497
    %9499 = vrot.lane.b32.xlu0 %v8796, 22
    %v9500 = vpop.permute.xlu0 %9499
    %9501 = vrot.lane.b32.xlu0 %v8800, 22
    %v9502 = vpop.permute.xlu0 %9501
    %9503 = vrot.lane.b32.xlu0 %v8804, 22
    %v9504 = vpop.permute.xlu0 %9503
    %9505 = vrot.lane.b32.xlu0 %v8808, 22
    %v9506 = vpop.permute.xlu0 %9505
    %9523 = vst.msk [vmem:[%s7210 + $0xd] sm:$0x1] %vm1986, %v9476
    %9524 = vst.msk [vmem:[%s7210 + $0x1d] sm:$0x1] %vm1986, %v9478
    %9525 = vst.msk [vmem:[%s7210 + $0x2d] sm:$0x1] %vm1986, %v9480
    %9526 = vst.msk [vmem:[%s7210 + $0x3d] sm:$0x1] %vm1986, %v9482
    %9527 = vst.msk [vmem:[%s7210 + $0x4d] sm:$0x1] %vm1986, %v9484
    %9528 = vst.msk [vmem:[%s7210 + $0x5d] sm:$0x1] %vm1986, %v9486
    %9529 = vst.msk [vmem:[%s7210 + $0x6d] sm:$0x1] %vm1986, %v9488
    %9530 = vst.msk [vmem:[%s7210 + $0x7d] sm:$0x1] %vm1986, %v9490
    %9531 = vst.msk [vmem:[%s7210 + $0x8d] sm:$0x1] %vm1986, %v9492
    %9532 = vst.msk [vmem:[%s7210 + $0x9d] sm:$0x1] %vm1986, %v9494
    %9533 = vst.msk [vmem:[%s7210 + $0xad] sm:$0x1] %vm1986, %v9496
    %9534 = vst.msk [vmem:[%s7210 + $0xbd] sm:$0x1] %vm1986, %v9498
    %9535 = vst.msk [vmem:[%s7210 + $0xcd] sm:$0x1] %vm1986, %v9500
    %9536 = vst.msk [vmem:[%s7210 + $0xdd] sm:$0x1] %vm1986, %v9502
    %9537 = vst.msk [vmem:[%s7210 + $0xed] sm:$0x1] %vm1986, %v9504
    %9538 = vst.msk [vmem:[%s7210 + $0xfd] sm:$0x1] %vm1986, %v9506
    %9539 = vrot.lane.b32.xlu0 %v8925, 22
    %v9540 = vpop.permute.xlu0 %9539
    %9541 = vrot.lane.b32.xlu0 %v8929, 22
    %v9542 = vpop.permute.xlu0 %9541
    %9543 = vrot.lane.b32.xlu0 %v8933, 22
    %v9544 = vpop.permute.xlu0 %9543
    %9545 = vrot.lane.b32.xlu0 %v8937, 22
    %v9546 = vpop.permute.xlu0 %9545
    %9547 = vrot.lane.b32.xlu0 %v8941, 22
    %v9548 = vpop.permute.xlu0 %9547
    %9549 = vrot.lane.b32.xlu0 %v8945, 22
    %v9550 = vpop.permute.xlu0 %9549
    %9551 = vrot.lane.b32.xlu0 %v8949, 22
    %v9552 = vpop.permute.xlu0 %9551
    %9553 = vrot.lane.b32.xlu0 %v8953, 22
    %v9554 = vpop.permute.xlu0 %9553
    %9563 = vst.msk [vmem:[%s7285 + $0xd] sm:$0x1] %vm1986, %v9540
    %9564 = vst.msk [vmem:[%s7285 + $0x1d] sm:$0x1] %vm1986, %v9542
    %9565 = vst.msk [vmem:[%s7285 + $0x2d] sm:$0x1] %vm1986, %v9544
    %9566 = vst.msk [vmem:[%s7285 + $0x3d] sm:$0x1] %vm1986, %v9546
    %9567 = vst.msk [vmem:[%s7285 + $0x4d] sm:$0x1] %vm1986, %v9548
    %9568 = vst.msk [vmem:[%s7285 + $0x5d] sm:$0x1] %vm1986, %v9550
    %9569 = vst.msk [vmem:[%s7285 + $0x6d] sm:$0x1] %vm1986, %v9552
    %9570 = vst.msk [vmem:[%s7285 + $0x7d] sm:$0x1] %vm1986, %v9554
    %9571 = vrot.lane.b32.xlu0 %v7086, 22
    %v9572 = vpop.permute.xlu0 %9571
    %9573 = vrot.lane.b32.xlu0 %v7089, 22
    %v9574 = vpop.permute.xlu0 %9573
    %9575 = vrot.lane.b32.xlu0 %v7092, 22
    %v9576 = vpop.permute.xlu0 %9575
    %v9580 = vsel %vm2069, %v9572, 0.0
    %9581 = vadd.xlane.f32.xlu0 %v9580
    %v9582 = vpop.xlane.xlu0 %9581
    %v9583 = vsel %vm2069, %v9574, 0.0
    %9584 = vadd.xlane.f32.xlu0 %v9583
    %v9585 = vpop.xlane.xlu0 %9584
    %v9586 = vsel %vm2069, %v9576, 0.0
    %9587 = vadd.xlane.f32.xlu0 %v9586
    %v9588 = vpop.xlane.xlu0 %9587
    %v9589 = vadd.f32 %v9472, %v9582
    %v9590 = vadd.f32 %v9473, %v9585
    %v9591 = vadd.f32 %v9474, %v9588
    %v9594 = vcombine.low %v7086, %v7087
    %v9595 = vcombine.high %v7086, %v7087
    %v9597 = vunpack.c.l.s4 1966171168
    %v9598 = vunpack.c.0.s8 %v9597
    %v9599 = vlaneseq
    %v9600 = vshrl.u32 %v9599, 7
    %v9601 = vsub.s32 %v9598, %v9600
    %v9602 = vrot.slane %v9594, %v9601
    %v9604 = vunpack.c.l.s4 1966171168
    %v9605 = vunpack.c.0.s8 %v9604
    %v9606 = vlaneseq
    %v9607 = vshrl.u32 %v9606, 7
    %v9608 = vsub.s32 %v9605, %v9607
    %v9609 = vrot.slane %v9595, %v9608
    %v9610 = vcombine.high %v9602, %v9602
    %v9611 = vcombine.high %v9609, %v9609
    %v9613 = vunpack.c.l.s4 1966171168
    %v9614 = vunpack.c.0.s8 %v9613
    %v9615 = vlaneseq
    %v9616 = vshrl.u32 %v9615, 7
    %v9617 = vsub.s32 %v9614, %v9616
    %v9618 = vrot.slane %v9602, %v9617
    %v9620 = vunpack.c.l.s4 1966171168
    %v9621 = vunpack.c.0.s8 %v9620
    %v9622 = vlaneseq
    %v9623 = vshrl.u32 %v9622, 7
    %v9624 = vsub.s32 %v9621, %v9623
    %v9625 = vrot.slane %v9609, %v9624
    %v9627 = vunpack.c.l.s4 1966171168
    %v9628 = vunpack.c.0.s8 %v9627
    %v9629 = vlaneseq
    %v9630 = vshrl.u32 %v9629, 7
    %v9631 = vsub.s32 %v9628, %v9630
    %v9632 = vrot.slane %v9610, %v9631
    %v9634 = vunpack.c.l.s4 1966171168
    %v9635 = vunpack.c.0.s8 %v9634
    %v9636 = vlaneseq
    %v9637 = vshrl.u32 %v9636, 7
    %v9638 = vsub.s32 %v9635, %v9637
    %v9639 = vrot.slane %v9611, %v9638
    %v9640 = vcombine.high %v9618, %v9618
    %v9641 = vcombine.high %v9625, %v9625
    %v9642 = vcombine.high %v9632, %v9632
    %v9643 = vcombine.high %v9639, %v9639
    %v9644 = vcombine.low %v7089, %v7090
    %v9645 = vcombine.high %v7089, %v7090
    %v9647 = vunpack.c.l.s4 1966171168
    %v9648 = vunpack.c.0.s8 %v9647
    %v9649 = vlaneseq
    %v9650 = vshrl.u32 %v9649, 7
    %v9651 = vsub.s32 %v9648, %v9650
    %v9652 = vrot.slane %v9644, %v9651
    %v9654 = vunpack.c.l.s4 1966171168
    %v9655 = vunpack.c.0.s8 %v9654
    %v9656 = vlaneseq
    %v9657 = vshrl.u32 %v9656, 7
    %v9658 = vsub.s32 %v9655, %v9657
    %v9659 = vrot.slane %v9645, %v9658
    %v9660 = vcombine.high %v9652, %v9652
    %v9661 = vcombine.high %v9659, %v9659
    %v9663 = vunpack.c.l.s4 1966171168
    %v9664 = vunpack.c.0.s8 %v9663
    %v9665 = vlaneseq
    %v9666 = vshrl.u32 %v9665, 7
    %v9667 = vsub.s32 %v9664, %v9666
    %v9668 = vrot.slane %v9652, %v9667
    %v9670 = vunpack.c.l.s4 1966171168
    %v9671 = vunpack.c.0.s8 %v9670
    %v9672 = vlaneseq
    %v9673 = vshrl.u32 %v9672, 7
    %v9674 = vsub.s32 %v9671, %v9673
    %v9675 = vrot.slane %v9659, %v9674
    %v9677 = vunpack.c.l.s4 1966171168
    %v9678 = vunpack.c.0.s8 %v9677
    %v9679 = vlaneseq
    %v9680 = vshrl.u32 %v9679, 7
    %v9681 = vsub.s32 %v9678, %v9680
    %v9682 = vrot.slane %v9660, %v9681
    %v9684 = vunpack.c.l.s4 1966171168
    %v9685 = vunpack.c.0.s8 %v9684
    %v9686 = vlaneseq
    %v9687 = vshrl.u32 %v9686, 7
    %v9688 = vsub.s32 %v9685, %v9687
    %v9689 = vrot.slane %v9661, %v9688
    %v9690 = vcombine.high %v9668, %v9668
    %v9691 = vcombine.high %v9675, %v9675
    %v9692 = vcombine.high %v9682, %v9682
    %v9693 = vcombine.high %v9689, %v9689
    %v9694 = vlaneseq
    %v9695 = vshrl.u32 %v9694, 7
    %v9696 = vsub.s32 0, %v9695
    %v9697 = vrot.slane %v9618, %v9696
    %v9698 = vlaneseq
    %v9699 = vshrl.u32 %v9698, 7
    %v9700 = vsub.s32 1, %v9699
    %v9701 = vrot.slane %v9618, %v9700
    %v9702 = vlaneseq
    %v9703 = vshrl.u32 %v9702, 7
    %v9704 = vsub.s32 0, %v9703
    %v9705 = vrot.slane %v9632, %v9704
    %v9706 = vlaneseq
    %v9707 = vshrl.u32 %v9706, 7
    %v9708 = vsub.s32 1, %v9707
    %v9709 = vrot.slane %v9632, %v9708
    %v9710 = vlaneseq
    %v9711 = vshrl.u32 %v9710, 7
    %v9712 = vsub.s32 0, %v9711
    %v9713 = vrot.slane %v9640, %v9712
    %v9714 = vlaneseq
    %v9715 = vshrl.u32 %v9714, 7
    %v9716 = vsub.s32 1, %v9715
    %v9717 = vrot.slane %v9640, %v9716
    %v9718 = vlaneseq
    %v9719 = vshrl.u32 %v9718, 7
    %v9720 = vsub.s32 0, %v9719
    %v9721 = vrot.slane %v9642, %v9720
    %v9722 = vlaneseq
    %v9723 = vshrl.u32 %v9722, 7
    %v9724 = vsub.s32 1, %v9723
    %v9725 = vrot.slane %v9642, %v9724
    %v9726 = vlaneseq
    %v9727 = vshrl.u32 %v9726, 7
    %v9728 = vsub.s32 0, %v9727
    %v9729 = vrot.slane %v9625, %v9728
    %v9730 = vlaneseq
    %v9731 = vshrl.u32 %v9730, 7
    %v9732 = vsub.s32 1, %v9731
    %v9733 = vrot.slane %v9625, %v9732
    %v9734 = vlaneseq
    %v9735 = vshrl.u32 %v9734, 7
    %v9736 = vsub.s32 0, %v9735
    %v9737 = vrot.slane %v9639, %v9736
    %v9738 = vlaneseq
    %v9739 = vshrl.u32 %v9738, 7
    %v9740 = vsub.s32 1, %v9739
    %v9741 = vrot.slane %v9639, %v9740
    %v9742 = vlaneseq
    %v9743 = vshrl.u32 %v9742, 7
    %v9744 = vsub.s32 0, %v9743
    %v9745 = vrot.slane %v9641, %v9744
    %v9746 = vlaneseq
    %v9747 = vshrl.u32 %v9746, 7
    %v9748 = vsub.s32 1, %v9747
    %v9749 = vrot.slane %v9641, %v9748
    %v9750 = vlaneseq
    %v9751 = vshrl.u32 %v9750, 7
    %v9752 = vsub.s32 0, %v9751
    %v9753 = vrot.slane %v9643, %v9752
    %v9754 = vlaneseq
    %v9755 = vshrl.u32 %v9754, 7
    %v9756 = vsub.s32 1, %v9755
    %v9757 = vrot.slane %v9643, %v9756
    %v9758 = vlaneseq
    %v9759 = vshrl.u32 %v9758, 7
    %v9760 = vsub.s32 0, %v9759
    %v9761 = vrot.slane %v9668, %v9760
    %v9762 = vlaneseq
    %v9763 = vshrl.u32 %v9762, 7
    %v9764 = vsub.s32 1, %v9763
    %v9765 = vrot.slane %v9668, %v9764
    %v9766 = vlaneseq
    %v9767 = vshrl.u32 %v9766, 7
    %v9768 = vsub.s32 0, %v9767
    %v9769 = vrot.slane %v9682, %v9768
    %v9770 = vlaneseq
    %v9771 = vshrl.u32 %v9770, 7
    %v9772 = vsub.s32 1, %v9771
    %v9773 = vrot.slane %v9682, %v9772
    %v9774 = vlaneseq
    %v9775 = vshrl.u32 %v9774, 7
    %v9776 = vsub.s32 0, %v9775
    %v9777 = vrot.slane %v9690, %v9776
    %v9778 = vlaneseq
    %v9779 = vshrl.u32 %v9778, 7
    %v9780 = vsub.s32 1, %v9779
    %v9781 = vrot.slane %v9690, %v9780
    %v9782 = vlaneseq
    %v9783 = vshrl.u32 %v9782, 7
    %v9784 = vsub.s32 0, %v9783
    %v9785 = vrot.slane %v9692, %v9784
    %v9786 = vlaneseq
    %v9787 = vshrl.u32 %v9786, 7
    %v9788 = vsub.s32 1, %v9787
    %v9789 = vrot.slane %v9692, %v9788
    %v9790 = vlaneseq
    %v9791 = vshrl.u32 %v9790, 7
    %v9792 = vsub.s32 0, %v9791
    %v9793 = vrot.slane %v9675, %v9792
    %v9794 = vlaneseq
    %v9795 = vshrl.u32 %v9794, 7
    %v9796 = vsub.s32 1, %v9795
    %v9797 = vrot.slane %v9675, %v9796
    %v9798 = vlaneseq
    %v9799 = vshrl.u32 %v9798, 7
    %v9800 = vsub.s32 0, %v9799
    %v9801 = vrot.slane %v9689, %v9800
    %v9802 = vlaneseq
    %v9803 = vshrl.u32 %v9802, 7
    %v9804 = vsub.s32 1, %v9803
    %v9805 = vrot.slane %v9689, %v9804
    %v9806 = vlaneseq
    %v9807 = vshrl.u32 %v9806, 7
    %v9808 = vsub.s32 0, %v9807
    %v9809 = vrot.slane %v9691, %v9808
    %v9810 = vlaneseq
    %v9811 = vshrl.u32 %v9810, 7
    %v9812 = vsub.s32 1, %v9811
    %v9813 = vrot.slane %v9691, %v9812
    %v9814 = vlaneseq
    %v9815 = vshrl.u32 %v9814, 7
    %v9816 = vsub.s32 0, %v9815
    %v9817 = vrot.slane %v9693, %v9816
    %v9818 = vlaneseq
    %v9819 = vshrl.u32 %v9818, 7
    %v9820 = vsub.s32 1, %v9819
    %v9821 = vrot.slane %v9693, %v9820
    %9822 = vrot.lane.b32.xlu0 %v9697, 4
    %v9823 = vpop.permute.xlu0 %9822
    %9824 = vrot.lane.b32.xlu0 %v9701, 4
    %v9825 = vpop.permute.xlu0 %9824
    %9826 = vrot.lane.b32.xlu0 %v9705, 4
    %v9827 = vpop.permute.xlu0 %9826
    %9828 = vrot.lane.b32.xlu0 %v9709, 4
    %v9829 = vpop.permute.xlu0 %9828
    %9830 = vrot.lane.b32.xlu0 %v9713, 4
    %v9831 = vpop.permute.xlu0 %9830
    %9832 = vrot.lane.b32.xlu0 %v9717, 4
    %v9833 = vpop.permute.xlu0 %9832
    %9834 = vrot.lane.b32.xlu0 %v9721, 4
    %v9835 = vpop.permute.xlu0 %9834
    %9836 = vrot.lane.b32.xlu0 %v9725, 4
    %v9837 = vpop.permute.xlu0 %9836
    %9838 = vrot.lane.b32.xlu0 %v9729, 4
    %v9839 = vpop.permute.xlu0 %9838
    %9840 = vrot.lane.b32.xlu0 %v9733, 4
    %v9841 = vpop.permute.xlu0 %9840
    %9842 = vrot.lane.b32.xlu0 %v9737, 4
    %v9843 = vpop.permute.xlu0 %9842
    %9844 = vrot.lane.b32.xlu0 %v9741, 4
    %v9845 = vpop.permute.xlu0 %9844
    %9846 = vrot.lane.b32.xlu0 %v9745, 4
    %v9847 = vpop.permute.xlu0 %9846
    %9848 = vrot.lane.b32.xlu0 %v9749, 4
    %v9849 = vpop.permute.xlu0 %9848
    %9850 = vrot.lane.b32.xlu0 %v9753, 4
    %v9851 = vpop.permute.xlu0 %9850
    %9852 = vrot.lane.b32.xlu0 %v9757, 4
    %v9853 = vpop.permute.xlu0 %9852
    %9854 = vrot.lane.b32.xlu0 %v9761, 4
    %v9855 = vpop.permute.xlu0 %9854
    %9856 = vrot.lane.b32.xlu0 %v9765, 4
    %v9857 = vpop.permute.xlu0 %9856
    %9858 = vrot.lane.b32.xlu0 %v9769, 4
    %v9859 = vpop.permute.xlu0 %9858
    %9860 = vrot.lane.b32.xlu0 %v9773, 4
    %v9861 = vpop.permute.xlu0 %9860
    %9862 = vrot.lane.b32.xlu0 %v9777, 4
    %v9863 = vpop.permute.xlu0 %9862
    %9864 = vrot.lane.b32.xlu0 %v9781, 4
    %v9865 = vpop.permute.xlu0 %9864
    %9866 = vrot.lane.b32.xlu0 %v9785, 4
    %v9867 = vpop.permute.xlu0 %9866
    %9868 = vrot.lane.b32.xlu0 %v9789, 4
    %v9869 = vpop.permute.xlu0 %9868
    %9870 = vrot.lane.b32.xlu0 %v9793, 4
    %v9871 = vpop.permute.xlu0 %9870
    %9872 = vrot.lane.b32.xlu0 %v9797, 4
    %v9873 = vpop.permute.xlu0 %9872
    %9874 = vrot.lane.b32.xlu0 %v9801, 4
    %v9875 = vpop.permute.xlu0 %9874
    %9876 = vrot.lane.b32.xlu0 %v9805, 4
    %v9877 = vpop.permute.xlu0 %9876
    %9878 = vrot.lane.b32.xlu0 %v9809, 4
    %v9879 = vpop.permute.xlu0 %9878
    %9880 = vrot.lane.b32.xlu0 %v9813, 4
    %v9881 = vpop.permute.xlu0 %9880
    %9882 = vrot.lane.b32.xlu0 %v9817, 4
    %v9883 = vpop.permute.xlu0 %9882
    %9884 = vrot.lane.b32.xlu0 %v9821, 4
    %v9885 = vpop.permute.xlu0 %9884
    %v9886 = vsel %vm44, %v9823, %v9825
    %v9887 = vsel %vm44, %v9827, %v9829
    %v9888 = vsel %vm44, %v9831, %v9833
    %v9889 = vsel %vm44, %v9835, %v9837
    %v9890 = vsel %vm44, %v9839, %v9841
    %v9891 = vsel %vm44, %v9843, %v9845
    %v9892 = vsel %vm44, %v9847, %v9849
    %v9893 = vsel %vm44, %v9851, %v9853
    %v9894 = vsel %vm44, %v9855, %v9857
    %v9895 = vsel %vm44, %v9859, %v9861
    %v9896 = vsel %vm44, %v9863, %v9865
    %v9897 = vsel %vm44, %v9867, %v9869
    %v9898 = vsel %vm44, %v9871, %v9873
    %v9899 = vsel %vm44, %v9875, %v9877
    %v9900 = vsel %vm44, %v9879, %v9881
    %v9901 = vsel %vm44, %v9883, %v9885
    %9918 = vst.msk [vmem:[%s7210 + $0xe] sm:$0x1] %vm1986, %v9886
    %9919 = vst.msk [vmem:[%s7210 + $0x1e] sm:$0x1] %vm1986, %v9887
    %9920 = vst.msk [vmem:[%s7210 + $0x2e] sm:$0x1] %vm1986, %v9888
    %9921 = vst.msk [vmem:[%s7210 + $0x3e] sm:$0x1] %vm1986, %v9889
    %9922 = vst.msk [vmem:[%s7210 + $0x4e] sm:$0x1] %vm1986, %v9890
    %9923 = vst.msk [vmem:[%s7210 + $0x5e] sm:$0x1] %vm1986, %v9891
    %9924 = vst.msk [vmem:[%s7210 + $0x6e] sm:$0x1] %vm1986, %v9892
    %9925 = vst.msk [vmem:[%s7210 + $0x7e] sm:$0x1] %vm1986, %v9893
    %9926 = vst.msk [vmem:[%s7210 + $0x8e] sm:$0x1] %vm1986, %v9894
    %9927 = vst.msk [vmem:[%s7210 + $0x9e] sm:$0x1] %vm1986, %v9895
    %9928 = vst.msk [vmem:[%s7210 + $0xae] sm:$0x1] %vm1986, %v9896
    %9929 = vst.msk [vmem:[%s7210 + $0xbe] sm:$0x1] %vm1986, %v9897
    %9930 = vst.msk [vmem:[%s7210 + $0xce] sm:$0x1] %vm1986, %v9898
    %9931 = vst.msk [vmem:[%s7210 + $0xde] sm:$0x1] %vm1986, %v9899
    %9932 = vst.msk [vmem:[%s7210 + $0xee] sm:$0x1] %vm1986, %v9900
    %9933 = vst.msk [vmem:[%s7210 + $0xfe] sm:$0x1] %vm1986, %v9901
    %v9935 = vcombine.low %v7092, %v7093
    %v9936 = vcombine.high %v7092, %v7093
    %v9938 = vunpack.c.l.s4 1966171168
    %v9939 = vunpack.c.0.s8 %v9938
    %v9940 = vlaneseq
    %v9941 = vshrl.u32 %v9940, 7
    %v9942 = vsub.s32 %v9939, %v9941
    %v9943 = vrot.slane %v9935, %v9942
    %v9945 = vunpack.c.l.s4 1966171168
    %v9946 = vunpack.c.0.s8 %v9945
    %v9947 = vlaneseq
    %v9948 = vshrl.u32 %v9947, 7
    %v9949 = vsub.s32 %v9946, %v9948
    %v9950 = vrot.slane %v9936, %v9949
    %v9951 = vcombine.high %v9943, %v9943
    %v9952 = vcombine.high %v9950, %v9950
    %v9954 = vunpack.c.l.s4 1966171168
    %v9955 = vunpack.c.0.s8 %v9954
    %v9956 = vlaneseq
    %v9957 = vshrl.u32 %v9956, 7
    %v9958 = vsub.s32 %v9955, %v9957
    %v9959 = vrot.slane %v9943, %v9958
    %v9961 = vunpack.c.l.s4 1966171168
    %v9962 = vunpack.c.0.s8 %v9961
    %v9963 = vlaneseq
    %v9964 = vshrl.u32 %v9963, 7
    %v9965 = vsub.s32 %v9962, %v9964
    %v9966 = vrot.slane %v9950, %v9965
    %v9968 = vunpack.c.l.s4 1966171168
    %v9969 = vunpack.c.0.s8 %v9968
    %v9970 = vlaneseq
    %v9971 = vshrl.u32 %v9970, 7
    %v9972 = vsub.s32 %v9969, %v9971
    %v9973 = vrot.slane %v9951, %v9972
    %v9975 = vunpack.c.l.s4 1966171168
    %v9976 = vunpack.c.0.s8 %v9975
    %v9977 = vlaneseq
    %v9978 = vshrl.u32 %v9977, 7
    %v9979 = vsub.s32 %v9976, %v9978
    %v9980 = vrot.slane %v9952, %v9979
    %v9981 = vcombine.high %v9959, %v9959
    %v9982 = vcombine.high %v9966, %v9966
    %v9983 = vcombine.high %v9973, %v9973
    %v9984 = vcombine.high %v9980, %v9980
    %v9985 = vlaneseq
    %v9986 = vshrl.u32 %v9985, 7
    %v9987 = vsub.s32 0, %v9986
    %v9988 = vrot.slane %v9959, %v9987
    %v9989 = vlaneseq
    %v9990 = vshrl.u32 %v9989, 7
    %v9991 = vsub.s32 1, %v9990
    %v9992 = vrot.slane %v9959, %v9991
    %v9993 = vlaneseq
    %v9994 = vshrl.u32 %v9993, 7
    %v9995 = vsub.s32 0, %v9994
    %v9996 = vrot.slane %v9973, %v9995
    %v9997 = vlaneseq
    %v9998 = vshrl.u32 %v9997, 7
    %v9999 = vsub.s32 1, %v9998
    %v10000 = vrot.slane %v9973, %v9999
    %v10001 = vlaneseq
    %v10002 = vshrl.u32 %v10001, 7
    %v10003 = vsub.s32 0, %v10002
    %v10004 = vrot.slane %v9981, %v10003
    %v10005 = vlaneseq
    %v10006 = vshrl.u32 %v10005, 7
    %v10007 = vsub.s32 1, %v10006
    %v10008 = vrot.slane %v9981, %v10007
    %v10009 = vlaneseq
    %v10010 = vshrl.u32 %v10009, 7
    %v10011 = vsub.s32 0, %v10010
    %v10012 = vrot.slane %v9983, %v10011
    %v10013 = vlaneseq
    %v10014 = vshrl.u32 %v10013, 7
    %v10015 = vsub.s32 1, %v10014
    %v10016 = vrot.slane %v9983, %v10015
    %v10017 = vlaneseq
    %v10018 = vshrl.u32 %v10017, 7
    %v10019 = vsub.s32 0, %v10018
    %v10020 = vrot.slane %v9966, %v10019
    %v10021 = vlaneseq
    %v10022 = vshrl.u32 %v10021, 7
    %v10023 = vsub.s32 1, %v10022
    %v10024 = vrot.slane %v9966, %v10023
    %v10025 = vlaneseq
    %v10026 = vshrl.u32 %v10025, 7
    %v10027 = vsub.s32 0, %v10026
    %v10028 = vrot.slane %v9980, %v10027
    %v10029 = vlaneseq
    %v10030 = vshrl.u32 %v10029, 7
    %v10031 = vsub.s32 1, %v10030
    %v10032 = vrot.slane %v9980, %v10031
    %v10033 = vlaneseq
    %v10034 = vshrl.u32 %v10033, 7
    %v10035 = vsub.s32 0, %v10034
    %v10036 = vrot.slane %v9982, %v10035
    %v10037 = vlaneseq
    %v10038 = vshrl.u32 %v10037, 7
    %v10039 = vsub.s32 1, %v10038
    %v10040 = vrot.slane %v9982, %v10039
    %v10041 = vlaneseq
    %v10042 = vshrl.u32 %v10041, 7
    %v10043 = vsub.s32 0, %v10042
    %v10044 = vrot.slane %v9984, %v10043
    %v10045 = vlaneseq
    %v10046 = vshrl.u32 %v10045, 7
    %v10047 = vsub.s32 1, %v10046
    %v10048 = vrot.slane %v9984, %v10047
    %10049 = vrot.lane.b32.xlu0 %v9988, 4
    %v10050 = vpop.permute.xlu0 %10049
    %10051 = vrot.lane.b32.xlu0 %v9992, 4
    %v10052 = vpop.permute.xlu0 %10051
    %10053 = vrot.lane.b32.xlu0 %v9996, 4
    %v10054 = vpop.permute.xlu0 %10053
    %10055 = vrot.lane.b32.xlu0 %v10000, 4
    %v10056 = vpop.permute.xlu0 %10055
    %10057 = vrot.lane.b32.xlu0 %v10004, 4
    %v10058 = vpop.permute.xlu0 %10057
    %10059 = vrot.lane.b32.xlu0 %v10008, 4
    %v10060 = vpop.permute.xlu0 %10059
    %10061 = vrot.lane.b32.xlu0 %v10012, 4
    %v10062 = vpop.permute.xlu0 %10061
    %10063 = vrot.lane.b32.xlu0 %v10016, 4
    %v10064 = vpop.permute.xlu0 %10063
    %10065 = vrot.lane.b32.xlu0 %v10020, 4
    %v10066 = vpop.permute.xlu0 %10065
    %10067 = vrot.lane.b32.xlu0 %v10024, 4
    %v10068 = vpop.permute.xlu0 %10067
    %10069 = vrot.lane.b32.xlu0 %v10028, 4
    %v10070 = vpop.permute.xlu0 %10069
    %10071 = vrot.lane.b32.xlu0 %v10032, 4
    %v10072 = vpop.permute.xlu0 %10071
    %10073 = vrot.lane.b32.xlu0 %v10036, 4
    %v10074 = vpop.permute.xlu0 %10073
    %10075 = vrot.lane.b32.xlu0 %v10040, 4
    %v10076 = vpop.permute.xlu0 %10075
    %10077 = vrot.lane.b32.xlu0 %v10044, 4
    %v10078 = vpop.permute.xlu0 %10077
    %10079 = vrot.lane.b32.xlu0 %v10048, 4
    %v10080 = vpop.permute.xlu0 %10079
    %v10081 = vsel %vm44, %v10050, %v10052
    %v10082 = vsel %vm44, %v10054, %v10056
    %v10083 = vsel %vm44, %v10058, %v10060
    %v10084 = vsel %vm44, %v10062, %v10064
    %v10085 = vsel %vm44, %v10066, %v10068
    %v10086 = vsel %vm44, %v10070, %v10072
    %v10087 = vsel %vm44, %v10074, %v10076
    %v10088 = vsel %vm44, %v10078, %v10080
    %10097 = vst.msk [vmem:[%s7285 + $0xe] sm:$0x1] %vm1986, %v10081
    %10098 = vst.msk [vmem:[%s7285 + $0x1e] sm:$0x1] %vm1986, %v10082
    %10099 = vst.msk [vmem:[%s7285 + $0x2e] sm:$0x1] %vm1986, %v10083
    %10100 = vst.msk [vmem:[%s7285 + $0x3e] sm:$0x1] %vm1986, %v10084
    %10101 = vst.msk [vmem:[%s7285 + $0x4e] sm:$0x1] %vm1986, %v10085
    %10102 = vst.msk [vmem:[%s7285 + $0x5e] sm:$0x1] %vm1986, %v10086
    %10103 = vst.msk [vmem:[%s7285 + $0x6e] sm:$0x1] %vm1986, %v10087
    %10104 = vst.msk [vmem:[%s7285 + $0x7e] sm:$0x1] %vm1986, %v10088
    %10105 = vrot.lane.b32.xlu0 %v7086, 4
    %v10106 = vpop.permute.xlu0 %10105
    %10107 = vrot.lane.b32.xlu0 %v7087, 4
    %v10108 = vpop.permute.xlu0 %10107
    %10109 = vrot.lane.b32.xlu0 %v7089, 4
    %v10110 = vpop.permute.xlu0 %10109
    %10111 = vrot.lane.b32.xlu0 %v7090, 4
    %v10112 = vpop.permute.xlu0 %10111
    %10113 = vrot.lane.b32.xlu0 %v7092, 4
    %v10114 = vpop.permute.xlu0 %10113
    %10115 = vrot.lane.b32.xlu0 %v7093, 4
    %v10116 = vpop.permute.xlu0 %10115
    %v10117 = vsel %vm44, %v10106, %v10108
    %v10118 = vsel %vm44, %v10110, %v10112
    %v10119 = vsel %vm44, %v10114, %v10116
    %v10123 = vsel %vm2069, %v10117, 0.0
    %10124 = vadd.xlane.f32.xlu0 %v10123
    %v10125 = vpop.xlane.xlu0 %10124
    %v10126 = vsel %vm2069, %v10118, 0.0
    %10127 = vadd.xlane.f32.xlu0 %v10126
    %v10128 = vpop.xlane.xlu0 %10127
    %v10129 = vsel %vm2069, %v10119, 0.0
    %10130 = vadd.xlane.f32.xlu0 %v10129
    %v10131 = vpop.xlane.xlu0 %10130
    %v10132 = vadd.f32 %v9589, %v10125
    %v10133 = vadd.f32 %v9590, %v10128
    %v10134 = vadd.f32 %v9591, %v10131
    %v10135 = vcombine.high %v7087, %v7087
    %v10137 = vunpack.c.l.s4 1966171168
    %v10138 = vunpack.c.0.s8 %v10137
    %v10139 = vlaneseq
    %v10140 = vshrl.u32 %v10139, 7
    %v10141 = vsub.s32 %v10138, %v10140
    %v10142 = vrot.slane %v7087, %v10141
    %v10144 = vunpack.c.l.s4 1966171168
    %v10145 = vunpack.c.0.s8 %v10144
    %v10146 = vlaneseq
    %v10147 = vshrl.u32 %v10146, 7
    %v10148 = vsub.s32 %v10145, %v10147
    %v10149 = vrot.slane %v10135, %v10148
    %v10150 = vcombine.high %v10142, %v10142
    %v10151 = vcombine.high %v10149, %v10149
    %v10153 = vunpack.c.l.s4 1966171168
    %v10154 = vunpack.c.0.s8 %v10153
    %v10155 = vlaneseq
    %v10156 = vshrl.u32 %v10155, 7
    %v10157 = vsub.s32 %v10154, %v10156
    %v10158 = vrot.slane %v10142, %v10157
    %v10160 = vunpack.c.l.s4 1966171168
    %v10161 = vunpack.c.0.s8 %v10160
    %v10162 = vlaneseq
    %v10163 = vshrl.u32 %v10162, 7
    %v10164 = vsub.s32 %v10161, %v10163
    %v10165 = vrot.slane %v10149, %v10164
    %v10167 = vunpack.c.l.s4 1966171168
    %v10168 = vunpack.c.0.s8 %v10167
    %v10169 = vlaneseq
    %v10170 = vshrl.u32 %v10169, 7
    %v10171 = vsub.s32 %v10168, %v10170
    %v10172 = vrot.slane %v10150, %v10171
    %v10174 = vunpack.c.l.s4 1966171168
    %v10175 = vunpack.c.0.s8 %v10174
    %v10176 = vlaneseq
    %v10177 = vshrl.u32 %v10176, 7
    %v10178 = vsub.s32 %v10175, %v10177
    %v10179 = vrot.slane %v10151, %v10178
    %v10180 = vcombine.high %v10158, %v10158
    %v10181 = vcombine.high %v10165, %v10165
    %v10182 = vcombine.high %v10172, %v10172
    %v10183 = vcombine.high %v10179, %v10179
    %v10184 = vcombine.high %v7090, %v7090
    %v10186 = vunpack.c.l.s4 1966171168
    %v10187 = vunpack.c.0.s8 %v10186
    %v10188 = vlaneseq
    %v10189 = vshrl.u32 %v10188, 7
    %v10190 = vsub.s32 %v10187, %v10189
    %v10191 = vrot.slane %v7090, %v10190
    %v10193 = vunpack.c.l.s4 1966171168
    %v10194 = vunpack.c.0.s8 %v10193
    %v10195 = vlaneseq
    %v10196 = vshrl.u32 %v10195, 7
    %v10197 = vsub.s32 %v10194, %v10196
    %v10198 = vrot.slane %v10184, %v10197
    %v10199 = vcombine.high %v10191, %v10191
    %v10200 = vcombine.high %v10198, %v10198
    %v10202 = vunpack.c.l.s4 1966171168
    %v10203 = vunpack.c.0.s8 %v10202
    %v10204 = vlaneseq
    %v10205 = vshrl.u32 %v10204, 7
    %v10206 = vsub.s32 %v10203, %v10205
    %v10207 = vrot.slane %v10191, %v10206
    %v10209 = vunpack.c.l.s4 1966171168
    %v10210 = vunpack.c.0.s8 %v10209
    %v10211 = vlaneseq
    %v10212 = vshrl.u32 %v10211, 7
    %v10213 = vsub.s32 %v10210, %v10212
    %v10214 = vrot.slane %v10198, %v10213
    %v10216 = vunpack.c.l.s4 1966171168
    %v10217 = vunpack.c.0.s8 %v10216
    %v10218 = vlaneseq
    %v10219 = vshrl.u32 %v10218, 7
    %v10220 = vsub.s32 %v10217, %v10219
    %v10221 = vrot.slane %v10199, %v10220
    %v10223 = vunpack.c.l.s4 1966171168
    %v10224 = vunpack.c.0.s8 %v10223
    %v10225 = vlaneseq
    %v10226 = vshrl.u32 %v10225, 7
    %v10227 = vsub.s32 %v10224, %v10226
    %v10228 = vrot.slane %v10200, %v10227
    %v10229 = vcombine.high %v10207, %v10207
    %v10230 = vcombine.high %v10214, %v10214
    %v10231 = vcombine.high %v10221, %v10221
    %v10232 = vcombine.high %v10228, %v10228
    %v10233 = vlaneseq
    %v10234 = vshrl.u32 %v10233, 7
    %v10235 = vsub.s32 0, %v10234
    %v10236 = vrot.slane %v10158, %v10235
    %v10237 = vlaneseq
    %v10238 = vshrl.u32 %v10237, 7
    %v10239 = vsub.s32 0, %v10238
    %v10240 = vrot.slane %v10172, %v10239
    %v10241 = vlaneseq
    %v10242 = vshrl.u32 %v10241, 7
    %v10243 = vsub.s32 0, %v10242
    %v10244 = vrot.slane %v10180, %v10243
    %v10245 = vlaneseq
    %v10246 = vshrl.u32 %v10245, 7
    %v10247 = vsub.s32 0, %v10246
    %v10248 = vrot.slane %v10182, %v10247
    %v10249 = vlaneseq
    %v10250 = vshrl.u32 %v10249, 7
    %v10251 = vsub.s32 0, %v10250
    %v10252 = vrot.slane %v10165, %v10251
    %v10253 = vlaneseq
    %v10254 = vshrl.u32 %v10253, 7
    %v10255 = vsub.s32 0, %v10254
    %v10256 = vrot.slane %v10179, %v10255
    %v10257 = vlaneseq
    %v10258 = vshrl.u32 %v10257, 7
    %v10259 = vsub.s32 0, %v10258
    %v10260 = vrot.slane %v10181, %v10259
    %v10261 = vlaneseq
    %v10262 = vshrl.u32 %v10261, 7
    %v10263 = vsub.s32 0, %v10262
    %v10264 = vrot.slane %v10183, %v10263
    %v10265 = vlaneseq
    %v10266 = vshrl.u32 %v10265, 7
    %v10267 = vsub.s32 0, %v10266
    %v10268 = vrot.slane %v10207, %v10267
    %v10269 = vlaneseq
    %v10270 = vshrl.u32 %v10269, 7
    %v10271 = vsub.s32 0, %v10270
    %v10272 = vrot.slane %v10221, %v10271
    %v10273 = vlaneseq
    %v10274 = vshrl.u32 %v10273, 7
    %v10275 = vsub.s32 0, %v10274
    %v10276 = vrot.slane %v10229, %v10275
    %v10277 = vlaneseq
    %v10278 = vshrl.u32 %v10277, 7
    %v10279 = vsub.s32 0, %v10278
    %v10280 = vrot.slane %v10231, %v10279
    %v10281 = vlaneseq
    %v10282 = vshrl.u32 %v10281, 7
    %v10283 = vsub.s32 0, %v10282
    %v10284 = vrot.slane %v10214, %v10283
    %v10285 = vlaneseq
    %v10286 = vshrl.u32 %v10285, 7
    %v10287 = vsub.s32 0, %v10286
    %v10288 = vrot.slane %v10228, %v10287
    %v10289 = vlaneseq
    %v10290 = vshrl.u32 %v10289, 7
    %v10291 = vsub.s32 0, %v10290
    %v10292 = vrot.slane %v10230, %v10291
    %v10293 = vlaneseq
    %v10294 = vshrl.u32 %v10293, 7
    %v10295 = vsub.s32 0, %v10294
    %v10296 = vrot.slane %v10232, %v10295
    %10297 = vrot.lane.b32.xlu0 %v10236, 114
    %v10298 = vpop.permute.xlu0 %10297
    %10299 = vrot.lane.b32.xlu0 %v10240, 114
    %v10300 = vpop.permute.xlu0 %10299
    %10301 = vrot.lane.b32.xlu0 %v10244, 114
    %v10302 = vpop.permute.xlu0 %10301
    %10303 = vrot.lane.b32.xlu0 %v10248, 114
    %v10304 = vpop.permute.xlu0 %10303
    %10305 = vrot.lane.b32.xlu0 %v10252, 114
    %v10306 = vpop.permute.xlu0 %10305
    %10307 = vrot.lane.b32.xlu0 %v10256, 114
    %v10308 = vpop.permute.xlu0 %10307
    %10309 = vrot.lane.b32.xlu0 %v10260, 114
    %v10310 = vpop.permute.xlu0 %10309
    %10311 = vrot.lane.b32.xlu0 %v10264, 114
    %v10312 = vpop.permute.xlu0 %10311
    %10313 = vrot.lane.b32.xlu0 %v10268, 114
    %v10314 = vpop.permute.xlu0 %10313
    %10315 = vrot.lane.b32.xlu0 %v10272, 114
    %v10316 = vpop.permute.xlu0 %10315
    %10317 = vrot.lane.b32.xlu0 %v10276, 114
    %v10318 = vpop.permute.xlu0 %10317
    %10319 = vrot.lane.b32.xlu0 %v10280, 114
    %v10320 = vpop.permute.xlu0 %10319
    %10321 = vrot.lane.b32.xlu0 %v10284, 114
    %v10322 = vpop.permute.xlu0 %10321
    %10323 = vrot.lane.b32.xlu0 %v10288, 114
    %v10324 = vpop.permute.xlu0 %10323
    %10325 = vrot.lane.b32.xlu0 %v10292, 114
    %v10326 = vpop.permute.xlu0 %10325
    %10327 = vrot.lane.b32.xlu0 %v10296, 114
    %v10328 = vpop.permute.xlu0 %10327
    %10345 = vst.msk [vmem:[%s7210 + $0xf] sm:$0x1] %vm1986, %v10298
    %10346 = vst.msk [vmem:[%s7210 + $0x1f] sm:$0x1] %vm1986, %v10300
    %10347 = vst.msk [vmem:[%s7210 + $0x2f] sm:$0x1] %vm1986, %v10302
    %10348 = vst.msk [vmem:[%s7210 + $0x3f] sm:$0x1] %vm1986, %v10304
    %10349 = vst.msk [vmem:[%s7210 + $0x4f] sm:$0x1] %vm1986, %v10306
    %10350 = vst.msk [vmem:[%s7210 + $0x5f] sm:$0x1] %vm1986, %v10308
    %10351 = vst.msk [vmem:[%s7210 + $0x6f] sm:$0x1] %vm1986, %v10310
    %10352 = vst.msk [vmem:[%s7210 + $0x7f] sm:$0x1] %vm1986, %v10312
    %10353 = vst.msk [vmem:[%s7210 + $0x8f] sm:$0x1] %vm1986, %v10314
    %10354 = vst.msk [vmem:[%s7210 + $0x9f] sm:$0x1] %vm1986, %v10316
    %10355 = vst.msk [vmem:[%s7210 + $0xaf] sm:$0x1] %vm1986, %v10318
    %10356 = vst.msk [vmem:[%s7210 + $0xbf] sm:$0x1] %vm1986, %v10320
    %10357 = vst.msk [vmem:[%s7210 + $0xcf] sm:$0x1] %vm1986, %v10322
    %10358 = vst.msk [vmem:[%s7210 + $0xdf] sm:$0x1] %vm1986, %v10324
    %10359 = vst.msk [vmem:[%s7210 + $0xef] sm:$0x1] %vm1986, %v10326
    %10360 = vst.msk [vmem:[%s7210 + $0xff] sm:$0x1] %vm1986, %v10328
    %v10361 = vcombine.high %v7093, %v7093
    %v10363 = vunpack.c.l.s4 1966171168
    %v10364 = vunpack.c.0.s8 %v10363
    %v10365 = vlaneseq
    %v10366 = vshrl.u32 %v10365, 7
    %v10367 = vsub.s32 %v10364, %v10366
    %v10368 = vrot.slane %v7093, %v10367
    %v10370 = vunpack.c.l.s4 1966171168
    %v10371 = vunpack.c.0.s8 %v10370
    %v10372 = vlaneseq
    %v10373 = vshrl.u32 %v10372, 7
    %v10374 = vsub.s32 %v10371, %v10373
    %v10375 = vrot.slane %v10361, %v10374
    %v10376 = vcombine.high %v10368, %v10368
    %v10377 = vcombine.high %v10375, %v10375
    %v10379 = vunpack.c.l.s4 1966171168
    %v10380 = vunpack.c.0.s8 %v10379
    %v10381 = vlaneseq
    %v10382 = vshrl.u32 %v10381, 7
    %v10383 = vsub.s32 %v10380, %v10382
    %v10384 = vrot.slane %v10368, %v10383
    %v10386 = vunpack.c.l.s4 1966171168
    %v10387 = vunpack.c.0.s8 %v10386
    %v10388 = vlaneseq
    %v10389 = vshrl.u32 %v10388, 7
    %v10390 = vsub.s32 %v10387, %v10389
    %v10391 = vrot.slane %v10375, %v10390
    %v10393 = vunpack.c.l.s4 1966171168
    %v10394 = vunpack.c.0.s8 %v10393
    %v10395 = vlaneseq
    %v10396 = vshrl.u32 %v10395, 7
    %v10397 = vsub.s32 %v10394, %v10396
    %v10398 = vrot.slane %v10376, %v10397
    %v10400 = vunpack.c.l.s4 1966171168
    %v10401 = vunpack.c.0.s8 %v10400
    %v10402 = vlaneseq
    %v10403 = vshrl.u32 %v10402, 7
    %v10404 = vsub.s32 %v10401, %v10403
    %v10405 = vrot.slane %v10377, %v10404
    %v10406 = vcombine.high %v10384, %v10384
    %v10407 = vcombine.high %v10391, %v10391
    %v10408 = vcombine.high %v10398, %v10398
    %v10409 = vcombine.high %v10405, %v10405
    %v10410 = vlaneseq
    %v10411 = vshrl.u32 %v10410, 7
    %v10412 = vsub.s32 0, %v10411
    %v10413 = vrot.slane %v10384, %v10412
    %v10414 = vlaneseq
    %v10415 = vshrl.u32 %v10414, 7
    %v10416 = vsub.s32 0, %v10415
    %v10417 = vrot.slane %v10398, %v10416
    %v10418 = vlaneseq
    %v10419 = vshrl.u32 %v10418, 7
    %v10420 = vsub.s32 0, %v10419
    %v10421 = vrot.slane %v10406, %v10420
    %v10422 = vlaneseq
    %v10423 = vshrl.u32 %v10422, 7
    %v10424 = vsub.s32 0, %v10423
    %v10425 = vrot.slane %v10408, %v10424
    %v10426 = vlaneseq
    %v10427 = vshrl.u32 %v10426, 7
    %v10428 = vsub.s32 0, %v10427
    %v10429 = vrot.slane %v10391, %v10428
    %v10430 = vlaneseq
    %v10431 = vshrl.u32 %v10430, 7
    %v10432 = vsub.s32 0, %v10431
    %v10433 = vrot.slane %v10405, %v10432
    %v10434 = vlaneseq
    %v10435 = vshrl.u32 %v10434, 7
    %v10436 = vsub.s32 0, %v10435
    %v10437 = vrot.slane %v10407, %v10436
    %v10438 = vlaneseq
    %v10439 = vshrl.u32 %v10438, 7
    %v10440 = vsub.s32 0, %v10439
    %v10441 = vrot.slane %v10409, %v10440
    %10442 = vrot.lane.b32.xlu0 %v10413, 114
    %v10443 = vpop.permute.xlu0 %10442
    %10444 = vrot.lane.b32.xlu0 %v10417, 114
    %v10445 = vpop.permute.xlu0 %10444
    %10446 = vrot.lane.b32.xlu0 %v10421, 114
    %v10447 = vpop.permute.xlu0 %10446
    %10448 = vrot.lane.b32.xlu0 %v10425, 114
    %v10449 = vpop.permute.xlu0 %10448
    %10450 = vrot.lane.b32.xlu0 %v10429, 114
    %v10451 = vpop.permute.xlu0 %10450
    %10452 = vrot.lane.b32.xlu0 %v10433, 114
    %v10453 = vpop.permute.xlu0 %10452
    %10454 = vrot.lane.b32.xlu0 %v10437, 114
    %v10455 = vpop.permute.xlu0 %10454
    %10456 = vrot.lane.b32.xlu0 %v10441, 114
    %v10457 = vpop.permute.xlu0 %10456
    %10466 = vst.msk [vmem:[%s7285 + $0xf] sm:$0x1] %vm1986, %v10443
    %10467 = vst.msk [vmem:[%s7285 + $0x1f] sm:$0x1] %vm1986, %v10445
    %10468 = vst.msk [vmem:[%s7285 + $0x2f] sm:$0x1] %vm1986, %v10447
    %10469 = vst.msk [vmem:[%s7285 + $0x3f] sm:$0x1] %vm1986, %v10449
    %10470 = vst.msk [vmem:[%s7285 + $0x4f] sm:$0x1] %vm1986, %v10451
    %10471 = vst.msk [vmem:[%s7285 + $0x5f] sm:$0x1] %vm1986, %v10453
    %10472 = vst.msk [vmem:[%s7285 + $0x6f] sm:$0x1] %vm1986, %v10455
    %10473 = vst.msk [vmem:[%s7285 + $0x7f] sm:$0x1] %vm1986, %v10457
    %10474 = vrot.lane.b32.xlu0 %v7087, 114
    %v10475 = vpop.permute.xlu0 %10474
    %10476 = vrot.lane.b32.xlu0 %v7090, 114
    %v10477 = vpop.permute.xlu0 %10476
    %10478 = vrot.lane.b32.xlu0 %v7093, 114
    %v10479 = vpop.permute.xlu0 %10478
    %v10483 = vsel %vm2069, %v10475, 0.0
    %10484 = vadd.xlane.f32.xlu0 %v10483
    %v10485 = vpop.xlane.xlu0 %10484
    %v10486 = vsel %vm2069, %v10477, 0.0
    %10487 = vadd.xlane.f32.xlu0 %v10486
    %v10488 = vpop.xlane.xlu0 %10487
    %v10489 = vsel %vm2069, %v10479, 0.0
    %10490 = vadd.xlane.f32.xlu0 %v10489
    %v10491 = vpop.xlane.xlu0 %10490
    %v10492 = vadd.f32 %v10132, %v10485
    %v10493 = vadd.f32 %v10133, %v10488
    %v10494 = vadd.f32 %v10134, %v10491
    %v10495 = vmul.f32 %v10492, 0.00390625
    %v10496 = vmul.f32 %v10493, 0.00390625
    %v10497 = vmul.f32 %v10494, 0.00390625
    %s10498 = scalar_lea.vmem %s5, 16
    %10499 = vst.msk [vmem:[%s10498] sm:$0xff] %vm5275, %v10495
    %10500 = vst.msk [vmem:[%s10498 + $0x8] sm:$0xff] %vm5275, %v10496
    %s10501 = scalar_lea.vmem %s6, 8
    %10502 = vst.msk [vmem:[%s10501] sm:$0xff] %vm5275, %v10497
    // Predicated region
    $region14: #{distiller_forward.1} parent=1 // pred_check
      _
    $region15: #{distiller_forward.1} parent=1 // pred_check_branch
      %10504 = sbr.rel (0) target = $region17
    $region16: #{distiller_forward.1} parent=1 // pred_region
      %s10506 = ssub.s32 8192, 8192
      %10507 = vsyncadd [#allocation3], %s10506
      %s10508 = sshll.u32 [#allocation2], 4
      %s10509 = int_to_ptr.vmem [resolvable:$true] %s10508
      %10514 = dma.vmem_to_hbm [thread:$0]  %s10509, 8192, %s3, [#allocation3], 128, 128, 8
    $region17: #{distiller_forward.1} parent=1 // pred_fallthru
      _
    // Predicated region
    $region18: #{distiller_forward.1} parent=1 // pred_check
      _
    $region19: #{distiller_forward.1} parent=1 // pred_check_branch
      %10516 = sbr.rel (0) target = $region21
    $region20: #{distiller_forward.1} parent=1 // pred_region
      %s10518 = ssub.s32 4096, 4096
      %10519 = vsyncadd [#allocation5], %s10518
      %s10520 = sshll.u32 [#allocation4], 4
      %s10521 = int_to_ptr.vmem [resolvable:$true] %s10520
      %10526 = dma.vmem_to_hbm [thread:$0]  %s10521, 4096, %s4, [#allocation5], 128, 128, 8
    $region21: #{distiller_forward.1} parent=1 // pred_fallthru
      _
    // Predicated region
    $region22: #{distiller_forward.1} parent=1 // pred_check
      _
    $region23: #{distiller_forward.1} parent=1 // pred_check_branch
      %10528 = sbr.rel (0) target = $region25
    $region24: #{distiller_forward.1} parent=1 // pred_region
      _
    $region25: #{distiller_forward.1} parent=1 // pred_fallthru
      _
    // Predicated region
    $region26: #{distiller_forward.1} parent=1 // pred_check
      _
    $region27: #{distiller_forward.1} parent=1 // pred_check_branch
      %10530 = sbr.rel (0) target = $region29
    $region28: #{distiller_forward.1} parent=1 // pred_region
      _
    $region29: #{distiller_forward.1} parent=1 // pred_fallthru
      _
    // Predicated region
    $region30: #{distiller_forward.1} parent=1 // pred_check
      _
    $region31: #{distiller_forward.1} parent=1 // pred_check_branch
      %10532 = sbr.rel (0) target = $region33
    $region32: #{distiller_forward.1} parent=1 // pred_region
      %10533 = dma.done [#allocation3], 8192
    $region33: #{distiller_forward.1} parent=1 // pred_fallthru
      _
    // Predicated region
    $region34: #{distiller_forward.1} parent=1 // pred_check
      _
    $region35: #{distiller_forward.1} parent=1 // pred_check_branch
      %10535 = sbr.rel (0) target = $region37
    $region36: #{distiller_forward.1} parent=1 // pred_region
      %10536 = dma.done [#allocation5], 4096
    $region37: #{distiller_forward.1} parent=1 // pred_fallthru
      _
    // Predicated region
    $region38: #{distiller_forward.1} parent=1 // pred_check
      _
    $region39: #{distiller_forward.1} parent=1 // pred_check_branch
      %10538 = sbr.rel (0) target = $region41
    $region40: #{distiller_forward.1} parent=1 // pred_region
      _
    $region41: #{distiller_forward.1} parent=1 // pred_fallthru
      _
    // Predicated region
    $region42: #{distiller_forward.1} parent=1 // pred_check
      _
    $region43: #{distiller_forward.1} parent=1 // pred_check_branch
      %10540 = sbr.rel (0) target = $region45
    $region44: #{distiller_forward.1} parent=1 // pred_region
      _
    $region45: #{distiller_forward.1} parent=1 // pred_fallthru
      _
    %10541 = vsyncpa [#allocation3], 1
    %10542 = vsyncpa [#allocation5], 1

</llo_original>
